<compile_context>
chip_gen: v7x
topology: tpu7x:2x2x1
jax: 0.10.0
libtpu: 0.0.40
codegen_flags: <defaults>
</compile_context>

<pallas_src>
import functools

import jax
import jax.numpy as jnp
from jax.experimental import pallas as pl
from jax.experimental.pallas import tpu as pltpu

INPUT_C, INPUT_H, INPUT_W = 3, 28, 28
INPUT_SIZE = INPUT_C * INPUT_H * INPUT_W        # 2352
HIDDEN_DIM = 400
LATENT_SIZE = 15

# Lane-padded dims (multiples of 128).
F_PAD = 2432                                    # 19 * 128
H_PAD = 512
L_PAD = 128
HEADS_PAD = 2 * L_PAD                           # fused mu|logvar head

# Packed-bias layout (8 layers after head fusion), all offsets lane-aligned.
_BIAS_WIDTHS = (H_PAD, H_PAD, H_PAD, HEADS_PAD, H_PAD, H_PAD, H_PAD, F_PAD)
_BIAS_OFFSETS = tuple(sum(_BIAS_WIDTHS[:i]) for i in range(len(_BIAS_WIDTHS)))
B_TOTAL = sum(_BIAS_WIDTHS)                     # 5760 = 45 * 128


def _round_up(x, m):
    return (x + m - 1) // m * m


def _hw_config():
    """Generation-aware tile size / VMEM limit / sigmoid precision."""
    try:
        kind = jax.devices()[0].device_kind.lower()
    except Exception:
        kind = ""
    if "v7" in kind:
        # 64 MiB physical VMEM, 2 TensorCores/chip -> keep >=2 grid steps.
        return dict(max_tm=512, vmem_limit=56 << 20, bf16_sigmoid=True,
                    num_cores=2)
    if "v6" in kind:
        # 128 MiB VMEM; HBM-writeback bound -> bf16 x_hat + large tiles.
        return dict(max_tm=1024, vmem_limit=96 << 20, bf16_sigmoid=True,
                    num_cores=1)
    if "v5" in kind:
        # MXU-bound; no bf16 EUP -> keep the sigmoid in f32, use big tiles.
        return dict(max_tm=1024, vmem_limit=96 << 20, bf16_sigmoid=False,
                    num_cores=1)
    # Unknown backend (older TPU / interpret mode): conservative defaults.
    return dict(max_tm=256, vmem_limit=48 << 20, bf16_sigmoid=False,
                num_cores=1)


def _pick_tile(n, cfg):
    """Batch tile (multiple of 16 for bf16 sublanes) and padded batch size."""
    n16 = _round_up(max(n, 1), 16)
    tm = min(cfg["max_tm"], n16)
    if cfg["num_cores"] > 1:
        # Guarantee >=2 grid steps so the "parallel" batch axis actually
        # shards across both TensorCores on v7x.
        tm = min(tm, max(128, _round_up(pl.cdiv(n16, 2), 16)))
        tm = min(tm, n16)
    n_pad = _round_up(max(n, 1), tm)
    return tm, n_pad


def _vae_kernel(x_ref, eps_ref,
                w1_ref, w2_ref, w3_ref, wh_ref,
                dw1_ref, dw2_ref, dw3_ref, dw4_ref,
                b_ref,
                xhat_ref, mu_ref, logvar_ref,
                *, sigmoid_in_bf16):
    """One batch tile. x: bf16 (TM, F_PAD); eps: f32 (TM, L_PAD); weights bf16
    (VMEM-resident, single-buffered); biases packed f32 (1, B_TOTAL).
    Outputs: x_hat bf16 (TM, F_PAD), mu/logvar f32 (TM, L_PAD)."""

    def fc(h_bf16, w_ref, layer, relu):
        off = _BIAS_OFFSETS[layer]
        width = _BIAS_WIDTHS[layer]
        y = jnp.dot(h_bf16, w_ref[...], preferred_element_type=jnp.float32)
        y = y + b_ref[:, off:off + width]          # f32 bias add (VPU)
        if relu:
            y = jnp.maximum(y, 0.0)
        return y

    # --- encoder: Linear+ReLU x3 (bf16 matmul, f32 accumulate/elementwise) ---
    h = fc(x_ref[...], w1_ref, 0, True).astype(jnp.bfloat16)
    h = fc(h, w2_ref, 1, True).astype(jnp.bfloat16)
    h = fc(h, w3_ref, 2, True).astype(jnp.bfloat16)

    # --- fused latent heads: one (H_PAD, 2*L_PAD) matmul, split mu|logvar ---
    heads = fc(h, wh_ref, 3, False)                 # (TM, 256) f32
    mu = heads[:, :L_PAD]
    logvar = heads[:, L_PAD:]
    # Store early: shortens mu/logvar/heads live ranges across the decoder.
    mu_ref[...] = mu
    logvar_ref[...] = logvar

    # --- reparametrize: z = exp(0.5*logvar) * eps + mu (f32) ---
    # NOTE: padded latent lanes rely on eps being zero-padded there
    # (sigma=exp(0)=1, mu=0 -> z=0 in lanes >= LATENT_SIZE).
    sigma = jnp.exp(0.5 * logvar)
    z = (sigma * eps_ref[...] + mu).astype(jnp.bfloat16)

    # --- decoder: Linear+ReLU x3, Linear, Sigmoid ---
    d = fc(z, dw1_ref, 4, True).astype(jnp.bfloat16)
    d = fc(d, dw2_ref, 5, True).astype(jnp.bfloat16)
    d = fc(d, dw3_ref, 6, True).astype(jnp.bfloat16)
    logits = fc(d, dw4_ref, 7, False)               # (TM, F_PAD) f32

    if sigmoid_in_bf16:
        # bf16 EUP on v6e/v7x: ~2x transcendental throughput, stays hidden.
        xhat_ref[...] = jax.nn.sigmoid(logits.astype(jnp.bfloat16))
    else:
        xhat_ref[...] = jax.nn.sigmoid(logits).astype(jnp.bfloat16)


def init_vae_params(key, input_size=INPUT_SIZE, hidden=HIDDEN_DIM,
                    latent=LATENT_SIZE):
    """Torch-Linear-style init: U(-1/sqrt(fan_in), 1/sqrt(fan_in)).
    Returns unpadded f32 params: list of (W (in,out), b (out,))."""
    dims = [
        (input_size, hidden), (hidden, hidden), (hidden, hidden),   # encoder
        (hidden, latent), (hidden, latent),                         # mu, logvar
        (latent, hidden), (hidden, hidden), (hidden, hidden),       # decoder
        (hidden, input_size),
    ]
    params = []
    for fan_in, fan_out in dims:
        key, kw, kb = jax.random.split(key, 3)
        bound = 1.0 / jnp.sqrt(jnp.float32(fan_in))
        w = jax.random.uniform(kw, (fan_in, fan_out), jnp.float32, -bound, bound)
        b = jax.random.uniform(kb, (fan_out,), jnp.float32, -bound, bound)
        params.append((w, b))
    return params


def pack_params(params):
    """Zero-pad to lane-aligned shapes, fuse mu/logvar heads, cast weights to
    bf16, pack all biases into one (1, B_TOTAL) f32 row."""
    pad_dims = [
        (F_PAD, H_PAD), (H_PAD, H_PAD), (H_PAD, H_PAD),
        (H_PAD, L_PAD), (H_PAD, L_PAD),
        (L_PAD, H_PAD), (H_PAD, H_PAD), (H_PAD, H_PAD),
        (H_PAD, F_PAD),
    ]
    pw, pb = [], []
    for (w, b), (pi, po) in zip(params, pad_dims):
        wp = jnp.zeros((pi, po), jnp.float32).at[:w.shape[0], :w.shape[1]].set(w)
        bp = jnp.zeros((po,), jnp.float32).at[:b.shape[0]].set(b)
        pw.append(wp)
        pb.append(bp)

    # Fuse mu (idx 3) and logvar (idx 4) heads along the output dim.
    wh = jnp.concatenate([pw[3], pw[4]], axis=1)        # (H_PAD, 256)
    bh = jnp.concatenate([pb[3], pb[4]], axis=0)        # (256,)

    weights = [pw[0], pw[1], pw[2], wh, pw[5], pw[6], pw[7], pw[8]]
    biases = [pb[0], pb[1], pb[2], bh, pb[5], pb[6], pb[7], pb[8]]

    weights_bf16 = [w.astype(jnp.bfloat16) for w in weights]
    bias_packed = jnp.concatenate(biases, axis=0).reshape(1, B_TOTAL)
    return weights_bf16, bias_packed


@jax.jit
def vae_forward(x, weights_bf16, bias_packed, eps):
    """x: (N, 3, 28, 28) f32. Returns (x_hat (N,3,28,28), mu (N,Z), logvar (N,Z)).
    Jitted end-to-end so pad/cast/slice plumbing fuses with producers/consumers."""
    cfg = _hw_config()
    n = x.shape[0]
    tm, n_pad = _pick_tile(n, cfg)
    grid = (n_pad // tm,)

    x_flat = x.reshape(n, INPUT_SIZE)
    # Zero padding is benign: padded weight rows/cols and biases are zero, and
    # eps MUST stay zero in lanes >= LATENT_SIZE so padded latent lanes are 0.
    x_p = (jnp.zeros((n_pad, F_PAD), jnp.bfloat16)
           .at[:n, :INPUT_SIZE].set(x_flat.astype(jnp.bfloat16)))
    eps_p = (jnp.zeros((n_pad, L_PAD), jnp.float32)
             .at[:n, :LATENT_SIZE].set(eps.astype(jnp.float32)))

    # Constant index_map -> single-buffer the VMEM-resident weights & biases.
    resident = pl.Buffered(1)

    in_specs = [
        pl.BlockSpec((tm, F_PAD), lambda i: (i, 0)),    # x tile
        pl.BlockSpec((tm, L_PAD), lambda i: (i, 0)),    # eps tile
    ]
    in_specs += [pl.BlockSpec(w.shape, lambda i: (0, 0), pipeline_mode=resident)
                 for w in weights_bf16]
    in_specs += [pl.BlockSpec((1, B_TOTAL), lambda i: (0, 0),
                              pipeline_mode=resident)]

    out_shapes = (
        jax.ShapeDtypeStruct((n_pad, F_PAD), jnp.bfloat16),   # x_hat (bf16, padded)
        jax.ShapeDtypeStruct((n_pad, L_PAD), jnp.float32),    # mu (padded)
        jax.ShapeDtypeStruct((n_pad, L_PAD), jnp.float32),    # logvar (padded)
    )
    out_specs = (
        pl.BlockSpec((tm, F_PAD), lambda i: (i, 0)),
        pl.BlockSpec((tm, L_PAD), lambda i: (i, 0)),
        pl.BlockSpec((tm, L_PAD), lambda i: (i, 0)),
    )

    kernel = functools.partial(_vae_kernel,
                               sigmoid_in_bf16=cfg["bf16_sigmoid"])

    xhat_p, mu_p, logvar_p = pl.pallas_call(
        kernel,
        out_shape=out_shapes,
        grid_spec=pltpu.PrefetchScalarGridSpec(
            num_scalar_prefetch=0,
            grid=grid,
            in_specs=in_specs,
            out_specs=out_specs,
        ),
        compiler_params=pltpu.CompilerParams(
            dimension_semantics=("parallel",),
            vmem_limit_bytes=cfg["vmem_limit"],
        ),
    )(x_p, eps_p, *weights_bf16, bias_packed)

    x_hat = (xhat_p[:n, :INPUT_SIZE].astype(jnp.float32)
             .reshape(n, INPUT_C, INPUT_H, INPUT_W))
    mu = mu_p[:n, :LATENT_SIZE]
    logvar = logvar_p[:n, :LATENT_SIZE]
    return x_hat, mu, logvar


def vae_reference(x, params, eps):
    """Pure-JAX f32 reference (same math as the PyTorch module)."""
    n = x.shape[0]
    h = x.reshape(n, INPUT_SIZE).astype(jnp.float32)
    (w1, b1), (w2, b2), (w3, b3), (wmu, bmu), (wlv, blv), \
        (v1, c1), (v2, c2), (v3, c3), (v4, c4) = params
    h = jnp.maximum(h @ w1 + b1, 0.0)
    h = jnp.maximum(h @ w2 + b2, 0.0)
    h = jnp.maximum(h @ w3 + b3, 0.0)
    mu = h @ wmu + bmu
    logvar = h @ wlv + blv
    z = jnp.exp(0.5 * logvar) * eps + mu
    d = jnp.maximum(z @ v1 + c1, 0.0)
    d = jnp.maximum(d @ v2 + c2, 0.0)
    d = jnp.maximum(d @ v3 + c3, 0.0)
    x_hat = jax.nn.sigmoid(d @ v4 + c4)
    return x_hat.reshape(n, INPUT_C, INPUT_H, INPUT_W), mu, logvar


if __name__ == "__main__":
    key = jax.random.PRNGKey(0)
    k_params, k_x, k_eps = jax.random.split(key, 3)

    N = 2
    params = init_vae_params(k_params)
    weights_bf16, bias_packed = pack_params(params)

    x = jax.random.uniform(k_x, (N, INPUT_C, INPUT_H, INPUT_W), jnp.float32)
    # torch.randn_like(mu) replaced by an explicit deterministic eps input.
    eps = jax.random.normal(k_eps, (N, LATENT_SIZE), jnp.float32)

    x_hat, mu, logvar = vae_forward(x, weights_bf16, bias_packed, eps)
    jax.block_until_ready((x_hat, mu, logvar))

    assert x_hat.shape == (N, INPUT_C, INPUT_H, INPUT_W)
    assert mu.shape == (N, LATENT_SIZE)
    assert logvar.shape == (N, LATENT_SIZE)
    assert bool(jnp.all(jnp.isfinite(x_hat)))
    assert bool(jnp.all((x_hat >= 0.0) & (x_hat <= 1.0)))   # sigmoid range

    # Loose check vs f32 reference (bf16 matmuls/sigmoid add small rounding).
    xr, mr, lr = vae_reference(x, params, eps)
    assert float(jnp.max(jnp.abs(x_hat - xr))) < 0.1
    assert float(jnp.max(jnp.abs(mu - mr))) < 0.1
    assert float(jnp.max(jnp.abs(logvar - lr))) < 0.1

    print("KERNEL_OK")
</pallas_src>

<mosaic_0001>
module attributes {stable_mosaic.version = 11 : i64} {
  func.func @_vae_kernel(%arg0: i32, %arg1: memref<16x2432xbf16, #tpu.memory_space<vmem>>, %arg2: memref<16x128xf32, #tpu.memory_space<vmem>>, %arg3: memref<2432x512xbf16, #tpu.memory_space<vmem>>, %arg4: memref<512x512xbf16, #tpu.memory_space<vmem>>, %arg5: memref<512x512xbf16, #tpu.memory_space<vmem>>, %arg6: memref<512x256xbf16, #tpu.memory_space<vmem>>, %arg7: memref<128x512xbf16, #tpu.memory_space<vmem>>, %arg8: memref<512x512xbf16, #tpu.memory_space<vmem>>, %arg9: memref<512x512xbf16, #tpu.memory_space<vmem>>, %arg10: memref<512x2432xbf16, #tpu.memory_space<vmem>>, %arg11: memref<1x5760xf32, #tpu.memory_space<vmem>>, %arg12: memref<16x2432xbf16, #tpu.memory_space<vmem>>, %arg13: memref<16x128xf32, #tpu.memory_space<vmem>>, %arg14: memref<16x128xf32, #tpu.memory_space<vmem>>) attributes {dimension_semantics = [#tpu.dimension_semantics<parallel>], iteration_bounds = array<i64: 1>, scalar_prefetch = 0 : i64, scratch_operands = 0 : i64, tpu.core_type = #tpu.core_type<tc>, window_params = [{transform_indices = @transform_0, window_bounds = array<i64: 16, 2432>}, {transform_indices = @transform_1, window_bounds = array<i64: 16, 128>}, {pipeline_mode = #tpu.pipeline_mode<synchronous>, transform_indices = @transform_2, window_bounds = array<i64: 2432, 512>}, {pipeline_mode = #tpu.pipeline_mode<synchronous>, transform_indices = @transform_3, window_bounds = array<i64: 512, 512>}, {pipeline_mode = #tpu.pipeline_mode<synchronous>, transform_indices = @transform_4, window_bounds = array<i64: 512, 512>}, {pipeline_mode = #tpu.pipeline_mode<synchronous>, transform_indices = @transform_5, window_bounds = array<i64: 512, 256>}, {pipeline_mode = #tpu.pipeline_mode<synchronous>, transform_indices = @transform_6, window_bounds = array<i64: 128, 512>}, {pipeline_mode = #tpu.pipeline_mode<synchronous>, transform_indices = @transform_7, window_bounds = array<i64: 512, 512>}, {pipeline_mode = #tpu.pipeline_mode<synchronous>, transform_indices = @transform_8, window_bounds = array<i64: 512, 512>}, {pipeline_mode = #tpu.pipeline_mode<synchronous>, transform_indices = @transform_9, window_bounds = array<i64: 512, 2432>}, {pipeline_mode = #tpu.pipeline_mode<synchronous>, transform_indices = @transform_10, window_bounds = array<i64: 1, 5760>}, {transform_indices = @transform_11, window_bounds = array<i64: 16, 2432>}, {transform_indices = @transform_12, window_bounds = array<i64: 16, 128>}, {transform_indices = @transform_13, window_bounds = array<i64: 16, 128>}]} {
    %c0 = arith.constant 0 : index
    %c0_0 = arith.constant 0 : index
    %0 = vector.load %arg1[%c0, %c0_0] : memref<16x2432xbf16, #tpu.memory_space<vmem>>, vector<16x2432xbf16>
    %c0_1 = arith.constant 0 : index
    %c0_2 = arith.constant 0 : index
    %1 = vector.load %arg3[%c0_1, %c0_2] : memref<2432x512xbf16, #tpu.memory_space<vmem>>, vector<2432x512xbf16>
    %cst = arith.constant dense<0.000000e+00> : vector<16x512xf32>
    %2 = tpu.matmul %0, %1, %cst {dimension_numbers = #tpu.dot_dimension_numbers<[1], [0], [0], [1], [0, 0, 1, 1], [], []>} : vector<16x2432xbf16>, vector<2432x512xbf16>, vector<16x512xf32> -> vector<16x512xf32>
    %c0_3 = arith.constant 0 : index
    %c0_4 = arith.constant 0 : index
    %3 = vector.load %arg11[%c0_3, %c0_4] : memref<1x5760xf32, #tpu.memory_space<vmem>>, vector<1x512xf32>
    %4 = vector.broadcast %3 : vector<1x512xf32> to vector<16x512xf32>
    %5 = arith.addf %2, %4 : vector<16x512xf32>
    %cst_5 = arith.constant 0.000000e+00 : f32
    %6 = vector.broadcast %cst_5 : f32 to vector<16x512xf32>
    %7 = arith.maximumf %5, %6 : vector<16x512xf32>
    %8 = arith.truncf %7 : vector<16x512xf32> to vector<16x512xbf16>
    %c0_6 = arith.constant 0 : index
    %c0_7 = arith.constant 0 : index
    %9 = vector.load %arg4[%c0_6, %c0_7] : memref<512x512xbf16, #tpu.memory_space<vmem>>, vector<512x512xbf16>
    %cst_8 = arith.constant dense<0.000000e+00> : vector<16x512xf32>
    %10 = tpu.matmul %8, %9, %cst_8 {dimension_numbers = #tpu.dot_dimension_numbers<[1], [0], [0], [1], [0, 0, 1, 1], [], []>} : vector<16x512xbf16>, vector<512x512xbf16>, vector<16x512xf32> -> vector<16x512xf32>
    %c0_9 = arith.constant 0 : index
    %c512 = arith.constant 512 : index
    %11 = vector.load %arg11[%c0_9, %c512] : memref<1x5760xf32, #tpu.memory_space<vmem>>, vector<1x512xf32>
    %12 = vector.broadcast %11 : vector<1x512xf32> to vector<16x512xf32>
    %13 = arith.addf %10, %12 : vector<16x512xf32>
    %cst_10 = arith.constant 0.000000e+00 : f32
    %14 = vector.broadcast %cst_10 : f32 to vector<16x512xf32>
    %15 = arith.maximumf %13, %14 : vector<16x512xf32>
    %16 = arith.truncf %15 : vector<16x512xf32> to vector<16x512xbf16>
    %c0_11 = arith.constant 0 : index
    %c0_12 = arith.constant 0 : index
    %17 = vector.load %arg5[%c0_11, %c0_12] : memref<512x512xbf16, #tpu.memory_space<vmem>>, vector<512x512xbf16>
    %cst_13 = arith.constant dense<0.000000e+00> : vector<16x512xf32>
    %18 = tpu.matmul %16, %17, %cst_13 {dimension_numbers = #tpu.dot_dimension_numbers<[1], [0], [0], [1], [0, 0, 1, 1], [], []>} : vector<16x512xbf16>, vector<512x512xbf16>, vector<16x512xf32> -> vector<16x512xf32>
    %c0_14 = arith.constant 0 : index
    %c1024 = arith.constant 1024 : index
    %19 = vector.load %arg11[%c0_14, %c1024] : memref<1x5760xf32, #tpu.memory_space<vmem>>, vector<1x512xf32>
    %20 = vector.broadcast %19 : vector<1x512xf32> to vector<16x512xf32>
    %21 = arith.addf %18, %20 : vector<16x512xf32>
    %cst_15 = arith.constant 0.000000e+00 : f32
    %22 = vector.broadcast %cst_15 : f32 to vector<16x512xf32>
    %23 = arith.maximumf %21, %22 : vector<16x512xf32>
    %24 = arith.truncf %23 : vector<16x512xf32> to vector<16x512xbf16>
    %c0_16 = arith.constant 0 : index
    %c0_17 = arith.constant 0 : index
    %25 = vector.load %arg6[%c0_16, %c0_17] : memref<512x256xbf16, #tpu.memory_space<vmem>>, vector<512x256xbf16>
    %cst_18 = arith.constant dense<0.000000e+00> : vector<16x256xf32>
    %26 = tpu.matmul %24, %25, %cst_18 {dimension_numbers = #tpu.dot_dimension_numbers<[1], [0], [0], [1], [0, 0, 1, 1], [], []>} : vector<16x512xbf16>, vector<512x256xbf16>, vector<16x256xf32> -> vector<16x256xf32>
    %c0_19 = arith.constant 0 : index
    %c1536 = arith.constant 1536 : index
    %27 = vector.load %arg11[%c0_19, %c1536] : memref<1x5760xf32, #tpu.memory_space<vmem>>, vector<1x256xf32>
    %28 = vector.broadcast %27 : vector<1x256xf32> to vector<16x256xf32>
    %29 = arith.addf %26, %28 : vector<16x256xf32>
    %30 = vector.extract_strided_slice %29 {offsets = [0, 0], sizes = [16, 128], strides = [1, 1]} : vector<16x256xf32> to vector<16x128xf32>
    %31 = vector.extract_strided_slice %29 {offsets = [0, 128], sizes = [16, 128], strides = [1, 1]} : vector<16x256xf32> to vector<16x128xf32>
    %c0_20 = arith.constant 0 : index
    %c0_21 = arith.constant 0 : index
    %32 = vector.load %arg13[%c0_20, %c0_21] : memref<16x128xf32, #tpu.memory_space<vmem>>, vector<16x128xf32>
    tpu.vector_store %arg13[%c0_20, %c0_21], %30 {strides = array<i32>} : memref<16x128xf32, #tpu.memory_space<vmem>>, vector<16x128xf32>,
    %c0_22 = arith.constant 0 : index
    %c0_23 = arith.constant 0 : index
    %33 = vector.load %arg14[%c0_22, %c0_23] : memref<16x128xf32, #tpu.memory_space<vmem>>, vector<16x128xf32>
    tpu.vector_store %arg14[%c0_22, %c0_23], %31 {strides = array<i32>} : memref<16x128xf32, #tpu.memory_space<vmem>>, vector<16x128xf32>,
    %cst_24 = arith.constant 5.000000e-01 : f32
    %34 = vector.broadcast %cst_24 : f32 to vector<16x128xf32>
    %35 = arith.mulf %34, %31 : vector<16x128xf32>
    %36 = math.exp %35 : vector<16x128xf32>
    %c0_25 = arith.constant 0 : index
    %c0_26 = arith.constant 0 : index
    %37 = vector.load %arg2[%c0_25, %c0_26] : memref<16x128xf32, #tpu.memory_space<vmem>>, vector<16x128xf32>
    %38 = arith.mulf %36, %37 : vector<16x128xf32>
    %39 = arith.addf %38, %30 : vector<16x128xf32>
    %40 = arith.truncf %39 : vector<16x128xf32> to vector<16x128xbf16>
    %c0_27 = arith.constant 0 : index
    %c0_28 = arith.constant 0 : index
    %41 = vector.load %arg7[%c0_27, %c0_28] : memref<128x512xbf16, #tpu.memory_space<vmem>>, vector<128x512xbf16>
    %cst_29 = arith.constant dense<0.000000e+00> : vector<16x512xf32>
    %42 = tpu.matmul %40, %41, %cst_29 {dimension_numbers = #tpu.dot_dimension_numbers<[1], [0], [0], [1], [0, 0, 1, 1], [], []>} : vector<16x128xbf16>, vector<128x512xbf16>, vector<16x512xf32> -> vector<16x512xf32>
    %c0_30 = arith.constant 0 : index
    %c1792 = arith.constant 1792 : index
    %43 = vector.load %arg11[%c0_30, %c1792] : memref<1x5760xf32, #tpu.memory_space<vmem>>, vector<1x512xf32>
    %44 = vector.broadcast %43 : vector<1x512xf32> to vector<16x512xf32>
    %45 = arith.addf %42, %44 : vector<16x512xf32>
    %cst_31 = arith.constant 0.000000e+00 : f32
    %46 = vector.broadcast %cst_31 : f32 to vector<16x512xf32>
    %47 = arith.maximumf %45, %46 : vector<16x512xf32>
    %48 = arith.truncf %47 : vector<16x512xf32> to vector<16x512xbf16>
    %c0_32 = arith.constant 0 : index
    %c0_33 = arith.constant 0 : index
    %49 = vector.load %arg8[%c0_32, %c0_33] : memref<512x512xbf16, #tpu.memory_space<vmem>>, vector<512x512xbf16>
    %cst_34 = arith.constant dense<0.000000e+00> : vector<16x512xf32>
    %50 = tpu.matmul %48, %49, %cst_34 {dimension_numbers = #tpu.dot_dimension_numbers<[1], [0], [0], [1], [0, 0, 1, 1], [], []>} : vector<16x512xbf16>, vector<512x512xbf16>, vector<16x512xf32> -> vector<16x512xf32>
    %c0_35 = arith.constant 0 : index
    %c2304 = arith.constant 2304 : index
    %51 = vector.load %arg11[%c0_35, %c2304] : memref<1x5760xf32, #tpu.memory_space<vmem>>, vector<1x512xf32>
    %52 = vector.broadcast %51 : vector<1x512xf32> to vector<16x512xf32>
    %53 = arith.addf %50, %52 : vector<16x512xf32>
    %cst_36 = arith.constant 0.000000e+00 : f32
    %54 = vector.broadcast %cst_36 : f32 to vector<16x512xf32>
    %55 = arith.maximumf %53, %54 : vector<16x512xf32>
    %56 = arith.truncf %55 : vector<16x512xf32> to vector<16x512xbf16>
    %c0_37 = arith.constant 0 : index
    %c0_38 = arith.constant 0 : index
    %57 = vector.load %arg9[%c0_37, %c0_38] : memref<512x512xbf16, #tpu.memory_space<vmem>>, vector<512x512xbf16>
    %cst_39 = arith.constant dense<0.000000e+00> : vector<16x512xf32>
    %58 = tpu.matmul %56, %57, %cst_39 {dimension_numbers = #tpu.dot_dimension_numbers<[1], [0], [0], [1], [0, 0, 1, 1], [], []>} : vector<16x512xbf16>, vector<512x512xbf16>, vector<16x512xf32> -> vector<16x512xf32>
    %c0_40 = arith.constant 0 : index
    %c2816 = arith.constant 2816 : index
    %59 = vector.load %arg11[%c0_40, %c2816] : memref<1x5760xf32, #tpu.memory_space<vmem>>, vector<1x512xf32>
    %60 = vector.broadcast %59 : vector<1x512xf32> to vector<16x512xf32>
    %61 = arith.addf %58, %60 : vector<16x512xf32>
    %cst_41 = arith.constant 0.000000e+00 : f32
    %62 = vector.broadcast %cst_41 : f32 to vector<16x512xf32>
    %63 = arith.maximumf %61, %62 : vector<16x512xf32>
    %64 = arith.truncf %63 : vector<16x512xf32> to vector<16x512xbf16>
    %c0_42 = arith.constant 0 : index
    %c0_43 = arith.constant 0 : index
    %65 = vector.load %arg10[%c0_42, %c0_43] : memref<512x2432xbf16, #tpu.memory_space<vmem>>, vector<512x2432xbf16>
    %cst_44 = arith.constant dense<0.000000e+00> : vector<16x2432xf32>
    %66 = tpu.matmul %64, %65, %cst_44 {dimension_numbers = #tpu.dot_dimension_numbers<[1], [0], [0], [1], [0, 0, 1, 1], [], []>} : vector<16x512xbf16>, vector<512x2432xbf16>, vector<16x2432xf32> -> vector<16x2432xf32>
    %c0_45 = arith.constant 0 : index
    %c3328 = arith.constant 3328 : index
    %67 = vector.load %arg11[%c0_45, %c3328] : memref<1x5760xf32, #tpu.memory_space<vmem>>, vector<1x2432xf32>
    %68 = vector.broadcast %67 : vector<1x2432xf32> to vector<16x2432xf32>
    %69 = arith.addf %66, %68 : vector<16x2432xf32>
    %70 = arith.negf %69 : vector<16x2432xf32>
    %71 = math.exp %70 : vector<16x2432xf32>
    %cst_46 = arith.constant 1.000000e+00 : f32
    %72 = vector.broadcast %cst_46 : f32 to vector<16x2432xf32>
    %73 = arith.addf %72, %71 : vector<16x2432xf32>
    %74 = arith.divf %72, %73 : vector<16x2432xf32>
    %75 = arith.truncf %74 : vector<16x2432xf32> to vector<16x2432xbf16>
    %c0_47 = arith.constant 0 : index
    %c0_48 = arith.constant 0 : index
    %76 = vector.load %arg12[%c0_47, %c0_48] : memref<16x2432xbf16, #tpu.memory_space<vmem>>, vector<16x2432xbf16>
    tpu.vector_store %arg12[%c0_47, %c0_48], %75 {strides = array<i32>} : memref<16x2432xbf16, #tpu.memory_space<vmem>>, vector<16x2432xbf16>,
    return
  }
  func.func @transform_0(%arg0: i32) -> (i32, i32) {
    %c0_i32 = arith.constant 0 : i32
    %c0_i32_0 = arith.constant 0 : i32
    return %arg0, %c0_i32 : i32, i32
  }
  func.func @transform_1(%arg0: i32) -> (i32, i32) {
    %c0_i32 = arith.constant 0 : i32
    %c0_i32_0 = arith.constant 0 : i32
    return %arg0, %c0_i32 : i32, i32
  }
  func.func @transform_2(%arg0: i32) -> (i32, i32) {
    %c0_i32 = arith.constant 0 : i32
    %c0_i32_0 = arith.constant 0 : i32
    %c0_i32_1 = arith.constant 0 : i32
    return %c0_i32, %c0_i32_0 : i32, i32
  }
  func.func @transform_3(%arg0: i32) -> (i32, i32) {
    %c0_i32 = arith.constant 0 : i32
    %c0_i32_0 = arith.constant 0 : i32
    %c0_i32_1 = arith.constant 0 : i32
    return %c0_i32, %c0_i32_0 : i32, i32
  }
  func.func @transform_4(%arg0: i32) -> (i32, i32) {
    %c0_i32 = arith.constant 0 : i32
    %c0_i32_0 = arith.constant 0 : i32
    %c0_i32_1 = arith.constant 0 : i32
    return %c0_i32, %c0_i32_0 : i32, i32
  }
  func.func @transform_5(%arg0: i32) -> (i32, i32) {
    %c0_i32 = arith.constant 0 : i32
    %c0_i32_0 = arith.constant 0 : i32
    %c0_i32_1 = arith.constant 0 : i32
    return %c0_i32, %c0_i32_0 : i32, i32
  }
  func.func @transform_6(%arg0: i32) -> (i32, i32) {
    %c0_i32 = arith.constant 0 : i32
    %c0_i32_0 = arith.constant 0 : i32
    %c0_i32_1 = arith.constant 0 : i32
    return %c0_i32, %c0_i32_0 : i32, i32
  }
  func.func @transform_7(%arg0: i32) -> (i32, i32) {
    %c0_i32 = arith.constant 0 : i32
    %c0_i32_0 = arith.constant 0 : i32
    %c0_i32_1 = arith.constant 0 : i32
    return %c0_i32, %c0_i32_0 : i32, i32
  }
  func.func @transform_8(%arg0: i32) -> (i32, i32) {
    %c0_i32 = arith.constant 0 : i32
    %c0_i32_0 = arith.constant 0 : i32
    %c0_i32_1 = arith.constant 0 : i32
    return %c0_i32, %c0_i32_0 : i32, i32
  }
  func.func @transform_9(%arg0: i32) -> (i32, i32) {
    %c0_i32 = arith.constant 0 : i32
    %c0_i32_0 = arith.constant 0 : i32
    %c0_i32_1 = arith.constant 0 : i32
    return %c0_i32, %c0_i32_0 : i32, i32
  }
  func.func @transform_10(%arg0: i32) -> (i32, i32) {
    %c0_i32 = arith.constant 0 : i32
    %c0_i32_0 = arith.constant 0 : i32
    %c0_i32_1 = arith.constant 0 : i32
    return %c0_i32, %c0_i32_0 : i32, i32
  }
  func.func @transform_11(%arg0: i32) -> (i32, i32) {
    %c0_i32 = arith.constant 0 : i32
    %c0_i32_0 = arith.constant 0 : i32
    return %arg0, %c0_i32 : i32, i32
  }
  func.func @transform_12(%arg0: i32) -> (i32, i32) {
    %c0_i32 = arith.constant 0 : i32
    %c0_i32_0 = arith.constant 0 : i32
    return %arg0, %c0_i32 : i32, i32
  }
  func.func @transform_13(%arg0: i32) -> (i32, i32) {
    %c0_i32 = arith.constant 0 : i32
    %c0_i32_0 = arith.constant 0 : i32
    return %arg0, %c0_i32 : i32, i32
  }
}

</mosaic_0001>

<llo_original>
// kernel: vae_forward.1
$region0: #{vae_forward.1}
  #allocation0 [shape = 'u32[]', space=smem, size = 0x4, offset = 0x4, fixed_abs, tag = 'smem constant byte address 0x4 - core index']
  #allocation1 [shape = 'u32[144,128]{1,0:T(1,128)}', space=vmem, size = 0x12000, scoped, tag = 'internal scratch']
  %s0 = inlined_call_operand.vmem [shape: bf16[16,2432], index: 0, kind: input, shape index: {}]
  %s1 = inlined_call_operand.vmem [shape: f32[16,128], index: 1, kind: input, shape index: {}]
  %s2 = inlined_call_operand.hbm [shape: bf16[2432,512], index: 2, kind: input, shape index: {}]
  %s3 = inlined_call_operand.hbm [shape: bf16[512,512], index: 3, kind: input, shape index: {}]
  %s4 = inlined_call_operand.hbm [shape: bf16[512,512], index: 4, kind: input, shape index: {}]
  %s5 = inlined_call_operand.hbm [shape: bf16[512,256], index: 5, kind: input, shape index: {}]
  %s6 = inlined_call_operand.hbm [shape: bf16[128,512], index: 6, kind: input, shape index: {}]
  %s7 = inlined_call_operand.hbm [shape: bf16[512,512], index: 7, kind: input, shape index: {}]
  %s8 = inlined_call_operand.hbm [shape: bf16[512,512], index: 8, kind: input, shape index: {}]
  %s9 = inlined_call_operand.hbm [shape: bf16[512,2432], index: 9, kind: input, shape index: {}]
  %s10 = inlined_call_operand.hbm [shape: f32[1,5760], index: 10, kind: input, shape index: {}]
  %s11 = inlined_call_operand.vmem [shape: bf16[16,2432], index: 11, kind: output, shape index: {0}]
  %s12 = inlined_call_operand.vmem [shape: f32[16,128], index: 12, kind: output, shape index: {1}]
  %s13 = inlined_call_operand.vmem [shape: f32[16,128], index: 13, kind: output, shape index: {2}]
  %14 = xla_tuple %s11, %s12, %s13
  %s15 = sld [smem:[#allocation0]]
  $region106: #{vae_forward.1} parent=0
    _
  %s17 = ssub.s32 1, %s15
  %s18 = scalar_select 0, %s17, %s15
  $region1: #{vae_forward.1} parent=0
    #allocation2 [shape = 'u8[2490368]{0}', space=vmem, size = 0x260000, scoped, tag = 'input window, operand 2, single buffered']
    #allocation3 [shape = 's32[1]{0}', space=sflag, size = 0x4, scoped, tag = 'scoped memory for vae_forward.1']
    #allocation4 [shape = 'u8[524288]{0}', space=vmem, size = 0x80000, scoped, tag = 'input window, operand 3, single buffered']
    #allocation5 [shape = 's32[1]{0}', space=sflag, size = 0x4, scoped, tag = 'scoped memory for vae_forward.1']
    #allocation6 [shape = 'u8[524288]{0}', space=vmem, size = 0x80000, scoped, tag = 'input window, operand 4, single buffered']
    #allocation7 [shape = 'u8[262144]{0}', space=vmem, size = 0x40000, scoped, tag = 'input window, operand 5, single buffered']
    #allocation8 [shape = 's32[1]{0}', space=sflag, size = 0x4, scoped, tag = 'scoped memory for vae_forward.1']
    #allocation9 [shape = 'u8[131072]{0}', space=vmem, size = 0x20000, scoped, tag = 'input window, operand 6, single buffered']
    #allocation10 [shape = 'u8[524288]{0}', space=vmem, size = 0x80000, scoped, tag = 'input window, operand 7, single buffered']
    #allocation11 [shape = 's32[1]{0}', space=sflag, size = 0x4, scoped, tag = 'scoped memory for vae_forward.1']
    #allocation12 [shape = 'u8[524288]{0}', space=vmem, size = 0x80000, scoped, tag = 'input window, operand 8, single buffered']
    #allocation13 [shape = 'u8[2490368]{0}', space=vmem, size = 0x260000, scoped, tag = 'input window, operand 9, single buffered']
    #allocation14 [shape = 's32[1]{0}', space=sflag, size = 0x4, scoped, tag = 'scoped memory for vae_forward.1']
    #allocation15 [shape = 'u8[23040]{0}', space=vmem, size = 0x5c00, scoped, tag = 'input window, operand 10, single buffered']
    %19 = vsyncpa [#allocation3], 0
    %20 = vsyncpa [#allocation5], 0
    %21 = vsyncpa [#allocation8], 0
    %22 = vsyncpa [#allocation11], 0
    %23 = vsyncpa [#allocation14], 0
    // Predicated region
    $region2: #{vae_forward.1} parent=1 // pred_check
      _
    $region3: #{vae_forward.1} parent=1 // pred_check_branch
      %25 = sbr.rel (0) target = $region5
    $region4: #{vae_forward.1} parent=1 // pred_region
      _
    $region5: #{vae_forward.1} parent=1 // pred_fallthru
      _
    // Predicated region
    $region6: #{vae_forward.1} parent=1 // pred_check
      _
    $region7: #{vae_forward.1} parent=1 // pred_check_branch
      %27 = sbr.rel (0) target = $region9
    $region8: #{vae_forward.1} parent=1 // pred_region
      _
    $region9: #{vae_forward.1} parent=1 // pred_fallthru
      _
    // Predicated region
    $region10: #{vae_forward.1} parent=1 // pred_check
      _
    $region11: #{vae_forward.1} parent=1 // pred_check_branch
      %29 = sbr.rel (0) target = $region13
    $region12: #{vae_forward.1} parent=1 // pred_region
      %s31 = ssub.s32 77824, 77824
      %32 = vsyncadd [#allocation3], %s31
      %s33 = sshll.u32 [#allocation2], 4
      %s34 = int_to_ptr.vmem [resolvable:$true] %s33
      %39 = dma.hbm_to_vmem [thread:$0]  %s2, 77824, %s34, [#allocation3], 256, 256, 16
    $region13: #{vae_forward.1} parent=1 // pred_fallthru
      _
    // Predicated region
    $region14: #{vae_forward.1} parent=1 // pred_check
      _
    $region15: #{vae_forward.1} parent=1 // pred_check_branch
      %41 = sbr.rel (0) target = $region17
    $region16: #{vae_forward.1} parent=1 // pred_region
      %s43 = ssub.s32 16384, 16384
      %44 = vsyncadd [#allocation5], %s43
      %s45 = sshll.u32 [#allocation4], 4
      %s46 = int_to_ptr.vmem [resolvable:$true] %s45
      %51 = dma.hbm_to_vmem [thread:$0]  %s3, 16384, %s46, [#allocation5], 256, 256, 16
    $region17: #{vae_forward.1} parent=1 // pred_fallthru
      _
    // Predicated region
    $region18: #{vae_forward.1} parent=1 // pred_check
      _
    $region19: #{vae_forward.1} parent=1 // pred_check_branch
      %53 = sbr.rel (0) target = $region21
    $region20: #{vae_forward.1} parent=1 // pred_region
      %s55 = ssub.s32 16384, 16384
      %56 = vsyncadd [#allocation5], %s55
      %s57 = sshll.u32 [#allocation6], 4
      %s58 = int_to_ptr.vmem [resolvable:$true] %s57
      %63 = dma.hbm_to_vmem [thread:$0]  %s4, 16384, %s58, [#allocation5], 256, 256, 16
    $region21: #{vae_forward.1} parent=1 // pred_fallthru
      _
    // Predicated region
    $region22: #{vae_forward.1} parent=1 // pred_check
      _
    $region23: #{vae_forward.1} parent=1 // pred_check_branch
      %65 = sbr.rel (0) target = $region25
    $region24: #{vae_forward.1} parent=1 // pred_region
      %s67 = ssub.s32 8192, 8192
      %68 = vsyncadd [#allocation8], %s67
      %s69 = sshll.u32 [#allocation7], 4
      %s70 = int_to_ptr.vmem [resolvable:$true] %s69
      %75 = dma.hbm_to_vmem [thread:$0]  %s5, 8192, %s70, [#allocation8], 128, 128, 8
    $region25: #{vae_forward.1} parent=1 // pred_fallthru
      _
    // Predicated region
    $region26: #{vae_forward.1} parent=1 // pred_check
      _
    $region27: #{vae_forward.1} parent=1 // pred_check_branch
      %77 = sbr.rel (0) target = $region29
    $region28: #{vae_forward.1} parent=1 // pred_region
      %s79 = ssub.s32 4096, 4096
      %80 = vsyncadd [#allocation8], %s79
      %s81 = sshll.u32 [#allocation9], 4
      %s82 = int_to_ptr.vmem [resolvable:$true] %s81
      %87 = dma.hbm_to_vmem [thread:$0]  %s6, 4096, %s82, [#allocation8], 256, 256, 16
    $region29: #{vae_forward.1} parent=1 // pred_fallthru
      _
    // Predicated region
    $region30: #{vae_forward.1} parent=1 // pred_check
      _
    $region31: #{vae_forward.1} parent=1 // pred_check_branch
      %89 = sbr.rel (0) target = $region33
    $region32: #{vae_forward.1} parent=1 // pred_region
      %s91 = ssub.s32 16384, 16384
      %92 = vsyncadd [#allocation11], %s91
      %s93 = sshll.u32 [#allocation10], 4
      %s94 = int_to_ptr.vmem [resolvable:$true] %s93
      %99 = dma.hbm_to_vmem [thread:$0]  %s7, 16384, %s94, [#allocation11], 256, 256, 16
    $region33: #{vae_forward.1} parent=1 // pred_fallthru
      _
    // Predicated region
    $region34: #{vae_forward.1} parent=1 // pred_check
      _
    $region35: #{vae_forward.1} parent=1 // pred_check_branch
      %101 = sbr.rel (0) target = $region37
    $region36: #{vae_forward.1} parent=1 // pred_region
      %s103 = ssub.s32 16384, 16384
      %104 = vsyncadd [#allocation11], %s103
      %s105 = sshll.u32 [#allocation12], 4
      %s106 = int_to_ptr.vmem [resolvable:$true] %s105
      %111 = dma.hbm_to_vmem [thread:$0]  %s8, 16384, %s106, [#allocation11], 256, 256, 16
    $region37: #{vae_forward.1} parent=1 // pred_fallthru
      _
    // Predicated region
    $region38: #{vae_forward.1} parent=1 // pred_check
      _
    $region39: #{vae_forward.1} parent=1 // pred_check_branch
      %113 = sbr.rel (0) target = $region41
    $region40: #{vae_forward.1} parent=1 // pred_region
      %s115 = ssub.s32 77824, 77824
      %116 = vsyncadd [#allocation14], %s115
      %s117 = sshll.u32 [#allocation13], 4
      %s118 = int_to_ptr.vmem [resolvable:$true] %s117
      %123 = dma.hbm_to_vmem [thread:$0]  %s9, 77824, %s118, [#allocation14], 1216, 1216, 76
    $region41: #{vae_forward.1} parent=1 // pred_fallthru
      _
    // Predicated region
    $region42: #{vae_forward.1} parent=1 // pred_check
      _
    $region43: #{vae_forward.1} parent=1 // pred_check_branch
      %125 = sbr.rel (0) target = $region45
    $region44: #{vae_forward.1} parent=1 // pred_region
      %s127 = ssub.s32 720, 720
      %128 = vsyncadd [#allocation14], %s127
      %s130 = sshll.u32 [#allocation15], 4
      %s131 = int_to_ptr.vmem [resolvable:$true] %s130
      %133 = dma.hbm_to_vmem [thread:$0]  %s10, 720, %s131, [#allocation14]
    $region45: #{vae_forward.1} parent=1 // pred_fallthru
      _
    // Predicated region
    $region46: #{vae_forward.1} parent=1 // pred_check
      _
    $region47: #{vae_forward.1} parent=1 // pred_check_branch
      %135 = sbr.rel (0) target = $region49
    $region48: #{vae_forward.1} parent=1 // pred_region
      %136 = dma.done [#allocation3], 77824
    $region49: #{vae_forward.1} parent=1 // pred_fallthru
      _
    // Predicated region
    $region50: #{vae_forward.1} parent=1 // pred_check
      _
    $region51: #{vae_forward.1} parent=1 // pred_check_branch
      %138 = sbr.rel (0) target = $region53
    $region52: #{vae_forward.1} parent=1 // pred_region
      %139 = dma.done [#allocation5], 16384
    $region53: #{vae_forward.1} parent=1 // pred_fallthru
      _
    // Predicated region
    $region54: #{vae_forward.1} parent=1 // pred_check
      _
    $region55: #{vae_forward.1} parent=1 // pred_check_branch
      %141 = sbr.rel (0) target = $region57
    $region56: #{vae_forward.1} parent=1 // pred_region
      %142 = dma.done [#allocation5], 16384
    $region57: #{vae_forward.1} parent=1 // pred_fallthru
      _
    // Predicated region
    $region58: #{vae_forward.1} parent=1 // pred_check
      _
    $region59: #{vae_forward.1} parent=1 // pred_check_branch
      %144 = sbr.rel (0) target = $region61
    $region60: #{vae_forward.1} parent=1 // pred_region
      %145 = dma.done [#allocation8], 8192
    $region61: #{vae_forward.1} parent=1 // pred_fallthru
      _
    // Predicated region
    $region62: #{vae_forward.1} parent=1 // pred_check
      _
    $region63: #{vae_forward.1} parent=1 // pred_check_branch
      %147 = sbr.rel (0) target = $region65
    $region64: #{vae_forward.1} parent=1 // pred_region
      %148 = dma.done [#allocation8], 4096
    $region65: #{vae_forward.1} parent=1 // pred_fallthru
      _
    // Predicated region
    $region66: #{vae_forward.1} parent=1 // pred_check
      _
    $region67: #{vae_forward.1} parent=1 // pred_check_branch
      %150 = sbr.rel (0) target = $region69
    $region68: #{vae_forward.1} parent=1 // pred_region
      %151 = dma.done [#allocation11], 16384
    $region69: #{vae_forward.1} parent=1 // pred_fallthru
      _
    // Predicated region
    $region70: #{vae_forward.1} parent=1 // pred_check
      _
    $region71: #{vae_forward.1} parent=1 // pred_check_branch
      %153 = sbr.rel (0) target = $region73
    $region72: #{vae_forward.1} parent=1 // pred_region
      %154 = dma.done [#allocation11], 16384
    $region73: #{vae_forward.1} parent=1 // pred_fallthru
      _
    // Predicated region
    $region74: #{vae_forward.1} parent=1 // pred_check
      _
    $region75: #{vae_forward.1} parent=1 // pred_check_branch
      %156 = sbr.rel (0) target = $region77
    $region76: #{vae_forward.1} parent=1 // pred_region
      %157 = dma.done [#allocation14], 77824
    $region77: #{vae_forward.1} parent=1 // pred_fallthru
      _
    // Predicated region
    $region78: #{vae_forward.1} parent=1 // pred_check
      _
    $region79: #{vae_forward.1} parent=1 // pred_check_branch
      %159 = sbr.rel (0) target = $region81
    $region80: #{vae_forward.1} parent=1 // pred_region
      %160 = dma.done [#allocation14], 720
    $region81: #{vae_forward.1} parent=1 // pred_fallthru
      _
    %v162 = vld [vmem:[%s0] sm:$0xff]
    %v163 = vld [vmem:[%s0 + $0x8] sm:$0xff]
    %v164 = vld [vmem:[%s0 + $0x10] sm:$0xff]
    %v165 = vld [vmem:[%s0 + $0x18] sm:$0xff]
    %v166 = vld [vmem:[%s0 + $0x20] sm:$0xff]
    %v167 = vld [vmem:[%s0 + $0x28] sm:$0xff]
    %v168 = vld [vmem:[%s0 + $0x30] sm:$0xff]
    %v169 = vld [vmem:[%s0 + $0x38] sm:$0xff]
    %v170 = vld [vmem:[%s0 + $0x40] sm:$0xff]
    %v171 = vld [vmem:[%s0 + $0x48] sm:$0xf]
    %v172 = vld [vmem:[%s0 + $0x4c] sm:$0xff]
    %v173 = vld [vmem:[%s0 + $0x54] sm:$0xff]
    %v174 = vld [vmem:[%s0 + $0x5c] sm:$0xff]
    %v175 = vld [vmem:[%s0 + $0x64] sm:$0xff]
    %v176 = vld [vmem:[%s0 + $0x6c] sm:$0xff]
    %v177 = vld [vmem:[%s0 + $0x74] sm:$0xff]
    %v178 = vld [vmem:[%s0 + $0x7c] sm:$0xff]
    %v179 = vld [vmem:[%s0 + $0x84] sm:$0xff]
    %v180 = vld [vmem:[%s0 + $0x8c] sm:$0xff]
    %v181 = vld [vmem:[%s0 + $0x94] sm:$0xf]
    %v182 = vld [vmem:[#allocation2] sm:$0xff]
    %v183 = vld [vmem:[#allocation2 + $0x8] sm:$0xff]
    %v184 = vld [vmem:[#allocation2 + $0x10] sm:$0xff]
    %v185 = vld [vmem:[#allocation2 + $0x18] sm:$0xff]
    %v186 = vld [vmem:[#allocation2 + $0x20] sm:$0xff]
    %v187 = vld [vmem:[#allocation2 + $0x28] sm:$0xff]
    %v188 = vld [vmem:[#allocation2 + $0x30] sm:$0xff]
    %v189 = vld [vmem:[#allocation2 + $0x38] sm:$0xff]
    %v190 = vld [vmem:[#allocation2 + $0x40] sm:$0xff]
    %v191 = vld [vmem:[#allocation2 + $0x48] sm:$0xff]
    %v192 = vld [vmem:[#allocation2 + $0x50] sm:$0xff]
    %v193 = vld [vmem:[#allocation2 + $0x58] sm:$0xff]
    %v194 = vld [vmem:[#allocation2 + $0x60] sm:$0xff]
    %v195 = vld [vmem:[#allocation2 + $0x68] sm:$0xff]
    %v196 = vld [vmem:[#allocation2 + $0x70] sm:$0xff]
    %v197 = vld [vmem:[#allocation2 + $0x78] sm:$0xff]
    %v198 = vld [vmem:[#allocation2 + $0x80] sm:$0xff]
    %v199 = vld [vmem:[#allocation2 + $0x88] sm:$0xff]
    %v200 = vld [vmem:[#allocation2 + $0x90] sm:$0xff]
    %v201 = vld [vmem:[#allocation2 + $0x98] sm:$0xff]
    %v202 = vld [vmem:[#allocation2 + $0xa0] sm:$0xff]
    %v203 = vld [vmem:[#allocation2 + $0xa8] sm:$0xff]
    %v204 = vld [vmem:[#allocation2 + $0xb0] sm:$0xff]
    %v205 = vld [vmem:[#allocation2 + $0xb8] sm:$0xff]
    %v206 = vld [vmem:[#allocation2 + $0xc0] sm:$0xff]
    %v207 = vld [vmem:[#allocation2 + $0xc8] sm:$0xff]
    %v208 = vld [vmem:[#allocation2 + $0xd0] sm:$0xff]
    %v209 = vld [vmem:[#allocation2 + $0xd8] sm:$0xff]
    %v210 = vld [vmem:[#allocation2 + $0xe0] sm:$0xff]
    %v211 = vld [vmem:[#allocation2 + $0xe8] sm:$0xff]
    %v212 = vld [vmem:[#allocation2 + $0xf0] sm:$0xff]
    %v213 = vld [vmem:[#allocation2 + $0xf8] sm:$0xff]
    %v214 = vld [vmem:[#allocation2 + $0x100] sm:$0xff]
    %v215 = vld [vmem:[#allocation2 + $0x108] sm:$0xff]
    %v216 = vld [vmem:[#allocation2 + $0x110] sm:$0xff]
    %v217 = vld [vmem:[#allocation2 + $0x118] sm:$0xff]
    %v218 = vld [vmem:[#allocation2 + $0x120] sm:$0xff]
    %v219 = vld [vmem:[#allocation2 + $0x128] sm:$0xff]
    %v220 = vld [vmem:[#allocation2 + $0x130] sm:$0xff]
    %v221 = vld [vmem:[#allocation2 + $0x138] sm:$0xff]
    %v222 = vld [vmem:[#allocation2 + $0x140] sm:$0xff]
    %v223 = vld [vmem:[#allocation2 + $0x148] sm:$0xff]
    %v224 = vld [vmem:[#allocation2 + $0x150] sm:$0xff]
    %v225 = vld [vmem:[#allocation2 + $0x158] sm:$0xff]
    %v226 = vld [vmem:[#allocation2 + $0x160] sm:$0xff]
    %v227 = vld [vmem:[#allocation2 + $0x168] sm:$0xff]
    %v228 = vld [vmem:[#allocation2 + $0x170] sm:$0xff]
    %v229 = vld [vmem:[#allocation2 + $0x178] sm:$0xff]
    %v230 = vld [vmem:[#allocation2 + $0x180] sm:$0xff]
    %v231 = vld [vmem:[#allocation2 + $0x188] sm:$0xff]
    %v232 = vld [vmem:[#allocation2 + $0x190] sm:$0xff]
    %v233 = vld [vmem:[#allocation2 + $0x198] sm:$0xff]
    %v234 = vld [vmem:[#allocation2 + $0x1a0] sm:$0xff]
    %v235 = vld [vmem:[#allocation2 + $0x1a8] sm:$0xff]
    %v236 = vld [vmem:[#allocation2 + $0x1b0] sm:$0xff]
    %v237 = vld [vmem:[#allocation2 + $0x1b8] sm:$0xff]
    %v238 = vld [vmem:[#allocation2 + $0x1c0] sm:$0xff]
    %v239 = vld [vmem:[#allocation2 + $0x1c8] sm:$0xff]
    %v240 = vld [vmem:[#allocation2 + $0x1d0] sm:$0xff]
    %v241 = vld [vmem:[#allocation2 + $0x1d8] sm:$0xff]
    %v242 = vld [vmem:[#allocation2 + $0x1e0] sm:$0xff]
    %v243 = vld [vmem:[#allocation2 + $0x1e8] sm:$0xff]
    %v244 = vld [vmem:[#allocation2 + $0x1f0] sm:$0xff]
    %v245 = vld [vmem:[#allocation2 + $0x1f8] sm:$0xff]
    %v246 = vld [vmem:[#allocation2 + $0x200] sm:$0xff]
    %v247 = vld [vmem:[#allocation2 + $0x208] sm:$0xff]
    %v248 = vld [vmem:[#allocation2 + $0x210] sm:$0xff]
    %v249 = vld [vmem:[#allocation2 + $0x218] sm:$0xff]
    %v250 = vld [vmem:[#allocation2 + $0x220] sm:$0xff]
    %v251 = vld [vmem:[#allocation2 + $0x228] sm:$0xff]
    %v252 = vld [vmem:[#allocation2 + $0x230] sm:$0xff]
    %v253 = vld [vmem:[#allocation2 + $0x238] sm:$0xff]
    %v254 = vld [vmem:[#allocation2 + $0x240] sm:$0xff]
    %v255 = vld [vmem:[#allocation2 + $0x248] sm:$0xff]
    %v256 = vld [vmem:[#allocation2 + $0x250] sm:$0xff]
    %v257 = vld [vmem:[#allocation2 + $0x258] sm:$0xff]
    %v258 = vld [vmem:[#allocation2 + $0x260] sm:$0xff]
    %v259 = vld [vmem:[#allocation2 + $0x268] sm:$0xff]
    %v260 = vld [vmem:[#allocation2 + $0x270] sm:$0xff]
    %v261 = vld [vmem:[#allocation2 + $0x278] sm:$0xff]
    %v262 = vld [vmem:[#allocation2 + $0x280] sm:$0xff]
    %v263 = vld [vmem:[#allocation2 + $0x288] sm:$0xff]
    %v264 = vld [vmem:[#allocation2 + $0x290] sm:$0xff]
    %v265 = vld [vmem:[#allocation2 + $0x298] sm:$0xff]
    %v266 = vld [vmem:[#allocation2 + $0x2a0] sm:$0xff]
    %v267 = vld [vmem:[#allocation2 + $0x2a8] sm:$0xff]
    %v268 = vld [vmem:[#allocation2 + $0x2b0] sm:$0xff]
    %v269 = vld [vmem:[#allocation2 + $0x2b8] sm:$0xff]
    %v270 = vld [vmem:[#allocation2 + $0x2c0] sm:$0xff]
    %v271 = vld [vmem:[#allocation2 + $0x2c8] sm:$0xff]
    %v272 = vld [vmem:[#allocation2 + $0x2d0] sm:$0xff]
    %v273 = vld [vmem:[#allocation2 + $0x2d8] sm:$0xff]
    %v274 = vld [vmem:[#allocation2 + $0x2e0] sm:$0xff]
    %v275 = vld [vmem:[#allocation2 + $0x2e8] sm:$0xff]
    %v276 = vld [vmem:[#allocation2 + $0x2f0] sm:$0xff]
    %v277 = vld [vmem:[#allocation2 + $0x2f8] sm:$0xff]
    %v278 = vld [vmem:[#allocation2 + $0x300] sm:$0xff]
    %v279 = vld [vmem:[#allocation2 + $0x308] sm:$0xff]
    %v280 = vld [vmem:[#allocation2 + $0x310] sm:$0xff]
    %v281 = vld [vmem:[#allocation2 + $0x318] sm:$0xff]
    %v282 = vld [vmem:[#allocation2 + $0x320] sm:$0xff]
    %v283 = vld [vmem:[#allocation2 + $0x328] sm:$0xff]
    %v284 = vld [vmem:[#allocation2 + $0x330] sm:$0xff]
    %v285 = vld [vmem:[#allocation2 + $0x338] sm:$0xff]
    %v286 = vld [vmem:[#allocation2 + $0x340] sm:$0xff]
    %v287 = vld [vmem:[#allocation2 + $0x348] sm:$0xff]
    %v288 = vld [vmem:[#allocation2 + $0x350] sm:$0xff]
    %v289 = vld [vmem:[#allocation2 + $0x358] sm:$0xff]
    %v290 = vld [vmem:[#allocation2 + $0x360] sm:$0xff]
    %v291 = vld [vmem:[#allocation2 + $0x368] sm:$0xff]
    %v292 = vld [vmem:[#allocation2 + $0x370] sm:$0xff]
    %v293 = vld [vmem:[#allocation2 + $0x378] sm:$0xff]
    %v294 = vld [vmem:[#allocation2 + $0x380] sm:$0xff]
    %v295 = vld [vmem:[#allocation2 + $0x388] sm:$0xff]
    %v296 = vld [vmem:[#allocation2 + $0x390] sm:$0xff]
    %v297 = vld [vmem:[#allocation2 + $0x398] sm:$0xff]
    %v298 = vld [vmem:[#allocation2 + $0x3a0] sm:$0xff]
    %v299 = vld [vmem:[#allocation2 + $0x3a8] sm:$0xff]
    %v300 = vld [vmem:[#allocation2 + $0x3b0] sm:$0xff]
    %v301 = vld [vmem:[#allocation2 + $0x3b8] sm:$0xff]
    %v302 = vld [vmem:[#allocation2 + $0x3c0] sm:$0xff]
    %v303 = vld [vmem:[#allocation2 + $0x3c8] sm:$0xff]
    %v304 = vld [vmem:[#allocation2 + $0x3d0] sm:$0xff]
    %v305 = vld [vmem:[#allocation2 + $0x3d8] sm:$0xff]
    %v306 = vld [vmem:[#allocation2 + $0x3e0] sm:$0xff]
    %v307 = vld [vmem:[#allocation2 + $0x3e8] sm:$0xff]
    %v308 = vld [vmem:[#allocation2 + $0x3f0] sm:$0xff]
    %v309 = vld [vmem:[#allocation2 + $0x3f8] sm:$0xff]
    %v310 = vld [vmem:[#allocation2 + $0x400] sm:$0xff]
    %v311 = vld [vmem:[#allocation2 + $0x408] sm:$0xff]
    %v312 = vld [vmem:[#allocation2 + $0x410] sm:$0xff]
    %v313 = vld [vmem:[#allocation2 + $0x418] sm:$0xff]
    %v314 = vld [vmem:[#allocation2 + $0x420] sm:$0xff]
    %v315 = vld [vmem:[#allocation2 + $0x428] sm:$0xff]
    %v316 = vld [vmem:[#allocation2 + $0x430] sm:$0xff]
    %v317 = vld [vmem:[#allocation2 + $0x438] sm:$0xff]
    %v318 = vld [vmem:[#allocation2 + $0x440] sm:$0xff]
    %v319 = vld [vmem:[#allocation2 + $0x448] sm:$0xff]
    %v320 = vld [vmem:[#allocation2 + $0x450] sm:$0xff]
    %v321 = vld [vmem:[#allocation2 + $0x458] sm:$0xff]
    %v322 = vld [vmem:[#allocation2 + $0x460] sm:$0xff]
    %v323 = vld [vmem:[#allocation2 + $0x468] sm:$0xff]
    %v324 = vld [vmem:[#allocation2 + $0x470] sm:$0xff]
    %v325 = vld [vmem:[#allocation2 + $0x478] sm:$0xff]
    %v326 = vld [vmem:[#allocation2 + $0x480] sm:$0xff]
    %v327 = vld [vmem:[#allocation2 + $0x488] sm:$0xff]
    %v328 = vld [vmem:[#allocation2 + $0x490] sm:$0xff]
    %v329 = vld [vmem:[#allocation2 + $0x498] sm:$0xff]
    %v330 = vld [vmem:[#allocation2 + $0x4a0] sm:$0xff]
    %v331 = vld [vmem:[#allocation2 + $0x4a8] sm:$0xff]
    %v332 = vld [vmem:[#allocation2 + $0x4b0] sm:$0xff]
    %v333 = vld [vmem:[#allocation2 + $0x4b8] sm:$0xff]
    %v334 = vld [vmem:[#allocation2 + $0x4c0] sm:$0xff]
    %v335 = vld [vmem:[#allocation2 + $0x4c8] sm:$0xff]
    %v336 = vld [vmem:[#allocation2 + $0x4d0] sm:$0xff]
    %v337 = vld [vmem:[#allocation2 + $0x4d8] sm:$0xff]
    %v338 = vld [vmem:[#allocation2 + $0x4e0] sm:$0xff]
    %v339 = vld [vmem:[#allocation2 + $0x4e8] sm:$0xff]
    %v340 = vld [vmem:[#allocation2 + $0x4f0] sm:$0xff]
    %v341 = vld [vmem:[#allocation2 + $0x4f8] sm:$0xff]
    %v342 = vld [vmem:[#allocation2 + $0x500] sm:$0xff]
    %v343 = vld [vmem:[#allocation2 + $0x508] sm:$0xff]
    %v344 = vld [vmem:[#allocation2 + $0x510] sm:$0xff]
    %v345 = vld [vmem:[#allocation2 + $0x518] sm:$0xff]
    %v346 = vld [vmem:[#allocation2 + $0x520] sm:$0xff]
    %v347 = vld [vmem:[#allocation2 + $0x528] sm:$0xff]
    %v348 = vld [vmem:[#allocation2 + $0x530] sm:$0xff]
    %v349 = vld [vmem:[#allocation2 + $0x538] sm:$0xff]
    %v350 = vld [vmem:[#allocation2 + $0x540] sm:$0xff]
    %v351 = vld [vmem:[#allocation2 + $0x548] sm:$0xff]
    %v352 = vld [vmem:[#allocation2 + $0x550] sm:$0xff]
    %v353 = vld [vmem:[#allocation2 + $0x558] sm:$0xff]
    %v354 = vld [vmem:[#allocation2 + $0x560] sm:$0xff]
    %v355 = vld [vmem:[#allocation2 + $0x568] sm:$0xff]
    %v356 = vld [vmem:[#allocation2 + $0x570] sm:$0xff]
    %v357 = vld [vmem:[#allocation2 + $0x578] sm:$0xff]
    %v358 = vld [vmem:[#allocation2 + $0x580] sm:$0xff]
    %v359 = vld [vmem:[#allocation2 + $0x588] sm:$0xff]
    %v360 = vld [vmem:[#allocation2 + $0x590] sm:$0xff]
    %v361 = vld [vmem:[#allocation2 + $0x598] sm:$0xff]
    %v362 = vld [vmem:[#allocation2 + $0x5a0] sm:$0xff]
    %v363 = vld [vmem:[#allocation2 + $0x5a8] sm:$0xff]
    %v364 = vld [vmem:[#allocation2 + $0x5b0] sm:$0xff]
    %v365 = vld [vmem:[#allocation2 + $0x5b8] sm:$0xff]
    %v366 = vld [vmem:[#allocation2 + $0x5c0] sm:$0xff]
    %v367 = vld [vmem:[#allocation2 + $0x5c8] sm:$0xff]
    %v368 = vld [vmem:[#allocation2 + $0x5d0] sm:$0xff]
    %v369 = vld [vmem:[#allocation2 + $0x5d8] sm:$0xff]
    %v370 = vld [vmem:[#allocation2 + $0x5e0] sm:$0xff]
    %v371 = vld [vmem:[#allocation2 + $0x5e8] sm:$0xff]
    %v372 = vld [vmem:[#allocation2 + $0x5f0] sm:$0xff]
    %v373 = vld [vmem:[#allocation2 + $0x5f8] sm:$0xff]
    %v374 = vld [vmem:[#allocation2 + $0x600] sm:$0xff]
    %v375 = vld [vmem:[#allocation2 + $0x608] sm:$0xff]
    %v376 = vld [vmem:[#allocation2 + $0x610] sm:$0xff]
    %v377 = vld [vmem:[#allocation2 + $0x618] sm:$0xff]
    %v378 = vld [vmem:[#allocation2 + $0x620] sm:$0xff]
    %v379 = vld [vmem:[#allocation2 + $0x628] sm:$0xff]
    %v380 = vld [vmem:[#allocation2 + $0x630] sm:$0xff]
    %v381 = vld [vmem:[#allocation2 + $0x638] sm:$0xff]
    %v382 = vld [vmem:[#allocation2 + $0x640] sm:$0xff]
    %v383 = vld [vmem:[#allocation2 + $0x648] sm:$0xff]
    %v384 = vld [vmem:[#allocation2 + $0x650] sm:$0xff]
    %v385 = vld [vmem:[#allocation2 + $0x658] sm:$0xff]
    %v386 = vld [vmem:[#allocation2 + $0x660] sm:$0xff]
    %v387 = vld [vmem:[#allocation2 + $0x668] sm:$0xff]
    %v388 = vld [vmem:[#allocation2 + $0x670] sm:$0xff]
    %v389 = vld [vmem:[#allocation2 + $0x678] sm:$0xff]
    %v390 = vld [vmem:[#allocation2 + $0x680] sm:$0xff]
    %v391 = vld [vmem:[#allocation2 + $0x688] sm:$0xff]
    %v392 = vld [vmem:[#allocation2 + $0x690] sm:$0xff]
    %v393 = vld [vmem:[#allocation2 + $0x698] sm:$0xff]
    %v394 = vld [vmem:[#allocation2 + $0x6a0] sm:$0xff]
    %v395 = vld [vmem:[#allocation2 + $0x6a8] sm:$0xff]
    %v396 = vld [vmem:[#allocation2 + $0x6b0] sm:$0xff]
    %v397 = vld [vmem:[#allocation2 + $0x6b8] sm:$0xff]
    %v398 = vld [vmem:[#allocation2 + $0x6c0] sm:$0xff]
    %v399 = vld [vmem:[#allocation2 + $0x6c8] sm:$0xff]
    %v400 = vld [vmem:[#allocation2 + $0x6d0] sm:$0xff]
    %v401 = vld [vmem:[#allocation2 + $0x6d8] sm:$0xff]
    %v402 = vld [vmem:[#allocation2 + $0x6e0] sm:$0xff]
    %v403 = vld [vmem:[#allocation2 + $0x6e8] sm:$0xff]
    %v404 = vld [vmem:[#allocation2 + $0x6f0] sm:$0xff]
    %v405 = vld [vmem:[#allocation2 + $0x6f8] sm:$0xff]
    %v406 = vld [vmem:[#allocation2 + $0x700] sm:$0xff]
    %v407 = vld [vmem:[#allocation2 + $0x708] sm:$0xff]
    %v408 = vld [vmem:[#allocation2 + $0x710] sm:$0xff]
    %v409 = vld [vmem:[#allocation2 + $0x718] sm:$0xff]
    %v410 = vld [vmem:[#allocation2 + $0x720] sm:$0xff]
    %v411 = vld [vmem:[#allocation2 + $0x728] sm:$0xff]
    %v412 = vld [vmem:[#allocation2 + $0x730] sm:$0xff]
    %v413 = vld [vmem:[#allocation2 + $0x738] sm:$0xff]
    %v414 = vld [vmem:[#allocation2 + $0x740] sm:$0xff]
    %v415 = vld [vmem:[#allocation2 + $0x748] sm:$0xff]
    %v416 = vld [vmem:[#allocation2 + $0x750] sm:$0xff]
    %v417 = vld [vmem:[#allocation2 + $0x758] sm:$0xff]
    %v418 = vld [vmem:[#allocation2 + $0x760] sm:$0xff]
    %v419 = vld [vmem:[#allocation2 + $0x768] sm:$0xff]
    %v420 = vld [vmem:[#allocation2 + $0x770] sm:$0xff]
    %v421 = vld [vmem:[#allocation2 + $0x778] sm:$0xff]
    %v422 = vld [vmem:[#allocation2 + $0x780] sm:$0xff]
    %v423 = vld [vmem:[#allocation2 + $0x788] sm:$0xff]
    %v424 = vld [vmem:[#allocation2 + $0x790] sm:$0xff]
    %v425 = vld [vmem:[#allocation2 + $0x798] sm:$0xff]
    %v426 = vld [vmem:[#allocation2 + $0x7a0] sm:$0xff]
    %v427 = vld [vmem:[#allocation2 + $0x7a8] sm:$0xff]
    %v428 = vld [vmem:[#allocation2 + $0x7b0] sm:$0xff]
    %v429 = vld [vmem:[#allocation2 + $0x7b8] sm:$0xff]
    %v430 = vld [vmem:[#allocation2 + $0x7c0] sm:$0xff]
    %v431 = vld [vmem:[#allocation2 + $0x7c8] sm:$0xff]
    %v432 = vld [vmem:[#allocation2 + $0x7d0] sm:$0xff]
    %v433 = vld [vmem:[#allocation2 + $0x7d8] sm:$0xff]
    %v434 = vld [vmem:[#allocation2 + $0x7e0] sm:$0xff]
    %v435 = vld [vmem:[#allocation2 + $0x7e8] sm:$0xff]
    %v436 = vld [vmem:[#allocation2 + $0x7f0] sm:$0xff]
    %v437 = vld [vmem:[#allocation2 + $0x7f8] sm:$0xff]
    %v438 = vld [vmem:[#allocation2 + $0x800] sm:$0xff]
    %v439 = vld [vmem:[#allocation2 + $0x808] sm:$0xff]
    %v440 = vld [vmem:[#allocation2 + $0x810] sm:$0xff]
    %v441 = vld [vmem:[#allocation2 + $0x818] sm:$0xff]
    %v442 = vld [vmem:[#allocation2 + $0x820] sm:$0xff]
    %v443 = vld [vmem:[#allocation2 + $0x828] sm:$0xff]
    %v444 = vld [vmem:[#allocation2 + $0x830] sm:$0xff]
    %v445 = vld [vmem:[#allocation2 + $0x838] sm:$0xff]
    %v446 = vld [vmem:[#allocation2 + $0x840] sm:$0xff]
    %v447 = vld [vmem:[#allocation2 + $0x848] sm:$0xff]
    %v448 = vld [vmem:[#allocation2 + $0x850] sm:$0xff]
    %v449 = vld [vmem:[#allocation2 + $0x858] sm:$0xff]
    %v450 = vld [vmem:[#allocation2 + $0x860] sm:$0xff]
    %v451 = vld [vmem:[#allocation2 + $0x868] sm:$0xff]
    %v452 = vld [vmem:[#allocation2 + $0x870] sm:$0xff]
    %v453 = vld [vmem:[#allocation2 + $0x878] sm:$0xff]
    %v454 = vld [vmem:[#allocation2 + $0x880] sm:$0xff]
    %v455 = vld [vmem:[#allocation2 + $0x888] sm:$0xff]
    %v456 = vld [vmem:[#allocation2 + $0x890] sm:$0xff]
    %v457 = vld [vmem:[#allocation2 + $0x898] sm:$0xff]
    %v458 = vld [vmem:[#allocation2 + $0x8a0] sm:$0xff]
    %v459 = vld [vmem:[#allocation2 + $0x8a8] sm:$0xff]
    %v460 = vld [vmem:[#allocation2 + $0x8b0] sm:$0xff]
    %v461 = vld [vmem:[#allocation2 + $0x8b8] sm:$0xff]
    %v462 = vld [vmem:[#allocation2 + $0x8c0] sm:$0xff]
    %v463 = vld [vmem:[#allocation2 + $0x8c8] sm:$0xff]
    %v464 = vld [vmem:[#allocation2 + $0x8d0] sm:$0xff]
    %v465 = vld [vmem:[#allocation2 + $0x8d8] sm:$0xff]
    %v466 = vld [vmem:[#allocation2 + $0x8e0] sm:$0xff]
    %v467 = vld [vmem:[#allocation2 + $0x8e8] sm:$0xff]
    %v468 = vld [vmem:[#allocation2 + $0x8f0] sm:$0xff]
    %v469 = vld [vmem:[#allocation2 + $0x8f8] sm:$0xff]
    %v470 = vld [vmem:[#allocation2 + $0x900] sm:$0xff]
    %v471 = vld [vmem:[#allocation2 + $0x908] sm:$0xff]
    %v472 = vld [vmem:[#allocation2 + $0x910] sm:$0xff]
    %v473 = vld [vmem:[#allocation2 + $0x918] sm:$0xff]
    %v474 = vld [vmem:[#allocation2 + $0x920] sm:$0xff]
    %v475 = vld [vmem:[#allocation2 + $0x928] sm:$0xff]
    %v476 = vld [vmem:[#allocation2 + $0x930] sm:$0xff]
    %v477 = vld [vmem:[#allocation2 + $0x938] sm:$0xff]
    %v478 = vld [vmem:[#allocation2 + $0x940] sm:$0xff]
    %v479 = vld [vmem:[#allocation2 + $0x948] sm:$0xff]
    %v480 = vld [vmem:[#allocation2 + $0x950] sm:$0xff]
    %v481 = vld [vmem:[#allocation2 + $0x958] sm:$0xff]
    %v482 = vld [vmem:[#allocation2 + $0x960] sm:$0xff]
    %v483 = vld [vmem:[#allocation2 + $0x968] sm:$0xff]
    %v484 = vld [vmem:[#allocation2 + $0x970] sm:$0xff]
    %v485 = vld [vmem:[#allocation2 + $0x978] sm:$0xff]
    %v486 = vld [vmem:[#allocation2 + $0x980] sm:$0xff]
    %v487 = vld [vmem:[#allocation2 + $0x988] sm:$0xff]
    %v488 = vld [vmem:[#allocation2 + $0x990] sm:$0xff]
    %v489 = vld [vmem:[#allocation2 + $0x998] sm:$0xff]
    %v490 = vld [vmem:[#allocation2 + $0x9a0] sm:$0xff]
    %v491 = vld [vmem:[#allocation2 + $0x9a8] sm:$0xff]
    %v492 = vld [vmem:[#allocation2 + $0x9b0] sm:$0xff]
    %v493 = vld [vmem:[#allocation2 + $0x9b8] sm:$0xff]
    %v494 = vld [vmem:[#allocation2 + $0x9c0] sm:$0xff]
    %v495 = vld [vmem:[#allocation2 + $0x9c8] sm:$0xff]
    %v496 = vld [vmem:[#allocation2 + $0x9d0] sm:$0xff]
    %v497 = vld [vmem:[#allocation2 + $0x9d8] sm:$0xff]
    %v498 = vld [vmem:[#allocation2 + $0x9e0] sm:$0xff]
    %v499 = vld [vmem:[#allocation2 + $0x9e8] sm:$0xff]
    %v500 = vld [vmem:[#allocation2 + $0x9f0] sm:$0xff]
    %v501 = vld [vmem:[#allocation2 + $0x9f8] sm:$0xff]
    %v502 = vld [vmem:[#allocation2 + $0xa00] sm:$0xff]
    %v503 = vld [vmem:[#allocation2 + $0xa08] sm:$0xff]
    %v504 = vld [vmem:[#allocation2 + $0xa10] sm:$0xff]
    %v505 = vld [vmem:[#allocation2 + $0xa18] sm:$0xff]
    %v506 = vld [vmem:[#allocation2 + $0xa20] sm:$0xff]
    %v507 = vld [vmem:[#allocation2 + $0xa28] sm:$0xff]
    %v508 = vld [vmem:[#allocation2 + $0xa30] sm:$0xff]
    %v509 = vld [vmem:[#allocation2 + $0xa38] sm:$0xff]
    %v510 = vld [vmem:[#allocation2 + $0xa40] sm:$0xff]
    %v511 = vld [vmem:[#allocation2 + $0xa48] sm:$0xff]
    %v512 = vld [vmem:[#allocation2 + $0xa50] sm:$0xff]
    %v513 = vld [vmem:[#allocation2 + $0xa58] sm:$0xff]
    %v514 = vld [vmem:[#allocation2 + $0xa60] sm:$0xff]
    %v515 = vld [vmem:[#allocation2 + $0xa68] sm:$0xff]
    %v516 = vld [vmem:[#allocation2 + $0xa70] sm:$0xff]
    %v517 = vld [vmem:[#allocation2 + $0xa78] sm:$0xff]
    %v518 = vld [vmem:[#allocation2 + $0xa80] sm:$0xff]
    %v519 = vld [vmem:[#allocation2 + $0xa88] sm:$0xff]
    %v520 = vld [vmem:[#allocation2 + $0xa90] sm:$0xff]
    %v521 = vld [vmem:[#allocation2 + $0xa98] sm:$0xff]
    %v522 = vld [vmem:[#allocation2 + $0xaa0] sm:$0xff]
    %v523 = vld [vmem:[#allocation2 + $0xaa8] sm:$0xff]
    %v524 = vld [vmem:[#allocation2 + $0xab0] sm:$0xff]
    %v525 = vld [vmem:[#allocation2 + $0xab8] sm:$0xff]
    %v526 = vld [vmem:[#allocation2 + $0xac0] sm:$0xff]
    %v527 = vld [vmem:[#allocation2 + $0xac8] sm:$0xff]
    %v528 = vld [vmem:[#allocation2 + $0xad0] sm:$0xff]
    %v529 = vld [vmem:[#allocation2 + $0xad8] sm:$0xff]
    %v530 = vld [vmem:[#allocation2 + $0xae0] sm:$0xff]
    %v531 = vld [vmem:[#allocation2 + $0xae8] sm:$0xff]
    %v532 = vld [vmem:[#allocation2 + $0xaf0] sm:$0xff]
    %v533 = vld [vmem:[#allocation2 + $0xaf8] sm:$0xff]
    %v534 = vld [vmem:[#allocation2 + $0xb00] sm:$0xff]
    %v535 = vld [vmem:[#allocation2 + $0xb08] sm:$0xff]
    %v536 = vld [vmem:[#allocation2 + $0xb10] sm:$0xff]
    %v537 = vld [vmem:[#allocation2 + $0xb18] sm:$0xff]
    %v538 = vld [vmem:[#allocation2 + $0xb20] sm:$0xff]
    %v539 = vld [vmem:[#allocation2 + $0xb28] sm:$0xff]
    %v540 = vld [vmem:[#allocation2 + $0xb30] sm:$0xff]
    %v541 = vld [vmem:[#allocation2 + $0xb38] sm:$0xff]
    %v542 = vld [vmem:[#allocation2 + $0xb40] sm:$0xff]
    %v543 = vld [vmem:[#allocation2 + $0xb48] sm:$0xff]
    %v544 = vld [vmem:[#allocation2 + $0xb50] sm:$0xff]
    %v545 = vld [vmem:[#allocation2 + $0xb58] sm:$0xff]
    %v546 = vld [vmem:[#allocation2 + $0xb60] sm:$0xff]
    %v547 = vld [vmem:[#allocation2 + $0xb68] sm:$0xff]
    %v548 = vld [vmem:[#allocation2 + $0xb70] sm:$0xff]
    %v549 = vld [vmem:[#allocation2 + $0xb78] sm:$0xff]
    %v550 = vld [vmem:[#allocation2 + $0xb80] sm:$0xff]
    %v551 = vld [vmem:[#allocation2 + $0xb88] sm:$0xff]
    %v552 = vld [vmem:[#allocation2 + $0xb90] sm:$0xff]
    %v553 = vld [vmem:[#allocation2 + $0xb98] sm:$0xff]
    %v554 = vld [vmem:[#allocation2 + $0xba0] sm:$0xff]
    %v555 = vld [vmem:[#allocation2 + $0xba8] sm:$0xff]
    %v556 = vld [vmem:[#allocation2 + $0xbb0] sm:$0xff]
    %v557 = vld [vmem:[#allocation2 + $0xbb8] sm:$0xff]
    %v558 = vld [vmem:[#allocation2 + $0xbc0] sm:$0xff]
    %v559 = vld [vmem:[#allocation2 + $0xbc8] sm:$0xff]
    %v560 = vld [vmem:[#allocation2 + $0xbd0] sm:$0xff]
    %v561 = vld [vmem:[#allocation2 + $0xbd8] sm:$0xff]
    %v562 = vld [vmem:[#allocation2 + $0xbe0] sm:$0xff]
    %v563 = vld [vmem:[#allocation2 + $0xbe8] sm:$0xff]
    %v564 = vld [vmem:[#allocation2 + $0xbf0] sm:$0xff]
    %v565 = vld [vmem:[#allocation2 + $0xbf8] sm:$0xff]
    %v566 = vld [vmem:[#allocation2 + $0xc00] sm:$0xff]
    %v567 = vld [vmem:[#allocation2 + $0xc08] sm:$0xff]
    %v568 = vld [vmem:[#allocation2 + $0xc10] sm:$0xff]
    %v569 = vld [vmem:[#allocation2 + $0xc18] sm:$0xff]
    %v570 = vld [vmem:[#allocation2 + $0xc20] sm:$0xff]
    %v571 = vld [vmem:[#allocation2 + $0xc28] sm:$0xff]
    %v572 = vld [vmem:[#allocation2 + $0xc30] sm:$0xff]
    %v573 = vld [vmem:[#allocation2 + $0xc38] sm:$0xff]
    %v574 = vld [vmem:[#allocation2 + $0xc40] sm:$0xff]
    %v575 = vld [vmem:[#allocation2 + $0xc48] sm:$0xff]
    %v576 = vld [vmem:[#allocation2 + $0xc50] sm:$0xff]
    %v577 = vld [vmem:[#allocation2 + $0xc58] sm:$0xff]
    %v578 = vld [vmem:[#allocation2 + $0xc60] sm:$0xff]
    %v579 = vld [vmem:[#allocation2 + $0xc68] sm:$0xff]
    %v580 = vld [vmem:[#allocation2 + $0xc70] sm:$0xff]
    %v581 = vld [vmem:[#allocation2 + $0xc78] sm:$0xff]
    %v582 = vld [vmem:[#allocation2 + $0xc80] sm:$0xff]
    %v583 = vld [vmem:[#allocation2 + $0xc88] sm:$0xff]
    %v584 = vld [vmem:[#allocation2 + $0xc90] sm:$0xff]
    %v585 = vld [vmem:[#allocation2 + $0xc98] sm:$0xff]
    %v586 = vld [vmem:[#allocation2 + $0xca0] sm:$0xff]
    %v587 = vld [vmem:[#allocation2 + $0xca8] sm:$0xff]
    %v588 = vld [vmem:[#allocation2 + $0xcb0] sm:$0xff]
    %v589 = vld [vmem:[#allocation2 + $0xcb8] sm:$0xff]
    %v590 = vld [vmem:[#allocation2 + $0xcc0] sm:$0xff]
    %v591 = vld [vmem:[#allocation2 + $0xcc8] sm:$0xff]
    %v592 = vld [vmem:[#allocation2 + $0xcd0] sm:$0xff]
    %v593 = vld [vmem:[#allocation2 + $0xcd8] sm:$0xff]
    %v594 = vld [vmem:[#allocation2 + $0xce0] sm:$0xff]
    %v595 = vld [vmem:[#allocation2 + $0xce8] sm:$0xff]
    %v596 = vld [vmem:[#allocation2 + $0xcf0] sm:$0xff]
    %v597 = vld [vmem:[#allocation2 + $0xcf8] sm:$0xff]
    %v598 = vld [vmem:[#allocation2 + $0xd00] sm:$0xff]
    %v599 = vld [vmem:[#allocation2 + $0xd08] sm:$0xff]
    %v600 = vld [vmem:[#allocation2 + $0xd10] sm:$0xff]
    %v601 = vld [vmem:[#allocation2 + $0xd18] sm:$0xff]
    %v602 = vld [vmem:[#allocation2 + $0xd20] sm:$0xff]
    %v603 = vld [vmem:[#allocation2 + $0xd28] sm:$0xff]
    %v604 = vld [vmem:[#allocation2 + $0xd30] sm:$0xff]
    %v605 = vld [vmem:[#allocation2 + $0xd38] sm:$0xff]
    %v606 = vld [vmem:[#allocation2 + $0xd40] sm:$0xff]
    %v607 = vld [vmem:[#allocation2 + $0xd48] sm:$0xff]
    %v608 = vld [vmem:[#allocation2 + $0xd50] sm:$0xff]
    %v609 = vld [vmem:[#allocation2 + $0xd58] sm:$0xff]
    %v610 = vld [vmem:[#allocation2 + $0xd60] sm:$0xff]
    %v611 = vld [vmem:[#allocation2 + $0xd68] sm:$0xff]
    %v612 = vld [vmem:[#allocation2 + $0xd70] sm:$0xff]
    %v613 = vld [vmem:[#allocation2 + $0xd78] sm:$0xff]
    %v614 = vld [vmem:[#allocation2 + $0xd80] sm:$0xff]
    %v615 = vld [vmem:[#allocation2 + $0xd88] sm:$0xff]
    %v616 = vld [vmem:[#allocation2 + $0xd90] sm:$0xff]
    %v617 = vld [vmem:[#allocation2 + $0xd98] sm:$0xff]
    %v618 = vld [vmem:[#allocation2 + $0xda0] sm:$0xff]
    %v619 = vld [vmem:[#allocation2 + $0xda8] sm:$0xff]
    %v620 = vld [vmem:[#allocation2 + $0xdb0] sm:$0xff]
    %v621 = vld [vmem:[#allocation2 + $0xdb8] sm:$0xff]
    %v622 = vld [vmem:[#allocation2 + $0xdc0] sm:$0xff]
    %v623 = vld [vmem:[#allocation2 + $0xdc8] sm:$0xff]
    %v624 = vld [vmem:[#allocation2 + $0xdd0] sm:$0xff]
    %v625 = vld [vmem:[#allocation2 + $0xdd8] sm:$0xff]
    %v626 = vld [vmem:[#allocation2 + $0xde0] sm:$0xff]
    %v627 = vld [vmem:[#allocation2 + $0xde8] sm:$0xff]
    %v628 = vld [vmem:[#allocation2 + $0xdf0] sm:$0xff]
    %v629 = vld [vmem:[#allocation2 + $0xdf8] sm:$0xff]
    %v630 = vld [vmem:[#allocation2 + $0xe00] sm:$0xff]
    %v631 = vld [vmem:[#allocation2 + $0xe08] sm:$0xff]
    %v632 = vld [vmem:[#allocation2 + $0xe10] sm:$0xff]
    %v633 = vld [vmem:[#allocation2 + $0xe18] sm:$0xff]
    %v634 = vld [vmem:[#allocation2 + $0xe20] sm:$0xff]
    %v635 = vld [vmem:[#allocation2 + $0xe28] sm:$0xff]
    %v636 = vld [vmem:[#allocation2 + $0xe30] sm:$0xff]
    %v637 = vld [vmem:[#allocation2 + $0xe38] sm:$0xff]
    %v638 = vld [vmem:[#allocation2 + $0xe40] sm:$0xff]
    %v639 = vld [vmem:[#allocation2 + $0xe48] sm:$0xff]
    %v640 = vld [vmem:[#allocation2 + $0xe50] sm:$0xff]
    %v641 = vld [vmem:[#allocation2 + $0xe58] sm:$0xff]
    %v642 = vld [vmem:[#allocation2 + $0xe60] sm:$0xff]
    %v643 = vld [vmem:[#allocation2 + $0xe68] sm:$0xff]
    %v644 = vld [vmem:[#allocation2 + $0xe70] sm:$0xff]
    %v645 = vld [vmem:[#allocation2 + $0xe78] sm:$0xff]
    %v646 = vld [vmem:[#allocation2 + $0xe80] sm:$0xff]
    %v647 = vld [vmem:[#allocation2 + $0xe88] sm:$0xff]
    %v648 = vld [vmem:[#allocation2 + $0xe90] sm:$0xff]
    %v649 = vld [vmem:[#allocation2 + $0xe98] sm:$0xff]
    %v650 = vld [vmem:[#allocation2 + $0xea0] sm:$0xff]
    %v651 = vld [vmem:[#allocation2 + $0xea8] sm:$0xff]
    %v652 = vld [vmem:[#allocation2 + $0xeb0] sm:$0xff]
    %v653 = vld [vmem:[#allocation2 + $0xeb8] sm:$0xff]
    %v654 = vld [vmem:[#allocation2 + $0xec0] sm:$0xff]
    %v655 = vld [vmem:[#allocation2 + $0xec8] sm:$0xff]
    %v656 = vld [vmem:[#allocation2 + $0xed0] sm:$0xff]
    %v657 = vld [vmem:[#allocation2 + $0xed8] sm:$0xff]
    %v658 = vld [vmem:[#allocation2 + $0xee0] sm:$0xff]
    %v659 = vld [vmem:[#allocation2 + $0xee8] sm:$0xff]
    %v660 = vld [vmem:[#allocation2 + $0xef0] sm:$0xff]
    %v661 = vld [vmem:[#allocation2 + $0xef8] sm:$0xff]
    %v662 = vld [vmem:[#allocation2 + $0xf00] sm:$0xff]
    %v663 = vld [vmem:[#allocation2 + $0xf08] sm:$0xff]
    %v664 = vld [vmem:[#allocation2 + $0xf10] sm:$0xff]
    %v665 = vld [vmem:[#allocation2 + $0xf18] sm:$0xff]
    %v666 = vld [vmem:[#allocation2 + $0xf20] sm:$0xff]
    %v667 = vld [vmem:[#allocation2 + $0xf28] sm:$0xff]
    %v668 = vld [vmem:[#allocation2 + $0xf30] sm:$0xff]
    %v669 = vld [vmem:[#allocation2 + $0xf38] sm:$0xff]
    %v670 = vld [vmem:[#allocation2 + $0xf40] sm:$0xff]
    %v671 = vld [vmem:[#allocation2 + $0xf48] sm:$0xff]
    %v672 = vld [vmem:[#allocation2 + $0xf50] sm:$0xff]
    %v673 = vld [vmem:[#allocation2 + $0xf58] sm:$0xff]
    %v674 = vld [vmem:[#allocation2 + $0xf60] sm:$0xff]
    %v675 = vld [vmem:[#allocation2 + $0xf68] sm:$0xff]
    %v676 = vld [vmem:[#allocation2 + $0xf70] sm:$0xff]
    %v677 = vld [vmem:[#allocation2 + $0xf78] sm:$0xff]
    %v678 = vld [vmem:[#allocation2 + $0xf80] sm:$0xff]
    %v679 = vld [vmem:[#allocation2 + $0xf88] sm:$0xff]
    %v680 = vld [vmem:[#allocation2 + $0xf90] sm:$0xff]
    %v681 = vld [vmem:[#allocation2 + $0xf98] sm:$0xff]
    %v682 = vld [vmem:[#allocation2 + $0xfa0] sm:$0xff]
    %v683 = vld [vmem:[#allocation2 + $0xfa8] sm:$0xff]
    %v684 = vld [vmem:[#allocation2 + $0xfb0] sm:$0xff]
    %v685 = vld [vmem:[#allocation2 + $0xfb8] sm:$0xff]
    %v686 = vld [vmem:[#allocation2 + $0xfc0] sm:$0xff]
    %v687 = vld [vmem:[#allocation2 + $0xfc8] sm:$0xff]
    %v688 = vld [vmem:[#allocation2 + $0xfd0] sm:$0xff]
    %v689 = vld [vmem:[#allocation2 + $0xfd8] sm:$0xff]
    %v690 = vld [vmem:[#allocation2 + $0xfe0] sm:$0xff]
    %v691 = vld [vmem:[#allocation2 + $0xfe8] sm:$0xff]
    %v692 = vld [vmem:[#allocation2 + $0xff0] sm:$0xff]
    %v693 = vld [vmem:[#allocation2 + $0xff8] sm:$0xff]
    %v694 = vld [vmem:[#allocation2 + $0x1000] sm:$0xff]
    %v695 = vld [vmem:[#allocation2 + $0x1008] sm:$0xff]
    %v696 = vld [vmem:[#allocation2 + $0x1010] sm:$0xff]
    %v697 = vld [vmem:[#allocation2 + $0x1018] sm:$0xff]
    %v698 = vld [vmem:[#allocation2 + $0x1020] sm:$0xff]
    %v699 = vld [vmem:[#allocation2 + $0x1028] sm:$0xff]
    %v700 = vld [vmem:[#allocation2 + $0x1030] sm:$0xff]
    %v701 = vld [vmem:[#allocation2 + $0x1038] sm:$0xff]
    %v702 = vld [vmem:[#allocation2 + $0x1040] sm:$0xff]
    %v703 = vld [vmem:[#allocation2 + $0x1048] sm:$0xff]
    %v704 = vld [vmem:[#allocation2 + $0x1050] sm:$0xff]
    %v705 = vld [vmem:[#allocation2 + $0x1058] sm:$0xff]
    %v706 = vld [vmem:[#allocation2 + $0x1060] sm:$0xff]
    %v707 = vld [vmem:[#allocation2 + $0x1068] sm:$0xff]
    %v708 = vld [vmem:[#allocation2 + $0x1070] sm:$0xff]
    %v709 = vld [vmem:[#allocation2 + $0x1078] sm:$0xff]
    %v710 = vld [vmem:[#allocation2 + $0x1080] sm:$0xff]
    %v711 = vld [vmem:[#allocation2 + $0x1088] sm:$0xff]
    %v712 = vld [vmem:[#allocation2 + $0x1090] sm:$0xff]
    %v713 = vld [vmem:[#allocation2 + $0x1098] sm:$0xff]
    %v714 = vld [vmem:[#allocation2 + $0x10a0] sm:$0xff]
    %v715 = vld [vmem:[#allocation2 + $0x10a8] sm:$0xff]
    %v716 = vld [vmem:[#allocation2 + $0x10b0] sm:$0xff]
    %v717 = vld [vmem:[#allocation2 + $0x10b8] sm:$0xff]
    %v718 = vld [vmem:[#allocation2 + $0x10c0] sm:$0xff]
    %v719 = vld [vmem:[#allocation2 + $0x10c8] sm:$0xff]
    %v720 = vld [vmem:[#allocation2 + $0x10d0] sm:$0xff]
    %v721 = vld [vmem:[#allocation2 + $0x10d8] sm:$0xff]
    %v722 = vld [vmem:[#allocation2 + $0x10e0] sm:$0xff]
    %v723 = vld [vmem:[#allocation2 + $0x10e8] sm:$0xff]
    %v724 = vld [vmem:[#allocation2 + $0x10f0] sm:$0xff]
    %v725 = vld [vmem:[#allocation2 + $0x10f8] sm:$0xff]
    %v726 = vld [vmem:[#allocation2 + $0x1100] sm:$0xff]
    %v727 = vld [vmem:[#allocation2 + $0x1108] sm:$0xff]
    %v728 = vld [vmem:[#allocation2 + $0x1110] sm:$0xff]
    %v729 = vld [vmem:[#allocation2 + $0x1118] sm:$0xff]
    %v730 = vld [vmem:[#allocation2 + $0x1120] sm:$0xff]
    %v731 = vld [vmem:[#allocation2 + $0x1128] sm:$0xff]
    %v732 = vld [vmem:[#allocation2 + $0x1130] sm:$0xff]
    %v733 = vld [vmem:[#allocation2 + $0x1138] sm:$0xff]
    %v734 = vld [vmem:[#allocation2 + $0x1140] sm:$0xff]
    %v735 = vld [vmem:[#allocation2 + $0x1148] sm:$0xff]
    %v736 = vld [vmem:[#allocation2 + $0x1150] sm:$0xff]
    %v737 = vld [vmem:[#allocation2 + $0x1158] sm:$0xff]
    %v738 = vld [vmem:[#allocation2 + $0x1160] sm:$0xff]
    %v739 = vld [vmem:[#allocation2 + $0x1168] sm:$0xff]
    %v740 = vld [vmem:[#allocation2 + $0x1170] sm:$0xff]
    %v741 = vld [vmem:[#allocation2 + $0x1178] sm:$0xff]
    %v742 = vld [vmem:[#allocation2 + $0x1180] sm:$0xff]
    %v743 = vld [vmem:[#allocation2 + $0x1188] sm:$0xff]
    %v744 = vld [vmem:[#allocation2 + $0x1190] sm:$0xff]
    %v745 = vld [vmem:[#allocation2 + $0x1198] sm:$0xff]
    %v746 = vld [vmem:[#allocation2 + $0x11a0] sm:$0xff]
    %v747 = vld [vmem:[#allocation2 + $0x11a8] sm:$0xff]
    %v748 = vld [vmem:[#allocation2 + $0x11b0] sm:$0xff]
    %v749 = vld [vmem:[#allocation2 + $0x11b8] sm:$0xff]
    %v750 = vld [vmem:[#allocation2 + $0x11c0] sm:$0xff]
    %v751 = vld [vmem:[#allocation2 + $0x11c8] sm:$0xff]
    %v752 = vld [vmem:[#allocation2 + $0x11d0] sm:$0xff]
    %v753 = vld [vmem:[#allocation2 + $0x11d8] sm:$0xff]
    %v754 = vld [vmem:[#allocation2 + $0x11e0] sm:$0xff]
    %v755 = vld [vmem:[#allocation2 + $0x11e8] sm:$0xff]
    %v756 = vld [vmem:[#allocation2 + $0x11f0] sm:$0xff]
    %v757 = vld [vmem:[#allocation2 + $0x11f8] sm:$0xff]
    %v758 = vld [vmem:[#allocation2 + $0x1200] sm:$0xff]
    %v759 = vld [vmem:[#allocation2 + $0x1208] sm:$0xff]
    %v760 = vld [vmem:[#allocation2 + $0x1210] sm:$0xff]
    %v761 = vld [vmem:[#allocation2 + $0x1218] sm:$0xff]
    %v762 = vld [vmem:[#allocation2 + $0x1220] sm:$0xff]
    %v763 = vld [vmem:[#allocation2 + $0x1228] sm:$0xff]
    %v764 = vld [vmem:[#allocation2 + $0x1230] sm:$0xff]
    %v765 = vld [vmem:[#allocation2 + $0x1238] sm:$0xff]
    %v766 = vld [vmem:[#allocation2 + $0x1240] sm:$0xff]
    %v767 = vld [vmem:[#allocation2 + $0x1248] sm:$0xff]
    %v768 = vld [vmem:[#allocation2 + $0x1250] sm:$0xff]
    %v769 = vld [vmem:[#allocation2 + $0x1258] sm:$0xff]
    %v770 = vld [vmem:[#allocation2 + $0x1260] sm:$0xff]
    %v771 = vld [vmem:[#allocation2 + $0x1268] sm:$0xff]
    %v772 = vld [vmem:[#allocation2 + $0x1270] sm:$0xff]
    %v773 = vld [vmem:[#allocation2 + $0x1278] sm:$0xff]
    %v774 = vld [vmem:[#allocation2 + $0x1280] sm:$0xff]
    %v775 = vld [vmem:[#allocation2 + $0x1288] sm:$0xff]
    %v776 = vld [vmem:[#allocation2 + $0x1290] sm:$0xff]
    %v777 = vld [vmem:[#allocation2 + $0x1298] sm:$0xff]
    %v778 = vld [vmem:[#allocation2 + $0x12a0] sm:$0xff]
    %v779 = vld [vmem:[#allocation2 + $0x12a8] sm:$0xff]
    %v780 = vld [vmem:[#allocation2 + $0x12b0] sm:$0xff]
    %v781 = vld [vmem:[#allocation2 + $0x12b8] sm:$0xff]
    %v782 = vld [vmem:[#allocation2 + $0x12c0] sm:$0xff]
    %v783 = vld [vmem:[#allocation2 + $0x12c8] sm:$0xff]
    %v784 = vld [vmem:[#allocation2 + $0x12d0] sm:$0xff]
    %v785 = vld [vmem:[#allocation2 + $0x12d8] sm:$0xff]
    %v786 = vld [vmem:[#allocation2 + $0x12e0] sm:$0xff]
    %v787 = vld [vmem:[#allocation2 + $0x12e8] sm:$0xff]
    %v788 = vld [vmem:[#allocation2 + $0x12f0] sm:$0xff]
    %v789 = vld [vmem:[#allocation2 + $0x12f8] sm:$0xff]
    %v790 = vld [vmem:[#allocation15] sm:$0xf]
    %v792 = vlaneseq
    %v793 = vshrl.u32 %v792, 7
    %v794 = vsub.s32 0, %v793
    %v795 = vrot.slane %v790, %v794
    %v796 = vlaneseq
    %v797 = vshrl.u32 %v796, 7
    %v798 = vsub.s32 1, %v797
    %v799 = vrot.slane %v790, %v798
    %v800 = vlaneseq
    %v801 = vshrl.u32 %v800, 7
    %v802 = vsub.s32 2, %v801
    %v803 = vrot.slane %v790, %v802
    %v804 = vlaneseq
    %v805 = vshrl.u32 %v804, 7
    %v806 = vsub.s32 3, %v805
    %v807 = vrot.slane %v790, %v806
    %v832 = vunpack.c.l.b16 %v162
    %v833 = vunpack.c.h.b16 %v162
    %v834 = vunpack.c.l.b16 %v163
    %v835 = vunpack.c.h.b16 %v163
    %v836 = vunpack.c.l.b16 %v164
    %v837 = vunpack.c.h.b16 %v164
    %v838 = vunpack.c.l.b16 %v165
    %v839 = vunpack.c.h.b16 %v165
    %v840 = vunpack.c.l.b16 %v166
    %v841 = vunpack.c.h.b16 %v166
    %v842 = vunpack.c.l.b16 %v167
    %v843 = vunpack.c.h.b16 %v167
    %v844 = vunpack.c.l.b16 %v168
    %v845 = vunpack.c.h.b16 %v168
    %v846 = vunpack.c.l.b16 %v169
    %v847 = vunpack.c.h.b16 %v169
    %v848 = vunpack.c.l.b16 %v170
    %v849 = vunpack.c.h.b16 %v170
    %v850 = vunpack.c.l.b16 %v171
    %v851 = vunpack.c.l.b16 %v172
    %v852 = vunpack.c.h.b16 %v172
    %v853 = vunpack.c.l.b16 %v173
    %v854 = vunpack.c.h.b16 %v173
    %v855 = vunpack.c.l.b16 %v174
    %v856 = vunpack.c.h.b16 %v174
    %v857 = vunpack.c.l.b16 %v175
    %v858 = vunpack.c.h.b16 %v175
    %v859 = vunpack.c.l.b16 %v176
    %v860 = vunpack.c.h.b16 %v176
    %v861 = vunpack.c.l.b16 %v177
    %v862 = vunpack.c.h.b16 %v177
    %v863 = vunpack.c.l.b16 %v178
    %v864 = vunpack.c.h.b16 %v178
    %v865 = vunpack.c.l.b16 %v179
    %v866 = vunpack.c.h.b16 %v179
    %v867 = vunpack.c.l.b16 %v180
    %v868 = vunpack.c.h.b16 %v180
    %v869 = vunpack.c.l.b16 %v181
    %v870 = vpack.c.b16 %v851, %v832
    %v871 = vpack.c.b16 %v852, %v833
    %v872 = vpack.c.b16 %v853, %v834
    %v873 = vpack.c.b16 %v854, %v835
    %v874 = vpack.c.b16 %v855, %v836
    %v875 = vpack.c.b16 %v856, %v837
    %v876 = vpack.c.b16 %v857, %v838
    %v877 = vpack.c.b16 %v858, %v839
    %v878 = vpack.c.b16 %v859, %v840
    %v879 = vpack.c.b16 %v860, %v841
    %v880 = vpack.c.b16 %v861, %v842
    %v881 = vpack.c.b16 %v862, %v843
    %v882 = vpack.c.b16 %v863, %v844
    %v883 = vpack.c.b16 %v864, %v845
    %v884 = vpack.c.b16 %v865, %v846
    %v885 = vpack.c.b16 %v866, %v847
    %v886 = vpack.c.b16 %v867, %v848
    %v887 = vpack.c.b16 %v868, %v849
    %v888 = vpack.c.b16 %v869, %v850
    %v1516 = vunpack.c.l.b16 %v182
    %v1517 = vunpack.c.h.b16 %v182
    %v1518 = vunpack.c.l.b16 %v183
    %v1519 = vunpack.c.h.b16 %v183
    %v1520 = vunpack.c.l.b16 %v184
    %v1521 = vunpack.c.h.b16 %v184
    %v1522 = vunpack.c.l.b16 %v185
    %v1523 = vunpack.c.h.b16 %v185
    %v1524 = vunpack.c.l.b16 %v186
    %v1525 = vunpack.c.h.b16 %v186
    %v1526 = vunpack.c.l.b16 %v187
    %v1527 = vunpack.c.h.b16 %v187
    %v1528 = vunpack.c.l.b16 %v188
    %v1529 = vunpack.c.h.b16 %v188
    %v1530 = vunpack.c.l.b16 %v189
    %v1531 = vunpack.c.h.b16 %v189
    %v1532 = vunpack.c.l.b16 %v190
    %v1533 = vunpack.c.h.b16 %v190
    %v1534 = vunpack.c.l.b16 %v191
    %v1535 = vunpack.c.h.b16 %v191
    %v1536 = vunpack.c.l.b16 %v192
    %v1537 = vunpack.c.h.b16 %v192
    %v1538 = vunpack.c.l.b16 %v193
    %v1539 = vunpack.c.h.b16 %v193
    %v1540 = vunpack.c.l.b16 %v194
    %v1541 = vunpack.c.h.b16 %v194
    %v1542 = vunpack.c.l.b16 %v195
    %v1543 = vunpack.c.h.b16 %v195
    %v1544 = vunpack.c.l.b16 %v196
    %v1545 = vunpack.c.h.b16 %v196
    %v1546 = vunpack.c.l.b16 %v197
    %v1547 = vunpack.c.h.b16 %v197
    %v1548 = vunpack.c.l.b16 %v198
    %v1549 = vunpack.c.h.b16 %v198
    %v1550 = vunpack.c.l.b16 %v199
    %v1551 = vunpack.c.h.b16 %v199
    %v1552 = vunpack.c.l.b16 %v200
    %v1553 = vunpack.c.h.b16 %v200
    %v1554 = vunpack.c.l.b16 %v201
    %v1555 = vunpack.c.h.b16 %v201
    %v1556 = vunpack.c.l.b16 %v202
    %v1557 = vunpack.c.h.b16 %v202
    %v1558 = vunpack.c.l.b16 %v203
    %v1559 = vunpack.c.h.b16 %v203
    %v1560 = vunpack.c.l.b16 %v204
    %v1561 = vunpack.c.h.b16 %v204
    %v1562 = vunpack.c.l.b16 %v205
    %v1563 = vunpack.c.h.b16 %v205
    %v1564 = vunpack.c.l.b16 %v206
    %v1565 = vunpack.c.h.b16 %v206
    %v1566 = vunpack.c.l.b16 %v207
    %v1567 = vunpack.c.h.b16 %v207
    %v1568 = vunpack.c.l.b16 %v208
    %v1569 = vunpack.c.h.b16 %v208
    %v1570 = vunpack.c.l.b16 %v209
    %v1571 = vunpack.c.h.b16 %v209
    %v1572 = vunpack.c.l.b16 %v210
    %v1573 = vunpack.c.h.b16 %v210
    %v1574 = vunpack.c.l.b16 %v211
    %v1575 = vunpack.c.h.b16 %v211
    %v1576 = vunpack.c.l.b16 %v212
    %v1577 = vunpack.c.h.b16 %v212
    %v1578 = vunpack.c.l.b16 %v213
    %v1579 = vunpack.c.h.b16 %v213
    %v1580 = vunpack.c.l.b16 %v214
    %v1581 = vunpack.c.h.b16 %v214
    %v1582 = vunpack.c.l.b16 %v215
    %v1583 = vunpack.c.h.b16 %v215
    %v1584 = vunpack.c.l.b16 %v216
    %v1585 = vunpack.c.h.b16 %v216
    %v1586 = vunpack.c.l.b16 %v217
    %v1587 = vunpack.c.h.b16 %v217
    %v1588 = vunpack.c.l.b16 %v218
    %v1589 = vunpack.c.h.b16 %v218
    %v1590 = vunpack.c.l.b16 %v219
    %v1591 = vunpack.c.h.b16 %v219
    %v1592 = vunpack.c.l.b16 %v220
    %v1593 = vunpack.c.h.b16 %v220
    %v1594 = vunpack.c.l.b16 %v221
    %v1595 = vunpack.c.h.b16 %v221
    %v1596 = vunpack.c.l.b16 %v222
    %v1597 = vunpack.c.h.b16 %v222
    %v1598 = vunpack.c.l.b16 %v223
    %v1599 = vunpack.c.h.b16 %v223
    %v1600 = vunpack.c.l.b16 %v224
    %v1601 = vunpack.c.h.b16 %v224
    %v1602 = vunpack.c.l.b16 %v225
    %v1603 = vunpack.c.h.b16 %v225
    %v1604 = vunpack.c.l.b16 %v226
    %v1605 = vunpack.c.h.b16 %v226
    %v1606 = vunpack.c.l.b16 %v227
    %v1607 = vunpack.c.h.b16 %v227
    %v1608 = vunpack.c.l.b16 %v228
    %v1609 = vunpack.c.h.b16 %v228
    %v1610 = vunpack.c.l.b16 %v229
    %v1611 = vunpack.c.h.b16 %v229
    %v1612 = vunpack.c.l.b16 %v230
    %v1613 = vunpack.c.h.b16 %v230
    %v1614 = vunpack.c.l.b16 %v231
    %v1615 = vunpack.c.h.b16 %v231
    %v1616 = vunpack.c.l.b16 %v232
    %v1617 = vunpack.c.h.b16 %v232
    %v1618 = vunpack.c.l.b16 %v233
    %v1619 = vunpack.c.h.b16 %v233
    %v1620 = vunpack.c.l.b16 %v234
    %v1621 = vunpack.c.h.b16 %v234
    %v1622 = vunpack.c.l.b16 %v235
    %v1623 = vunpack.c.h.b16 %v235
    %v1624 = vunpack.c.l.b16 %v236
    %v1625 = vunpack.c.h.b16 %v236
    %v1626 = vunpack.c.l.b16 %v237
    %v1627 = vunpack.c.h.b16 %v237
    %v1628 = vunpack.c.l.b16 %v238
    %v1629 = vunpack.c.h.b16 %v238
    %v1630 = vunpack.c.l.b16 %v239
    %v1631 = vunpack.c.h.b16 %v239
    %v1632 = vunpack.c.l.b16 %v240
    %v1633 = vunpack.c.h.b16 %v240
    %v1634 = vunpack.c.l.b16 %v241
    %v1635 = vunpack.c.h.b16 %v241
    %v1636 = vunpack.c.l.b16 %v242
    %v1637 = vunpack.c.h.b16 %v242
    %v1638 = vunpack.c.l.b16 %v243
    %v1639 = vunpack.c.h.b16 %v243
    %v1640 = vunpack.c.l.b16 %v244
    %v1641 = vunpack.c.h.b16 %v244
    %v1642 = vunpack.c.l.b16 %v245
    %v1643 = vunpack.c.h.b16 %v245
    %v1644 = vunpack.c.l.b16 %v246
    %v1645 = vunpack.c.h.b16 %v246
    %v1646 = vunpack.c.l.b16 %v247
    %v1647 = vunpack.c.h.b16 %v247
    %v1648 = vunpack.c.l.b16 %v248
    %v1649 = vunpack.c.h.b16 %v248
    %v1650 = vunpack.c.l.b16 %v249
    %v1651 = vunpack.c.h.b16 %v249
    %v1652 = vunpack.c.l.b16 %v250
    %v1653 = vunpack.c.h.b16 %v250
    %v1654 = vunpack.c.l.b16 %v251
    %v1655 = vunpack.c.h.b16 %v251
    %v1656 = vunpack.c.l.b16 %v252
    %v1657 = vunpack.c.h.b16 %v252
    %v1658 = vunpack.c.l.b16 %v253
    %v1659 = vunpack.c.h.b16 %v253
    %v1660 = vunpack.c.l.b16 %v254
    %v1661 = vunpack.c.h.b16 %v254
    %v1662 = vunpack.c.l.b16 %v255
    %v1663 = vunpack.c.h.b16 %v255
    %v1664 = vunpack.c.l.b16 %v256
    %v1665 = vunpack.c.h.b16 %v256
    %v1666 = vunpack.c.l.b16 %v257
    %v1667 = vunpack.c.h.b16 %v257
    %v1668 = vunpack.c.l.b16 %v258
    %v1669 = vunpack.c.h.b16 %v258
    %v1670 = vunpack.c.l.b16 %v259
    %v1671 = vunpack.c.h.b16 %v259
    %v1672 = vunpack.c.l.b16 %v260
    %v1673 = vunpack.c.h.b16 %v260
    %v1674 = vunpack.c.l.b16 %v261
    %v1675 = vunpack.c.h.b16 %v261
    %v1676 = vunpack.c.l.b16 %v262
    %v1677 = vunpack.c.h.b16 %v262
    %v1678 = vunpack.c.l.b16 %v263
    %v1679 = vunpack.c.h.b16 %v263
    %v1680 = vunpack.c.l.b16 %v264
    %v1681 = vunpack.c.h.b16 %v264
    %v1682 = vunpack.c.l.b16 %v265
    %v1683 = vunpack.c.h.b16 %v265
    %v1684 = vunpack.c.l.b16 %v266
    %v1685 = vunpack.c.h.b16 %v266
    %v1686 = vunpack.c.l.b16 %v267
    %v1687 = vunpack.c.h.b16 %v267
    %v1688 = vunpack.c.l.b16 %v268
    %v1689 = vunpack.c.h.b16 %v268
    %v1690 = vunpack.c.l.b16 %v269
    %v1691 = vunpack.c.h.b16 %v269
    %v1692 = vunpack.c.l.b16 %v270
    %v1693 = vunpack.c.h.b16 %v270
    %v1694 = vunpack.c.l.b16 %v271
    %v1695 = vunpack.c.h.b16 %v271
    %v1696 = vunpack.c.l.b16 %v272
    %v1697 = vunpack.c.h.b16 %v272
    %v1698 = vunpack.c.l.b16 %v273
    %v1699 = vunpack.c.h.b16 %v273
    %v1700 = vunpack.c.l.b16 %v274
    %v1701 = vunpack.c.h.b16 %v274
    %v1702 = vunpack.c.l.b16 %v275
    %v1703 = vunpack.c.h.b16 %v275
    %v1704 = vunpack.c.l.b16 %v276
    %v1705 = vunpack.c.h.b16 %v276
    %v1706 = vunpack.c.l.b16 %v277
    %v1707 = vunpack.c.h.b16 %v277
    %v1708 = vunpack.c.l.b16 %v278
    %v1709 = vunpack.c.h.b16 %v278
    %v1710 = vunpack.c.l.b16 %v279
    %v1711 = vunpack.c.h.b16 %v279
    %v1712 = vunpack.c.l.b16 %v280
    %v1713 = vunpack.c.h.b16 %v280
    %v1714 = vunpack.c.l.b16 %v281
    %v1715 = vunpack.c.h.b16 %v281
    %v1716 = vunpack.c.l.b16 %v282
    %v1717 = vunpack.c.h.b16 %v282
    %v1718 = vunpack.c.l.b16 %v283
    %v1719 = vunpack.c.h.b16 %v283
    %v1720 = vunpack.c.l.b16 %v284
    %v1721 = vunpack.c.h.b16 %v284
    %v1722 = vunpack.c.l.b16 %v285
    %v1723 = vunpack.c.h.b16 %v285
    %v1724 = vunpack.c.l.b16 %v286
    %v1725 = vunpack.c.h.b16 %v286
    %v1726 = vunpack.c.l.b16 %v287
    %v1727 = vunpack.c.h.b16 %v287
    %v1728 = vunpack.c.l.b16 %v288
    %v1729 = vunpack.c.h.b16 %v288
    %v1730 = vunpack.c.l.b16 %v289
    %v1731 = vunpack.c.h.b16 %v289
    %v1732 = vunpack.c.l.b16 %v290
    %v1733 = vunpack.c.h.b16 %v290
    %v1734 = vunpack.c.l.b16 %v291
    %v1735 = vunpack.c.h.b16 %v291
    %v1736 = vunpack.c.l.b16 %v292
    %v1737 = vunpack.c.h.b16 %v292
    %v1738 = vunpack.c.l.b16 %v293
    %v1739 = vunpack.c.h.b16 %v293
    %v1740 = vunpack.c.l.b16 %v294
    %v1741 = vunpack.c.h.b16 %v294
    %v1742 = vunpack.c.l.b16 %v295
    %v1743 = vunpack.c.h.b16 %v295
    %v1744 = vunpack.c.l.b16 %v296
    %v1745 = vunpack.c.h.b16 %v296
    %v1746 = vunpack.c.l.b16 %v297
    %v1747 = vunpack.c.h.b16 %v297
    %v1748 = vunpack.c.l.b16 %v298
    %v1749 = vunpack.c.h.b16 %v298
    %v1750 = vunpack.c.l.b16 %v299
    %v1751 = vunpack.c.h.b16 %v299
    %v1752 = vunpack.c.l.b16 %v300
    %v1753 = vunpack.c.h.b16 %v300
    %v1754 = vunpack.c.l.b16 %v301
    %v1755 = vunpack.c.h.b16 %v301
    %v1756 = vunpack.c.l.b16 %v302
    %v1757 = vunpack.c.h.b16 %v302
    %v1758 = vunpack.c.l.b16 %v303
    %v1759 = vunpack.c.h.b16 %v303
    %v1760 = vunpack.c.l.b16 %v304
    %v1761 = vunpack.c.h.b16 %v304
    %v1762 = vunpack.c.l.b16 %v305
    %v1763 = vunpack.c.h.b16 %v305
    %v1764 = vunpack.c.l.b16 %v306
    %v1765 = vunpack.c.h.b16 %v306
    %v1766 = vunpack.c.l.b16 %v307
    %v1767 = vunpack.c.h.b16 %v307
    %v1768 = vunpack.c.l.b16 %v308
    %v1769 = vunpack.c.h.b16 %v308
    %v1770 = vunpack.c.l.b16 %v309
    %v1771 = vunpack.c.h.b16 %v309
    %v1772 = vunpack.c.l.b16 %v310
    %v1773 = vunpack.c.h.b16 %v310
    %v1774 = vunpack.c.l.b16 %v311
    %v1775 = vunpack.c.h.b16 %v311
    %v1776 = vunpack.c.l.b16 %v312
    %v1777 = vunpack.c.h.b16 %v312
    %v1778 = vunpack.c.l.b16 %v313
    %v1779 = vunpack.c.h.b16 %v313
    %v1780 = vunpack.c.l.b16 %v314
    %v1781 = vunpack.c.h.b16 %v314
    %v1782 = vunpack.c.l.b16 %v315
    %v1783 = vunpack.c.h.b16 %v315
    %v1784 = vunpack.c.l.b16 %v316
    %v1785 = vunpack.c.h.b16 %v316
    %v1786 = vunpack.c.l.b16 %v317
    %v1787 = vunpack.c.h.b16 %v317
    %v1788 = vunpack.c.l.b16 %v318
    %v1789 = vunpack.c.h.b16 %v318
    %v1790 = vunpack.c.l.b16 %v319
    %v1791 = vunpack.c.h.b16 %v319
    %v1792 = vunpack.c.l.b16 %v320
    %v1793 = vunpack.c.h.b16 %v320
    %v1794 = vunpack.c.l.b16 %v321
    %v1795 = vunpack.c.h.b16 %v321
    %v1796 = vunpack.c.l.b16 %v322
    %v1797 = vunpack.c.h.b16 %v322
    %v1798 = vunpack.c.l.b16 %v323
    %v1799 = vunpack.c.h.b16 %v323
    %v1800 = vunpack.c.l.b16 %v324
    %v1801 = vunpack.c.h.b16 %v324
    %v1802 = vunpack.c.l.b16 %v325
    %v1803 = vunpack.c.h.b16 %v325
    %v1804 = vunpack.c.l.b16 %v326
    %v1805 = vunpack.c.h.b16 %v326
    %v1806 = vunpack.c.l.b16 %v327
    %v1807 = vunpack.c.h.b16 %v327
    %v1808 = vunpack.c.l.b16 %v328
    %v1809 = vunpack.c.h.b16 %v328
    %v1810 = vunpack.c.l.b16 %v329
    %v1811 = vunpack.c.h.b16 %v329
    %v1812 = vunpack.c.l.b16 %v330
    %v1813 = vunpack.c.h.b16 %v330
    %v1814 = vunpack.c.l.b16 %v331
    %v1815 = vunpack.c.h.b16 %v331
    %v1816 = vunpack.c.l.b16 %v332
    %v1817 = vunpack.c.h.b16 %v332
    %v1818 = vunpack.c.l.b16 %v333
    %v1819 = vunpack.c.h.b16 %v333
    %v1820 = vunpack.c.l.b16 %v334
    %v1821 = vunpack.c.h.b16 %v334
    %v1822 = vunpack.c.l.b16 %v335
    %v1823 = vunpack.c.h.b16 %v335
    %v1824 = vunpack.c.l.b16 %v336
    %v1825 = vunpack.c.h.b16 %v336
    %v1826 = vunpack.c.l.b16 %v337
    %v1827 = vunpack.c.h.b16 %v337
    %v1828 = vunpack.c.l.b16 %v338
    %v1829 = vunpack.c.h.b16 %v338
    %v1830 = vunpack.c.l.b16 %v339
    %v1831 = vunpack.c.h.b16 %v339
    %v1832 = vunpack.c.l.b16 %v340
    %v1833 = vunpack.c.h.b16 %v340
    %v1834 = vunpack.c.l.b16 %v341
    %v1835 = vunpack.c.h.b16 %v341
    %v1836 = vunpack.c.l.b16 %v342
    %v1837 = vunpack.c.h.b16 %v342
    %v1838 = vunpack.c.l.b16 %v343
    %v1839 = vunpack.c.h.b16 %v343
    %v1840 = vunpack.c.l.b16 %v344
    %v1841 = vunpack.c.h.b16 %v344
    %v1842 = vunpack.c.l.b16 %v345
    %v1843 = vunpack.c.h.b16 %v345
    %v1844 = vunpack.c.l.b16 %v346
    %v1845 = vunpack.c.h.b16 %v346
    %v1846 = vunpack.c.l.b16 %v347
    %v1847 = vunpack.c.h.b16 %v347
    %v1848 = vunpack.c.l.b16 %v348
    %v1849 = vunpack.c.h.b16 %v348
    %v1850 = vunpack.c.l.b16 %v349
    %v1851 = vunpack.c.h.b16 %v349
    %v1852 = vunpack.c.l.b16 %v350
    %v1853 = vunpack.c.h.b16 %v350
    %v1854 = vunpack.c.l.b16 %v351
    %v1855 = vunpack.c.h.b16 %v351
    %v1856 = vunpack.c.l.b16 %v352
    %v1857 = vunpack.c.h.b16 %v352
    %v1858 = vunpack.c.l.b16 %v353
    %v1859 = vunpack.c.h.b16 %v353
    %v1860 = vunpack.c.l.b16 %v354
    %v1861 = vunpack.c.h.b16 %v354
    %v1862 = vunpack.c.l.b16 %v355
    %v1863 = vunpack.c.h.b16 %v355
    %v1864 = vunpack.c.l.b16 %v356
    %v1865 = vunpack.c.h.b16 %v356
    %v1866 = vunpack.c.l.b16 %v357
    %v1867 = vunpack.c.h.b16 %v357
    %v1868 = vunpack.c.l.b16 %v358
    %v1869 = vunpack.c.h.b16 %v358
    %v1870 = vunpack.c.l.b16 %v359
    %v1871 = vunpack.c.h.b16 %v359
    %v1872 = vunpack.c.l.b16 %v360
    %v1873 = vunpack.c.h.b16 %v360
    %v1874 = vunpack.c.l.b16 %v361
    %v1875 = vunpack.c.h.b16 %v361
    %v1876 = vunpack.c.l.b16 %v362
    %v1877 = vunpack.c.h.b16 %v362
    %v1878 = vunpack.c.l.b16 %v363
    %v1879 = vunpack.c.h.b16 %v363
    %v1880 = vunpack.c.l.b16 %v364
    %v1881 = vunpack.c.h.b16 %v364
    %v1882 = vunpack.c.l.b16 %v365
    %v1883 = vunpack.c.h.b16 %v365
    %v1884 = vunpack.c.l.b16 %v366
    %v1885 = vunpack.c.h.b16 %v366
    %v1886 = vunpack.c.l.b16 %v367
    %v1887 = vunpack.c.h.b16 %v367
    %v1888 = vunpack.c.l.b16 %v368
    %v1889 = vunpack.c.h.b16 %v368
    %v1890 = vunpack.c.l.b16 %v369
    %v1891 = vunpack.c.h.b16 %v369
    %v1892 = vunpack.c.l.b16 %v370
    %v1893 = vunpack.c.h.b16 %v370
    %v1894 = vunpack.c.l.b16 %v371
    %v1895 = vunpack.c.h.b16 %v371
    %v1896 = vunpack.c.l.b16 %v372
    %v1897 = vunpack.c.h.b16 %v372
    %v1898 = vunpack.c.l.b16 %v373
    %v1899 = vunpack.c.h.b16 %v373
    %v1900 = vunpack.c.l.b16 %v374
    %v1901 = vunpack.c.h.b16 %v374
    %v1902 = vunpack.c.l.b16 %v375
    %v1903 = vunpack.c.h.b16 %v375
    %v1904 = vunpack.c.l.b16 %v376
    %v1905 = vunpack.c.h.b16 %v376
    %v1906 = vunpack.c.l.b16 %v377
    %v1907 = vunpack.c.h.b16 %v377
    %v1908 = vunpack.c.l.b16 %v378
    %v1909 = vunpack.c.h.b16 %v378
    %v1910 = vunpack.c.l.b16 %v379
    %v1911 = vunpack.c.h.b16 %v379
    %v1912 = vunpack.c.l.b16 %v380
    %v1913 = vunpack.c.h.b16 %v380
    %v1914 = vunpack.c.l.b16 %v381
    %v1915 = vunpack.c.h.b16 %v381
    %v1916 = vunpack.c.l.b16 %v382
    %v1917 = vunpack.c.h.b16 %v382
    %v1918 = vunpack.c.l.b16 %v383
    %v1919 = vunpack.c.h.b16 %v383
    %v1920 = vunpack.c.l.b16 %v384
    %v1921 = vunpack.c.h.b16 %v384
    %v1922 = vunpack.c.l.b16 %v385
    %v1923 = vunpack.c.h.b16 %v385
    %v1924 = vunpack.c.l.b16 %v386
    %v1925 = vunpack.c.h.b16 %v386
    %v1926 = vunpack.c.l.b16 %v387
    %v1927 = vunpack.c.h.b16 %v387
    %v1928 = vunpack.c.l.b16 %v388
    %v1929 = vunpack.c.h.b16 %v388
    %v1930 = vunpack.c.l.b16 %v389
    %v1931 = vunpack.c.h.b16 %v389
    %v1932 = vunpack.c.l.b16 %v390
    %v1933 = vunpack.c.h.b16 %v390
    %v1934 = vunpack.c.l.b16 %v391
    %v1935 = vunpack.c.h.b16 %v391
    %v1936 = vunpack.c.l.b16 %v392
    %v1937 = vunpack.c.h.b16 %v392
    %v1938 = vunpack.c.l.b16 %v393
    %v1939 = vunpack.c.h.b16 %v393
    %v1940 = vunpack.c.l.b16 %v394
    %v1941 = vunpack.c.h.b16 %v394
    %v1942 = vunpack.c.l.b16 %v395
    %v1943 = vunpack.c.h.b16 %v395
    %v1944 = vunpack.c.l.b16 %v396
    %v1945 = vunpack.c.h.b16 %v396
    %v1946 = vunpack.c.l.b16 %v397
    %v1947 = vunpack.c.h.b16 %v397
    %v1948 = vunpack.c.l.b16 %v398
    %v1949 = vunpack.c.h.b16 %v398
    %v1950 = vunpack.c.l.b16 %v399
    %v1951 = vunpack.c.h.b16 %v399
    %v1952 = vunpack.c.l.b16 %v400
    %v1953 = vunpack.c.h.b16 %v400
    %v1954 = vunpack.c.l.b16 %v401
    %v1955 = vunpack.c.h.b16 %v401
    %v1956 = vunpack.c.l.b16 %v402
    %v1957 = vunpack.c.h.b16 %v402
    %v1958 = vunpack.c.l.b16 %v403
    %v1959 = vunpack.c.h.b16 %v403
    %v1960 = vunpack.c.l.b16 %v404
    %v1961 = vunpack.c.h.b16 %v404
    %v1962 = vunpack.c.l.b16 %v405
    %v1963 = vunpack.c.h.b16 %v405
    %v1964 = vunpack.c.l.b16 %v406
    %v1965 = vunpack.c.h.b16 %v406
    %v1966 = vunpack.c.l.b16 %v407
    %v1967 = vunpack.c.h.b16 %v407
    %v1968 = vunpack.c.l.b16 %v408
    %v1969 = vunpack.c.h.b16 %v408
    %v1970 = vunpack.c.l.b16 %v409
    %v1971 = vunpack.c.h.b16 %v409
    %v1972 = vunpack.c.l.b16 %v410
    %v1973 = vunpack.c.h.b16 %v410
    %v1974 = vunpack.c.l.b16 %v411
    %v1975 = vunpack.c.h.b16 %v411
    %v1976 = vunpack.c.l.b16 %v412
    %v1977 = vunpack.c.h.b16 %v412
    %v1978 = vunpack.c.l.b16 %v413
    %v1979 = vunpack.c.h.b16 %v413
    %v1980 = vunpack.c.l.b16 %v414
    %v1981 = vunpack.c.h.b16 %v414
    %v1982 = vunpack.c.l.b16 %v415
    %v1983 = vunpack.c.h.b16 %v415
    %v1984 = vunpack.c.l.b16 %v416
    %v1985 = vunpack.c.h.b16 %v416
    %v1986 = vunpack.c.l.b16 %v417
    %v1987 = vunpack.c.h.b16 %v417
    %v1988 = vunpack.c.l.b16 %v418
    %v1989 = vunpack.c.h.b16 %v418
    %v1990 = vunpack.c.l.b16 %v419
    %v1991 = vunpack.c.h.b16 %v419
    %v1992 = vunpack.c.l.b16 %v420
    %v1993 = vunpack.c.h.b16 %v420
    %v1994 = vunpack.c.l.b16 %v421
    %v1995 = vunpack.c.h.b16 %v421
    %v1996 = vunpack.c.l.b16 %v422
    %v1997 = vunpack.c.h.b16 %v422
    %v1998 = vunpack.c.l.b16 %v423
    %v1999 = vunpack.c.h.b16 %v423
    %v2000 = vunpack.c.l.b16 %v424
    %v2001 = vunpack.c.h.b16 %v424
    %v2002 = vunpack.c.l.b16 %v425
    %v2003 = vunpack.c.h.b16 %v425
    %v2004 = vunpack.c.l.b16 %v426
    %v2005 = vunpack.c.h.b16 %v426
    %v2006 = vunpack.c.l.b16 %v427
    %v2007 = vunpack.c.h.b16 %v427
    %v2008 = vunpack.c.l.b16 %v428
    %v2009 = vunpack.c.h.b16 %v428
    %v2010 = vunpack.c.l.b16 %v429
    %v2011 = vunpack.c.h.b16 %v429
    %v2012 = vunpack.c.l.b16 %v430
    %v2013 = vunpack.c.h.b16 %v430
    %v2014 = vunpack.c.l.b16 %v431
    %v2015 = vunpack.c.h.b16 %v431
    %v2016 = vunpack.c.l.b16 %v432
    %v2017 = vunpack.c.h.b16 %v432
    %v2018 = vunpack.c.l.b16 %v433
    %v2019 = vunpack.c.h.b16 %v433
    %v2020 = vunpack.c.l.b16 %v434
    %v2021 = vunpack.c.h.b16 %v434
    %v2022 = vunpack.c.l.b16 %v435
    %v2023 = vunpack.c.h.b16 %v435
    %v2024 = vunpack.c.l.b16 %v436
    %v2025 = vunpack.c.h.b16 %v436
    %v2026 = vunpack.c.l.b16 %v437
    %v2027 = vunpack.c.h.b16 %v437
    %v2028 = vunpack.c.l.b16 %v438
    %v2029 = vunpack.c.h.b16 %v438
    %v2030 = vunpack.c.l.b16 %v439
    %v2031 = vunpack.c.h.b16 %v439
    %v2032 = vunpack.c.l.b16 %v440
    %v2033 = vunpack.c.h.b16 %v440
    %v2034 = vunpack.c.l.b16 %v441
    %v2035 = vunpack.c.h.b16 %v441
    %v2036 = vunpack.c.l.b16 %v442
    %v2037 = vunpack.c.h.b16 %v442
    %v2038 = vunpack.c.l.b16 %v443
    %v2039 = vunpack.c.h.b16 %v443
    %v2040 = vunpack.c.l.b16 %v444
    %v2041 = vunpack.c.h.b16 %v444
    %v2042 = vunpack.c.l.b16 %v445
    %v2043 = vunpack.c.h.b16 %v445
    %v2044 = vunpack.c.l.b16 %v446
    %v2045 = vunpack.c.h.b16 %v446
    %v2046 = vunpack.c.l.b16 %v447
    %v2047 = vunpack.c.h.b16 %v447
    %v2048 = vunpack.c.l.b16 %v448
    %v2049 = vunpack.c.h.b16 %v448
    %v2050 = vunpack.c.l.b16 %v449
    %v2051 = vunpack.c.h.b16 %v449
    %v2052 = vunpack.c.l.b16 %v450
    %v2053 = vunpack.c.h.b16 %v450
    %v2054 = vunpack.c.l.b16 %v451
    %v2055 = vunpack.c.h.b16 %v451
    %v2056 = vunpack.c.l.b16 %v452
    %v2057 = vunpack.c.h.b16 %v452
    %v2058 = vunpack.c.l.b16 %v453
    %v2059 = vunpack.c.h.b16 %v453
    %v2060 = vunpack.c.l.b16 %v454
    %v2061 = vunpack.c.h.b16 %v454
    %v2062 = vunpack.c.l.b16 %v455
    %v2063 = vunpack.c.h.b16 %v455
    %v2064 = vunpack.c.l.b16 %v456
    %v2065 = vunpack.c.h.b16 %v456
    %v2066 = vunpack.c.l.b16 %v457
    %v2067 = vunpack.c.h.b16 %v457
    %v2068 = vunpack.c.l.b16 %v458
    %v2069 = vunpack.c.h.b16 %v458
    %v2070 = vunpack.c.l.b16 %v459
    %v2071 = vunpack.c.h.b16 %v459
    %v2072 = vunpack.c.l.b16 %v460
    %v2073 = vunpack.c.h.b16 %v460
    %v2074 = vunpack.c.l.b16 %v461
    %v2075 = vunpack.c.h.b16 %v461
    %v2076 = vunpack.c.l.b16 %v462
    %v2077 = vunpack.c.h.b16 %v462
    %v2078 = vunpack.c.l.b16 %v463
    %v2079 = vunpack.c.h.b16 %v463
    %v2080 = vunpack.c.l.b16 %v464
    %v2081 = vunpack.c.h.b16 %v464
    %v2082 = vunpack.c.l.b16 %v465
    %v2083 = vunpack.c.h.b16 %v465
    %v2084 = vunpack.c.l.b16 %v466
    %v2085 = vunpack.c.h.b16 %v466
    %v2086 = vunpack.c.l.b16 %v467
    %v2087 = vunpack.c.h.b16 %v467
    %v2088 = vunpack.c.l.b16 %v468
    %v2089 = vunpack.c.h.b16 %v468
    %v2090 = vunpack.c.l.b16 %v469
    %v2091 = vunpack.c.h.b16 %v469
    %v2092 = vunpack.c.l.b16 %v470
    %v2093 = vunpack.c.h.b16 %v470
    %v2094 = vunpack.c.l.b16 %v471
    %v2095 = vunpack.c.h.b16 %v471
    %v2096 = vunpack.c.l.b16 %v472
    %v2097 = vunpack.c.h.b16 %v472
    %v2098 = vunpack.c.l.b16 %v473
    %v2099 = vunpack.c.h.b16 %v473
    %v2100 = vunpack.c.l.b16 %v474
    %v2101 = vunpack.c.h.b16 %v474
    %v2102 = vunpack.c.l.b16 %v475
    %v2103 = vunpack.c.h.b16 %v475
    %v2104 = vunpack.c.l.b16 %v476
    %v2105 = vunpack.c.h.b16 %v476
    %v2106 = vunpack.c.l.b16 %v477
    %v2107 = vunpack.c.h.b16 %v477
    %v2108 = vunpack.c.l.b16 %v478
    %v2109 = vunpack.c.h.b16 %v478
    %v2110 = vunpack.c.l.b16 %v479
    %v2111 = vunpack.c.h.b16 %v479
    %v2112 = vunpack.c.l.b16 %v480
    %v2113 = vunpack.c.h.b16 %v480
    %v2114 = vunpack.c.l.b16 %v481
    %v2115 = vunpack.c.h.b16 %v481
    %v2116 = vunpack.c.l.b16 %v482
    %v2117 = vunpack.c.h.b16 %v482
    %v2118 = vunpack.c.l.b16 %v483
    %v2119 = vunpack.c.h.b16 %v483
    %v2120 = vunpack.c.l.b16 %v484
    %v2121 = vunpack.c.h.b16 %v484
    %v2122 = vunpack.c.l.b16 %v485
    %v2123 = vunpack.c.h.b16 %v485
    %v2124 = vunpack.c.l.b16 %v486
    %v2125 = vunpack.c.h.b16 %v486
    %v2126 = vunpack.c.l.b16 %v487
    %v2127 = vunpack.c.h.b16 %v487
    %v2128 = vunpack.c.l.b16 %v488
    %v2129 = vunpack.c.h.b16 %v488
    %v2130 = vunpack.c.l.b16 %v489
    %v2131 = vunpack.c.h.b16 %v489
    %v2132 = vunpack.c.l.b16 %v490
    %v2133 = vunpack.c.h.b16 %v490
    %v2134 = vunpack.c.l.b16 %v491
    %v2135 = vunpack.c.h.b16 %v491
    %v2136 = vunpack.c.l.b16 %v492
    %v2137 = vunpack.c.h.b16 %v492
    %v2138 = vunpack.c.l.b16 %v493
    %v2139 = vunpack.c.h.b16 %v493
    %v2140 = vunpack.c.l.b16 %v494
    %v2141 = vunpack.c.h.b16 %v494
    %v2142 = vunpack.c.l.b16 %v495
    %v2143 = vunpack.c.h.b16 %v495
    %v2144 = vunpack.c.l.b16 %v496
    %v2145 = vunpack.c.h.b16 %v496
    %v2146 = vunpack.c.l.b16 %v497
    %v2147 = vunpack.c.h.b16 %v497
    %v2148 = vunpack.c.l.b16 %v498
    %v2149 = vunpack.c.h.b16 %v498
    %v2150 = vunpack.c.l.b16 %v499
    %v2151 = vunpack.c.h.b16 %v499
    %v2152 = vunpack.c.l.b16 %v500
    %v2153 = vunpack.c.h.b16 %v500
    %v2154 = vunpack.c.l.b16 %v501
    %v2155 = vunpack.c.h.b16 %v501
    %v2156 = vunpack.c.l.b16 %v502
    %v2157 = vunpack.c.h.b16 %v502
    %v2158 = vunpack.c.l.b16 %v503
    %v2159 = vunpack.c.h.b16 %v503
    %v2160 = vunpack.c.l.b16 %v504
    %v2161 = vunpack.c.h.b16 %v504
    %v2162 = vunpack.c.l.b16 %v505
    %v2163 = vunpack.c.h.b16 %v505
    %v2164 = vunpack.c.l.b16 %v506
    %v2165 = vunpack.c.h.b16 %v506
    %v2166 = vunpack.c.l.b16 %v507
    %v2167 = vunpack.c.h.b16 %v507
    %v2168 = vunpack.c.l.b16 %v508
    %v2169 = vunpack.c.h.b16 %v508
    %v2170 = vunpack.c.l.b16 %v509
    %v2171 = vunpack.c.h.b16 %v509
    %v2172 = vunpack.c.l.b16 %v510
    %v2173 = vunpack.c.h.b16 %v510
    %v2174 = vunpack.c.l.b16 %v511
    %v2175 = vunpack.c.h.b16 %v511
    %v2176 = vunpack.c.l.b16 %v512
    %v2177 = vunpack.c.h.b16 %v512
    %v2178 = vunpack.c.l.b16 %v513
    %v2179 = vunpack.c.h.b16 %v513
    %v2180 = vunpack.c.l.b16 %v514
    %v2181 = vunpack.c.h.b16 %v514
    %v2182 = vunpack.c.l.b16 %v515
    %v2183 = vunpack.c.h.b16 %v515
    %v2184 = vunpack.c.l.b16 %v516
    %v2185 = vunpack.c.h.b16 %v516
    %v2186 = vunpack.c.l.b16 %v517
    %v2187 = vunpack.c.h.b16 %v517
    %v2188 = vunpack.c.l.b16 %v518
    %v2189 = vunpack.c.h.b16 %v518
    %v2190 = vunpack.c.l.b16 %v519
    %v2191 = vunpack.c.h.b16 %v519
    %v2192 = vunpack.c.l.b16 %v520
    %v2193 = vunpack.c.h.b16 %v520
    %v2194 = vunpack.c.l.b16 %v521
    %v2195 = vunpack.c.h.b16 %v521
    %v2196 = vunpack.c.l.b16 %v522
    %v2197 = vunpack.c.h.b16 %v522
    %v2198 = vunpack.c.l.b16 %v523
    %v2199 = vunpack.c.h.b16 %v523
    %v2200 = vunpack.c.l.b16 %v524
    %v2201 = vunpack.c.h.b16 %v524
    %v2202 = vunpack.c.l.b16 %v525
    %v2203 = vunpack.c.h.b16 %v525
    %v2204 = vunpack.c.l.b16 %v526
    %v2205 = vunpack.c.h.b16 %v526
    %v2206 = vunpack.c.l.b16 %v527
    %v2207 = vunpack.c.h.b16 %v527
    %v2208 = vunpack.c.l.b16 %v528
    %v2209 = vunpack.c.h.b16 %v528
    %v2210 = vunpack.c.l.b16 %v529
    %v2211 = vunpack.c.h.b16 %v529
    %v2212 = vunpack.c.l.b16 %v530
    %v2213 = vunpack.c.h.b16 %v530
    %v2214 = vunpack.c.l.b16 %v531
    %v2215 = vunpack.c.h.b16 %v531
    %v2216 = vunpack.c.l.b16 %v532
    %v2217 = vunpack.c.h.b16 %v532
    %v2218 = vunpack.c.l.b16 %v533
    %v2219 = vunpack.c.h.b16 %v533
    %v2220 = vunpack.c.l.b16 %v534
    %v2221 = vunpack.c.h.b16 %v534
    %v2222 = vunpack.c.l.b16 %v535
    %v2223 = vunpack.c.h.b16 %v535
    %v2224 = vunpack.c.l.b16 %v536
    %v2225 = vunpack.c.h.b16 %v536
    %v2226 = vunpack.c.l.b16 %v537
    %v2227 = vunpack.c.h.b16 %v537
    %v2228 = vunpack.c.l.b16 %v538
    %v2229 = vunpack.c.h.b16 %v538
    %v2230 = vunpack.c.l.b16 %v539
    %v2231 = vunpack.c.h.b16 %v539
    %v2232 = vunpack.c.l.b16 %v540
    %v2233 = vunpack.c.h.b16 %v540
    %v2234 = vunpack.c.l.b16 %v541
    %v2235 = vunpack.c.h.b16 %v541
    %v2236 = vunpack.c.l.b16 %v542
    %v2237 = vunpack.c.h.b16 %v542
    %v2238 = vunpack.c.l.b16 %v543
    %v2239 = vunpack.c.h.b16 %v543
    %v2240 = vunpack.c.l.b16 %v544
    %v2241 = vunpack.c.h.b16 %v544
    %v2242 = vunpack.c.l.b16 %v545
    %v2243 = vunpack.c.h.b16 %v545
    %v2244 = vunpack.c.l.b16 %v546
    %v2245 = vunpack.c.h.b16 %v546
    %v2246 = vunpack.c.l.b16 %v547
    %v2247 = vunpack.c.h.b16 %v547
    %v2248 = vunpack.c.l.b16 %v548
    %v2249 = vunpack.c.h.b16 %v548
    %v2250 = vunpack.c.l.b16 %v549
    %v2251 = vunpack.c.h.b16 %v549
    %v2252 = vunpack.c.l.b16 %v550
    %v2253 = vunpack.c.h.b16 %v550
    %v2254 = vunpack.c.l.b16 %v551
    %v2255 = vunpack.c.h.b16 %v551
    %v2256 = vunpack.c.l.b16 %v552
    %v2257 = vunpack.c.h.b16 %v552
    %v2258 = vunpack.c.l.b16 %v553
    %v2259 = vunpack.c.h.b16 %v553
    %v2260 = vunpack.c.l.b16 %v554
    %v2261 = vunpack.c.h.b16 %v554
    %v2262 = vunpack.c.l.b16 %v555
    %v2263 = vunpack.c.h.b16 %v555
    %v2264 = vunpack.c.l.b16 %v556
    %v2265 = vunpack.c.h.b16 %v556
    %v2266 = vunpack.c.l.b16 %v557
    %v2267 = vunpack.c.h.b16 %v557
    %v2268 = vunpack.c.l.b16 %v558
    %v2269 = vunpack.c.h.b16 %v558
    %v2270 = vunpack.c.l.b16 %v559
    %v2271 = vunpack.c.h.b16 %v559
    %v2272 = vunpack.c.l.b16 %v560
    %v2273 = vunpack.c.h.b16 %v560
    %v2274 = vunpack.c.l.b16 %v561
    %v2275 = vunpack.c.h.b16 %v561
    %v2276 = vunpack.c.l.b16 %v562
    %v2277 = vunpack.c.h.b16 %v562
    %v2278 = vunpack.c.l.b16 %v563
    %v2279 = vunpack.c.h.b16 %v563
    %v2280 = vunpack.c.l.b16 %v564
    %v2281 = vunpack.c.h.b16 %v564
    %v2282 = vunpack.c.l.b16 %v565
    %v2283 = vunpack.c.h.b16 %v565
    %v2284 = vunpack.c.l.b16 %v566
    %v2285 = vunpack.c.h.b16 %v566
    %v2286 = vunpack.c.l.b16 %v567
    %v2287 = vunpack.c.h.b16 %v567
    %v2288 = vunpack.c.l.b16 %v568
    %v2289 = vunpack.c.h.b16 %v568
    %v2290 = vunpack.c.l.b16 %v569
    %v2291 = vunpack.c.h.b16 %v569
    %v2292 = vunpack.c.l.b16 %v570
    %v2293 = vunpack.c.h.b16 %v570
    %v2294 = vunpack.c.l.b16 %v571
    %v2295 = vunpack.c.h.b16 %v571
    %v2296 = vunpack.c.l.b16 %v572
    %v2297 = vunpack.c.h.b16 %v572
    %v2298 = vunpack.c.l.b16 %v573
    %v2299 = vunpack.c.h.b16 %v573
    %v2300 = vunpack.c.l.b16 %v574
    %v2301 = vunpack.c.h.b16 %v574
    %v2302 = vunpack.c.l.b16 %v575
    %v2303 = vunpack.c.h.b16 %v575
    %v2304 = vunpack.c.l.b16 %v576
    %v2305 = vunpack.c.h.b16 %v576
    %v2306 = vunpack.c.l.b16 %v577
    %v2307 = vunpack.c.h.b16 %v577
    %v2308 = vunpack.c.l.b16 %v578
    %v2309 = vunpack.c.h.b16 %v578
    %v2310 = vunpack.c.l.b16 %v579
    %v2311 = vunpack.c.h.b16 %v579
    %v2312 = vunpack.c.l.b16 %v580
    %v2313 = vunpack.c.h.b16 %v580
    %v2314 = vunpack.c.l.b16 %v581
    %v2315 = vunpack.c.h.b16 %v581
    %v2316 = vunpack.c.l.b16 %v582
    %v2317 = vunpack.c.h.b16 %v582
    %v2318 = vunpack.c.l.b16 %v583
    %v2319 = vunpack.c.h.b16 %v583
    %v2320 = vunpack.c.l.b16 %v584
    %v2321 = vunpack.c.h.b16 %v584
    %v2322 = vunpack.c.l.b16 %v585
    %v2323 = vunpack.c.h.b16 %v585
    %v2324 = vunpack.c.l.b16 %v586
    %v2325 = vunpack.c.h.b16 %v586
    %v2326 = vunpack.c.l.b16 %v587
    %v2327 = vunpack.c.h.b16 %v587
    %v2328 = vunpack.c.l.b16 %v588
    %v2329 = vunpack.c.h.b16 %v588
    %v2330 = vunpack.c.l.b16 %v589
    %v2331 = vunpack.c.h.b16 %v589
    %v2332 = vunpack.c.l.b16 %v590
    %v2333 = vunpack.c.h.b16 %v590
    %v2334 = vunpack.c.l.b16 %v591
    %v2335 = vunpack.c.h.b16 %v591
    %v2336 = vunpack.c.l.b16 %v592
    %v2337 = vunpack.c.h.b16 %v592
    %v2338 = vunpack.c.l.b16 %v593
    %v2339 = vunpack.c.h.b16 %v593
    %v2340 = vunpack.c.l.b16 %v594
    %v2341 = vunpack.c.h.b16 %v594
    %v2342 = vunpack.c.l.b16 %v595
    %v2343 = vunpack.c.h.b16 %v595
    %v2344 = vunpack.c.l.b16 %v596
    %v2345 = vunpack.c.h.b16 %v596
    %v2346 = vunpack.c.l.b16 %v597
    %v2347 = vunpack.c.h.b16 %v597
    %v2348 = vunpack.c.l.b16 %v598
    %v2349 = vunpack.c.h.b16 %v598
    %v2350 = vunpack.c.l.b16 %v599
    %v2351 = vunpack.c.h.b16 %v599
    %v2352 = vunpack.c.l.b16 %v600
    %v2353 = vunpack.c.h.b16 %v600
    %v2354 = vunpack.c.l.b16 %v601
    %v2355 = vunpack.c.h.b16 %v601
    %v2356 = vunpack.c.l.b16 %v602
    %v2357 = vunpack.c.h.b16 %v602
    %v2358 = vunpack.c.l.b16 %v603
    %v2359 = vunpack.c.h.b16 %v603
    %v2360 = vunpack.c.l.b16 %v604
    %v2361 = vunpack.c.h.b16 %v604
    %v2362 = vunpack.c.l.b16 %v605
    %v2363 = vunpack.c.h.b16 %v605
    %v2364 = vunpack.c.l.b16 %v606
    %v2365 = vunpack.c.h.b16 %v606
    %v2366 = vunpack.c.l.b16 %v607
    %v2367 = vunpack.c.h.b16 %v607
    %v2368 = vunpack.c.l.b16 %v608
    %v2369 = vunpack.c.h.b16 %v608
    %v2370 = vunpack.c.l.b16 %v609
    %v2371 = vunpack.c.h.b16 %v609
    %v2372 = vunpack.c.l.b16 %v610
    %v2373 = vunpack.c.h.b16 %v610
    %v2374 = vunpack.c.l.b16 %v611
    %v2375 = vunpack.c.h.b16 %v611
    %v2376 = vunpack.c.l.b16 %v612
    %v2377 = vunpack.c.h.b16 %v612
    %v2378 = vunpack.c.l.b16 %v613
    %v2379 = vunpack.c.h.b16 %v613
    %v2380 = vunpack.c.l.b16 %v614
    %v2381 = vunpack.c.h.b16 %v614
    %v2382 = vunpack.c.l.b16 %v615
    %v2383 = vunpack.c.h.b16 %v615
    %v2384 = vunpack.c.l.b16 %v616
    %v2385 = vunpack.c.h.b16 %v616
    %v2386 = vunpack.c.l.b16 %v617
    %v2387 = vunpack.c.h.b16 %v617
    %v2388 = vunpack.c.l.b16 %v618
    %v2389 = vunpack.c.h.b16 %v618
    %v2390 = vunpack.c.l.b16 %v619
    %v2391 = vunpack.c.h.b16 %v619
    %v2392 = vunpack.c.l.b16 %v620
    %v2393 = vunpack.c.h.b16 %v620
    %v2394 = vunpack.c.l.b16 %v621
    %v2395 = vunpack.c.h.b16 %v621
    %v2396 = vunpack.c.l.b16 %v622
    %v2397 = vunpack.c.h.b16 %v622
    %v2398 = vunpack.c.l.b16 %v623
    %v2399 = vunpack.c.h.b16 %v623
    %v2400 = vunpack.c.l.b16 %v624
    %v2401 = vunpack.c.h.b16 %v624
    %v2402 = vunpack.c.l.b16 %v625
    %v2403 = vunpack.c.h.b16 %v625
    %v2404 = vunpack.c.l.b16 %v626
    %v2405 = vunpack.c.h.b16 %v626
    %v2406 = vunpack.c.l.b16 %v627
    %v2407 = vunpack.c.h.b16 %v627
    %v2408 = vunpack.c.l.b16 %v628
    %v2409 = vunpack.c.h.b16 %v628
    %v2410 = vunpack.c.l.b16 %v629
    %v2411 = vunpack.c.h.b16 %v629
    %v2412 = vunpack.c.l.b16 %v630
    %v2413 = vunpack.c.h.b16 %v630
    %v2414 = vunpack.c.l.b16 %v631
    %v2415 = vunpack.c.h.b16 %v631
    %v2416 = vunpack.c.l.b16 %v632
    %v2417 = vunpack.c.h.b16 %v632
    %v2418 = vunpack.c.l.b16 %v633
    %v2419 = vunpack.c.h.b16 %v633
    %v2420 = vunpack.c.l.b16 %v634
    %v2421 = vunpack.c.h.b16 %v634
    %v2422 = vunpack.c.l.b16 %v635
    %v2423 = vunpack.c.h.b16 %v635
    %v2424 = vunpack.c.l.b16 %v636
    %v2425 = vunpack.c.h.b16 %v636
    %v2426 = vunpack.c.l.b16 %v637
    %v2427 = vunpack.c.h.b16 %v637
    %v2428 = vunpack.c.l.b16 %v638
    %v2429 = vunpack.c.h.b16 %v638
    %v2430 = vunpack.c.l.b16 %v639
    %v2431 = vunpack.c.h.b16 %v639
    %v2432 = vunpack.c.l.b16 %v640
    %v2433 = vunpack.c.h.b16 %v640
    %v2434 = vunpack.c.l.b16 %v641
    %v2435 = vunpack.c.h.b16 %v641
    %v2436 = vunpack.c.l.b16 %v642
    %v2437 = vunpack.c.h.b16 %v642
    %v2438 = vunpack.c.l.b16 %v643
    %v2439 = vunpack.c.h.b16 %v643
    %v2440 = vunpack.c.l.b16 %v644
    %v2441 = vunpack.c.h.b16 %v644
    %v2442 = vunpack.c.l.b16 %v645
    %v2443 = vunpack.c.h.b16 %v645
    %v2444 = vunpack.c.l.b16 %v646
    %v2445 = vunpack.c.h.b16 %v646
    %v2446 = vunpack.c.l.b16 %v647
    %v2447 = vunpack.c.h.b16 %v647
    %v2448 = vunpack.c.l.b16 %v648
    %v2449 = vunpack.c.h.b16 %v648
    %v2450 = vunpack.c.l.b16 %v649
    %v2451 = vunpack.c.h.b16 %v649
    %v2452 = vunpack.c.l.b16 %v650
    %v2453 = vunpack.c.h.b16 %v650
    %v2454 = vunpack.c.l.b16 %v651
    %v2455 = vunpack.c.h.b16 %v651
    %v2456 = vunpack.c.l.b16 %v652
    %v2457 = vunpack.c.h.b16 %v652
    %v2458 = vunpack.c.l.b16 %v653
    %v2459 = vunpack.c.h.b16 %v653
    %v2460 = vunpack.c.l.b16 %v654
    %v2461 = vunpack.c.h.b16 %v654
    %v2462 = vunpack.c.l.b16 %v655
    %v2463 = vunpack.c.h.b16 %v655
    %v2464 = vunpack.c.l.b16 %v656
    %v2465 = vunpack.c.h.b16 %v656
    %v2466 = vunpack.c.l.b16 %v657
    %v2467 = vunpack.c.h.b16 %v657
    %v2468 = vunpack.c.l.b16 %v658
    %v2469 = vunpack.c.h.b16 %v658
    %v2470 = vunpack.c.l.b16 %v659
    %v2471 = vunpack.c.h.b16 %v659
    %v2472 = vunpack.c.l.b16 %v660
    %v2473 = vunpack.c.h.b16 %v660
    %v2474 = vunpack.c.l.b16 %v661
    %v2475 = vunpack.c.h.b16 %v661
    %v2476 = vunpack.c.l.b16 %v662
    %v2477 = vunpack.c.h.b16 %v662
    %v2478 = vunpack.c.l.b16 %v663
    %v2479 = vunpack.c.h.b16 %v663
    %v2480 = vunpack.c.l.b16 %v664
    %v2481 = vunpack.c.h.b16 %v664
    %v2482 = vunpack.c.l.b16 %v665
    %v2483 = vunpack.c.h.b16 %v665
    %v2484 = vunpack.c.l.b16 %v666
    %v2485 = vunpack.c.h.b16 %v666
    %v2486 = vunpack.c.l.b16 %v667
    %v2487 = vunpack.c.h.b16 %v667
    %v2488 = vunpack.c.l.b16 %v668
    %v2489 = vunpack.c.h.b16 %v668
    %v2490 = vunpack.c.l.b16 %v669
    %v2491 = vunpack.c.h.b16 %v669
    %v2492 = vunpack.c.l.b16 %v670
    %v2493 = vunpack.c.h.b16 %v670
    %v2494 = vunpack.c.l.b16 %v671
    %v2495 = vunpack.c.h.b16 %v671
    %v2496 = vunpack.c.l.b16 %v672
    %v2497 = vunpack.c.h.b16 %v672
    %v2498 = vunpack.c.l.b16 %v673
    %v2499 = vunpack.c.h.b16 %v673
    %v2500 = vunpack.c.l.b16 %v674
    %v2501 = vunpack.c.h.b16 %v674
    %v2502 = vunpack.c.l.b16 %v675
    %v2503 = vunpack.c.h.b16 %v675
    %v2504 = vunpack.c.l.b16 %v676
    %v2505 = vunpack.c.h.b16 %v676
    %v2506 = vunpack.c.l.b16 %v677
    %v2507 = vunpack.c.h.b16 %v677
    %v2508 = vunpack.c.l.b16 %v678
    %v2509 = vunpack.c.h.b16 %v678
    %v2510 = vunpack.c.l.b16 %v679
    %v2511 = vunpack.c.h.b16 %v679
    %v2512 = vunpack.c.l.b16 %v680
    %v2513 = vunpack.c.h.b16 %v680
    %v2514 = vunpack.c.l.b16 %v681
    %v2515 = vunpack.c.h.b16 %v681
    %v2516 = vunpack.c.l.b16 %v682
    %v2517 = vunpack.c.h.b16 %v682
    %v2518 = vunpack.c.l.b16 %v683
    %v2519 = vunpack.c.h.b16 %v683
    %v2520 = vunpack.c.l.b16 %v684
    %v2521 = vunpack.c.h.b16 %v684
    %v2522 = vunpack.c.l.b16 %v685
    %v2523 = vunpack.c.h.b16 %v685
    %v2524 = vunpack.c.l.b16 %v686
    %v2525 = vunpack.c.h.b16 %v686
    %v2526 = vunpack.c.l.b16 %v687
    %v2527 = vunpack.c.h.b16 %v687
    %v2528 = vunpack.c.l.b16 %v688
    %v2529 = vunpack.c.h.b16 %v688
    %v2530 = vunpack.c.l.b16 %v689
    %v2531 = vunpack.c.h.b16 %v689
    %v2532 = vunpack.c.l.b16 %v690
    %v2533 = vunpack.c.h.b16 %v690
    %v2534 = vunpack.c.l.b16 %v691
    %v2535 = vunpack.c.h.b16 %v691
    %v2536 = vunpack.c.l.b16 %v692
    %v2537 = vunpack.c.h.b16 %v692
    %v2538 = vunpack.c.l.b16 %v693
    %v2539 = vunpack.c.h.b16 %v693
    %v2540 = vunpack.c.l.b16 %v694
    %v2541 = vunpack.c.h.b16 %v694
    %v2542 = vunpack.c.l.b16 %v695
    %v2543 = vunpack.c.h.b16 %v695
    %v2544 = vunpack.c.l.b16 %v696
    %v2545 = vunpack.c.h.b16 %v696
    %v2546 = vunpack.c.l.b16 %v697
    %v2547 = vunpack.c.h.b16 %v697
    %v2548 = vunpack.c.l.b16 %v698
    %v2549 = vunpack.c.h.b16 %v698
    %v2550 = vunpack.c.l.b16 %v699
    %v2551 = vunpack.c.h.b16 %v699
    %v2552 = vunpack.c.l.b16 %v700
    %v2553 = vunpack.c.h.b16 %v700
    %v2554 = vunpack.c.l.b16 %v701
    %v2555 = vunpack.c.h.b16 %v701
    %v2556 = vunpack.c.l.b16 %v702
    %v2557 = vunpack.c.h.b16 %v702
    %v2558 = vunpack.c.l.b16 %v703
    %v2559 = vunpack.c.h.b16 %v703
    %v2560 = vunpack.c.l.b16 %v704
    %v2561 = vunpack.c.h.b16 %v704
    %v2562 = vunpack.c.l.b16 %v705
    %v2563 = vunpack.c.h.b16 %v705
    %v2564 = vunpack.c.l.b16 %v706
    %v2565 = vunpack.c.h.b16 %v706
    %v2566 = vunpack.c.l.b16 %v707
    %v2567 = vunpack.c.h.b16 %v707
    %v2568 = vunpack.c.l.b16 %v708
    %v2569 = vunpack.c.h.b16 %v708
    %v2570 = vunpack.c.l.b16 %v709
    %v2571 = vunpack.c.h.b16 %v709
    %v2572 = vunpack.c.l.b16 %v710
    %v2573 = vunpack.c.h.b16 %v710
    %v2574 = vunpack.c.l.b16 %v711
    %v2575 = vunpack.c.h.b16 %v711
    %v2576 = vunpack.c.l.b16 %v712
    %v2577 = vunpack.c.h.b16 %v712
    %v2578 = vunpack.c.l.b16 %v713
    %v2579 = vunpack.c.h.b16 %v713
    %v2580 = vunpack.c.l.b16 %v714
    %v2581 = vunpack.c.h.b16 %v714
    %v2582 = vunpack.c.l.b16 %v715
    %v2583 = vunpack.c.h.b16 %v715
    %v2584 = vunpack.c.l.b16 %v716
    %v2585 = vunpack.c.h.b16 %v716
    %v2586 = vunpack.c.l.b16 %v717
    %v2587 = vunpack.c.h.b16 %v717
    %v2588 = vunpack.c.l.b16 %v718
    %v2589 = vunpack.c.h.b16 %v718
    %v2590 = vunpack.c.l.b16 %v719
    %v2591 = vunpack.c.h.b16 %v719
    %v2592 = vunpack.c.l.b16 %v720
    %v2593 = vunpack.c.h.b16 %v720
    %v2594 = vunpack.c.l.b16 %v721
    %v2595 = vunpack.c.h.b16 %v721
    %v2596 = vunpack.c.l.b16 %v722
    %v2597 = vunpack.c.h.b16 %v722
    %v2598 = vunpack.c.l.b16 %v723
    %v2599 = vunpack.c.h.b16 %v723
    %v2600 = vunpack.c.l.b16 %v724
    %v2601 = vunpack.c.h.b16 %v724
    %v2602 = vunpack.c.l.b16 %v725
    %v2603 = vunpack.c.h.b16 %v725
    %v2604 = vunpack.c.l.b16 %v726
    %v2605 = vunpack.c.h.b16 %v726
    %v2606 = vunpack.c.l.b16 %v727
    %v2607 = vunpack.c.h.b16 %v727
    %v2608 = vunpack.c.l.b16 %v728
    %v2609 = vunpack.c.h.b16 %v728
    %v2610 = vunpack.c.l.b16 %v729
    %v2611 = vunpack.c.h.b16 %v729
    %v2612 = vunpack.c.l.b16 %v730
    %v2613 = vunpack.c.h.b16 %v730
    %v2614 = vunpack.c.l.b16 %v731
    %v2615 = vunpack.c.h.b16 %v731
    %v2616 = vunpack.c.l.b16 %v732
    %v2617 = vunpack.c.h.b16 %v732
    %v2618 = vunpack.c.l.b16 %v733
    %v2619 = vunpack.c.h.b16 %v733
    %v2620 = vunpack.c.l.b16 %v734
    %v2621 = vunpack.c.h.b16 %v734
    %v2622 = vunpack.c.l.b16 %v735
    %v2623 = vunpack.c.h.b16 %v735
    %v2624 = vunpack.c.l.b16 %v736
    %v2625 = vunpack.c.h.b16 %v736
    %v2626 = vunpack.c.l.b16 %v737
    %v2627 = vunpack.c.h.b16 %v737
    %v2628 = vunpack.c.l.b16 %v738
    %v2629 = vunpack.c.h.b16 %v738
    %v2630 = vunpack.c.l.b16 %v739
    %v2631 = vunpack.c.h.b16 %v739
    %v2632 = vunpack.c.l.b16 %v740
    %v2633 = vunpack.c.h.b16 %v740
    %v2634 = vunpack.c.l.b16 %v741
    %v2635 = vunpack.c.h.b16 %v741
    %v2636 = vunpack.c.l.b16 %v742
    %v2637 = vunpack.c.h.b16 %v742
    %v2638 = vunpack.c.l.b16 %v743
    %v2639 = vunpack.c.h.b16 %v743
    %v2640 = vunpack.c.l.b16 %v744
    %v2641 = vunpack.c.h.b16 %v744
    %v2642 = vunpack.c.l.b16 %v745
    %v2643 = vunpack.c.h.b16 %v745
    %v2644 = vunpack.c.l.b16 %v746
    %v2645 = vunpack.c.h.b16 %v746
    %v2646 = vunpack.c.l.b16 %v747
    %v2647 = vunpack.c.h.b16 %v747
    %v2648 = vunpack.c.l.b16 %v748
    %v2649 = vunpack.c.h.b16 %v748
    %v2650 = vunpack.c.l.b16 %v749
    %v2651 = vunpack.c.h.b16 %v749
    %v2652 = vunpack.c.l.b16 %v750
    %v2653 = vunpack.c.h.b16 %v750
    %v2654 = vunpack.c.l.b16 %v751
    %v2655 = vunpack.c.h.b16 %v751
    %v2656 = vunpack.c.l.b16 %v752
    %v2657 = vunpack.c.h.b16 %v752
    %v2658 = vunpack.c.l.b16 %v753
    %v2659 = vunpack.c.h.b16 %v753
    %v2660 = vunpack.c.l.b16 %v754
    %v2661 = vunpack.c.h.b16 %v754
    %v2662 = vunpack.c.l.b16 %v755
    %v2663 = vunpack.c.h.b16 %v755
    %v2664 = vunpack.c.l.b16 %v756
    %v2665 = vunpack.c.h.b16 %v756
    %v2666 = vunpack.c.l.b16 %v757
    %v2667 = vunpack.c.h.b16 %v757
    %v2668 = vunpack.c.l.b16 %v758
    %v2669 = vunpack.c.h.b16 %v758
    %v2670 = vunpack.c.l.b16 %v759
    %v2671 = vunpack.c.h.b16 %v759
    %v2672 = vunpack.c.l.b16 %v760
    %v2673 = vunpack.c.h.b16 %v760
    %v2674 = vunpack.c.l.b16 %v761
    %v2675 = vunpack.c.h.b16 %v761
    %v2676 = vunpack.c.l.b16 %v762
    %v2677 = vunpack.c.h.b16 %v762
    %v2678 = vunpack.c.l.b16 %v763
    %v2679 = vunpack.c.h.b16 %v763
    %v2680 = vunpack.c.l.b16 %v764
    %v2681 = vunpack.c.h.b16 %v764
    %v2682 = vunpack.c.l.b16 %v765
    %v2683 = vunpack.c.h.b16 %v765
    %v2684 = vunpack.c.l.b16 %v766
    %v2685 = vunpack.c.h.b16 %v766
    %v2686 = vunpack.c.l.b16 %v767
    %v2687 = vunpack.c.h.b16 %v767
    %v2688 = vunpack.c.l.b16 %v768
    %v2689 = vunpack.c.h.b16 %v768
    %v2690 = vunpack.c.l.b16 %v769
    %v2691 = vunpack.c.h.b16 %v769
    %v2692 = vunpack.c.l.b16 %v770
    %v2693 = vunpack.c.h.b16 %v770
    %v2694 = vunpack.c.l.b16 %v771
    %v2695 = vunpack.c.h.b16 %v771
    %v2696 = vunpack.c.l.b16 %v772
    %v2697 = vunpack.c.h.b16 %v772
    %v2698 = vunpack.c.l.b16 %v773
    %v2699 = vunpack.c.h.b16 %v773
    %v2700 = vunpack.c.l.b16 %v774
    %v2701 = vunpack.c.h.b16 %v774
    %v2702 = vunpack.c.l.b16 %v775
    %v2703 = vunpack.c.h.b16 %v775
    %v2704 = vunpack.c.l.b16 %v776
    %v2705 = vunpack.c.h.b16 %v776
    %v2706 = vunpack.c.l.b16 %v777
    %v2707 = vunpack.c.h.b16 %v777
    %v2708 = vunpack.c.l.b16 %v778
    %v2709 = vunpack.c.h.b16 %v778
    %v2710 = vunpack.c.l.b16 %v779
    %v2711 = vunpack.c.h.b16 %v779
    %v2712 = vunpack.c.l.b16 %v780
    %v2713 = vunpack.c.h.b16 %v780
    %v2714 = vunpack.c.l.b16 %v781
    %v2715 = vunpack.c.h.b16 %v781
    %v2716 = vunpack.c.l.b16 %v782
    %v2717 = vunpack.c.h.b16 %v782
    %v2718 = vunpack.c.l.b16 %v783
    %v2719 = vunpack.c.h.b16 %v783
    %v2720 = vunpack.c.l.b16 %v784
    %v2721 = vunpack.c.h.b16 %v784
    %v2722 = vunpack.c.l.b16 %v785
    %v2723 = vunpack.c.h.b16 %v785
    %v2724 = vunpack.c.l.b16 %v786
    %v2725 = vunpack.c.h.b16 %v786
    %v2726 = vunpack.c.l.b16 %v787
    %v2727 = vunpack.c.h.b16 %v787
    %v2728 = vunpack.c.l.b16 %v788
    %v2729 = vunpack.c.h.b16 %v788
    %v2730 = vunpack.c.l.b16 %v789
    %v2731 = vunpack.c.h.b16 %v789
    %v2732 = vpack.c.b16 %v1520, %v1516
    %v2733 = vpack.c.b16 %v1521, %v1517
    %v2734 = vpack.c.b16 %v1522, %v1518
    %v2735 = vpack.c.b16 %v1523, %v1519
    %v2736 = vpack.c.b16 %v1528, %v1524
    %v2737 = vpack.c.b16 %v1529, %v1525
    %v2738 = vpack.c.b16 %v1530, %v1526
    %v2739 = vpack.c.b16 %v1531, %v1527
    %v2740 = vpack.c.b16 %v1536, %v1532
    %v2741 = vpack.c.b16 %v1537, %v1533
    %v2742 = vpack.c.b16 %v1538, %v1534
    %v2743 = vpack.c.b16 %v1539, %v1535
    %v2744 = vpack.c.b16 %v1544, %v1540
    %v2745 = vpack.c.b16 %v1545, %v1541
    %v2746 = vpack.c.b16 %v1546, %v1542
    %v2747 = vpack.c.b16 %v1547, %v1543
    %v2748 = vpack.c.b16 %v1552, %v1548
    %v2749 = vpack.c.b16 %v1553, %v1549
    %v2750 = vpack.c.b16 %v1554, %v1550
    %v2751 = vpack.c.b16 %v1555, %v1551
    %v2752 = vpack.c.b16 %v1560, %v1556
    %v2753 = vpack.c.b16 %v1561, %v1557
    %v2754 = vpack.c.b16 %v1562, %v1558
    %v2755 = vpack.c.b16 %v1563, %v1559
    %v2756 = vpack.c.b16 %v1568, %v1564
    %v2757 = vpack.c.b16 %v1569, %v1565
    %v2758 = vpack.c.b16 %v1570, %v1566
    %v2759 = vpack.c.b16 %v1571, %v1567
    %v2760 = vpack.c.b16 %v1576, %v1572
    %v2761 = vpack.c.b16 %v1577, %v1573
    %v2762 = vpack.c.b16 %v1578, %v1574
    %v2763 = vpack.c.b16 %v1579, %v1575
    %v2764 = vpack.c.b16 %v1584, %v1580
    %v2765 = vpack.c.b16 %v1585, %v1581
    %v2766 = vpack.c.b16 %v1586, %v1582
    %v2767 = vpack.c.b16 %v1587, %v1583
    %v2768 = vpack.c.b16 %v1592, %v1588
    %v2769 = vpack.c.b16 %v1593, %v1589
    %v2770 = vpack.c.b16 %v1594, %v1590
    %v2771 = vpack.c.b16 %v1595, %v1591
    %v2772 = vpack.c.b16 %v1600, %v1596
    %v2773 = vpack.c.b16 %v1601, %v1597
    %v2774 = vpack.c.b16 %v1602, %v1598
    %v2775 = vpack.c.b16 %v1603, %v1599
    %v2776 = vpack.c.b16 %v1608, %v1604
    %v2777 = vpack.c.b16 %v1609, %v1605
    %v2778 = vpack.c.b16 %v1610, %v1606
    %v2779 = vpack.c.b16 %v1611, %v1607
    %v2780 = vpack.c.b16 %v1616, %v1612
    %v2781 = vpack.c.b16 %v1617, %v1613
    %v2782 = vpack.c.b16 %v1618, %v1614
    %v2783 = vpack.c.b16 %v1619, %v1615
    %v2784 = vpack.c.b16 %v1624, %v1620
    %v2785 = vpack.c.b16 %v1625, %v1621
    %v2786 = vpack.c.b16 %v1626, %v1622
    %v2787 = vpack.c.b16 %v1627, %v1623
    %v2788 = vpack.c.b16 %v1632, %v1628
    %v2789 = vpack.c.b16 %v1633, %v1629
    %v2790 = vpack.c.b16 %v1634, %v1630
    %v2791 = vpack.c.b16 %v1635, %v1631
    %v2792 = vpack.c.b16 %v1640, %v1636
    %v2793 = vpack.c.b16 %v1641, %v1637
    %v2794 = vpack.c.b16 %v1642, %v1638
    %v2795 = vpack.c.b16 %v1643, %v1639
    %v2796 = vpack.c.b16 %v1648, %v1644
    %v2797 = vpack.c.b16 %v1649, %v1645
    %v2798 = vpack.c.b16 %v1650, %v1646
    %v2799 = vpack.c.b16 %v1651, %v1647
    %v2800 = vpack.c.b16 %v1656, %v1652
    %v2801 = vpack.c.b16 %v1657, %v1653
    %v2802 = vpack.c.b16 %v1658, %v1654
    %v2803 = vpack.c.b16 %v1659, %v1655
    %v2804 = vpack.c.b16 %v1664, %v1660
    %v2805 = vpack.c.b16 %v1665, %v1661
    %v2806 = vpack.c.b16 %v1666, %v1662
    %v2807 = vpack.c.b16 %v1667, %v1663
    %v2808 = vpack.c.b16 %v1672, %v1668
    %v2809 = vpack.c.b16 %v1673, %v1669
    %v2810 = vpack.c.b16 %v1674, %v1670
    %v2811 = vpack.c.b16 %v1675, %v1671
    %v2812 = vpack.c.b16 %v1680, %v1676
    %v2813 = vpack.c.b16 %v1681, %v1677
    %v2814 = vpack.c.b16 %v1682, %v1678
    %v2815 = vpack.c.b16 %v1683, %v1679
    %v2816 = vpack.c.b16 %v1688, %v1684
    %v2817 = vpack.c.b16 %v1689, %v1685
    %v2818 = vpack.c.b16 %v1690, %v1686
    %v2819 = vpack.c.b16 %v1691, %v1687
    %v2820 = vpack.c.b16 %v1696, %v1692
    %v2821 = vpack.c.b16 %v1697, %v1693
    %v2822 = vpack.c.b16 %v1698, %v1694
    %v2823 = vpack.c.b16 %v1699, %v1695
    %v2824 = vpack.c.b16 %v1704, %v1700
    %v2825 = vpack.c.b16 %v1705, %v1701
    %v2826 = vpack.c.b16 %v1706, %v1702
    %v2827 = vpack.c.b16 %v1707, %v1703
    %v2828 = vpack.c.b16 %v1712, %v1708
    %v2829 = vpack.c.b16 %v1713, %v1709
    %v2830 = vpack.c.b16 %v1714, %v1710
    %v2831 = vpack.c.b16 %v1715, %v1711
    %v2832 = vpack.c.b16 %v1720, %v1716
    %v2833 = vpack.c.b16 %v1721, %v1717
    %v2834 = vpack.c.b16 %v1722, %v1718
    %v2835 = vpack.c.b16 %v1723, %v1719
    %v2836 = vpack.c.b16 %v1728, %v1724
    %v2837 = vpack.c.b16 %v1729, %v1725
    %v2838 = vpack.c.b16 %v1730, %v1726
    %v2839 = vpack.c.b16 %v1731, %v1727
    %v2840 = vpack.c.b16 %v1736, %v1732
    %v2841 = vpack.c.b16 %v1737, %v1733
    %v2842 = vpack.c.b16 %v1738, %v1734
    %v2843 = vpack.c.b16 %v1739, %v1735
    %v2844 = vpack.c.b16 %v1744, %v1740
    %v2845 = vpack.c.b16 %v1745, %v1741
    %v2846 = vpack.c.b16 %v1746, %v1742
    %v2847 = vpack.c.b16 %v1747, %v1743
    %v2848 = vpack.c.b16 %v1752, %v1748
    %v2849 = vpack.c.b16 %v1753, %v1749
    %v2850 = vpack.c.b16 %v1754, %v1750
    %v2851 = vpack.c.b16 %v1755, %v1751
    %v2852 = vpack.c.b16 %v1760, %v1756
    %v2853 = vpack.c.b16 %v1761, %v1757
    %v2854 = vpack.c.b16 %v1762, %v1758
    %v2855 = vpack.c.b16 %v1763, %v1759
    %v2856 = vpack.c.b16 %v1768, %v1764
    %v2857 = vpack.c.b16 %v1769, %v1765
    %v2858 = vpack.c.b16 %v1770, %v1766
    %v2859 = vpack.c.b16 %v1771, %v1767
    %v2860 = vpack.c.b16 %v1776, %v1772
    %v2861 = vpack.c.b16 %v1777, %v1773
    %v2862 = vpack.c.b16 %v1778, %v1774
    %v2863 = vpack.c.b16 %v1779, %v1775
    %v2864 = vpack.c.b16 %v1784, %v1780
    %v2865 = vpack.c.b16 %v1785, %v1781
    %v2866 = vpack.c.b16 %v1786, %v1782
    %v2867 = vpack.c.b16 %v1787, %v1783
    %v2868 = vpack.c.b16 %v1792, %v1788
    %v2869 = vpack.c.b16 %v1793, %v1789
    %v2870 = vpack.c.b16 %v1794, %v1790
    %v2871 = vpack.c.b16 %v1795, %v1791
    %v2872 = vpack.c.b16 %v1800, %v1796
    %v2873 = vpack.c.b16 %v1801, %v1797
    %v2874 = vpack.c.b16 %v1802, %v1798
    %v2875 = vpack.c.b16 %v1803, %v1799
    %v2876 = vpack.c.b16 %v1808, %v1804
    %v2877 = vpack.c.b16 %v1809, %v1805
    %v2878 = vpack.c.b16 %v1810, %v1806
    %v2879 = vpack.c.b16 %v1811, %v1807
    %v2880 = vpack.c.b16 %v1816, %v1812
    %v2881 = vpack.c.b16 %v1817, %v1813
    %v2882 = vpack.c.b16 %v1818, %v1814
    %v2883 = vpack.c.b16 %v1819, %v1815
    %v2884 = vpack.c.b16 %v1824, %v1820
    %v2885 = vpack.c.b16 %v1825, %v1821
    %v2886 = vpack.c.b16 %v1826, %v1822
    %v2887 = vpack.c.b16 %v1827, %v1823
    %v2888 = vpack.c.b16 %v1832, %v1828
    %v2889 = vpack.c.b16 %v1833, %v1829
    %v2890 = vpack.c.b16 %v1834, %v1830
    %v2891 = vpack.c.b16 %v1835, %v1831
    %v2892 = vpack.c.b16 %v1840, %v1836
    %v2893 = vpack.c.b16 %v1841, %v1837
    %v2894 = vpack.c.b16 %v1842, %v1838
    %v2895 = vpack.c.b16 %v1843, %v1839
    %v2896 = vpack.c.b16 %v1848, %v1844
    %v2897 = vpack.c.b16 %v1849, %v1845
    %v2898 = vpack.c.b16 %v1850, %v1846
    %v2899 = vpack.c.b16 %v1851, %v1847
    %v2900 = vpack.c.b16 %v1856, %v1852
    %v2901 = vpack.c.b16 %v1857, %v1853
    %v2902 = vpack.c.b16 %v1858, %v1854
    %v2903 = vpack.c.b16 %v1859, %v1855
    %v2904 = vpack.c.b16 %v1864, %v1860
    %v2905 = vpack.c.b16 %v1865, %v1861
    %v2906 = vpack.c.b16 %v1866, %v1862
    %v2907 = vpack.c.b16 %v1867, %v1863
    %v2908 = vpack.c.b16 %v1872, %v1868
    %v2909 = vpack.c.b16 %v1873, %v1869
    %v2910 = vpack.c.b16 %v1874, %v1870
    %v2911 = vpack.c.b16 %v1875, %v1871
    %v2912 = vpack.c.b16 %v1880, %v1876
    %v2913 = vpack.c.b16 %v1881, %v1877
    %v2914 = vpack.c.b16 %v1882, %v1878
    %v2915 = vpack.c.b16 %v1883, %v1879
    %v2916 = vpack.c.b16 %v1888, %v1884
    %v2917 = vpack.c.b16 %v1889, %v1885
    %v2918 = vpack.c.b16 %v1890, %v1886
    %v2919 = vpack.c.b16 %v1891, %v1887
    %v2920 = vpack.c.b16 %v1896, %v1892
    %v2921 = vpack.c.b16 %v1897, %v1893
    %v2922 = vpack.c.b16 %v1898, %v1894
    %v2923 = vpack.c.b16 %v1899, %v1895
    %v2924 = vpack.c.b16 %v1904, %v1900
    %v2925 = vpack.c.b16 %v1905, %v1901
    %v2926 = vpack.c.b16 %v1906, %v1902
    %v2927 = vpack.c.b16 %v1907, %v1903
    %v2928 = vpack.c.b16 %v1912, %v1908
    %v2929 = vpack.c.b16 %v1913, %v1909
    %v2930 = vpack.c.b16 %v1914, %v1910
    %v2931 = vpack.c.b16 %v1915, %v1911
    %v2932 = vpack.c.b16 %v1920, %v1916
    %v2933 = vpack.c.b16 %v1921, %v1917
    %v2934 = vpack.c.b16 %v1922, %v1918
    %v2935 = vpack.c.b16 %v1923, %v1919
    %v2936 = vpack.c.b16 %v1928, %v1924
    %v2937 = vpack.c.b16 %v1929, %v1925
    %v2938 = vpack.c.b16 %v1930, %v1926
    %v2939 = vpack.c.b16 %v1931, %v1927
    %v2940 = vpack.c.b16 %v1936, %v1932
    %v2941 = vpack.c.b16 %v1937, %v1933
    %v2942 = vpack.c.b16 %v1938, %v1934
    %v2943 = vpack.c.b16 %v1939, %v1935
    %v2944 = vpack.c.b16 %v1944, %v1940
    %v2945 = vpack.c.b16 %v1945, %v1941
    %v2946 = vpack.c.b16 %v1946, %v1942
    %v2947 = vpack.c.b16 %v1947, %v1943
    %v2948 = vpack.c.b16 %v1952, %v1948
    %v2949 = vpack.c.b16 %v1953, %v1949
    %v2950 = vpack.c.b16 %v1954, %v1950
    %v2951 = vpack.c.b16 %v1955, %v1951
    %v2952 = vpack.c.b16 %v1960, %v1956
    %v2953 = vpack.c.b16 %v1961, %v1957
    %v2954 = vpack.c.b16 %v1962, %v1958
    %v2955 = vpack.c.b16 %v1963, %v1959
    %v2956 = vpack.c.b16 %v1968, %v1964
    %v2957 = vpack.c.b16 %v1969, %v1965
    %v2958 = vpack.c.b16 %v1970, %v1966
    %v2959 = vpack.c.b16 %v1971, %v1967
    %v2960 = vpack.c.b16 %v1976, %v1972
    %v2961 = vpack.c.b16 %v1977, %v1973
    %v2962 = vpack.c.b16 %v1978, %v1974
    %v2963 = vpack.c.b16 %v1979, %v1975
    %v2964 = vpack.c.b16 %v1984, %v1980
    %v2965 = vpack.c.b16 %v1985, %v1981
    %v2966 = vpack.c.b16 %v1986, %v1982
    %v2967 = vpack.c.b16 %v1987, %v1983
    %v2968 = vpack.c.b16 %v1992, %v1988
    %v2969 = vpack.c.b16 %v1993, %v1989
    %v2970 = vpack.c.b16 %v1994, %v1990
    %v2971 = vpack.c.b16 %v1995, %v1991
    %v2972 = vpack.c.b16 %v2000, %v1996
    %v2973 = vpack.c.b16 %v2001, %v1997
    %v2974 = vpack.c.b16 %v2002, %v1998
    %v2975 = vpack.c.b16 %v2003, %v1999
    %v2976 = vpack.c.b16 %v2008, %v2004
    %v2977 = vpack.c.b16 %v2009, %v2005
    %v2978 = vpack.c.b16 %v2010, %v2006
    %v2979 = vpack.c.b16 %v2011, %v2007
    %v2980 = vpack.c.b16 %v2016, %v2012
    %v2981 = vpack.c.b16 %v2017, %v2013
    %v2982 = vpack.c.b16 %v2018, %v2014
    %v2983 = vpack.c.b16 %v2019, %v2015
    %v2984 = vpack.c.b16 %v2024, %v2020
    %v2985 = vpack.c.b16 %v2025, %v2021
    %v2986 = vpack.c.b16 %v2026, %v2022
    %v2987 = vpack.c.b16 %v2027, %v2023
    %v2988 = vpack.c.b16 %v2032, %v2028
    %v2989 = vpack.c.b16 %v2033, %v2029
    %v2990 = vpack.c.b16 %v2034, %v2030
    %v2991 = vpack.c.b16 %v2035, %v2031
    %v2992 = vpack.c.b16 %v2040, %v2036
    %v2993 = vpack.c.b16 %v2041, %v2037
    %v2994 = vpack.c.b16 %v2042, %v2038
    %v2995 = vpack.c.b16 %v2043, %v2039
    %v2996 = vpack.c.b16 %v2048, %v2044
    %v2997 = vpack.c.b16 %v2049, %v2045
    %v2998 = vpack.c.b16 %v2050, %v2046
    %v2999 = vpack.c.b16 %v2051, %v2047
    %v3000 = vpack.c.b16 %v2056, %v2052
    %v3001 = vpack.c.b16 %v2057, %v2053
    %v3002 = vpack.c.b16 %v2058, %v2054
    %v3003 = vpack.c.b16 %v2059, %v2055
    %v3004 = vpack.c.b16 %v2064, %v2060
    %v3005 = vpack.c.b16 %v2065, %v2061
    %v3006 = vpack.c.b16 %v2066, %v2062
    %v3007 = vpack.c.b16 %v2067, %v2063
    %v3008 = vpack.c.b16 %v2072, %v2068
    %v3009 = vpack.c.b16 %v2073, %v2069
    %v3010 = vpack.c.b16 %v2074, %v2070
    %v3011 = vpack.c.b16 %v2075, %v2071
    %v3012 = vpack.c.b16 %v2080, %v2076
    %v3013 = vpack.c.b16 %v2081, %v2077
    %v3014 = vpack.c.b16 %v2082, %v2078
    %v3015 = vpack.c.b16 %v2083, %v2079
    %v3016 = vpack.c.b16 %v2088, %v2084
    %v3017 = vpack.c.b16 %v2089, %v2085
    %v3018 = vpack.c.b16 %v2090, %v2086
    %v3019 = vpack.c.b16 %v2091, %v2087
    %v3020 = vpack.c.b16 %v2096, %v2092
    %v3021 = vpack.c.b16 %v2097, %v2093
    %v3022 = vpack.c.b16 %v2098, %v2094
    %v3023 = vpack.c.b16 %v2099, %v2095
    %v3024 = vpack.c.b16 %v2104, %v2100
    %v3025 = vpack.c.b16 %v2105, %v2101
    %v3026 = vpack.c.b16 %v2106, %v2102
    %v3027 = vpack.c.b16 %v2107, %v2103
    %v3028 = vpack.c.b16 %v2112, %v2108
    %v3029 = vpack.c.b16 %v2113, %v2109
    %v3030 = vpack.c.b16 %v2114, %v2110
    %v3031 = vpack.c.b16 %v2115, %v2111
    %v3032 = vpack.c.b16 %v2120, %v2116
    %v3033 = vpack.c.b16 %v2121, %v2117
    %v3034 = vpack.c.b16 %v2122, %v2118
    %v3035 = vpack.c.b16 %v2123, %v2119
    %v3036 = vpack.c.b16 %v2128, %v2124
    %v3037 = vpack.c.b16 %v2129, %v2125
    %v3038 = vpack.c.b16 %v2130, %v2126
    %v3039 = vpack.c.b16 %v2131, %v2127
    %v3040 = vpack.c.b16 %v2136, %v2132
    %v3041 = vpack.c.b16 %v2137, %v2133
    %v3042 = vpack.c.b16 %v2138, %v2134
    %v3043 = vpack.c.b16 %v2139, %v2135
    %v3044 = vpack.c.b16 %v2144, %v2140
    %v3045 = vpack.c.b16 %v2145, %v2141
    %v3046 = vpack.c.b16 %v2146, %v2142
    %v3047 = vpack.c.b16 %v2147, %v2143
    %v3048 = vpack.c.b16 %v2152, %v2148
    %v3049 = vpack.c.b16 %v2153, %v2149
    %v3050 = vpack.c.b16 %v2154, %v2150
    %v3051 = vpack.c.b16 %v2155, %v2151
    %v3052 = vpack.c.b16 %v2160, %v2156
    %v3053 = vpack.c.b16 %v2161, %v2157
    %v3054 = vpack.c.b16 %v2162, %v2158
    %v3055 = vpack.c.b16 %v2163, %v2159
    %v3056 = vpack.c.b16 %v2168, %v2164
    %v3057 = vpack.c.b16 %v2169, %v2165
    %v3058 = vpack.c.b16 %v2170, %v2166
    %v3059 = vpack.c.b16 %v2171, %v2167
    %v3060 = vpack.c.b16 %v2176, %v2172
    %v3061 = vpack.c.b16 %v2177, %v2173
    %v3062 = vpack.c.b16 %v2178, %v2174
    %v3063 = vpack.c.b16 %v2179, %v2175
    %v3064 = vpack.c.b16 %v2184, %v2180
    %v3065 = vpack.c.b16 %v2185, %v2181
    %v3066 = vpack.c.b16 %v2186, %v2182
    %v3067 = vpack.c.b16 %v2187, %v2183
    %v3068 = vpack.c.b16 %v2192, %v2188
    %v3069 = vpack.c.b16 %v2193, %v2189
    %v3070 = vpack.c.b16 %v2194, %v2190
    %v3071 = vpack.c.b16 %v2195, %v2191
    %v3072 = vpack.c.b16 %v2200, %v2196
    %v3073 = vpack.c.b16 %v2201, %v2197
    %v3074 = vpack.c.b16 %v2202, %v2198
    %v3075 = vpack.c.b16 %v2203, %v2199
    %v3076 = vpack.c.b16 %v2208, %v2204
    %v3077 = vpack.c.b16 %v2209, %v2205
    %v3078 = vpack.c.b16 %v2210, %v2206
    %v3079 = vpack.c.b16 %v2211, %v2207
    %v3080 = vpack.c.b16 %v2216, %v2212
    %v3081 = vpack.c.b16 %v2217, %v2213
    %v3082 = vpack.c.b16 %v2218, %v2214
    %v3083 = vpack.c.b16 %v2219, %v2215
    %v3084 = vpack.c.b16 %v2224, %v2220
    %v3085 = vpack.c.b16 %v2225, %v2221
    %v3086 = vpack.c.b16 %v2226, %v2222
    %v3087 = vpack.c.b16 %v2227, %v2223
    %v3088 = vpack.c.b16 %v2232, %v2228
    %v3089 = vpack.c.b16 %v2233, %v2229
    %v3090 = vpack.c.b16 %v2234, %v2230
    %v3091 = vpack.c.b16 %v2235, %v2231
    %v3092 = vpack.c.b16 %v2240, %v2236
    %v3093 = vpack.c.b16 %v2241, %v2237
    %v3094 = vpack.c.b16 %v2242, %v2238
    %v3095 = vpack.c.b16 %v2243, %v2239
    %v3096 = vpack.c.b16 %v2248, %v2244
    %v3097 = vpack.c.b16 %v2249, %v2245
    %v3098 = vpack.c.b16 %v2250, %v2246
    %v3099 = vpack.c.b16 %v2251, %v2247
    %v3100 = vpack.c.b16 %v2256, %v2252
    %v3101 = vpack.c.b16 %v2257, %v2253
    %v3102 = vpack.c.b16 %v2258, %v2254
    %v3103 = vpack.c.b16 %v2259, %v2255
    %v3104 = vpack.c.b16 %v2264, %v2260
    %v3105 = vpack.c.b16 %v2265, %v2261
    %v3106 = vpack.c.b16 %v2266, %v2262
    %v3107 = vpack.c.b16 %v2267, %v2263
    %v3108 = vpack.c.b16 %v2272, %v2268
    %v3109 = vpack.c.b16 %v2273, %v2269
    %v3110 = vpack.c.b16 %v2274, %v2270
    %v3111 = vpack.c.b16 %v2275, %v2271
    %v3112 = vpack.c.b16 %v2280, %v2276
    %v3113 = vpack.c.b16 %v2281, %v2277
    %v3114 = vpack.c.b16 %v2282, %v2278
    %v3115 = vpack.c.b16 %v2283, %v2279
    %v3116 = vpack.c.b16 %v2288, %v2284
    %v3117 = vpack.c.b16 %v2289, %v2285
    %v3118 = vpack.c.b16 %v2290, %v2286
    %v3119 = vpack.c.b16 %v2291, %v2287
    %v3120 = vpack.c.b16 %v2296, %v2292
    %v3121 = vpack.c.b16 %v2297, %v2293
    %v3122 = vpack.c.b16 %v2298, %v2294
    %v3123 = vpack.c.b16 %v2299, %v2295
    %v3124 = vpack.c.b16 %v2304, %v2300
    %v3125 = vpack.c.b16 %v2305, %v2301
    %v3126 = vpack.c.b16 %v2306, %v2302
    %v3127 = vpack.c.b16 %v2307, %v2303
    %v3128 = vpack.c.b16 %v2312, %v2308
    %v3129 = vpack.c.b16 %v2313, %v2309
    %v3130 = vpack.c.b16 %v2314, %v2310
    %v3131 = vpack.c.b16 %v2315, %v2311
    %v3132 = vpack.c.b16 %v2320, %v2316
    %v3133 = vpack.c.b16 %v2321, %v2317
    %v3134 = vpack.c.b16 %v2322, %v2318
    %v3135 = vpack.c.b16 %v2323, %v2319
    %v3136 = vpack.c.b16 %v2328, %v2324
    %v3137 = vpack.c.b16 %v2329, %v2325
    %v3138 = vpack.c.b16 %v2330, %v2326
    %v3139 = vpack.c.b16 %v2331, %v2327
    %v3140 = vpack.c.b16 %v2336, %v2332
    %v3141 = vpack.c.b16 %v2337, %v2333
    %v3142 = vpack.c.b16 %v2338, %v2334
    %v3143 = vpack.c.b16 %v2339, %v2335
    %v3144 = vpack.c.b16 %v2344, %v2340
    %v3145 = vpack.c.b16 %v2345, %v2341
    %v3146 = vpack.c.b16 %v2346, %v2342
    %v3147 = vpack.c.b16 %v2347, %v2343
    %v3148 = vpack.c.b16 %v2352, %v2348
    %v3149 = vpack.c.b16 %v2353, %v2349
    %v3150 = vpack.c.b16 %v2354, %v2350
    %v3151 = vpack.c.b16 %v2355, %v2351
    %v3152 = vpack.c.b16 %v2360, %v2356
    %v3153 = vpack.c.b16 %v2361, %v2357
    %v3154 = vpack.c.b16 %v2362, %v2358
    %v3155 = vpack.c.b16 %v2363, %v2359
    %v3156 = vpack.c.b16 %v2368, %v2364
    %v3157 = vpack.c.b16 %v2369, %v2365
    %v3158 = vpack.c.b16 %v2370, %v2366
    %v3159 = vpack.c.b16 %v2371, %v2367
    %v3160 = vpack.c.b16 %v2376, %v2372
    %v3161 = vpack.c.b16 %v2377, %v2373
    %v3162 = vpack.c.b16 %v2378, %v2374
    %v3163 = vpack.c.b16 %v2379, %v2375
    %v3164 = vpack.c.b16 %v2384, %v2380
    %v3165 = vpack.c.b16 %v2385, %v2381
    %v3166 = vpack.c.b16 %v2386, %v2382
    %v3167 = vpack.c.b16 %v2387, %v2383
    %v3168 = vpack.c.b16 %v2392, %v2388
    %v3169 = vpack.c.b16 %v2393, %v2389
    %v3170 = vpack.c.b16 %v2394, %v2390
    %v3171 = vpack.c.b16 %v2395, %v2391
    %v3172 = vpack.c.b16 %v2400, %v2396
    %v3173 = vpack.c.b16 %v2401, %v2397
    %v3174 = vpack.c.b16 %v2402, %v2398
    %v3175 = vpack.c.b16 %v2403, %v2399
    %v3176 = vpack.c.b16 %v2408, %v2404
    %v3177 = vpack.c.b16 %v2409, %v2405
    %v3178 = vpack.c.b16 %v2410, %v2406
    %v3179 = vpack.c.b16 %v2411, %v2407
    %v3180 = vpack.c.b16 %v2416, %v2412
    %v3181 = vpack.c.b16 %v2417, %v2413
    %v3182 = vpack.c.b16 %v2418, %v2414
    %v3183 = vpack.c.b16 %v2419, %v2415
    %v3184 = vpack.c.b16 %v2424, %v2420
    %v3185 = vpack.c.b16 %v2425, %v2421
    %v3186 = vpack.c.b16 %v2426, %v2422
    %v3187 = vpack.c.b16 %v2427, %v2423
    %v3188 = vpack.c.b16 %v2432, %v2428
    %v3189 = vpack.c.b16 %v2433, %v2429
    %v3190 = vpack.c.b16 %v2434, %v2430
    %v3191 = vpack.c.b16 %v2435, %v2431
    %v3192 = vpack.c.b16 %v2440, %v2436
    %v3193 = vpack.c.b16 %v2441, %v2437
    %v3194 = vpack.c.b16 %v2442, %v2438
    %v3195 = vpack.c.b16 %v2443, %v2439
    %v3196 = vpack.c.b16 %v2448, %v2444
    %v3197 = vpack.c.b16 %v2449, %v2445
    %v3198 = vpack.c.b16 %v2450, %v2446
    %v3199 = vpack.c.b16 %v2451, %v2447
    %v3200 = vpack.c.b16 %v2456, %v2452
    %v3201 = vpack.c.b16 %v2457, %v2453
    %v3202 = vpack.c.b16 %v2458, %v2454
    %v3203 = vpack.c.b16 %v2459, %v2455
    %v3204 = vpack.c.b16 %v2464, %v2460
    %v3205 = vpack.c.b16 %v2465, %v2461
    %v3206 = vpack.c.b16 %v2466, %v2462
    %v3207 = vpack.c.b16 %v2467, %v2463
    %v3208 = vpack.c.b16 %v2472, %v2468
    %v3209 = vpack.c.b16 %v2473, %v2469
    %v3210 = vpack.c.b16 %v2474, %v2470
    %v3211 = vpack.c.b16 %v2475, %v2471
    %v3212 = vpack.c.b16 %v2480, %v2476
    %v3213 = vpack.c.b16 %v2481, %v2477
    %v3214 = vpack.c.b16 %v2482, %v2478
    %v3215 = vpack.c.b16 %v2483, %v2479
    %v3216 = vpack.c.b16 %v2488, %v2484
    %v3217 = vpack.c.b16 %v2489, %v2485
    %v3218 = vpack.c.b16 %v2490, %v2486
    %v3219 = vpack.c.b16 %v2491, %v2487
    %v3220 = vpack.c.b16 %v2496, %v2492
    %v3221 = vpack.c.b16 %v2497, %v2493
    %v3222 = vpack.c.b16 %v2498, %v2494
    %v3223 = vpack.c.b16 %v2499, %v2495
    %v3224 = vpack.c.b16 %v2504, %v2500
    %v3225 = vpack.c.b16 %v2505, %v2501
    %v3226 = vpack.c.b16 %v2506, %v2502
    %v3227 = vpack.c.b16 %v2507, %v2503
    %v3228 = vpack.c.b16 %v2512, %v2508
    %v3229 = vpack.c.b16 %v2513, %v2509
    %v3230 = vpack.c.b16 %v2514, %v2510
    %v3231 = vpack.c.b16 %v2515, %v2511
    %v3232 = vpack.c.b16 %v2520, %v2516
    %v3233 = vpack.c.b16 %v2521, %v2517
    %v3234 = vpack.c.b16 %v2522, %v2518
    %v3235 = vpack.c.b16 %v2523, %v2519
    %v3236 = vpack.c.b16 %v2528, %v2524
    %v3237 = vpack.c.b16 %v2529, %v2525
    %v3238 = vpack.c.b16 %v2530, %v2526
    %v3239 = vpack.c.b16 %v2531, %v2527
    %v3240 = vpack.c.b16 %v2536, %v2532
    %v3241 = vpack.c.b16 %v2537, %v2533
    %v3242 = vpack.c.b16 %v2538, %v2534
    %v3243 = vpack.c.b16 %v2539, %v2535
    %v3244 = vpack.c.b16 %v2544, %v2540
    %v3245 = vpack.c.b16 %v2545, %v2541
    %v3246 = vpack.c.b16 %v2546, %v2542
    %v3247 = vpack.c.b16 %v2547, %v2543
    %v3248 = vpack.c.b16 %v2552, %v2548
    %v3249 = vpack.c.b16 %v2553, %v2549
    %v3250 = vpack.c.b16 %v2554, %v2550
    %v3251 = vpack.c.b16 %v2555, %v2551
    %v3252 = vpack.c.b16 %v2560, %v2556
    %v3253 = vpack.c.b16 %v2561, %v2557
    %v3254 = vpack.c.b16 %v2562, %v2558
    %v3255 = vpack.c.b16 %v2563, %v2559
    %v3256 = vpack.c.b16 %v2568, %v2564
    %v3257 = vpack.c.b16 %v2569, %v2565
    %v3258 = vpack.c.b16 %v2570, %v2566
    %v3259 = vpack.c.b16 %v2571, %v2567
    %v3260 = vpack.c.b16 %v2576, %v2572
    %v3261 = vpack.c.b16 %v2577, %v2573
    %v3262 = vpack.c.b16 %v2578, %v2574
    %v3263 = vpack.c.b16 %v2579, %v2575
    %v3264 = vpack.c.b16 %v2584, %v2580
    %v3265 = vpack.c.b16 %v2585, %v2581
    %v3266 = vpack.c.b16 %v2586, %v2582
    %v3267 = vpack.c.b16 %v2587, %v2583
    %v3268 = vpack.c.b16 %v2592, %v2588
    %v3269 = vpack.c.b16 %v2593, %v2589
    %v3270 = vpack.c.b16 %v2594, %v2590
    %v3271 = vpack.c.b16 %v2595, %v2591
    %v3272 = vpack.c.b16 %v2600, %v2596
    %v3273 = vpack.c.b16 %v2601, %v2597
    %v3274 = vpack.c.b16 %v2602, %v2598
    %v3275 = vpack.c.b16 %v2603, %v2599
    %v3276 = vpack.c.b16 %v2608, %v2604
    %v3277 = vpack.c.b16 %v2609, %v2605
    %v3278 = vpack.c.b16 %v2610, %v2606
    %v3279 = vpack.c.b16 %v2611, %v2607
    %v3280 = vpack.c.b16 %v2616, %v2612
    %v3281 = vpack.c.b16 %v2617, %v2613
    %v3282 = vpack.c.b16 %v2618, %v2614
    %v3283 = vpack.c.b16 %v2619, %v2615
    %v3284 = vpack.c.b16 %v2624, %v2620
    %v3285 = vpack.c.b16 %v2625, %v2621
    %v3286 = vpack.c.b16 %v2626, %v2622
    %v3287 = vpack.c.b16 %v2627, %v2623
    %v3288 = vpack.c.b16 %v2632, %v2628
    %v3289 = vpack.c.b16 %v2633, %v2629
    %v3290 = vpack.c.b16 %v2634, %v2630
    %v3291 = vpack.c.b16 %v2635, %v2631
    %v3292 = vpack.c.b16 %v2640, %v2636
    %v3293 = vpack.c.b16 %v2641, %v2637
    %v3294 = vpack.c.b16 %v2642, %v2638
    %v3295 = vpack.c.b16 %v2643, %v2639
    %v3296 = vpack.c.b16 %v2648, %v2644
    %v3297 = vpack.c.b16 %v2649, %v2645
    %v3298 = vpack.c.b16 %v2650, %v2646
    %v3299 = vpack.c.b16 %v2651, %v2647
    %v3300 = vpack.c.b16 %v2656, %v2652
    %v3301 = vpack.c.b16 %v2657, %v2653
    %v3302 = vpack.c.b16 %v2658, %v2654
    %v3303 = vpack.c.b16 %v2659, %v2655
    %v3304 = vpack.c.b16 %v2664, %v2660
    %v3305 = vpack.c.b16 %v2665, %v2661
    %v3306 = vpack.c.b16 %v2666, %v2662
    %v3307 = vpack.c.b16 %v2667, %v2663
    %v3308 = vpack.c.b16 %v2672, %v2668
    %v3309 = vpack.c.b16 %v2673, %v2669
    %v3310 = vpack.c.b16 %v2674, %v2670
    %v3311 = vpack.c.b16 %v2675, %v2671
    %v3312 = vpack.c.b16 %v2680, %v2676
    %v3313 = vpack.c.b16 %v2681, %v2677
    %v3314 = vpack.c.b16 %v2682, %v2678
    %v3315 = vpack.c.b16 %v2683, %v2679
    %v3316 = vpack.c.b16 %v2688, %v2684
    %v3317 = vpack.c.b16 %v2689, %v2685
    %v3318 = vpack.c.b16 %v2690, %v2686
    %v3319 = vpack.c.b16 %v2691, %v2687
    %v3320 = vpack.c.b16 %v2696, %v2692
    %v3321 = vpack.c.b16 %v2697, %v2693
    %v3322 = vpack.c.b16 %v2698, %v2694
    %v3323 = vpack.c.b16 %v2699, %v2695
    %v3324 = vpack.c.b16 %v2704, %v2700
    %v3325 = vpack.c.b16 %v2705, %v2701
    %v3326 = vpack.c.b16 %v2706, %v2702
    %v3327 = vpack.c.b16 %v2707, %v2703
    %v3328 = vpack.c.b16 %v2712, %v2708
    %v3329 = vpack.c.b16 %v2713, %v2709
    %v3330 = vpack.c.b16 %v2714, %v2710
    %v3331 = vpack.c.b16 %v2715, %v2711
    %v3332 = vpack.c.b16 %v2720, %v2716
    %v3333 = vpack.c.b16 %v2721, %v2717
    %v3334 = vpack.c.b16 %v2722, %v2718
    %v3335 = vpack.c.b16 %v2723, %v2719
    %v3336 = vpack.c.b16 %v2728, %v2724
    %v3337 = vpack.c.b16 %v2729, %v2725
    %v3338 = vpack.c.b16 %v2730, %v2726
    %v3339 = vpack.c.b16 %v2731, %v2727
    %3948 = vmatprep.subr.bf16.mxu0 %v2733
    %3949 = vmatpush1.bf16.msra.mxu0 %v2732
    %3950 = vmatprep.subr.bf16.mxu0 %v2737
    %3951 = vmatpush1.bf16.msra.mxu0 %v2736
    %3952 = vmatprep.subr.bf16.mxu0 %v2741
    %3953 = vmatpush1.bf16.msra.mxu0 %v2740
    %3954 = vmatprep.subr.bf16.mxu0 %v2745
    %3955 = vmatpush1.bf16.msra.mxu0 %v2744
    %3956 = vmatprep.subr.bf16.mxu0 %v2749
    %3957 = vmatpush1.bf16.msra.mxu0 %v2748
    %3958 = vmatprep.subr.bf16.mxu0 %v2753
    %3959 = vmatpush1.bf16.msra.mxu0 %v2752
    %3960 = vmatprep.subr.bf16.mxu0 %v2757
    %3961 = vmatpush1.bf16.msra.mxu0 %v2756
    %3962 = vmatprep.subr.bf16.mxu0 %v2761
    %3963 = vmatpush1.bf16.msra.mxu0 %v2760
    %3964 = vmatprep.subr.bf16.mxu0 %v2765
    %3965 = vmatpush1.bf16.msra.mxu0 %v2764
    %3966 = vmatprep.subr.bf16.mxu0 %v2769
    %3967 = vmatpush1.bf16.msra.mxu0 %v2768
    %3968 = vmatprep.subr.bf16.mxu0 %v2773
    %3969 = vmatpush1.bf16.msra.mxu0 %v2772
    %3970 = vmatprep.subr.bf16.mxu0 %v2777
    %3971 = vmatpush1.bf16.msra.mxu0 %v2776
    %3972 = vmatprep.subr.bf16.mxu0 %v2781
    %3973 = vmatpush1.bf16.msra.mxu0 %v2780
    %3974 = vmatprep.subr.bf16.mxu0 %v2785
    %3975 = vmatpush1.bf16.msra.mxu0 %v2784
    %3976 = vmatprep.subr.bf16.mxu0 %v2789
    %3977 = vmatpush1.bf16.msra.mxu0 %v2788
    %3978 = vmatprep.subr.bf16.mxu0 %v2793
    %3979 = vmatpush1.bf16.msra.mxu0 %v2792
    %3980 = vmatprep.mubr.bf16.mxu0 %v871
    %3981 = vmatmul.mubr.bf16.gmra.mrb[0].mxu0 %v870
    %v3982 = vpop.f32.mrb[0].mxu0
    %v3983 = vadd.f32 %v795, %v3982
    %v3984 = vpop.f32.mrb[0].mxu0
    %v3985 = vadd.f32 %v799, %v3984
    %v3986 = vpop.f32.mrb[0].mxu0
    %v3987 = vadd.f32 %v795, %v3986
    %v3988 = vpop.f32.mrb[0].mxu0
    %v3989 = vadd.f32 %v799, %v3988
    %3990 = vdwg.mxu0
    %3991 = vmatprep.subr.bf16.mxu0 %v2797
    %3992 = vmatpush1.bf16.msra.mxu0 %v2796
    %3993 = vmatprep.subr.bf16.mxu0 %v2801
    %3994 = vmatpush1.bf16.msra.mxu0 %v2800
    %3995 = vmatprep.subr.bf16.mxu0 %v2805
    %3996 = vmatpush1.bf16.msra.mxu0 %v2804
    %3997 = vmatprep.subr.bf16.mxu0 %v2809
    %3998 = vmatpush1.bf16.msra.mxu0 %v2808
    %3999 = vmatprep.subr.bf16.mxu0 %v2813
    %4000 = vmatpush1.bf16.msra.mxu0 %v2812
    %4001 = vmatprep.subr.bf16.mxu0 %v2817
    %4002 = vmatpush1.bf16.msra.mxu0 %v2816
    %4003 = vmatprep.subr.bf16.mxu0 %v2821
    %4004 = vmatpush1.bf16.msra.mxu0 %v2820
    %4005 = vmatprep.subr.bf16.mxu0 %v2825
    %4006 = vmatpush1.bf16.msra.mxu0 %v2824
    %4007 = vmatprep.subr.bf16.mxu0 %v2829
    %4008 = vmatpush1.bf16.msra.mxu0 %v2828
    %4009 = vmatprep.subr.bf16.mxu0 %v2833
    %4010 = vmatpush1.bf16.msra.mxu0 %v2832
    %4011 = vmatprep.subr.bf16.mxu0 %v2837
    %4012 = vmatpush1.bf16.msra.mxu0 %v2836
    %4013 = vmatprep.subr.bf16.mxu0 %v2841
    %4014 = vmatpush1.bf16.msra.mxu0 %v2840
    %4015 = vmatprep.subr.bf16.mxu0 %v2845
    %4016 = vmatpush1.bf16.msra.mxu0 %v2844
    %4017 = vmatprep.subr.bf16.mxu0 %v2849
    %4018 = vmatpush1.bf16.msra.mxu0 %v2848
    %4019 = vmatprep.subr.bf16.mxu0 %v2853
    %4020 = vmatpush1.bf16.msra.mxu0 %v2852
    %4021 = vmatprep.subr.bf16.mxu0 %v2857
    %4022 = vmatpush1.bf16.msra.mxu0 %v2856
    %4023 = vmatprep.mubr.bf16.mxu0 %v873
    %4024 = vmatmul.mubr.bf16.gmra.mrb[0].mxu0 %v872
    %v4025 = vpop.f32.mrb[0].mxu0
    %v4026 = vadd.f32 %v3983, %v4025
    %v4027 = vpop.f32.mrb[0].mxu0
    %v4028 = vadd.f32 %v3985, %v4027
    %v4029 = vpop.f32.mrb[0].mxu0
    %v4030 = vadd.f32 %v3987, %v4029
    %v4031 = vpop.f32.mrb[0].mxu0
    %v4032 = vadd.f32 %v3989, %v4031
    %4033 = vdwg.mxu0
    %4034 = vmatprep.subr.bf16.mxu0 %v2861
    %4035 = vmatpush1.bf16.msra.mxu0 %v2860
    %4036 = vmatprep.subr.bf16.mxu0 %v2865
    %4037 = vmatpush1.bf16.msra.mxu0 %v2864
    %4038 = vmatprep.subr.bf16.mxu0 %v2869
    %4039 = vmatpush1.bf16.msra.mxu0 %v2868
    %4040 = vmatprep.subr.bf16.mxu0 %v2873
    %4041 = vmatpush1.bf16.msra.mxu0 %v2872
    %4042 = vmatprep.subr.bf16.mxu0 %v2877
    %4043 = vmatpush1.bf16.msra.mxu0 %v2876
    %4044 = vmatprep.subr.bf16.mxu0 %v2881
    %4045 = vmatpush1.bf16.msra.mxu0 %v2880
    %4046 = vmatprep.subr.bf16.mxu0 %v2885
    %4047 = vmatpush1.bf16.msra.mxu0 %v2884
    %4048 = vmatprep.subr.bf16.mxu0 %v2889
    %4049 = vmatpush1.bf16.msra.mxu0 %v2888
    %4050 = vmatprep.subr.bf16.mxu0 %v2893
    %4051 = vmatpush1.bf16.msra.mxu0 %v2892
    %4052 = vmatprep.subr.bf16.mxu0 %v2897
    %4053 = vmatpush1.bf16.msra.mxu0 %v2896
    %4054 = vmatprep.subr.bf16.mxu0 %v2901
    %4055 = vmatpush1.bf16.msra.mxu0 %v2900
    %4056 = vmatprep.subr.bf16.mxu0 %v2905
    %4057 = vmatpush1.bf16.msra.mxu0 %v2904
    %4058 = vmatprep.subr.bf16.mxu0 %v2909
    %4059 = vmatpush1.bf16.msra.mxu0 %v2908
    %4060 = vmatprep.subr.bf16.mxu0 %v2913
    %4061 = vmatpush1.bf16.msra.mxu0 %v2912
    %4062 = vmatprep.subr.bf16.mxu0 %v2917
    %4063 = vmatpush1.bf16.msra.mxu0 %v2916
    %4064 = vmatprep.subr.bf16.mxu0 %v2921
    %4065 = vmatpush1.bf16.msra.mxu0 %v2920
    %4066 = vmatprep.mubr.bf16.mxu0 %v875
    %4067 = vmatmul.mubr.bf16.gmra.mrb[0].mxu0 %v874
    %v4068 = vpop.f32.mrb[0].mxu0
    %v4069 = vadd.f32 %v4026, %v4068
    %v4070 = vpop.f32.mrb[0].mxu0
    %v4071 = vadd.f32 %v4028, %v4070
    %v4072 = vpop.f32.mrb[0].mxu0
    %v4073 = vadd.f32 %v4030, %v4072
    %v4074 = vpop.f32.mrb[0].mxu0
    %v4075 = vadd.f32 %v4032, %v4074
    %4076 = vdwg.mxu0
    %4077 = vmatprep.subr.bf16.mxu0 %v2925
    %4078 = vmatpush1.bf16.msra.mxu0 %v2924
    %4079 = vmatprep.subr.bf16.mxu0 %v2929
    %4080 = vmatpush1.bf16.msra.mxu0 %v2928
    %4081 = vmatprep.subr.bf16.mxu0 %v2933
    %4082 = vmatpush1.bf16.msra.mxu0 %v2932
    %4083 = vmatprep.subr.bf16.mxu0 %v2937
    %4084 = vmatpush1.bf16.msra.mxu0 %v2936
    %4085 = vmatprep.subr.bf16.mxu0 %v2941
    %4086 = vmatpush1.bf16.msra.mxu0 %v2940
    %4087 = vmatprep.subr.bf16.mxu0 %v2945
    %4088 = vmatpush1.bf16.msra.mxu0 %v2944
    %4089 = vmatprep.subr.bf16.mxu0 %v2949
    %4090 = vmatpush1.bf16.msra.mxu0 %v2948
    %4091 = vmatprep.subr.bf16.mxu0 %v2953
    %4092 = vmatpush1.bf16.msra.mxu0 %v2952
    %4093 = vmatprep.subr.bf16.mxu0 %v2957
    %4094 = vmatpush1.bf16.msra.mxu0 %v2956
    %4095 = vmatprep.subr.bf16.mxu0 %v2961
    %4096 = vmatpush1.bf16.msra.mxu0 %v2960
    %4097 = vmatprep.subr.bf16.mxu0 %v2965
    %4098 = vmatpush1.bf16.msra.mxu0 %v2964
    %4099 = vmatprep.subr.bf16.mxu0 %v2969
    %4100 = vmatpush1.bf16.msra.mxu0 %v2968
    %4101 = vmatprep.subr.bf16.mxu0 %v2973
    %4102 = vmatpush1.bf16.msra.mxu0 %v2972
    %4103 = vmatprep.subr.bf16.mxu0 %v2977
    %4104 = vmatpush1.bf16.msra.mxu0 %v2976
    %4105 = vmatprep.subr.bf16.mxu0 %v2981
    %4106 = vmatpush1.bf16.msra.mxu0 %v2980
    %4107 = vmatprep.subr.bf16.mxu0 %v2985
    %4108 = vmatpush1.bf16.msra.mxu0 %v2984
    %4109 = vmatprep.mubr.bf16.mxu0 %v877
    %4110 = vmatmul.mubr.bf16.gmra.mrb[0].mxu0 %v876
    %v4111 = vpop.f32.mrb[0].mxu0
    %v4112 = vadd.f32 %v4069, %v4111
    %v4113 = vpop.f32.mrb[0].mxu0
    %v4114 = vadd.f32 %v4071, %v4113
    %v4115 = vpop.f32.mrb[0].mxu0
    %v4116 = vadd.f32 %v4073, %v4115
    %v4117 = vpop.f32.mrb[0].mxu0
    %v4118 = vadd.f32 %v4075, %v4117
    %4119 = vdwg.mxu0
    %4120 = vmatprep.subr.bf16.mxu0 %v2989
    %4121 = vmatpush1.bf16.msra.mxu0 %v2988
    %4122 = vmatprep.subr.bf16.mxu0 %v2993
    %4123 = vmatpush1.bf16.msra.mxu0 %v2992
    %4124 = vmatprep.subr.bf16.mxu0 %v2997
    %4125 = vmatpush1.bf16.msra.mxu0 %v2996
    %4126 = vmatprep.subr.bf16.mxu0 %v3001
    %4127 = vmatpush1.bf16.msra.mxu0 %v3000
    %4128 = vmatprep.subr.bf16.mxu0 %v3005
    %4129 = vmatpush1.bf16.msra.mxu0 %v3004
    %4130 = vmatprep.subr.bf16.mxu0 %v3009
    %4131 = vmatpush1.bf16.msra.mxu0 %v3008
    %4132 = vmatprep.subr.bf16.mxu0 %v3013
    %4133 = vmatpush1.bf16.msra.mxu0 %v3012
    %4134 = vmatprep.subr.bf16.mxu0 %v3017
    %4135 = vmatpush1.bf16.msra.mxu0 %v3016
    %4136 = vmatprep.subr.bf16.mxu0 %v3021
    %4137 = vmatpush1.bf16.msra.mxu0 %v3020
    %4138 = vmatprep.subr.bf16.mxu0 %v3025
    %4139 = vmatpush1.bf16.msra.mxu0 %v3024
    %4140 = vmatprep.subr.bf16.mxu0 %v3029
    %4141 = vmatpush1.bf16.msra.mxu0 %v3028
    %4142 = vmatprep.subr.bf16.mxu0 %v3033
    %4143 = vmatpush1.bf16.msra.mxu0 %v3032
    %4144 = vmatprep.subr.bf16.mxu0 %v3037
    %4145 = vmatpush1.bf16.msra.mxu0 %v3036
    %4146 = vmatprep.subr.bf16.mxu0 %v3041
    %4147 = vmatpush1.bf16.msra.mxu0 %v3040
    %4148 = vmatprep.subr.bf16.mxu0 %v3045
    %4149 = vmatpush1.bf16.msra.mxu0 %v3044
    %4150 = vmatprep.subr.bf16.mxu0 %v3049
    %4151 = vmatpush1.bf16.msra.mxu0 %v3048
    %4152 = vmatprep.mubr.bf16.mxu0 %v879
    %4153 = vmatmul.mubr.bf16.gmra.mrb[0].mxu0 %v878
    %v4154 = vpop.f32.mrb[0].mxu0
    %v4155 = vadd.f32 %v4112, %v4154
    %v4156 = vpop.f32.mrb[0].mxu0
    %v4157 = vadd.f32 %v4114, %v4156
    %v4158 = vpop.f32.mrb[0].mxu0
    %v4159 = vadd.f32 %v4116, %v4158
    %v4160 = vpop.f32.mrb[0].mxu0
    %v4161 = vadd.f32 %v4118, %v4160
    %4162 = vdwg.mxu0
    %4163 = vmatprep.subr.bf16.mxu0 %v3053
    %4164 = vmatpush1.bf16.msra.mxu0 %v3052
    %4165 = vmatprep.subr.bf16.mxu0 %v3057
    %4166 = vmatpush1.bf16.msra.mxu0 %v3056
    %4167 = vmatprep.subr.bf16.mxu0 %v3061
    %4168 = vmatpush1.bf16.msra.mxu0 %v3060
    %4169 = vmatprep.subr.bf16.mxu0 %v3065
    %4170 = vmatpush1.bf16.msra.mxu0 %v3064
    %4171 = vmatprep.subr.bf16.mxu0 %v3069
    %4172 = vmatpush1.bf16.msra.mxu0 %v3068
    %4173 = vmatprep.subr.bf16.mxu0 %v3073
    %4174 = vmatpush1.bf16.msra.mxu0 %v3072
    %4175 = vmatprep.subr.bf16.mxu0 %v3077
    %4176 = vmatpush1.bf16.msra.mxu0 %v3076
    %4177 = vmatprep.subr.bf16.mxu0 %v3081
    %4178 = vmatpush1.bf16.msra.mxu0 %v3080
    %4179 = vmatprep.subr.bf16.mxu0 %v3085
    %4180 = vmatpush1.bf16.msra.mxu0 %v3084
    %4181 = vmatprep.subr.bf16.mxu0 %v3089
    %4182 = vmatpush1.bf16.msra.mxu0 %v3088
    %4183 = vmatprep.subr.bf16.mxu0 %v3093
    %4184 = vmatpush1.bf16.msra.mxu0 %v3092
    %4185 = vmatprep.subr.bf16.mxu0 %v3097
    %4186 = vmatpush1.bf16.msra.mxu0 %v3096
    %4187 = vmatprep.subr.bf16.mxu0 %v3101
    %4188 = vmatpush1.bf16.msra.mxu0 %v3100
    %4189 = vmatprep.subr.bf16.mxu0 %v3105
    %4190 = vmatpush1.bf16.msra.mxu0 %v3104
    %4191 = vmatprep.subr.bf16.mxu0 %v3109
    %4192 = vmatpush1.bf16.msra.mxu0 %v3108
    %4193 = vmatprep.subr.bf16.mxu0 %v3113
    %4194 = vmatpush1.bf16.msra.mxu0 %v3112
    %4195 = vmatprep.mubr.bf16.mxu0 %v881
    %4196 = vmatmul.mubr.bf16.gmra.mrb[0].mxu0 %v880
    %v4197 = vpop.f32.mrb[0].mxu0
    %v4198 = vadd.f32 %v4155, %v4197
    %v4199 = vpop.f32.mrb[0].mxu0
    %v4200 = vadd.f32 %v4157, %v4199
    %v4201 = vpop.f32.mrb[0].mxu0
    %v4202 = vadd.f32 %v4159, %v4201
    %v4203 = vpop.f32.mrb[0].mxu0
    %v4204 = vadd.f32 %v4161, %v4203
    %4205 = vdwg.mxu0
    %4206 = vmatprep.subr.bf16.mxu0 %v3117
    %4207 = vmatpush1.bf16.msra.mxu0 %v3116
    %4208 = vmatprep.subr.bf16.mxu0 %v3121
    %4209 = vmatpush1.bf16.msra.mxu0 %v3120
    %4210 = vmatprep.subr.bf16.mxu0 %v3125
    %4211 = vmatpush1.bf16.msra.mxu0 %v3124
    %4212 = vmatprep.subr.bf16.mxu0 %v3129
    %4213 = vmatpush1.bf16.msra.mxu0 %v3128
    %4214 = vmatprep.subr.bf16.mxu0 %v3133
    %4215 = vmatpush1.bf16.msra.mxu0 %v3132
    %4216 = vmatprep.subr.bf16.mxu0 %v3137
    %4217 = vmatpush1.bf16.msra.mxu0 %v3136
    %4218 = vmatprep.subr.bf16.mxu0 %v3141
    %4219 = vmatpush1.bf16.msra.mxu0 %v3140
    %4220 = vmatprep.subr.bf16.mxu0 %v3145
    %4221 = vmatpush1.bf16.msra.mxu0 %v3144
    %4222 = vmatprep.subr.bf16.mxu0 %v3149
    %4223 = vmatpush1.bf16.msra.mxu0 %v3148
    %4224 = vmatprep.subr.bf16.mxu0 %v3153
    %4225 = vmatpush1.bf16.msra.mxu0 %v3152
    %4226 = vmatprep.subr.bf16.mxu0 %v3157
    %4227 = vmatpush1.bf16.msra.mxu0 %v3156
    %4228 = vmatprep.subr.bf16.mxu0 %v3161
    %4229 = vmatpush1.bf16.msra.mxu0 %v3160
    %4230 = vmatprep.subr.bf16.mxu0 %v3165
    %4231 = vmatpush1.bf16.msra.mxu0 %v3164
    %4232 = vmatprep.subr.bf16.mxu0 %v3169
    %4233 = vmatpush1.bf16.msra.mxu0 %v3168
    %4234 = vmatprep.subr.bf16.mxu0 %v3173
    %4235 = vmatpush1.bf16.msra.mxu0 %v3172
    %4236 = vmatprep.subr.bf16.mxu0 %v3177
    %4237 = vmatpush1.bf16.msra.mxu0 %v3176
    %4238 = vmatprep.mubr.bf16.mxu0 %v883
    %4239 = vmatmul.mubr.bf16.gmra.mrb[0].mxu0 %v882
    %v4240 = vpop.f32.mrb[0].mxu0
    %v4241 = vadd.f32 %v4198, %v4240
    %v4242 = vpop.f32.mrb[0].mxu0
    %v4243 = vadd.f32 %v4200, %v4242
    %v4244 = vpop.f32.mrb[0].mxu0
    %v4245 = vadd.f32 %v4202, %v4244
    %v4246 = vpop.f32.mrb[0].mxu0
    %v4247 = vadd.f32 %v4204, %v4246
    %4248 = vdwg.mxu0
    %4249 = vmatprep.subr.bf16.mxu0 %v3181
    %4250 = vmatpush1.bf16.msra.mxu0 %v3180
    %4251 = vmatprep.subr.bf16.mxu0 %v3185
    %4252 = vmatpush1.bf16.msra.mxu0 %v3184
    %4253 = vmatprep.subr.bf16.mxu0 %v3189
    %4254 = vmatpush1.bf16.msra.mxu0 %v3188
    %4255 = vmatprep.subr.bf16.mxu0 %v3193
    %4256 = vmatpush1.bf16.msra.mxu0 %v3192
    %4257 = vmatprep.subr.bf16.mxu0 %v3197
    %4258 = vmatpush1.bf16.msra.mxu0 %v3196
    %4259 = vmatprep.subr.bf16.mxu0 %v3201
    %4260 = vmatpush1.bf16.msra.mxu0 %v3200
    %4261 = vmatprep.subr.bf16.mxu0 %v3205
    %4262 = vmatpush1.bf16.msra.mxu0 %v3204
    %4263 = vmatprep.subr.bf16.mxu0 %v3209
    %4264 = vmatpush1.bf16.msra.mxu0 %v3208
    %4265 = vmatprep.subr.bf16.mxu0 %v3213
    %4266 = vmatpush1.bf16.msra.mxu0 %v3212
    %4267 = vmatprep.subr.bf16.mxu0 %v3217
    %4268 = vmatpush1.bf16.msra.mxu0 %v3216
    %4269 = vmatprep.subr.bf16.mxu0 %v3221
    %4270 = vmatpush1.bf16.msra.mxu0 %v3220
    %4271 = vmatprep.subr.bf16.mxu0 %v3225
    %4272 = vmatpush1.bf16.msra.mxu0 %v3224
    %4273 = vmatprep.subr.bf16.mxu0 %v3229
    %4274 = vmatpush1.bf16.msra.mxu0 %v3228
    %4275 = vmatprep.subr.bf16.mxu0 %v3233
    %4276 = vmatpush1.bf16.msra.mxu0 %v3232
    %4277 = vmatprep.subr.bf16.mxu0 %v3237
    %4278 = vmatpush1.bf16.msra.mxu0 %v3236
    %4279 = vmatprep.subr.bf16.mxu0 %v3241
    %4280 = vmatpush1.bf16.msra.mxu0 %v3240
    %4281 = vmatprep.mubr.bf16.mxu0 %v885
    %4282 = vmatmul.mubr.bf16.gmra.mrb[0].mxu0 %v884
    %v4283 = vpop.f32.mrb[0].mxu0
    %v4284 = vadd.f32 %v4241, %v4283
    %v4285 = vpop.f32.mrb[0].mxu0
    %v4286 = vadd.f32 %v4243, %v4285
    %v4287 = vpop.f32.mrb[0].mxu0
    %v4288 = vadd.f32 %v4245, %v4287
    %v4289 = vpop.f32.mrb[0].mxu0
    %v4290 = vadd.f32 %v4247, %v4289
    %4291 = vdwg.mxu0
    %4292 = vmatprep.subr.bf16.mxu0 %v3245
    %4293 = vmatpush1.bf16.msra.mxu0 %v3244
    %4294 = vmatprep.subr.bf16.mxu0 %v3249
    %4295 = vmatpush1.bf16.msra.mxu0 %v3248
    %4296 = vmatprep.subr.bf16.mxu0 %v3253
    %4297 = vmatpush1.bf16.msra.mxu0 %v3252
    %4298 = vmatprep.subr.bf16.mxu0 %v3257
    %4299 = vmatpush1.bf16.msra.mxu0 %v3256
    %4300 = vmatprep.subr.bf16.mxu0 %v3261
    %4301 = vmatpush1.bf16.msra.mxu0 %v3260
    %4302 = vmatprep.subr.bf16.mxu0 %v3265
    %4303 = vmatpush1.bf16.msra.mxu0 %v3264
    %4304 = vmatprep.subr.bf16.mxu0 %v3269
    %4305 = vmatpush1.bf16.msra.mxu0 %v3268
    %4306 = vmatprep.subr.bf16.mxu0 %v3273
    %4307 = vmatpush1.bf16.msra.mxu0 %v3272
    %4308 = vmatprep.subr.bf16.mxu0 %v3277
    %4309 = vmatpush1.bf16.msra.mxu0 %v3276
    %4310 = vmatprep.subr.bf16.mxu0 %v3281
    %4311 = vmatpush1.bf16.msra.mxu0 %v3280
    %4312 = vmatprep.subr.bf16.mxu0 %v3285
    %4313 = vmatpush1.bf16.msra.mxu0 %v3284
    %4314 = vmatprep.subr.bf16.mxu0 %v3289
    %4315 = vmatpush1.bf16.msra.mxu0 %v3288
    %4316 = vmatprep.subr.bf16.mxu0 %v3293
    %4317 = vmatpush1.bf16.msra.mxu0 %v3292
    %4318 = vmatprep.subr.bf16.mxu0 %v3297
    %4319 = vmatpush1.bf16.msra.mxu0 %v3296
    %4320 = vmatprep.subr.bf16.mxu0 %v3301
    %4321 = vmatpush1.bf16.msra.mxu0 %v3300
    %4322 = vmatprep.subr.bf16.mxu0 %v3305
    %4323 = vmatpush1.bf16.msra.mxu0 %v3304
    %4324 = vmatprep.mubr.bf16.mxu0 %v887
    %4325 = vmatmul.mubr.bf16.gmra.mrb[0].mxu0 %v886
    %v4326 = vpop.f32.mrb[0].mxu0
    %v4327 = vadd.f32 %v4284, %v4326
    %v4328 = vpop.f32.mrb[0].mxu0
    %v4329 = vadd.f32 %v4286, %v4328
    %v4330 = vpop.f32.mrb[0].mxu0
    %v4331 = vadd.f32 %v4288, %v4330
    %v4332 = vpop.f32.mrb[0].mxu0
    %v4333 = vadd.f32 %v4290, %v4332
    %4334 = vdwg.mxu0
    %4335 = vmatprep.subr.bf16.mxu0 %v3309
    %4336 = vmatpush1.bf16.msra.mxu0 %v3308
    %4337 = vmatprep.subr.bf16.mxu0 %v3313
    %4338 = vmatpush1.bf16.msra.mxu0 %v3312
    %4339 = vmatprep.subr.bf16.mxu0 %v3317
    %4340 = vmatpush1.bf16.msra.mxu0 %v3316
    %4341 = vmatprep.subr.bf16.mxu0 %v3321
    %4342 = vmatpush1.bf16.msra.mxu0 %v3320
    %4343 = vmatprep.subr.bf16.mxu0 %v3325
    %4344 = vmatpush1.bf16.msra.mxu0 %v3324
    %4345 = vmatprep.subr.bf16.mxu0 %v3329
    %4346 = vmatpush1.bf16.msra.mxu0 %v3328
    %4347 = vmatprep.subr.bf16.mxu0 %v3333
    %4348 = vmatpush1.bf16.msra.mxu0 %v3332
    %4349 = vmatprep.subr.bf16.mxu0 %v3337
    %4350 = vmatpush1.bf16.msra.mxu0 %v3336
    %4351 = vmatprep.subr.bf16.mxu0 0
    %4352 = vmatpush1.bf16.msra.mxu0 0
    %4353 = vmatprep.subr.bf16.mxu0 0
    %4354 = vmatpush1.bf16.msra.mxu0 0
    %4355 = vmatprep.subr.bf16.mxu0 0
    %4356 = vmatpush1.bf16.msra.mxu0 0
    %4357 = vmatprep.subr.bf16.mxu0 0
    %4358 = vmatpush1.bf16.msra.mxu0 0
    %4359 = vmatprep.subr.bf16.mxu0 0
    %4360 = vmatpush1.bf16.msra.mxu0 0
    %4361 = vmatprep.subr.bf16.mxu0 0
    %4362 = vmatpush1.bf16.msra.mxu0 0
    %4363 = vmatprep.subr.bf16.mxu0 0
    %4364 = vmatpush1.bf16.msra.mxu0 0
    %4365 = vmatprep.subr.bf16.mxu0 0
    %4366 = vmatpush1.bf16.msra.mxu0 0
    %4367 = vmatprep.mubr.bf16.mxu0 0
    %4368 = vmatmul.mubr.bf16.gmra.mrb[0].mxu0 %v888
    %v4369 = vpop.f32.mrb[0].mxu0
    %v4370 = vadd.f32 %v4327, %v4369
    %v4371 = vpop.f32.mrb[0].mxu0
    %v4372 = vadd.f32 %v4329, %v4371
    %v4373 = vpop.f32.mrb[0].mxu0
    %v4374 = vadd.f32 %v4331, %v4373
    %v4375 = vpop.f32.mrb[0].mxu0
    %v4376 = vadd.f32 %v4333, %v4375
    %4377 = vdwg.mxu0
    %4378 = vmatprep.subr.bf16.mxu0 %v2735
    %4379 = vmatpush1.bf16.msra.mxu0 %v2734
    %4380 = vmatprep.subr.bf16.mxu0 %v2739
    %4381 = vmatpush1.bf16.msra.mxu0 %v2738
    %4382 = vmatprep.subr.bf16.mxu0 %v2743
    %4383 = vmatpush1.bf16.msra.mxu0 %v2742
    %4384 = vmatprep.subr.bf16.mxu0 %v2747
    %4385 = vmatpush1.bf16.msra.mxu0 %v2746
    %4386 = vmatprep.subr.bf16.mxu0 %v2751
    %4387 = vmatpush1.bf16.msra.mxu0 %v2750
    %4388 = vmatprep.subr.bf16.mxu0 %v2755
    %4389 = vmatpush1.bf16.msra.mxu0 %v2754
    %4390 = vmatprep.subr.bf16.mxu0 %v2759
    %4391 = vmatpush1.bf16.msra.mxu0 %v2758
    %4392 = vmatprep.subr.bf16.mxu0 %v2763
    %4393 = vmatpush1.bf16.msra.mxu0 %v2762
    %4394 = vmatprep.subr.bf16.mxu0 %v2767
    %4395 = vmatpush1.bf16.msra.mxu0 %v2766
    %4396 = vmatprep.subr.bf16.mxu0 %v2771
    %4397 = vmatpush1.bf16.msra.mxu0 %v2770
    %4398 = vmatprep.subr.bf16.mxu0 %v2775
    %4399 = vmatpush1.bf16.msra.mxu0 %v2774
    %4400 = vmatprep.subr.bf16.mxu0 %v2779
    %4401 = vmatpush1.bf16.msra.mxu0 %v2778
    %4402 = vmatprep.subr.bf16.mxu0 %v2783
    %4403 = vmatpush1.bf16.msra.mxu0 %v2782
    %4404 = vmatprep.subr.bf16.mxu0 %v2787
    %4405 = vmatpush1.bf16.msra.mxu0 %v2786
    %4406 = vmatprep.subr.bf16.mxu0 %v2791
    %4407 = vmatpush1.bf16.msra.mxu0 %v2790
    %4408 = vmatprep.subr.bf16.mxu0 %v2795
    %4409 = vmatpush1.bf16.msra.mxu0 %v2794
    %4410 = vmatprep.mubr.bf16.mxu0 %v871
    %4411 = vmatmul.mubr.bf16.gmra.mrb[0].mxu0 %v870
    %v4412 = vpop.f32.mrb[0].mxu0
    %v4413 = vadd.f32 %v803, %v4412
    %v4414 = vpop.f32.mrb[0].mxu0
    %v4415 = vadd.f32 %v807, %v4414
    %v4416 = vpop.f32.mrb[0].mxu0
    %v4417 = vadd.f32 %v803, %v4416
    %v4418 = vpop.f32.mrb[0].mxu0
    %v4419 = vadd.f32 %v807, %v4418
    %4420 = vdwg.mxu0
    %4421 = vmatprep.subr.bf16.mxu0 %v2799
    %4422 = vmatpush1.bf16.msra.mxu0 %v2798
    %4423 = vmatprep.subr.bf16.mxu0 %v2803
    %4424 = vmatpush1.bf16.msra.mxu0 %v2802
    %4425 = vmatprep.subr.bf16.mxu0 %v2807
    %4426 = vmatpush1.bf16.msra.mxu0 %v2806
    %4427 = vmatprep.subr.bf16.mxu0 %v2811
    %4428 = vmatpush1.bf16.msra.mxu0 %v2810
    %4429 = vmatprep.subr.bf16.mxu0 %v2815
    %4430 = vmatpush1.bf16.msra.mxu0 %v2814
    %4431 = vmatprep.subr.bf16.mxu0 %v2819
    %4432 = vmatpush1.bf16.msra.mxu0 %v2818
    %4433 = vmatprep.subr.bf16.mxu0 %v2823
    %4434 = vmatpush1.bf16.msra.mxu0 %v2822
    %4435 = vmatprep.subr.bf16.mxu0 %v2827
    %4436 = vmatpush1.bf16.msra.mxu0 %v2826
    %4437 = vmatprep.subr.bf16.mxu0 %v2831
    %4438 = vmatpush1.bf16.msra.mxu0 %v2830
    %4439 = vmatprep.subr.bf16.mxu0 %v2835
    %4440 = vmatpush1.bf16.msra.mxu0 %v2834
    %4441 = vmatprep.subr.bf16.mxu0 %v2839
    %4442 = vmatpush1.bf16.msra.mxu0 %v2838
    %4443 = vmatprep.subr.bf16.mxu0 %v2843
    %4444 = vmatpush1.bf16.msra.mxu0 %v2842
    %4445 = vmatprep.subr.bf16.mxu0 %v2847
    %4446 = vmatpush1.bf16.msra.mxu0 %v2846
    %4447 = vmatprep.subr.bf16.mxu0 %v2851
    %4448 = vmatpush1.bf16.msra.mxu0 %v2850
    %4449 = vmatprep.subr.bf16.mxu0 %v2855
    %4450 = vmatpush1.bf16.msra.mxu0 %v2854
    %4451 = vmatprep.subr.bf16.mxu0 %v2859
    %4452 = vmatpush1.bf16.msra.mxu0 %v2858
    %4453 = vmatprep.mubr.bf16.mxu0 %v873
    %4454 = vmatmul.mubr.bf16.gmra.mrb[0].mxu0 %v872
    %v4455 = vpop.f32.mrb[0].mxu0
    %v4456 = vadd.f32 %v4413, %v4455
    %v4457 = vpop.f32.mrb[0].mxu0
    %v4458 = vadd.f32 %v4415, %v4457
    %v4459 = vpop.f32.mrb[0].mxu0
    %v4460 = vadd.f32 %v4417, %v4459
    %v4461 = vpop.f32.mrb[0].mxu0
    %v4462 = vadd.f32 %v4419, %v4461
    %4463 = vdwg.mxu0
    %4464 = vmatprep.subr.bf16.mxu0 %v2863
    %4465 = vmatpush1.bf16.msra.mxu0 %v2862
    %4466 = vmatprep.subr.bf16.mxu0 %v2867
    %4467 = vmatpush1.bf16.msra.mxu0 %v2866
    %4468 = vmatprep.subr.bf16.mxu0 %v2871
    %4469 = vmatpush1.bf16.msra.mxu0 %v2870
    %4470 = vmatprep.subr.bf16.mxu0 %v2875
    %4471 = vmatpush1.bf16.msra.mxu0 %v2874
    %4472 = vmatprep.subr.bf16.mxu0 %v2879
    %4473 = vmatpush1.bf16.msra.mxu0 %v2878
    %4474 = vmatprep.subr.bf16.mxu0 %v2883
    %4475 = vmatpush1.bf16.msra.mxu0 %v2882
    %4476 = vmatprep.subr.bf16.mxu0 %v2887
    %4477 = vmatpush1.bf16.msra.mxu0 %v2886
    %4478 = vmatprep.subr.bf16.mxu0 %v2891
    %4479 = vmatpush1.bf16.msra.mxu0 %v2890
    %4480 = vmatprep.subr.bf16.mxu0 %v2895
    %4481 = vmatpush1.bf16.msra.mxu0 %v2894
    %4482 = vmatprep.subr.bf16.mxu0 %v2899
    %4483 = vmatpush1.bf16.msra.mxu0 %v2898
    %4484 = vmatprep.subr.bf16.mxu0 %v2903
    %4485 = vmatpush1.bf16.msra.mxu0 %v2902
    %4486 = vmatprep.subr.bf16.mxu0 %v2907
    %4487 = vmatpush1.bf16.msra.mxu0 %v2906
    %4488 = vmatprep.subr.bf16.mxu0 %v2911
    %4489 = vmatpush1.bf16.msra.mxu0 %v2910
    %4490 = vmatprep.subr.bf16.mxu0 %v2915
    %4491 = vmatpush1.bf16.msra.mxu0 %v2914
    %4492 = vmatprep.subr.bf16.mxu0 %v2919
    %4493 = vmatpush1.bf16.msra.mxu0 %v2918
    %4494 = vmatprep.subr.bf16.mxu0 %v2923
    %4495 = vmatpush1.bf16.msra.mxu0 %v2922
    %4496 = vmatprep.mubr.bf16.mxu0 %v875
    %4497 = vmatmul.mubr.bf16.gmra.mrb[0].mxu0 %v874
    %v4498 = vpop.f32.mrb[0].mxu0
    %v4499 = vadd.f32 %v4456, %v4498
    %v4500 = vpop.f32.mrb[0].mxu0
    %v4501 = vadd.f32 %v4458, %v4500
    %v4502 = vpop.f32.mrb[0].mxu0
    %v4503 = vadd.f32 %v4460, %v4502
    %v4504 = vpop.f32.mrb[0].mxu0
    %v4505 = vadd.f32 %v4462, %v4504
    %4506 = vdwg.mxu0
    %4507 = vmatprep.subr.bf16.mxu0 %v2927
    %4508 = vmatpush1.bf16.msra.mxu0 %v2926
    %4509 = vmatprep.subr.bf16.mxu0 %v2931
    %4510 = vmatpush1.bf16.msra.mxu0 %v2930
    %4511 = vmatprep.subr.bf16.mxu0 %v2935
    %4512 = vmatpush1.bf16.msra.mxu0 %v2934
    %4513 = vmatprep.subr.bf16.mxu0 %v2939
    %4514 = vmatpush1.bf16.msra.mxu0 %v2938
    %4515 = vmatprep.subr.bf16.mxu0 %v2943
    %4516 = vmatpush1.bf16.msra.mxu0 %v2942
    %4517 = vmatprep.subr.bf16.mxu0 %v2947
    %4518 = vmatpush1.bf16.msra.mxu0 %v2946
    %4519 = vmatprep.subr.bf16.mxu0 %v2951
    %4520 = vmatpush1.bf16.msra.mxu0 %v2950
    %4521 = vmatprep.subr.bf16.mxu0 %v2955
    %4522 = vmatpush1.bf16.msra.mxu0 %v2954
    %4523 = vmatprep.subr.bf16.mxu0 %v2959
    %4524 = vmatpush1.bf16.msra.mxu0 %v2958
    %4525 = vmatprep.subr.bf16.mxu0 %v2963
    %4526 = vmatpush1.bf16.msra.mxu0 %v2962
    %4527 = vmatprep.subr.bf16.mxu0 %v2967
    %4528 = vmatpush1.bf16.msra.mxu0 %v2966
    %4529 = vmatprep.subr.bf16.mxu0 %v2971
    %4530 = vmatpush1.bf16.msra.mxu0 %v2970
    %4531 = vmatprep.subr.bf16.mxu0 %v2975
    %4532 = vmatpush1.bf16.msra.mxu0 %v2974
    %4533 = vmatprep.subr.bf16.mxu0 %v2979
    %4534 = vmatpush1.bf16.msra.mxu0 %v2978
    %4535 = vmatprep.subr.bf16.mxu0 %v2983
    %4536 = vmatpush1.bf16.msra.mxu0 %v2982
    %4537 = vmatprep.subr.bf16.mxu0 %v2987
    %4538 = vmatpush1.bf16.msra.mxu0 %v2986
    %4539 = vmatprep.mubr.bf16.mxu0 %v877
    %4540 = vmatmul.mubr.bf16.gmra.mrb[0].mxu0 %v876
    %v4541 = vpop.f32.mrb[0].mxu0
    %v4542 = vadd.f32 %v4499, %v4541
    %v4543 = vpop.f32.mrb[0].mxu0
    %v4544 = vadd.f32 %v4501, %v4543
    %v4545 = vpop.f32.mrb[0].mxu0
    %v4546 = vadd.f32 %v4503, %v4545
    %v4547 = vpop.f32.mrb[0].mxu0
    %v4548 = vadd.f32 %v4505, %v4547
    %4549 = vdwg.mxu0
    %4550 = vmatprep.subr.bf16.mxu0 %v2991
    %4551 = vmatpush1.bf16.msra.mxu0 %v2990
    %4552 = vmatprep.subr.bf16.mxu0 %v2995
    %4553 = vmatpush1.bf16.msra.mxu0 %v2994
    %4554 = vmatprep.subr.bf16.mxu0 %v2999
    %4555 = vmatpush1.bf16.msra.mxu0 %v2998
    %4556 = vmatprep.subr.bf16.mxu0 %v3003
    %4557 = vmatpush1.bf16.msra.mxu0 %v3002
    %4558 = vmatprep.subr.bf16.mxu0 %v3007
    %4559 = vmatpush1.bf16.msra.mxu0 %v3006
    %4560 = vmatprep.subr.bf16.mxu0 %v3011
    %4561 = vmatpush1.bf16.msra.mxu0 %v3010
    %4562 = vmatprep.subr.bf16.mxu0 %v3015
    %4563 = vmatpush1.bf16.msra.mxu0 %v3014
    %4564 = vmatprep.subr.bf16.mxu0 %v3019
    %4565 = vmatpush1.bf16.msra.mxu0 %v3018
    %4566 = vmatprep.subr.bf16.mxu0 %v3023
    %4567 = vmatpush1.bf16.msra.mxu0 %v3022
    %4568 = vmatprep.subr.bf16.mxu0 %v3027
    %4569 = vmatpush1.bf16.msra.mxu0 %v3026
    %4570 = vmatprep.subr.bf16.mxu0 %v3031
    %4571 = vmatpush1.bf16.msra.mxu0 %v3030
    %4572 = vmatprep.subr.bf16.mxu0 %v3035
    %4573 = vmatpush1.bf16.msra.mxu0 %v3034
    %4574 = vmatprep.subr.bf16.mxu0 %v3039
    %4575 = vmatpush1.bf16.msra.mxu0 %v3038
    %4576 = vmatprep.subr.bf16.mxu0 %v3043
    %4577 = vmatpush1.bf16.msra.mxu0 %v3042
    %4578 = vmatprep.subr.bf16.mxu0 %v3047
    %4579 = vmatpush1.bf16.msra.mxu0 %v3046
    %4580 = vmatprep.subr.bf16.mxu0 %v3051
    %4581 = vmatpush1.bf16.msra.mxu0 %v3050
    %4582 = vmatprep.mubr.bf16.mxu0 %v879
    %4583 = vmatmul.mubr.bf16.gmra.mrb[0].mxu0 %v878
    %v4584 = vpop.f32.mrb[0].mxu0
    %v4585 = vadd.f32 %v4542, %v4584
    %v4586 = vpop.f32.mrb[0].mxu0
    %v4587 = vadd.f32 %v4544, %v4586
    %v4588 = vpop.f32.mrb[0].mxu0
    %v4589 = vadd.f32 %v4546, %v4588
    %v4590 = vpop.f32.mrb[0].mxu0
    %v4591 = vadd.f32 %v4548, %v4590
    %4592 = vdwg.mxu0
    %4593 = vmatprep.subr.bf16.mxu0 %v3055
    %4594 = vmatpush1.bf16.msra.mxu0 %v3054
    %4595 = vmatprep.subr.bf16.mxu0 %v3059
    %4596 = vmatpush1.bf16.msra.mxu0 %v3058
    %4597 = vmatprep.subr.bf16.mxu0 %v3063
    %4598 = vmatpush1.bf16.msra.mxu0 %v3062
    %4599 = vmatprep.subr.bf16.mxu0 %v3067
    %4600 = vmatpush1.bf16.msra.mxu0 %v3066
    %4601 = vmatprep.subr.bf16.mxu0 %v3071
    %4602 = vmatpush1.bf16.msra.mxu0 %v3070
    %4603 = vmatprep.subr.bf16.mxu0 %v3075
    %4604 = vmatpush1.bf16.msra.mxu0 %v3074
    %4605 = vmatprep.subr.bf16.mxu0 %v3079
    %4606 = vmatpush1.bf16.msra.mxu0 %v3078
    %4607 = vmatprep.subr.bf16.mxu0 %v3083
    %4608 = vmatpush1.bf16.msra.mxu0 %v3082
    %4609 = vmatprep.subr.bf16.mxu0 %v3087
    %4610 = vmatpush1.bf16.msra.mxu0 %v3086
    %4611 = vmatprep.subr.bf16.mxu0 %v3091
    %4612 = vmatpush1.bf16.msra.mxu0 %v3090
    %4613 = vmatprep.subr.bf16.mxu0 %v3095
    %4614 = vmatpush1.bf16.msra.mxu0 %v3094
    %4615 = vmatprep.subr.bf16.mxu0 %v3099
    %4616 = vmatpush1.bf16.msra.mxu0 %v3098
    %4617 = vmatprep.subr.bf16.mxu0 %v3103
    %4618 = vmatpush1.bf16.msra.mxu0 %v3102
    %4619 = vmatprep.subr.bf16.mxu0 %v3107
    %4620 = vmatpush1.bf16.msra.mxu0 %v3106
    %4621 = vmatprep.subr.bf16.mxu0 %v3111
    %4622 = vmatpush1.bf16.msra.mxu0 %v3110
    %4623 = vmatprep.subr.bf16.mxu0 %v3115
    %4624 = vmatpush1.bf16.msra.mxu0 %v3114
    %4625 = vmatprep.mubr.bf16.mxu0 %v881
    %4626 = vmatmul.mubr.bf16.gmra.mrb[0].mxu0 %v880
    %v4627 = vpop.f32.mrb[0].mxu0
    %v4628 = vadd.f32 %v4585, %v4627
    %v4629 = vpop.f32.mrb[0].mxu0
    %v4630 = vadd.f32 %v4587, %v4629
    %v4631 = vpop.f32.mrb[0].mxu0
    %v4632 = vadd.f32 %v4589, %v4631
    %v4633 = vpop.f32.mrb[0].mxu0
    %v4634 = vadd.f32 %v4591, %v4633
    %4635 = vdwg.mxu0
    %4636 = vmatprep.subr.bf16.mxu0 %v3119
    %4637 = vmatpush1.bf16.msra.mxu0 %v3118
    %4638 = vmatprep.subr.bf16.mxu0 %v3123
    %4639 = vmatpush1.bf16.msra.mxu0 %v3122
    %4640 = vmatprep.subr.bf16.mxu0 %v3127
    %4641 = vmatpush1.bf16.msra.mxu0 %v3126
    %4642 = vmatprep.subr.bf16.mxu0 %v3131
    %4643 = vmatpush1.bf16.msra.mxu0 %v3130
    %4644 = vmatprep.subr.bf16.mxu0 %v3135
    %4645 = vmatpush1.bf16.msra.mxu0 %v3134
    %4646 = vmatprep.subr.bf16.mxu0 %v3139
    %4647 = vmatpush1.bf16.msra.mxu0 %v3138
    %4648 = vmatprep.subr.bf16.mxu0 %v3143
    %4649 = vmatpush1.bf16.msra.mxu0 %v3142
    %4650 = vmatprep.subr.bf16.mxu0 %v3147
    %4651 = vmatpush1.bf16.msra.mxu0 %v3146
    %4652 = vmatprep.subr.bf16.mxu0 %v3151
    %4653 = vmatpush1.bf16.msra.mxu0 %v3150
    %4654 = vmatprep.subr.bf16.mxu0 %v3155
    %4655 = vmatpush1.bf16.msra.mxu0 %v3154
    %4656 = vmatprep.subr.bf16.mxu0 %v3159
    %4657 = vmatpush1.bf16.msra.mxu0 %v3158
    %4658 = vmatprep.subr.bf16.mxu0 %v3163
    %4659 = vmatpush1.bf16.msra.mxu0 %v3162
    %4660 = vmatprep.subr.bf16.mxu0 %v3167
    %4661 = vmatpush1.bf16.msra.mxu0 %v3166
    %4662 = vmatprep.subr.bf16.mxu0 %v3171
    %4663 = vmatpush1.bf16.msra.mxu0 %v3170
    %4664 = vmatprep.subr.bf16.mxu0 %v3175
    %4665 = vmatpush1.bf16.msra.mxu0 %v3174
    %4666 = vmatprep.subr.bf16.mxu0 %v3179
    %4667 = vmatpush1.bf16.msra.mxu0 %v3178
    %4668 = vmatprep.mubr.bf16.mxu0 %v883
    %4669 = vmatmul.mubr.bf16.gmra.mrb[0].mxu0 %v882
    %v4670 = vpop.f32.mrb[0].mxu0
    %v4671 = vadd.f32 %v4628, %v4670
    %v4672 = vpop.f32.mrb[0].mxu0
    %v4673 = vadd.f32 %v4630, %v4672
    %v4674 = vpop.f32.mrb[0].mxu0
    %v4675 = vadd.f32 %v4632, %v4674
    %v4676 = vpop.f32.mrb[0].mxu0
    %v4677 = vadd.f32 %v4634, %v4676
    %4678 = vdwg.mxu0
    %4679 = vmatprep.subr.bf16.mxu0 %v3183
    %4680 = vmatpush1.bf16.msra.mxu0 %v3182
    %4681 = vmatprep.subr.bf16.mxu0 %v3187
    %4682 = vmatpush1.bf16.msra.mxu0 %v3186
    %4683 = vmatprep.subr.bf16.mxu0 %v3191
    %4684 = vmatpush1.bf16.msra.mxu0 %v3190
    %4685 = vmatprep.subr.bf16.mxu0 %v3195
    %4686 = vmatpush1.bf16.msra.mxu0 %v3194
    %4687 = vmatprep.subr.bf16.mxu0 %v3199
    %4688 = vmatpush1.bf16.msra.mxu0 %v3198
    %4689 = vmatprep.subr.bf16.mxu0 %v3203
    %4690 = vmatpush1.bf16.msra.mxu0 %v3202
    %4691 = vmatprep.subr.bf16.mxu0 %v3207
    %4692 = vmatpush1.bf16.msra.mxu0 %v3206
    %4693 = vmatprep.subr.bf16.mxu0 %v3211
    %4694 = vmatpush1.bf16.msra.mxu0 %v3210
    %4695 = vmatprep.subr.bf16.mxu0 %v3215
    %4696 = vmatpush1.bf16.msra.mxu0 %v3214
    %4697 = vmatprep.subr.bf16.mxu0 %v3219
    %4698 = vmatpush1.bf16.msra.mxu0 %v3218
    %4699 = vmatprep.subr.bf16.mxu0 %v3223
    %4700 = vmatpush1.bf16.msra.mxu0 %v3222
    %4701 = vmatprep.subr.bf16.mxu0 %v3227
    %4702 = vmatpush1.bf16.msra.mxu0 %v3226
    %4703 = vmatprep.subr.bf16.mxu0 %v3231
    %4704 = vmatpush1.bf16.msra.mxu0 %v3230
    %4705 = vmatprep.subr.bf16.mxu0 %v3235
    %4706 = vmatpush1.bf16.msra.mxu0 %v3234
    %4707 = vmatprep.subr.bf16.mxu0 %v3239
    %4708 = vmatpush1.bf16.msra.mxu0 %v3238
    %4709 = vmatprep.subr.bf16.mxu0 %v3243
    %4710 = vmatpush1.bf16.msra.mxu0 %v3242
    %4711 = vmatprep.mubr.bf16.mxu0 %v885
    %4712 = vmatmul.mubr.bf16.gmra.mrb[0].mxu0 %v884
    %v4713 = vpop.f32.mrb[0].mxu0
    %v4714 = vadd.f32 %v4671, %v4713
    %v4715 = vpop.f32.mrb[0].mxu0
    %v4716 = vadd.f32 %v4673, %v4715
    %v4717 = vpop.f32.mrb[0].mxu0
    %v4718 = vadd.f32 %v4675, %v4717
    %v4719 = vpop.f32.mrb[0].mxu0
    %v4720 = vadd.f32 %v4677, %v4719
    %4721 = vdwg.mxu0
    %4722 = vmatprep.subr.bf16.mxu0 %v3247
    %4723 = vmatpush1.bf16.msra.mxu0 %v3246
    %4724 = vmatprep.subr.bf16.mxu0 %v3251
    %4725 = vmatpush1.bf16.msra.mxu0 %v3250
    %4726 = vmatprep.subr.bf16.mxu0 %v3255
    %4727 = vmatpush1.bf16.msra.mxu0 %v3254
    %4728 = vmatprep.subr.bf16.mxu0 %v3259
    %4729 = vmatpush1.bf16.msra.mxu0 %v3258
    %4730 = vmatprep.subr.bf16.mxu0 %v3263
    %4731 = vmatpush1.bf16.msra.mxu0 %v3262
    %4732 = vmatprep.subr.bf16.mxu0 %v3267
    %4733 = vmatpush1.bf16.msra.mxu0 %v3266
    %4734 = vmatprep.subr.bf16.mxu0 %v3271
    %4735 = vmatpush1.bf16.msra.mxu0 %v3270
    %4736 = vmatprep.subr.bf16.mxu0 %v3275
    %4737 = vmatpush1.bf16.msra.mxu0 %v3274
    %4738 = vmatprep.subr.bf16.mxu0 %v3279
    %4739 = vmatpush1.bf16.msra.mxu0 %v3278
    %4740 = vmatprep.subr.bf16.mxu0 %v3283
    %4741 = vmatpush1.bf16.msra.mxu0 %v3282
    %4742 = vmatprep.subr.bf16.mxu0 %v3287
    %4743 = vmatpush1.bf16.msra.mxu0 %v3286
    %4744 = vmatprep.subr.bf16.mxu0 %v3291
    %4745 = vmatpush1.bf16.msra.mxu0 %v3290
    %4746 = vmatprep.subr.bf16.mxu0 %v3295
    %4747 = vmatpush1.bf16.msra.mxu0 %v3294
    %4748 = vmatprep.subr.bf16.mxu0 %v3299
    %4749 = vmatpush1.bf16.msra.mxu0 %v3298
    %4750 = vmatprep.subr.bf16.mxu0 %v3303
    %4751 = vmatpush1.bf16.msra.mxu0 %v3302
    %4752 = vmatprep.subr.bf16.mxu0 %v3307
    %4753 = vmatpush1.bf16.msra.mxu0 %v3306
    %4754 = vmatprep.mubr.bf16.mxu0 %v887
    %4755 = vmatmul.mubr.bf16.gmra.mrb[0].mxu0 %v886
    %v4756 = vpop.f32.mrb[0].mxu0
    %v4757 = vadd.f32 %v4714, %v4756
    %v4758 = vpop.f32.mrb[0].mxu0
    %v4759 = vadd.f32 %v4716, %v4758
    %v4760 = vpop.f32.mrb[0].mxu0
    %v4761 = vadd.f32 %v4718, %v4760
    %v4762 = vpop.f32.mrb[0].mxu0
    %v4763 = vadd.f32 %v4720, %v4762
    %4764 = vdwg.mxu0
    %4765 = vmatprep.subr.bf16.mxu0 %v3311
    %4766 = vmatpush1.bf16.msra.mxu0 %v3310
    %4767 = vmatprep.subr.bf16.mxu0 %v3315
    %4768 = vmatpush1.bf16.msra.mxu0 %v3314
    %4769 = vmatprep.subr.bf16.mxu0 %v3319
    %4770 = vmatpush1.bf16.msra.mxu0 %v3318
    %4771 = vmatprep.subr.bf16.mxu0 %v3323
    %4772 = vmatpush1.bf16.msra.mxu0 %v3322
    %4773 = vmatprep.subr.bf16.mxu0 %v3327
    %4774 = vmatpush1.bf16.msra.mxu0 %v3326
    %4775 = vmatprep.subr.bf16.mxu0 %v3331
    %4776 = vmatpush1.bf16.msra.mxu0 %v3330
    %4777 = vmatprep.subr.bf16.mxu0 %v3335
    %4778 = vmatpush1.bf16.msra.mxu0 %v3334
    %4779 = vmatprep.subr.bf16.mxu0 %v3339
    %4780 = vmatpush1.bf16.msra.mxu0 %v3338
    %4781 = vmatprep.subr.bf16.mxu0 0
    %4782 = vmatpush1.bf16.msra.mxu0 0
    %4783 = vmatprep.subr.bf16.mxu0 0
    %4784 = vmatpush1.bf16.msra.mxu0 0
    %4785 = vmatprep.subr.bf16.mxu0 0
    %4786 = vmatpush1.bf16.msra.mxu0 0
    %4787 = vmatprep.subr.bf16.mxu0 0
    %4788 = vmatpush1.bf16.msra.mxu0 0
    %4789 = vmatprep.subr.bf16.mxu0 0
    %4790 = vmatpush1.bf16.msra.mxu0 0
    %4791 = vmatprep.subr.bf16.mxu0 0
    %4792 = vmatpush1.bf16.msra.mxu0 0
    %4793 = vmatprep.subr.bf16.mxu0 0
    %4794 = vmatpush1.bf16.msra.mxu0 0
    %4795 = vmatprep.subr.bf16.mxu0 0
    %4796 = vmatpush1.bf16.msra.mxu0 0
    %4797 = vmatprep.mubr.bf16.mxu0 0
    %4798 = vmatmul.mubr.bf16.gmra.mrb[0].mxu0 %v888
    %v4799 = vpop.f32.mrb[0].mxu0
    %v4800 = vadd.f32 %v4757, %v4799
    %v4801 = vpop.f32.mrb[0].mxu0
    %v4802 = vadd.f32 %v4759, %v4801
    %v4803 = vpop.f32.mrb[0].mxu0
    %v4804 = vadd.f32 %v4761, %v4803
    %v4805 = vpop.f32.mrb[0].mxu0
    %v4806 = vadd.f32 %v4763, %v4805
    %4807 = vdwg.mxu0
    %v4808 = vmax.f32 %v4370, 0.0
    %v4809 = vmax.f32 %v4372, 0.0
    %v4810 = vmax.f32 %v4800, 0.0
    %v4811 = vmax.f32 %v4802, 0.0
    %v4812 = vmax.f32 %v4374, 0.0
    %v4813 = vmax.f32 %v4376, 0.0
    %v4814 = vmax.f32 %v4804, 0.0
    %v4815 = vmax.f32 %v4806, 0.0
    %v4816 = vpack.c.bf16 %v4812, %v4808
    %v4817 = vpack.c.bf16 %v4813, %v4809
    %v4818 = vpack.c.bf16 %v4814, %v4810
    %v4819 = vpack.c.bf16 %v4815, %v4811
    %v4820 = vld [vmem:[#allocation4] sm:$0xff]
    %v4821 = vld [vmem:[#allocation4 + $0x8] sm:$0xff]
    %v4822 = vld [vmem:[#allocation4 + $0x10] sm:$0xff]
    %v4823 = vld [vmem:[#allocation4 + $0x18] sm:$0xff]
    %v4824 = vld [vmem:[#allocation4 + $0x20] sm:$0xff]
    %v4825 = vld [vmem:[#allocation4 + $0x28] sm:$0xff]
    %v4826 = vld [vmem:[#allocation4 + $0x30] sm:$0xff]
    %v4827 = vld [vmem:[#allocation4 + $0x38] sm:$0xff]
    %v4828 = vld [vmem:[#allocation4 + $0x40] sm:$0xff]
    %v4829 = vld [vmem:[#allocation4 + $0x48] sm:$0xff]
    %v4830 = vld [vmem:[#allocation4 + $0x50] sm:$0xff]
    %v4831 = vld [vmem:[#allocation4 + $0x58] sm:$0xff]
    %v4832 = vld [vmem:[#allocation4 + $0x60] sm:$0xff]
    %v4833 = vld [vmem:[#allocation4 + $0x68] sm:$0xff]
    %v4834 = vld [vmem:[#allocation4 + $0x70] sm:$0xff]
    %v4835 = vld [vmem:[#allocation4 + $0x78] sm:$0xff]
    %v4836 = vld [vmem:[#allocation4 + $0x80] sm:$0xff]
    %v4837 = vld [vmem:[#allocation4 + $0x88] sm:$0xff]
    %v4838 = vld [vmem:[#allocation4 + $0x90] sm:$0xff]
    %v4839 = vld [vmem:[#allocation4 + $0x98] sm:$0xff]
    %v4840 = vld [vmem:[#allocation4 + $0xa0] sm:$0xff]
    %v4841 = vld [vmem:[#allocation4 + $0xa8] sm:$0xff]
    %v4842 = vld [vmem:[#allocation4 + $0xb0] sm:$0xff]
    %v4843 = vld [vmem:[#allocation4 + $0xb8] sm:$0xff]
    %v4844 = vld [vmem:[#allocation4 + $0xc0] sm:$0xff]
    %v4845 = vld [vmem:[#allocation4 + $0xc8] sm:$0xff]
    %v4846 = vld [vmem:[#allocation4 + $0xd0] sm:$0xff]
    %v4847 = vld [vmem:[#allocation4 + $0xd8] sm:$0xff]
    %v4848 = vld [vmem:[#allocation4 + $0xe0] sm:$0xff]
    %v4849 = vld [vmem:[#allocation4 + $0xe8] sm:$0xff]
    %v4850 = vld [vmem:[#allocation4 + $0xf0] sm:$0xff]
    %v4851 = vld [vmem:[#allocation4 + $0xf8] sm:$0xff]
    %v4852 = vld [vmem:[#allocation4 + $0x100] sm:$0xff]
    %v4853 = vld [vmem:[#allocation4 + $0x108] sm:$0xff]
    %v4854 = vld [vmem:[#allocation4 + $0x110] sm:$0xff]
    %v4855 = vld [vmem:[#allocation4 + $0x118] sm:$0xff]
    %v4856 = vld [vmem:[#allocation4 + $0x120] sm:$0xff]
    %v4857 = vld [vmem:[#allocation4 + $0x128] sm:$0xff]
    %v4858 = vld [vmem:[#allocation4 + $0x130] sm:$0xff]
    %v4859 = vld [vmem:[#allocation4 + $0x138] sm:$0xff]
    %v4860 = vld [vmem:[#allocation4 + $0x140] sm:$0xff]
    %v4861 = vld [vmem:[#allocation4 + $0x148] sm:$0xff]
    %v4862 = vld [vmem:[#allocation4 + $0x150] sm:$0xff]
    %v4863 = vld [vmem:[#allocation4 + $0x158] sm:$0xff]
    %v4864 = vld [vmem:[#allocation4 + $0x160] sm:$0xff]
    %v4865 = vld [vmem:[#allocation4 + $0x168] sm:$0xff]
    %v4866 = vld [vmem:[#allocation4 + $0x170] sm:$0xff]
    %v4867 = vld [vmem:[#allocation4 + $0x178] sm:$0xff]
    %v4868 = vld [vmem:[#allocation4 + $0x180] sm:$0xff]
    %v4869 = vld [vmem:[#allocation4 + $0x188] sm:$0xff]
    %v4870 = vld [vmem:[#allocation4 + $0x190] sm:$0xff]
    %v4871 = vld [vmem:[#allocation4 + $0x198] sm:$0xff]
    %v4872 = vld [vmem:[#allocation4 + $0x1a0] sm:$0xff]
    %v4873 = vld [vmem:[#allocation4 + $0x1a8] sm:$0xff]
    %v4874 = vld [vmem:[#allocation4 + $0x1b0] sm:$0xff]
    %v4875 = vld [vmem:[#allocation4 + $0x1b8] sm:$0xff]
    %v4876 = vld [vmem:[#allocation4 + $0x1c0] sm:$0xff]
    %v4877 = vld [vmem:[#allocation4 + $0x1c8] sm:$0xff]
    %v4878 = vld [vmem:[#allocation4 + $0x1d0] sm:$0xff]
    %v4879 = vld [vmem:[#allocation4 + $0x1d8] sm:$0xff]
    %v4880 = vld [vmem:[#allocation4 + $0x1e0] sm:$0xff]
    %v4881 = vld [vmem:[#allocation4 + $0x1e8] sm:$0xff]
    %v4882 = vld [vmem:[#allocation4 + $0x1f0] sm:$0xff]
    %v4883 = vld [vmem:[#allocation4 + $0x1f8] sm:$0xff]
    %v4884 = vld [vmem:[#allocation4 + $0x200] sm:$0xff]
    %v4885 = vld [vmem:[#allocation4 + $0x208] sm:$0xff]
    %v4886 = vld [vmem:[#allocation4 + $0x210] sm:$0xff]
    %v4887 = vld [vmem:[#allocation4 + $0x218] sm:$0xff]
    %v4888 = vld [vmem:[#allocation4 + $0x220] sm:$0xff]
    %v4889 = vld [vmem:[#allocation4 + $0x228] sm:$0xff]
    %v4890 = vld [vmem:[#allocation4 + $0x230] sm:$0xff]
    %v4891 = vld [vmem:[#allocation4 + $0x238] sm:$0xff]
    %v4892 = vld [vmem:[#allocation4 + $0x240] sm:$0xff]
    %v4893 = vld [vmem:[#allocation4 + $0x248] sm:$0xff]
    %v4894 = vld [vmem:[#allocation4 + $0x250] sm:$0xff]
    %v4895 = vld [vmem:[#allocation4 + $0x258] sm:$0xff]
    %v4896 = vld [vmem:[#allocation4 + $0x260] sm:$0xff]
    %v4897 = vld [vmem:[#allocation4 + $0x268] sm:$0xff]
    %v4898 = vld [vmem:[#allocation4 + $0x270] sm:$0xff]
    %v4899 = vld [vmem:[#allocation4 + $0x278] sm:$0xff]
    %v4900 = vld [vmem:[#allocation4 + $0x280] sm:$0xff]
    %v4901 = vld [vmem:[#allocation4 + $0x288] sm:$0xff]
    %v4902 = vld [vmem:[#allocation4 + $0x290] sm:$0xff]
    %v4903 = vld [vmem:[#allocation4 + $0x298] sm:$0xff]
    %v4904 = vld [vmem:[#allocation4 + $0x2a0] sm:$0xff]
    %v4905 = vld [vmem:[#allocation4 + $0x2a8] sm:$0xff]
    %v4906 = vld [vmem:[#allocation4 + $0x2b0] sm:$0xff]
    %v4907 = vld [vmem:[#allocation4 + $0x2b8] sm:$0xff]
    %v4908 = vld [vmem:[#allocation4 + $0x2c0] sm:$0xff]
    %v4909 = vld [vmem:[#allocation4 + $0x2c8] sm:$0xff]
    %v4910 = vld [vmem:[#allocation4 + $0x2d0] sm:$0xff]
    %v4911 = vld [vmem:[#allocation4 + $0x2d8] sm:$0xff]
    %v4912 = vld [vmem:[#allocation4 + $0x2e0] sm:$0xff]
    %v4913 = vld [vmem:[#allocation4 + $0x2e8] sm:$0xff]
    %v4914 = vld [vmem:[#allocation4 + $0x2f0] sm:$0xff]
    %v4915 = vld [vmem:[#allocation4 + $0x2f8] sm:$0xff]
    %v4916 = vld [vmem:[#allocation4 + $0x300] sm:$0xff]
    %v4917 = vld [vmem:[#allocation4 + $0x308] sm:$0xff]
    %v4918 = vld [vmem:[#allocation4 + $0x310] sm:$0xff]
    %v4919 = vld [vmem:[#allocation4 + $0x318] sm:$0xff]
    %v4920 = vld [vmem:[#allocation4 + $0x320] sm:$0xff]
    %v4921 = vld [vmem:[#allocation4 + $0x328] sm:$0xff]
    %v4922 = vld [vmem:[#allocation4 + $0x330] sm:$0xff]
    %v4923 = vld [vmem:[#allocation4 + $0x338] sm:$0xff]
    %v4924 = vld [vmem:[#allocation4 + $0x340] sm:$0xff]
    %v4925 = vld [vmem:[#allocation4 + $0x348] sm:$0xff]
    %v4926 = vld [vmem:[#allocation4 + $0x350] sm:$0xff]
    %v4927 = vld [vmem:[#allocation4 + $0x358] sm:$0xff]
    %v4928 = vld [vmem:[#allocation4 + $0x360] sm:$0xff]
    %v4929 = vld [vmem:[#allocation4 + $0x368] sm:$0xff]
    %v4930 = vld [vmem:[#allocation4 + $0x370] sm:$0xff]
    %v4931 = vld [vmem:[#allocation4 + $0x378] sm:$0xff]
    %v4932 = vld [vmem:[#allocation4 + $0x380] sm:$0xff]
    %v4933 = vld [vmem:[#allocation4 + $0x388] sm:$0xff]
    %v4934 = vld [vmem:[#allocation4 + $0x390] sm:$0xff]
    %v4935 = vld [vmem:[#allocation4 + $0x398] sm:$0xff]
    %v4936 = vld [vmem:[#allocation4 + $0x3a0] sm:$0xff]
    %v4937 = vld [vmem:[#allocation4 + $0x3a8] sm:$0xff]
    %v4938 = vld [vmem:[#allocation4 + $0x3b0] sm:$0xff]
    %v4939 = vld [vmem:[#allocation4 + $0x3b8] sm:$0xff]
    %v4940 = vld [vmem:[#allocation4 + $0x3c0] sm:$0xff]
    %v4941 = vld [vmem:[#allocation4 + $0x3c8] sm:$0xff]
    %v4942 = vld [vmem:[#allocation4 + $0x3d0] sm:$0xff]
    %v4943 = vld [vmem:[#allocation4 + $0x3d8] sm:$0xff]
    %v4944 = vld [vmem:[#allocation4 + $0x3e0] sm:$0xff]
    %v4945 = vld [vmem:[#allocation4 + $0x3e8] sm:$0xff]
    %v4946 = vld [vmem:[#allocation4 + $0x3f0] sm:$0xff]
    %v4947 = vld [vmem:[#allocation4 + $0x3f8] sm:$0xff]
    %v4948 = vld [vmem:[#allocation15 + $0x4] sm:$0xf]
    %v4950 = vlaneseq
    %v4951 = vshrl.u32 %v4950, 7
    %v4952 = vsub.s32 0, %v4951
    %v4953 = vrot.slane %v4948, %v4952
    %v4954 = vlaneseq
    %v4955 = vshrl.u32 %v4954, 7
    %v4956 = vsub.s32 1, %v4955
    %v4957 = vrot.slane %v4948, %v4956
    %v4958 = vlaneseq
    %v4959 = vshrl.u32 %v4958, 7
    %v4960 = vsub.s32 2, %v4959
    %v4961 = vrot.slane %v4948, %v4960
    %v4962 = vlaneseq
    %v4963 = vshrl.u32 %v4962, 7
    %v4964 = vsub.s32 3, %v4963
    %v4965 = vrot.slane %v4948, %v4964
    %v5098 = vunpack.c.l.b16 %v4820
    %v5099 = vunpack.c.h.b16 %v4820
    %v5100 = vunpack.c.l.b16 %v4821
    %v5101 = vunpack.c.h.b16 %v4821
    %v5102 = vunpack.c.l.b16 %v4822
    %v5103 = vunpack.c.h.b16 %v4822
    %v5104 = vunpack.c.l.b16 %v4823
    %v5105 = vunpack.c.h.b16 %v4823
    %v5106 = vunpack.c.l.b16 %v4824
    %v5107 = vunpack.c.h.b16 %v4824
    %v5108 = vunpack.c.l.b16 %v4825
    %v5109 = vunpack.c.h.b16 %v4825
    %v5110 = vunpack.c.l.b16 %v4826
    %v5111 = vunpack.c.h.b16 %v4826
    %v5112 = vunpack.c.l.b16 %v4827
    %v5113 = vunpack.c.h.b16 %v4827
    %v5114 = vunpack.c.l.b16 %v4828
    %v5115 = vunpack.c.h.b16 %v4828
    %v5116 = vunpack.c.l.b16 %v4829
    %v5117 = vunpack.c.h.b16 %v4829
    %v5118 = vunpack.c.l.b16 %v4830
    %v5119 = vunpack.c.h.b16 %v4830
    %v5120 = vunpack.c.l.b16 %v4831
    %v5121 = vunpack.c.h.b16 %v4831
    %v5122 = vunpack.c.l.b16 %v4832
    %v5123 = vunpack.c.h.b16 %v4832
    %v5124 = vunpack.c.l.b16 %v4833
    %v5125 = vunpack.c.h.b16 %v4833
    %v5126 = vunpack.c.l.b16 %v4834
    %v5127 = vunpack.c.h.b16 %v4834
    %v5128 = vunpack.c.l.b16 %v4835
    %v5129 = vunpack.c.h.b16 %v4835
    %v5130 = vunpack.c.l.b16 %v4836
    %v5131 = vunpack.c.h.b16 %v4836
    %v5132 = vunpack.c.l.b16 %v4837
    %v5133 = vunpack.c.h.b16 %v4837
    %v5134 = vunpack.c.l.b16 %v4838
    %v5135 = vunpack.c.h.b16 %v4838
    %v5136 = vunpack.c.l.b16 %v4839
    %v5137 = vunpack.c.h.b16 %v4839
    %v5138 = vunpack.c.l.b16 %v4840
    %v5139 = vunpack.c.h.b16 %v4840
    %v5140 = vunpack.c.l.b16 %v4841
    %v5141 = vunpack.c.h.b16 %v4841
    %v5142 = vunpack.c.l.b16 %v4842
    %v5143 = vunpack.c.h.b16 %v4842
    %v5144 = vunpack.c.l.b16 %v4843
    %v5145 = vunpack.c.h.b16 %v4843
    %v5146 = vunpack.c.l.b16 %v4844
    %v5147 = vunpack.c.h.b16 %v4844
    %v5148 = vunpack.c.l.b16 %v4845
    %v5149 = vunpack.c.h.b16 %v4845
    %v5150 = vunpack.c.l.b16 %v4846
    %v5151 = vunpack.c.h.b16 %v4846
    %v5152 = vunpack.c.l.b16 %v4847
    %v5153 = vunpack.c.h.b16 %v4847
    %v5154 = vunpack.c.l.b16 %v4848
    %v5155 = vunpack.c.h.b16 %v4848
    %v5156 = vunpack.c.l.b16 %v4849
    %v5157 = vunpack.c.h.b16 %v4849
    %v5158 = vunpack.c.l.b16 %v4850
    %v5159 = vunpack.c.h.b16 %v4850
    %v5160 = vunpack.c.l.b16 %v4851
    %v5161 = vunpack.c.h.b16 %v4851
    %v5162 = vunpack.c.l.b16 %v4852
    %v5163 = vunpack.c.h.b16 %v4852
    %v5164 = vunpack.c.l.b16 %v4853
    %v5165 = vunpack.c.h.b16 %v4853
    %v5166 = vunpack.c.l.b16 %v4854
    %v5167 = vunpack.c.h.b16 %v4854
    %v5168 = vunpack.c.l.b16 %v4855
    %v5169 = vunpack.c.h.b16 %v4855
    %v5170 = vunpack.c.l.b16 %v4856
    %v5171 = vunpack.c.h.b16 %v4856
    %v5172 = vunpack.c.l.b16 %v4857
    %v5173 = vunpack.c.h.b16 %v4857
    %v5174 = vunpack.c.l.b16 %v4858
    %v5175 = vunpack.c.h.b16 %v4858
    %v5176 = vunpack.c.l.b16 %v4859
    %v5177 = vunpack.c.h.b16 %v4859
    %v5178 = vunpack.c.l.b16 %v4860
    %v5179 = vunpack.c.h.b16 %v4860
    %v5180 = vunpack.c.l.b16 %v4861
    %v5181 = vunpack.c.h.b16 %v4861
    %v5182 = vunpack.c.l.b16 %v4862
    %v5183 = vunpack.c.h.b16 %v4862
    %v5184 = vunpack.c.l.b16 %v4863
    %v5185 = vunpack.c.h.b16 %v4863
    %v5186 = vunpack.c.l.b16 %v4864
    %v5187 = vunpack.c.h.b16 %v4864
    %v5188 = vunpack.c.l.b16 %v4865
    %v5189 = vunpack.c.h.b16 %v4865
    %v5190 = vunpack.c.l.b16 %v4866
    %v5191 = vunpack.c.h.b16 %v4866
    %v5192 = vunpack.c.l.b16 %v4867
    %v5193 = vunpack.c.h.b16 %v4867
    %v5194 = vunpack.c.l.b16 %v4868
    %v5195 = vunpack.c.h.b16 %v4868
    %v5196 = vunpack.c.l.b16 %v4869
    %v5197 = vunpack.c.h.b16 %v4869
    %v5198 = vunpack.c.l.b16 %v4870
    %v5199 = vunpack.c.h.b16 %v4870
    %v5200 = vunpack.c.l.b16 %v4871
    %v5201 = vunpack.c.h.b16 %v4871
    %v5202 = vunpack.c.l.b16 %v4872
    %v5203 = vunpack.c.h.b16 %v4872
    %v5204 = vunpack.c.l.b16 %v4873
    %v5205 = vunpack.c.h.b16 %v4873
    %v5206 = vunpack.c.l.b16 %v4874
    %v5207 = vunpack.c.h.b16 %v4874
    %v5208 = vunpack.c.l.b16 %v4875
    %v5209 = vunpack.c.h.b16 %v4875
    %v5210 = vunpack.c.l.b16 %v4876
    %v5211 = vunpack.c.h.b16 %v4876
    %v5212 = vunpack.c.l.b16 %v4877
    %v5213 = vunpack.c.h.b16 %v4877
    %v5214 = vunpack.c.l.b16 %v4878
    %v5215 = vunpack.c.h.b16 %v4878
    %v5216 = vunpack.c.l.b16 %v4879
    %v5217 = vunpack.c.h.b16 %v4879
    %v5218 = vunpack.c.l.b16 %v4880
    %v5219 = vunpack.c.h.b16 %v4880
    %v5220 = vunpack.c.l.b16 %v4881
    %v5221 = vunpack.c.h.b16 %v4881
    %v5222 = vunpack.c.l.b16 %v4882
    %v5223 = vunpack.c.h.b16 %v4882
    %v5224 = vunpack.c.l.b16 %v4883
    %v5225 = vunpack.c.h.b16 %v4883
    %v5226 = vunpack.c.l.b16 %v4884
    %v5227 = vunpack.c.h.b16 %v4884
    %v5228 = vunpack.c.l.b16 %v4885
    %v5229 = vunpack.c.h.b16 %v4885
    %v5230 = vunpack.c.l.b16 %v4886
    %v5231 = vunpack.c.h.b16 %v4886
    %v5232 = vunpack.c.l.b16 %v4887
    %v5233 = vunpack.c.h.b16 %v4887
    %v5234 = vunpack.c.l.b16 %v4888
    %v5235 = vunpack.c.h.b16 %v4888
    %v5236 = vunpack.c.l.b16 %v4889
    %v5237 = vunpack.c.h.b16 %v4889
    %v5238 = vunpack.c.l.b16 %v4890
    %v5239 = vunpack.c.h.b16 %v4890
    %v5240 = vunpack.c.l.b16 %v4891
    %v5241 = vunpack.c.h.b16 %v4891
    %v5242 = vunpack.c.l.b16 %v4892
    %v5243 = vunpack.c.h.b16 %v4892
    %v5244 = vunpack.c.l.b16 %v4893
    %v5245 = vunpack.c.h.b16 %v4893
    %v5246 = vunpack.c.l.b16 %v4894
    %v5247 = vunpack.c.h.b16 %v4894
    %v5248 = vunpack.c.l.b16 %v4895
    %v5249 = vunpack.c.h.b16 %v4895
    %v5250 = vunpack.c.l.b16 %v4896
    %v5251 = vunpack.c.h.b16 %v4896
    %v5252 = vunpack.c.l.b16 %v4897
    %v5253 = vunpack.c.h.b16 %v4897
    %v5254 = vunpack.c.l.b16 %v4898
    %v5255 = vunpack.c.h.b16 %v4898
    %v5256 = vunpack.c.l.b16 %v4899
    %v5257 = vunpack.c.h.b16 %v4899
    %v5258 = vunpack.c.l.b16 %v4900
    %v5259 = vunpack.c.h.b16 %v4900
    %v5260 = vunpack.c.l.b16 %v4901
    %v5261 = vunpack.c.h.b16 %v4901
    %v5262 = vunpack.c.l.b16 %v4902
    %v5263 = vunpack.c.h.b16 %v4902
    %v5264 = vunpack.c.l.b16 %v4903
    %v5265 = vunpack.c.h.b16 %v4903
    %v5266 = vunpack.c.l.b16 %v4904
    %v5267 = vunpack.c.h.b16 %v4904
    %v5268 = vunpack.c.l.b16 %v4905
    %v5269 = vunpack.c.h.b16 %v4905
    %v5270 = vunpack.c.l.b16 %v4906
    %v5271 = vunpack.c.h.b16 %v4906
    %v5272 = vunpack.c.l.b16 %v4907
    %v5273 = vunpack.c.h.b16 %v4907
    %v5274 = vunpack.c.l.b16 %v4908
    %v5275 = vunpack.c.h.b16 %v4908
    %v5276 = vunpack.c.l.b16 %v4909
    %v5277 = vunpack.c.h.b16 %v4909
    %v5278 = vunpack.c.l.b16 %v4910
    %v5279 = vunpack.c.h.b16 %v4910
    %v5280 = vunpack.c.l.b16 %v4911
    %v5281 = vunpack.c.h.b16 %v4911
    %v5282 = vunpack.c.l.b16 %v4912
    %v5283 = vunpack.c.h.b16 %v4912
    %v5284 = vunpack.c.l.b16 %v4913
    %v5285 = vunpack.c.h.b16 %v4913
    %v5286 = vunpack.c.l.b16 %v4914
    %v5287 = vunpack.c.h.b16 %v4914
    %v5288 = vunpack.c.l.b16 %v4915
    %v5289 = vunpack.c.h.b16 %v4915
    %v5290 = vunpack.c.l.b16 %v4916
    %v5291 = vunpack.c.h.b16 %v4916
    %v5292 = vunpack.c.l.b16 %v4917
    %v5293 = vunpack.c.h.b16 %v4917
    %v5294 = vunpack.c.l.b16 %v4918
    %v5295 = vunpack.c.h.b16 %v4918
    %v5296 = vunpack.c.l.b16 %v4919
    %v5297 = vunpack.c.h.b16 %v4919
    %v5298 = vunpack.c.l.b16 %v4920
    %v5299 = vunpack.c.h.b16 %v4920
    %v5300 = vunpack.c.l.b16 %v4921
    %v5301 = vunpack.c.h.b16 %v4921
    %v5302 = vunpack.c.l.b16 %v4922
    %v5303 = vunpack.c.h.b16 %v4922
    %v5304 = vunpack.c.l.b16 %v4923
    %v5305 = vunpack.c.h.b16 %v4923
    %v5306 = vunpack.c.l.b16 %v4924
    %v5307 = vunpack.c.h.b16 %v4924
    %v5308 = vunpack.c.l.b16 %v4925
    %v5309 = vunpack.c.h.b16 %v4925
    %v5310 = vunpack.c.l.b16 %v4926
    %v5311 = vunpack.c.h.b16 %v4926
    %v5312 = vunpack.c.l.b16 %v4927
    %v5313 = vunpack.c.h.b16 %v4927
    %v5314 = vunpack.c.l.b16 %v4928
    %v5315 = vunpack.c.h.b16 %v4928
    %v5316 = vunpack.c.l.b16 %v4929
    %v5317 = vunpack.c.h.b16 %v4929
    %v5318 = vunpack.c.l.b16 %v4930
    %v5319 = vunpack.c.h.b16 %v4930
    %v5320 = vunpack.c.l.b16 %v4931
    %v5321 = vunpack.c.h.b16 %v4931
    %v5322 = vunpack.c.l.b16 %v4932
    %v5323 = vunpack.c.h.b16 %v4932
    %v5324 = vunpack.c.l.b16 %v4933
    %v5325 = vunpack.c.h.b16 %v4933
    %v5326 = vunpack.c.l.b16 %v4934
    %v5327 = vunpack.c.h.b16 %v4934
    %v5328 = vunpack.c.l.b16 %v4935
    %v5329 = vunpack.c.h.b16 %v4935
    %v5330 = vunpack.c.l.b16 %v4936
    %v5331 = vunpack.c.h.b16 %v4936
    %v5332 = vunpack.c.l.b16 %v4937
    %v5333 = vunpack.c.h.b16 %v4937
    %v5334 = vunpack.c.l.b16 %v4938
    %v5335 = vunpack.c.h.b16 %v4938
    %v5336 = vunpack.c.l.b16 %v4939
    %v5337 = vunpack.c.h.b16 %v4939
    %v5338 = vunpack.c.l.b16 %v4940
    %v5339 = vunpack.c.h.b16 %v4940
    %v5340 = vunpack.c.l.b16 %v4941
    %v5341 = vunpack.c.h.b16 %v4941
    %v5342 = vunpack.c.l.b16 %v4942
    %v5343 = vunpack.c.h.b16 %v4942
    %v5344 = vunpack.c.l.b16 %v4943
    %v5345 = vunpack.c.h.b16 %v4943
    %v5346 = vunpack.c.l.b16 %v4944
    %v5347 = vunpack.c.h.b16 %v4944
    %v5348 = vunpack.c.l.b16 %v4945
    %v5349 = vunpack.c.h.b16 %v4945
    %v5350 = vunpack.c.l.b16 %v4946
    %v5351 = vunpack.c.h.b16 %v4946
    %v5352 = vunpack.c.l.b16 %v4947
    %v5353 = vunpack.c.h.b16 %v4947
    %v5354 = vpack.c.b16 %v5102, %v5098
    %v5355 = vpack.c.b16 %v5103, %v5099
    %v5356 = vpack.c.b16 %v5104, %v5100
    %v5357 = vpack.c.b16 %v5105, %v5101
    %v5358 = vpack.c.b16 %v5110, %v5106
    %v5359 = vpack.c.b16 %v5111, %v5107
    %v5360 = vpack.c.b16 %v5112, %v5108
    %v5361 = vpack.c.b16 %v5113, %v5109
    %v5362 = vpack.c.b16 %v5118, %v5114
    %v5363 = vpack.c.b16 %v5119, %v5115
    %v5364 = vpack.c.b16 %v5120, %v5116
    %v5365 = vpack.c.b16 %v5121, %v5117
    %v5366 = vpack.c.b16 %v5126, %v5122
    %v5367 = vpack.c.b16 %v5127, %v5123
    %v5368 = vpack.c.b16 %v5128, %v5124
    %v5369 = vpack.c.b16 %v5129, %v5125
    %v5370 = vpack.c.b16 %v5134, %v5130
    %v5371 = vpack.c.b16 %v5135, %v5131
    %v5372 = vpack.c.b16 %v5136, %v5132
    %v5373 = vpack.c.b16 %v5137, %v5133
    %v5374 = vpack.c.b16 %v5142, %v5138
    %v5375 = vpack.c.b16 %v5143, %v5139
    %v5376 = vpack.c.b16 %v5144, %v5140
    %v5377 = vpack.c.b16 %v5145, %v5141
    %v5378 = vpack.c.b16 %v5150, %v5146
    %v5379 = vpack.c.b16 %v5151, %v5147
    %v5380 = vpack.c.b16 %v5152, %v5148
    %v5381 = vpack.c.b16 %v5153, %v5149
    %v5382 = vpack.c.b16 %v5158, %v5154
    %v5383 = vpack.c.b16 %v5159, %v5155
    %v5384 = vpack.c.b16 %v5160, %v5156
    %v5385 = vpack.c.b16 %v5161, %v5157
    %v5386 = vpack.c.b16 %v5166, %v5162
    %v5387 = vpack.c.b16 %v5167, %v5163
    %v5388 = vpack.c.b16 %v5168, %v5164
    %v5389 = vpack.c.b16 %v5169, %v5165
    %v5390 = vpack.c.b16 %v5174, %v5170
    %v5391 = vpack.c.b16 %v5175, %v5171
    %v5392 = vpack.c.b16 %v5176, %v5172
    %v5393 = vpack.c.b16 %v5177, %v5173
    %v5394 = vpack.c.b16 %v5182, %v5178
    %v5395 = vpack.c.b16 %v5183, %v5179
    %v5396 = vpack.c.b16 %v5184, %v5180
    %v5397 = vpack.c.b16 %v5185, %v5181
    %v5398 = vpack.c.b16 %v5190, %v5186
    %v5399 = vpack.c.b16 %v5191, %v5187
    %v5400 = vpack.c.b16 %v5192, %v5188
    %v5401 = vpack.c.b16 %v5193, %v5189
    %v5402 = vpack.c.b16 %v5198, %v5194
    %v5403 = vpack.c.b16 %v5199, %v5195
    %v5404 = vpack.c.b16 %v5200, %v5196
    %v5405 = vpack.c.b16 %v5201, %v5197
    %v5406 = vpack.c.b16 %v5206, %v5202
    %v5407 = vpack.c.b16 %v5207, %v5203
    %v5408 = vpack.c.b16 %v5208, %v5204
    %v5409 = vpack.c.b16 %v5209, %v5205
    %v5410 = vpack.c.b16 %v5214, %v5210
    %v5411 = vpack.c.b16 %v5215, %v5211
    %v5412 = vpack.c.b16 %v5216, %v5212
    %v5413 = vpack.c.b16 %v5217, %v5213
    %v5414 = vpack.c.b16 %v5222, %v5218
    %v5415 = vpack.c.b16 %v5223, %v5219
    %v5416 = vpack.c.b16 %v5224, %v5220
    %v5417 = vpack.c.b16 %v5225, %v5221
    %v5418 = vpack.c.b16 %v5230, %v5226
    %v5419 = vpack.c.b16 %v5231, %v5227
    %v5420 = vpack.c.b16 %v5232, %v5228
    %v5421 = vpack.c.b16 %v5233, %v5229
    %v5422 = vpack.c.b16 %v5238, %v5234
    %v5423 = vpack.c.b16 %v5239, %v5235
    %v5424 = vpack.c.b16 %v5240, %v5236
    %v5425 = vpack.c.b16 %v5241, %v5237
    %v5426 = vpack.c.b16 %v5246, %v5242
    %v5427 = vpack.c.b16 %v5247, %v5243
    %v5428 = vpack.c.b16 %v5248, %v5244
    %v5429 = vpack.c.b16 %v5249, %v5245
    %v5430 = vpack.c.b16 %v5254, %v5250
    %v5431 = vpack.c.b16 %v5255, %v5251
    %v5432 = vpack.c.b16 %v5256, %v5252
    %v5433 = vpack.c.b16 %v5257, %v5253
    %v5434 = vpack.c.b16 %v5262, %v5258
    %v5435 = vpack.c.b16 %v5263, %v5259
    %v5436 = vpack.c.b16 %v5264, %v5260
    %v5437 = vpack.c.b16 %v5265, %v5261
    %v5438 = vpack.c.b16 %v5270, %v5266
    %v5439 = vpack.c.b16 %v5271, %v5267
    %v5440 = vpack.c.b16 %v5272, %v5268
    %v5441 = vpack.c.b16 %v5273, %v5269
    %v5442 = vpack.c.b16 %v5278, %v5274
    %v5443 = vpack.c.b16 %v5279, %v5275
    %v5444 = vpack.c.b16 %v5280, %v5276
    %v5445 = vpack.c.b16 %v5281, %v5277
    %v5446 = vpack.c.b16 %v5286, %v5282
    %v5447 = vpack.c.b16 %v5287, %v5283
    %v5448 = vpack.c.b16 %v5288, %v5284
    %v5449 = vpack.c.b16 %v5289, %v5285
    %v5450 = vpack.c.b16 %v5294, %v5290
    %v5451 = vpack.c.b16 %v5295, %v5291
    %v5452 = vpack.c.b16 %v5296, %v5292
    %v5453 = vpack.c.b16 %v5297, %v5293
    %v5454 = vpack.c.b16 %v5302, %v5298
    %v5455 = vpack.c.b16 %v5303, %v5299
    %v5456 = vpack.c.b16 %v5304, %v5300
    %v5457 = vpack.c.b16 %v5305, %v5301
    %v5458 = vpack.c.b16 %v5310, %v5306
    %v5459 = vpack.c.b16 %v5311, %v5307
    %v5460 = vpack.c.b16 %v5312, %v5308
    %v5461 = vpack.c.b16 %v5313, %v5309
    %v5462 = vpack.c.b16 %v5318, %v5314
    %v5463 = vpack.c.b16 %v5319, %v5315
    %v5464 = vpack.c.b16 %v5320, %v5316
    %v5465 = vpack.c.b16 %v5321, %v5317
    %v5466 = vpack.c.b16 %v5326, %v5322
    %v5467 = vpack.c.b16 %v5327, %v5323
    %v5468 = vpack.c.b16 %v5328, %v5324
    %v5469 = vpack.c.b16 %v5329, %v5325
    %v5470 = vpack.c.b16 %v5334, %v5330
    %v5471 = vpack.c.b16 %v5335, %v5331
    %v5472 = vpack.c.b16 %v5336, %v5332
    %v5473 = vpack.c.b16 %v5337, %v5333
    %v5474 = vpack.c.b16 %v5342, %v5338
    %v5475 = vpack.c.b16 %v5343, %v5339
    %v5476 = vpack.c.b16 %v5344, %v5340
    %v5477 = vpack.c.b16 %v5345, %v5341
    %v5478 = vpack.c.b16 %v5350, %v5346
    %v5479 = vpack.c.b16 %v5351, %v5347
    %v5480 = vpack.c.b16 %v5352, %v5348
    %v5481 = vpack.c.b16 %v5353, %v5349
    %5610 = vmatprep.subr.bf16.mxu0 %v5355
    %5611 = vmatpush1.bf16.msra.mxu0 %v5354
    %5612 = vmatprep.subr.bf16.mxu0 %v5359
    %5613 = vmatpush1.bf16.msra.mxu0 %v5358
    %5614 = vmatprep.subr.bf16.mxu0 %v5363
    %5615 = vmatpush1.bf16.msra.mxu0 %v5362
    %5616 = vmatprep.subr.bf16.mxu0 %v5367
    %5617 = vmatpush1.bf16.msra.mxu0 %v5366
    %5618 = vmatprep.subr.bf16.mxu0 %v5371
    %5619 = vmatpush1.bf16.msra.mxu0 %v5370
    %5620 = vmatprep.subr.bf16.mxu0 %v5375
    %5621 = vmatpush1.bf16.msra.mxu0 %v5374
    %5622 = vmatprep.subr.bf16.mxu0 %v5379
    %5623 = vmatpush1.bf16.msra.mxu0 %v5378
    %5624 = vmatprep.subr.bf16.mxu0 %v5383
    %5625 = vmatpush1.bf16.msra.mxu0 %v5382
    %5626 = vmatprep.subr.bf16.mxu0 %v5387
    %5627 = vmatpush1.bf16.msra.mxu0 %v5386
    %5628 = vmatprep.subr.bf16.mxu0 %v5391
    %5629 = vmatpush1.bf16.msra.mxu0 %v5390
    %5630 = vmatprep.subr.bf16.mxu0 %v5395
    %5631 = vmatpush1.bf16.msra.mxu0 %v5394
    %5632 = vmatprep.subr.bf16.mxu0 %v5399
    %5633 = vmatpush1.bf16.msra.mxu0 %v5398
    %5634 = vmatprep.subr.bf16.mxu0 %v5403
    %5635 = vmatpush1.bf16.msra.mxu0 %v5402
    %5636 = vmatprep.subr.bf16.mxu0 %v5407
    %5637 = vmatpush1.bf16.msra.mxu0 %v5406
    %5638 = vmatprep.subr.bf16.mxu0 %v5411
    %5639 = vmatpush1.bf16.msra.mxu0 %v5410
    %5640 = vmatprep.subr.bf16.mxu0 %v5415
    %5641 = vmatpush1.bf16.msra.mxu0 %v5414
    %5642 = vmatprep.mubr.bf16.mxu0 %v4817
    %5643 = vmatmul.mubr.bf16.gmra.mrb[0].mxu0 %v4816
    %v5644 = vpop.f32.mrb[0].mxu0
    %v5645 = vadd.f32 %v4953, %v5644
    %v5646 = vpop.f32.mrb[0].mxu0
    %v5647 = vadd.f32 %v4957, %v5646
    %v5648 = vpop.f32.mrb[0].mxu0
    %v5649 = vadd.f32 %v4953, %v5648
    %v5650 = vpop.f32.mrb[0].mxu0
    %v5651 = vadd.f32 %v4957, %v5650
    %5652 = vdwg.mxu0
    %5653 = vmatprep.subr.bf16.mxu0 %v5419
    %5654 = vmatpush1.bf16.msra.mxu0 %v5418
    %5655 = vmatprep.subr.bf16.mxu0 %v5423
    %5656 = vmatpush1.bf16.msra.mxu0 %v5422
    %5657 = vmatprep.subr.bf16.mxu0 %v5427
    %5658 = vmatpush1.bf16.msra.mxu0 %v5426
    %5659 = vmatprep.subr.bf16.mxu0 %v5431
    %5660 = vmatpush1.bf16.msra.mxu0 %v5430
    %5661 = vmatprep.subr.bf16.mxu0 %v5435
    %5662 = vmatpush1.bf16.msra.mxu0 %v5434
    %5663 = vmatprep.subr.bf16.mxu0 %v5439
    %5664 = vmatpush1.bf16.msra.mxu0 %v5438
    %5665 = vmatprep.subr.bf16.mxu0 %v5443
    %5666 = vmatpush1.bf16.msra.mxu0 %v5442
    %5667 = vmatprep.subr.bf16.mxu0 %v5447
    %5668 = vmatpush1.bf16.msra.mxu0 %v5446
    %5669 = vmatprep.subr.bf16.mxu0 %v5451
    %5670 = vmatpush1.bf16.msra.mxu0 %v5450
    %5671 = vmatprep.subr.bf16.mxu0 %v5455
    %5672 = vmatpush1.bf16.msra.mxu0 %v5454
    %5673 = vmatprep.subr.bf16.mxu0 %v5459
    %5674 = vmatpush1.bf16.msra.mxu0 %v5458
    %5675 = vmatprep.subr.bf16.mxu0 %v5463
    %5676 = vmatpush1.bf16.msra.mxu0 %v5462
    %5677 = vmatprep.subr.bf16.mxu0 %v5467
    %5678 = vmatpush1.bf16.msra.mxu0 %v5466
    %5679 = vmatprep.subr.bf16.mxu0 %v5471
    %5680 = vmatpush1.bf16.msra.mxu0 %v5470
    %5681 = vmatprep.subr.bf16.mxu0 %v5475
    %5682 = vmatpush1.bf16.msra.mxu0 %v5474
    %5683 = vmatprep.subr.bf16.mxu0 %v5479
    %5684 = vmatpush1.bf16.msra.mxu0 %v5478
    %5685 = vmatprep.mubr.bf16.mxu0 %v4819
    %5686 = vmatmul.mubr.bf16.gmra.mrb[0].mxu0 %v4818
    %v5687 = vpop.f32.mrb[0].mxu0
    %v5688 = vadd.f32 %v5645, %v5687
    %v5689 = vpop.f32.mrb[0].mxu0
    %v5690 = vadd.f32 %v5647, %v5689
    %v5691 = vpop.f32.mrb[0].mxu0
    %v5692 = vadd.f32 %v5649, %v5691
    %v5693 = vpop.f32.mrb[0].mxu0
    %v5694 = vadd.f32 %v5651, %v5693
    %5695 = vdwg.mxu0
    %5696 = vmatprep.subr.bf16.mxu0 %v5357
    %5697 = vmatpush1.bf16.msra.mxu0 %v5356
    %5698 = vmatprep.subr.bf16.mxu0 %v5361
    %5699 = vmatpush1.bf16.msra.mxu0 %v5360
    %5700 = vmatprep.subr.bf16.mxu0 %v5365
    %5701 = vmatpush1.bf16.msra.mxu0 %v5364
    %5702 = vmatprep.subr.bf16.mxu0 %v5369
    %5703 = vmatpush1.bf16.msra.mxu0 %v5368
    %5704 = vmatprep.subr.bf16.mxu0 %v5373
    %5705 = vmatpush1.bf16.msra.mxu0 %v5372
    %5706 = vmatprep.subr.bf16.mxu0 %v5377
    %5707 = vmatpush1.bf16.msra.mxu0 %v5376
    %5708 = vmatprep.subr.bf16.mxu0 %v5381
    %5709 = vmatpush1.bf16.msra.mxu0 %v5380
    %5710 = vmatprep.subr.bf16.mxu0 %v5385
    %5711 = vmatpush1.bf16.msra.mxu0 %v5384
    %5712 = vmatprep.subr.bf16.mxu0 %v5389
    %5713 = vmatpush1.bf16.msra.mxu0 %v5388
    %5714 = vmatprep.subr.bf16.mxu0 %v5393
    %5715 = vmatpush1.bf16.msra.mxu0 %v5392
    %5716 = vmatprep.subr.bf16.mxu0 %v5397
    %5717 = vmatpush1.bf16.msra.mxu0 %v5396
    %5718 = vmatprep.subr.bf16.mxu0 %v5401
    %5719 = vmatpush1.bf16.msra.mxu0 %v5400
    %5720 = vmatprep.subr.bf16.mxu0 %v5405
    %5721 = vmatpush1.bf16.msra.mxu0 %v5404
    %5722 = vmatprep.subr.bf16.mxu0 %v5409
    %5723 = vmatpush1.bf16.msra.mxu0 %v5408
    %5724 = vmatprep.subr.bf16.mxu0 %v5413
    %5725 = vmatpush1.bf16.msra.mxu0 %v5412
    %5726 = vmatprep.subr.bf16.mxu0 %v5417
    %5727 = vmatpush1.bf16.msra.mxu0 %v5416
    %5728 = vmatprep.mubr.bf16.mxu0 %v4817
    %5729 = vmatmul.mubr.bf16.gmra.mrb[0].mxu0 %v4816
    %v5730 = vpop.f32.mrb[0].mxu0
    %v5731 = vadd.f32 %v4961, %v5730
    %v5732 = vpop.f32.mrb[0].mxu0
    %v5733 = vadd.f32 %v4965, %v5732
    %v5734 = vpop.f32.mrb[0].mxu0
    %v5735 = vadd.f32 %v4961, %v5734
    %v5736 = vpop.f32.mrb[0].mxu0
    %v5737 = vadd.f32 %v4965, %v5736
    %5738 = vdwg.mxu0
    %5739 = vmatprep.subr.bf16.mxu0 %v5421
    %5740 = vmatpush1.bf16.msra.mxu0 %v5420
    %5741 = vmatprep.subr.bf16.mxu0 %v5425
    %5742 = vmatpush1.bf16.msra.mxu0 %v5424
    %5743 = vmatprep.subr.bf16.mxu0 %v5429
    %5744 = vmatpush1.bf16.msra.mxu0 %v5428
    %5745 = vmatprep.subr.bf16.mxu0 %v5433
    %5746 = vmatpush1.bf16.msra.mxu0 %v5432
    %5747 = vmatprep.subr.bf16.mxu0 %v5437
    %5748 = vmatpush1.bf16.msra.mxu0 %v5436
    %5749 = vmatprep.subr.bf16.mxu0 %v5441
    %5750 = vmatpush1.bf16.msra.mxu0 %v5440
    %5751 = vmatprep.subr.bf16.mxu0 %v5445
    %5752 = vmatpush1.bf16.msra.mxu0 %v5444
    %5753 = vmatprep.subr.bf16.mxu0 %v5449
    %5754 = vmatpush1.bf16.msra.mxu0 %v5448
    %5755 = vmatprep.subr.bf16.mxu0 %v5453
    %5756 = vmatpush1.bf16.msra.mxu0 %v5452
    %5757 = vmatprep.subr.bf16.mxu0 %v5457
    %5758 = vmatpush1.bf16.msra.mxu0 %v5456
    %5759 = vmatprep.subr.bf16.mxu0 %v5461
    %5760 = vmatpush1.bf16.msra.mxu0 %v5460
    %5761 = vmatprep.subr.bf16.mxu0 %v5465
    %5762 = vmatpush1.bf16.msra.mxu0 %v5464
    %5763 = vmatprep.subr.bf16.mxu0 %v5469
    %5764 = vmatpush1.bf16.msra.mxu0 %v5468
    %5765 = vmatprep.subr.bf16.mxu0 %v5473
    %5766 = vmatpush1.bf16.msra.mxu0 %v5472
    %5767 = vmatprep.subr.bf16.mxu0 %v5477
    %5768 = vmatpush1.bf16.msra.mxu0 %v5476
    %5769 = vmatprep.subr.bf16.mxu0 %v5481
    %5770 = vmatpush1.bf16.msra.mxu0 %v5480
    %5771 = vmatprep.mubr.bf16.mxu0 %v4819
    %5772 = vmatmul.mubr.bf16.gmra.mrb[0].mxu0 %v4818
    %v5773 = vpop.f32.mrb[0].mxu0
    %v5774 = vadd.f32 %v5731, %v5773
    %v5775 = vpop.f32.mrb[0].mxu0
    %v5776 = vadd.f32 %v5733, %v5775
    %v5777 = vpop.f32.mrb[0].mxu0
    %v5778 = vadd.f32 %v5735, %v5777
    %v5779 = vpop.f32.mrb[0].mxu0
    %v5780 = vadd.f32 %v5737, %v5779
    %5781 = vdwg.mxu0
    %v5782 = vmax.f32 %v5688, 0.0
    %v5783 = vmax.f32 %v5690, 0.0
    %v5784 = vmax.f32 %v5774, 0.0
    %v5785 = vmax.f32 %v5776, 0.0
    %v5786 = vmax.f32 %v5692, 0.0
    %v5787 = vmax.f32 %v5694, 0.0
    %v5788 = vmax.f32 %v5778, 0.0
    %v5789 = vmax.f32 %v5780, 0.0
    %v5790 = vpack.c.bf16 %v5786, %v5782
    %v5791 = vpack.c.bf16 %v5787, %v5783
    %v5792 = vpack.c.bf16 %v5788, %v5784
    %v5793 = vpack.c.bf16 %v5789, %v5785
    %v5794 = vld [vmem:[#allocation6] sm:$0xff]
    %v5795 = vld [vmem:[#allocation6 + $0x8] sm:$0xff]
    %v5796 = vld [vmem:[#allocation6 + $0x10] sm:$0xff]
    %v5797 = vld [vmem:[#allocation6 + $0x18] sm:$0xff]
    %v5798 = vld [vmem:[#allocation6 + $0x20] sm:$0xff]
    %v5799 = vld [vmem:[#allocation6 + $0x28] sm:$0xff]
    %v5800 = vld [vmem:[#allocation6 + $0x30] sm:$0xff]
    %v5801 = vld [vmem:[#allocation6 + $0x38] sm:$0xff]
    %v5802 = vld [vmem:[#allocation6 + $0x40] sm:$0xff]
    %v5803 = vld [vmem:[#allocation6 + $0x48] sm:$0xff]
    %v5804 = vld [vmem:[#allocation6 + $0x50] sm:$0xff]
    %v5805 = vld [vmem:[#allocation6 + $0x58] sm:$0xff]
    %v5806 = vld [vmem:[#allocation6 + $0x60] sm:$0xff]
    %v5807 = vld [vmem:[#allocation6 + $0x68] sm:$0xff]
    %v5808 = vld [vmem:[#allocation6 + $0x70] sm:$0xff]
    %v5809 = vld [vmem:[#allocation6 + $0x78] sm:$0xff]
    %v5810 = vld [vmem:[#allocation6 + $0x80] sm:$0xff]
    %v5811 = vld [vmem:[#allocation6 + $0x88] sm:$0xff]
    %v5812 = vld [vmem:[#allocation6 + $0x90] sm:$0xff]
    %v5813 = vld [vmem:[#allocation6 + $0x98] sm:$0xff]
    %v5814 = vld [vmem:[#allocation6 + $0xa0] sm:$0xff]
    %v5815 = vld [vmem:[#allocation6 + $0xa8] sm:$0xff]
    %v5816 = vld [vmem:[#allocation6 + $0xb0] sm:$0xff]
    %v5817 = vld [vmem:[#allocation6 + $0xb8] sm:$0xff]
    %v5818 = vld [vmem:[#allocation6 + $0xc0] sm:$0xff]
    %v5819 = vld [vmem:[#allocation6 + $0xc8] sm:$0xff]
    %v5820 = vld [vmem:[#allocation6 + $0xd0] sm:$0xff]
    %v5821 = vld [vmem:[#allocation6 + $0xd8] sm:$0xff]
    %v5822 = vld [vmem:[#allocation6 + $0xe0] sm:$0xff]
    %v5823 = vld [vmem:[#allocation6 + $0xe8] sm:$0xff]
    %v5824 = vld [vmem:[#allocation6 + $0xf0] sm:$0xff]
    %v5825 = vld [vmem:[#allocation6 + $0xf8] sm:$0xff]
    %v5826 = vld [vmem:[#allocation6 + $0x100] sm:$0xff]
    %v5827 = vld [vmem:[#allocation6 + $0x108] sm:$0xff]
    %v5828 = vld [vmem:[#allocation6 + $0x110] sm:$0xff]
    %v5829 = vld [vmem:[#allocation6 + $0x118] sm:$0xff]
    %v5830 = vld [vmem:[#allocation6 + $0x120] sm:$0xff]
    %v5831 = vld [vmem:[#allocation6 + $0x128] sm:$0xff]
    %v5832 = vld [vmem:[#allocation6 + $0x130] sm:$0xff]
    %v5833 = vld [vmem:[#allocation6 + $0x138] sm:$0xff]
    %v5834 = vld [vmem:[#allocation6 + $0x140] sm:$0xff]
    %v5835 = vld [vmem:[#allocation6 + $0x148] sm:$0xff]
    %v5836 = vld [vmem:[#allocation6 + $0x150] sm:$0xff]
    %v5837 = vld [vmem:[#allocation6 + $0x158] sm:$0xff]
    %v5838 = vld [vmem:[#allocation6 + $0x160] sm:$0xff]
    %v5839 = vld [vmem:[#allocation6 + $0x168] sm:$0xff]
    %v5840 = vld [vmem:[#allocation6 + $0x170] sm:$0xff]
    %v5841 = vld [vmem:[#allocation6 + $0x178] sm:$0xff]
    %v5842 = vld [vmem:[#allocation6 + $0x180] sm:$0xff]
    %v5843 = vld [vmem:[#allocation6 + $0x188] sm:$0xff]
    %v5844 = vld [vmem:[#allocation6 + $0x190] sm:$0xff]
    %v5845 = vld [vmem:[#allocation6 + $0x198] sm:$0xff]
    %v5846 = vld [vmem:[#allocation6 + $0x1a0] sm:$0xff]
    %v5847 = vld [vmem:[#allocation6 + $0x1a8] sm:$0xff]
    %v5848 = vld [vmem:[#allocation6 + $0x1b0] sm:$0xff]
    %v5849 = vld [vmem:[#allocation6 + $0x1b8] sm:$0xff]
    %v5850 = vld [vmem:[#allocation6 + $0x1c0] sm:$0xff]
    %v5851 = vld [vmem:[#allocation6 + $0x1c8] sm:$0xff]
    %v5852 = vld [vmem:[#allocation6 + $0x1d0] sm:$0xff]
    %v5853 = vld [vmem:[#allocation6 + $0x1d8] sm:$0xff]
    %v5854 = vld [vmem:[#allocation6 + $0x1e0] sm:$0xff]
    %v5855 = vld [vmem:[#allocation6 + $0x1e8] sm:$0xff]
    %v5856 = vld [vmem:[#allocation6 + $0x1f0] sm:$0xff]
    %v5857 = vld [vmem:[#allocation6 + $0x1f8] sm:$0xff]
    %v5858 = vld [vmem:[#allocation6 + $0x200] sm:$0xff]
    %v5859 = vld [vmem:[#allocation6 + $0x208] sm:$0xff]
    %v5860 = vld [vmem:[#allocation6 + $0x210] sm:$0xff]
    %v5861 = vld [vmem:[#allocation6 + $0x218] sm:$0xff]
    %v5862 = vld [vmem:[#allocation6 + $0x220] sm:$0xff]
    %v5863 = vld [vmem:[#allocation6 + $0x228] sm:$0xff]
    %v5864 = vld [vmem:[#allocation6 + $0x230] sm:$0xff]
    %v5865 = vld [vmem:[#allocation6 + $0x238] sm:$0xff]
    %v5866 = vld [vmem:[#allocation6 + $0x240] sm:$0xff]
    %v5867 = vld [vmem:[#allocation6 + $0x248] sm:$0xff]
    %v5868 = vld [vmem:[#allocation6 + $0x250] sm:$0xff]
    %v5869 = vld [vmem:[#allocation6 + $0x258] sm:$0xff]
    %v5870 = vld [vmem:[#allocation6 + $0x260] sm:$0xff]
    %v5871 = vld [vmem:[#allocation6 + $0x268] sm:$0xff]
    %v5872 = vld [vmem:[#allocation6 + $0x270] sm:$0xff]
    %v5873 = vld [vmem:[#allocation6 + $0x278] sm:$0xff]
    %v5874 = vld [vmem:[#allocation6 + $0x280] sm:$0xff]
    %v5875 = vld [vmem:[#allocation6 + $0x288] sm:$0xff]
    %v5876 = vld [vmem:[#allocation6 + $0x290] sm:$0xff]
    %v5877 = vld [vmem:[#allocation6 + $0x298] sm:$0xff]
    %v5878 = vld [vmem:[#allocation6 + $0x2a0] sm:$0xff]
    %v5879 = vld [vmem:[#allocation6 + $0x2a8] sm:$0xff]
    %v5880 = vld [vmem:[#allocation6 + $0x2b0] sm:$0xff]
    %v5881 = vld [vmem:[#allocation6 + $0x2b8] sm:$0xff]
    %v5882 = vld [vmem:[#allocation6 + $0x2c0] sm:$0xff]
    %v5883 = vld [vmem:[#allocation6 + $0x2c8] sm:$0xff]
    %v5884 = vld [vmem:[#allocation6 + $0x2d0] sm:$0xff]
    %v5885 = vld [vmem:[#allocation6 + $0x2d8] sm:$0xff]
    %v5886 = vld [vmem:[#allocation6 + $0x2e0] sm:$0xff]
    %v5887 = vld [vmem:[#allocation6 + $0x2e8] sm:$0xff]
    %v5888 = vld [vmem:[#allocation6 + $0x2f0] sm:$0xff]
    %v5889 = vld [vmem:[#allocation6 + $0x2f8] sm:$0xff]
    %v5890 = vld [vmem:[#allocation6 + $0x300] sm:$0xff]
    %v5891 = vld [vmem:[#allocation6 + $0x308] sm:$0xff]
    %v5892 = vld [vmem:[#allocation6 + $0x310] sm:$0xff]
    %v5893 = vld [vmem:[#allocation6 + $0x318] sm:$0xff]
    %v5894 = vld [vmem:[#allocation6 + $0x320] sm:$0xff]
    %v5895 = vld [vmem:[#allocation6 + $0x328] sm:$0xff]
    %v5896 = vld [vmem:[#allocation6 + $0x330] sm:$0xff]
    %v5897 = vld [vmem:[#allocation6 + $0x338] sm:$0xff]
    %v5898 = vld [vmem:[#allocation6 + $0x340] sm:$0xff]
    %v5899 = vld [vmem:[#allocation6 + $0x348] sm:$0xff]
    %v5900 = vld [vmem:[#allocation6 + $0x350] sm:$0xff]
    %v5901 = vld [vmem:[#allocation6 + $0x358] sm:$0xff]
    %v5902 = vld [vmem:[#allocation6 + $0x360] sm:$0xff]
    %v5903 = vld [vmem:[#allocation6 + $0x368] sm:$0xff]
    %v5904 = vld [vmem:[#allocation6 + $0x370] sm:$0xff]
    %v5905 = vld [vmem:[#allocation6 + $0x378] sm:$0xff]
    %v5906 = vld [vmem:[#allocation6 + $0x380] sm:$0xff]
    %v5907 = vld [vmem:[#allocation6 + $0x388] sm:$0xff]
    %v5908 = vld [vmem:[#allocation6 + $0x390] sm:$0xff]
    %v5909 = vld [vmem:[#allocation6 + $0x398] sm:$0xff]
    %v5910 = vld [vmem:[#allocation6 + $0x3a0] sm:$0xff]
    %v5911 = vld [vmem:[#allocation6 + $0x3a8] sm:$0xff]
    %v5912 = vld [vmem:[#allocation6 + $0x3b0] sm:$0xff]
    %v5913 = vld [vmem:[#allocation6 + $0x3b8] sm:$0xff]
    %v5914 = vld [vmem:[#allocation6 + $0x3c0] sm:$0xff]
    %v5915 = vld [vmem:[#allocation6 + $0x3c8] sm:$0xff]
    %v5916 = vld [vmem:[#allocation6 + $0x3d0] sm:$0xff]
    %v5917 = vld [vmem:[#allocation6 + $0x3d8] sm:$0xff]
    %v5918 = vld [vmem:[#allocation6 + $0x3e0] sm:$0xff]
    %v5919 = vld [vmem:[#allocation6 + $0x3e8] sm:$0xff]
    %v5920 = vld [vmem:[#allocation6 + $0x3f0] sm:$0xff]
    %v5921 = vld [vmem:[#allocation6 + $0x3f8] sm:$0xff]
    %v5922 = vld [vmem:[#allocation15 + $0x8] sm:$0xf]
    %v5924 = vlaneseq
    %v5925 = vshrl.u32 %v5924, 7
    %v5926 = vsub.s32 0, %v5925
    %v5927 = vrot.slane %v5922, %v5926
    %v5928 = vlaneseq
    %v5929 = vshrl.u32 %v5928, 7
    %v5930 = vsub.s32 1, %v5929
    %v5931 = vrot.slane %v5922, %v5930
    %v5932 = vlaneseq
    %v5933 = vshrl.u32 %v5932, 7
    %v5934 = vsub.s32 2, %v5933
    %v5935 = vrot.slane %v5922, %v5934
    %v5936 = vlaneseq
    %v5937 = vshrl.u32 %v5936, 7
    %v5938 = vsub.s32 3, %v5937
    %v5939 = vrot.slane %v5922, %v5938
    %v6072 = vunpack.c.l.b16 %v5794
    %v6073 = vunpack.c.h.b16 %v5794
    %v6074 = vunpack.c.l.b16 %v5795
    %v6075 = vunpack.c.h.b16 %v5795
    %v6076 = vunpack.c.l.b16 %v5796
    %v6077 = vunpack.c.h.b16 %v5796
    %v6078 = vunpack.c.l.b16 %v5797
    %v6079 = vunpack.c.h.b16 %v5797
    %v6080 = vunpack.c.l.b16 %v5798
    %v6081 = vunpack.c.h.b16 %v5798
    %v6082 = vunpack.c.l.b16 %v5799
    %v6083 = vunpack.c.h.b16 %v5799
    %v6084 = vunpack.c.l.b16 %v5800
    %v6085 = vunpack.c.h.b16 %v5800
    %v6086 = vunpack.c.l.b16 %v5801
    %v6087 = vunpack.c.h.b16 %v5801
    %v6088 = vunpack.c.l.b16 %v5802
    %v6089 = vunpack.c.h.b16 %v5802
    %v6090 = vunpack.c.l.b16 %v5803
    %v6091 = vunpack.c.h.b16 %v5803
    %v6092 = vunpack.c.l.b16 %v5804
    %v6093 = vunpack.c.h.b16 %v5804
    %v6094 = vunpack.c.l.b16 %v5805
    %v6095 = vunpack.c.h.b16 %v5805
    %v6096 = vunpack.c.l.b16 %v5806
    %v6097 = vunpack.c.h.b16 %v5806
    %v6098 = vunpack.c.l.b16 %v5807
    %v6099 = vunpack.c.h.b16 %v5807
    %v6100 = vunpack.c.l.b16 %v5808
    %v6101 = vunpack.c.h.b16 %v5808
    %v6102 = vunpack.c.l.b16 %v5809
    %v6103 = vunpack.c.h.b16 %v5809
    %v6104 = vunpack.c.l.b16 %v5810
    %v6105 = vunpack.c.h.b16 %v5810
    %v6106 = vunpack.c.l.b16 %v5811
    %v6107 = vunpack.c.h.b16 %v5811
    %v6108 = vunpack.c.l.b16 %v5812
    %v6109 = vunpack.c.h.b16 %v5812
    %v6110 = vunpack.c.l.b16 %v5813
    %v6111 = vunpack.c.h.b16 %v5813
    %v6112 = vunpack.c.l.b16 %v5814
    %v6113 = vunpack.c.h.b16 %v5814
    %v6114 = vunpack.c.l.b16 %v5815
    %v6115 = vunpack.c.h.b16 %v5815
    %v6116 = vunpack.c.l.b16 %v5816
    %v6117 = vunpack.c.h.b16 %v5816
    %v6118 = vunpack.c.l.b16 %v5817
    %v6119 = vunpack.c.h.b16 %v5817
    %v6120 = vunpack.c.l.b16 %v5818
    %v6121 = vunpack.c.h.b16 %v5818
    %v6122 = vunpack.c.l.b16 %v5819
    %v6123 = vunpack.c.h.b16 %v5819
    %v6124 = vunpack.c.l.b16 %v5820
    %v6125 = vunpack.c.h.b16 %v5820
    %v6126 = vunpack.c.l.b16 %v5821
    %v6127 = vunpack.c.h.b16 %v5821
    %v6128 = vunpack.c.l.b16 %v5822
    %v6129 = vunpack.c.h.b16 %v5822
    %v6130 = vunpack.c.l.b16 %v5823
    %v6131 = vunpack.c.h.b16 %v5823
    %v6132 = vunpack.c.l.b16 %v5824
    %v6133 = vunpack.c.h.b16 %v5824
    %v6134 = vunpack.c.l.b16 %v5825
    %v6135 = vunpack.c.h.b16 %v5825
    %v6136 = vunpack.c.l.b16 %v5826
    %v6137 = vunpack.c.h.b16 %v5826
    %v6138 = vunpack.c.l.b16 %v5827
    %v6139 = vunpack.c.h.b16 %v5827
    %v6140 = vunpack.c.l.b16 %v5828
    %v6141 = vunpack.c.h.b16 %v5828
    %v6142 = vunpack.c.l.b16 %v5829
    %v6143 = vunpack.c.h.b16 %v5829
    %v6144 = vunpack.c.l.b16 %v5830
    %v6145 = vunpack.c.h.b16 %v5830
    %v6146 = vunpack.c.l.b16 %v5831
    %v6147 = vunpack.c.h.b16 %v5831
    %v6148 = vunpack.c.l.b16 %v5832
    %v6149 = vunpack.c.h.b16 %v5832
    %v6150 = vunpack.c.l.b16 %v5833
    %v6151 = vunpack.c.h.b16 %v5833
    %v6152 = vunpack.c.l.b16 %v5834
    %v6153 = vunpack.c.h.b16 %v5834
    %v6154 = vunpack.c.l.b16 %v5835
    %v6155 = vunpack.c.h.b16 %v5835
    %v6156 = vunpack.c.l.b16 %v5836
    %v6157 = vunpack.c.h.b16 %v5836
    %v6158 = vunpack.c.l.b16 %v5837
    %v6159 = vunpack.c.h.b16 %v5837
    %v6160 = vunpack.c.l.b16 %v5838
    %v6161 = vunpack.c.h.b16 %v5838
    %v6162 = vunpack.c.l.b16 %v5839
    %v6163 = vunpack.c.h.b16 %v5839
    %v6164 = vunpack.c.l.b16 %v5840
    %v6165 = vunpack.c.h.b16 %v5840
    %v6166 = vunpack.c.l.b16 %v5841
    %v6167 = vunpack.c.h.b16 %v5841
    %v6168 = vunpack.c.l.b16 %v5842
    %v6169 = vunpack.c.h.b16 %v5842
    %v6170 = vunpack.c.l.b16 %v5843
    %v6171 = vunpack.c.h.b16 %v5843
    %v6172 = vunpack.c.l.b16 %v5844
    %v6173 = vunpack.c.h.b16 %v5844
    %v6174 = vunpack.c.l.b16 %v5845
    %v6175 = vunpack.c.h.b16 %v5845
    %v6176 = vunpack.c.l.b16 %v5846
    %v6177 = vunpack.c.h.b16 %v5846
    %v6178 = vunpack.c.l.b16 %v5847
    %v6179 = vunpack.c.h.b16 %v5847
    %v6180 = vunpack.c.l.b16 %v5848
    %v6181 = vunpack.c.h.b16 %v5848
    %v6182 = vunpack.c.l.b16 %v5849
    %v6183 = vunpack.c.h.b16 %v5849
    %v6184 = vunpack.c.l.b16 %v5850
    %v6185 = vunpack.c.h.b16 %v5850
    %v6186 = vunpack.c.l.b16 %v5851
    %v6187 = vunpack.c.h.b16 %v5851
    %v6188 = vunpack.c.l.b16 %v5852
    %v6189 = vunpack.c.h.b16 %v5852
    %v6190 = vunpack.c.l.b16 %v5853
    %v6191 = vunpack.c.h.b16 %v5853
    %v6192 = vunpack.c.l.b16 %v5854
    %v6193 = vunpack.c.h.b16 %v5854
    %v6194 = vunpack.c.l.b16 %v5855
    %v6195 = vunpack.c.h.b16 %v5855
    %v6196 = vunpack.c.l.b16 %v5856
    %v6197 = vunpack.c.h.b16 %v5856
    %v6198 = vunpack.c.l.b16 %v5857
    %v6199 = vunpack.c.h.b16 %v5857
    %v6200 = vunpack.c.l.b16 %v5858
    %v6201 = vunpack.c.h.b16 %v5858
    %v6202 = vunpack.c.l.b16 %v5859
    %v6203 = vunpack.c.h.b16 %v5859
    %v6204 = vunpack.c.l.b16 %v5860
    %v6205 = vunpack.c.h.b16 %v5860
    %v6206 = vunpack.c.l.b16 %v5861
    %v6207 = vunpack.c.h.b16 %v5861
    %v6208 = vunpack.c.l.b16 %v5862
    %v6209 = vunpack.c.h.b16 %v5862
    %v6210 = vunpack.c.l.b16 %v5863
    %v6211 = vunpack.c.h.b16 %v5863
    %v6212 = vunpack.c.l.b16 %v5864
    %v6213 = vunpack.c.h.b16 %v5864
    %v6214 = vunpack.c.l.b16 %v5865
    %v6215 = vunpack.c.h.b16 %v5865
    %v6216 = vunpack.c.l.b16 %v5866
    %v6217 = vunpack.c.h.b16 %v5866
    %v6218 = vunpack.c.l.b16 %v5867
    %v6219 = vunpack.c.h.b16 %v5867
    %v6220 = vunpack.c.l.b16 %v5868
    %v6221 = vunpack.c.h.b16 %v5868
    %v6222 = vunpack.c.l.b16 %v5869
    %v6223 = vunpack.c.h.b16 %v5869
    %v6224 = vunpack.c.l.b16 %v5870
    %v6225 = vunpack.c.h.b16 %v5870
    %v6226 = vunpack.c.l.b16 %v5871
    %v6227 = vunpack.c.h.b16 %v5871
    %v6228 = vunpack.c.l.b16 %v5872
    %v6229 = vunpack.c.h.b16 %v5872
    %v6230 = vunpack.c.l.b16 %v5873
    %v6231 = vunpack.c.h.b16 %v5873
    %v6232 = vunpack.c.l.b16 %v5874
    %v6233 = vunpack.c.h.b16 %v5874
    %v6234 = vunpack.c.l.b16 %v5875
    %v6235 = vunpack.c.h.b16 %v5875
    %v6236 = vunpack.c.l.b16 %v5876
    %v6237 = vunpack.c.h.b16 %v5876
    %v6238 = vunpack.c.l.b16 %v5877
    %v6239 = vunpack.c.h.b16 %v5877
    %v6240 = vunpack.c.l.b16 %v5878
    %v6241 = vunpack.c.h.b16 %v5878
    %v6242 = vunpack.c.l.b16 %v5879
    %v6243 = vunpack.c.h.b16 %v5879
    %v6244 = vunpack.c.l.b16 %v5880
    %v6245 = vunpack.c.h.b16 %v5880
    %v6246 = vunpack.c.l.b16 %v5881
    %v6247 = vunpack.c.h.b16 %v5881
    %v6248 = vunpack.c.l.b16 %v5882
    %v6249 = vunpack.c.h.b16 %v5882
    %v6250 = vunpack.c.l.b16 %v5883
    %v6251 = vunpack.c.h.b16 %v5883
    %v6252 = vunpack.c.l.b16 %v5884
    %v6253 = vunpack.c.h.b16 %v5884
    %v6254 = vunpack.c.l.b16 %v5885
    %v6255 = vunpack.c.h.b16 %v5885
    %v6256 = vunpack.c.l.b16 %v5886
    %v6257 = vunpack.c.h.b16 %v5886
    %v6258 = vunpack.c.l.b16 %v5887
    %v6259 = vunpack.c.h.b16 %v5887
    %v6260 = vunpack.c.l.b16 %v5888
    %v6261 = vunpack.c.h.b16 %v5888
    %v6262 = vunpack.c.l.b16 %v5889
    %v6263 = vunpack.c.h.b16 %v5889
    %v6264 = vunpack.c.l.b16 %v5890
    %v6265 = vunpack.c.h.b16 %v5890
    %v6266 = vunpack.c.l.b16 %v5891
    %v6267 = vunpack.c.h.b16 %v5891
    %v6268 = vunpack.c.l.b16 %v5892
    %v6269 = vunpack.c.h.b16 %v5892
    %v6270 = vunpack.c.l.b16 %v5893
    %v6271 = vunpack.c.h.b16 %v5893
    %v6272 = vunpack.c.l.b16 %v5894
    %v6273 = vunpack.c.h.b16 %v5894
    %v6274 = vunpack.c.l.b16 %v5895
    %v6275 = vunpack.c.h.b16 %v5895
    %v6276 = vunpack.c.l.b16 %v5896
    %v6277 = vunpack.c.h.b16 %v5896
    %v6278 = vunpack.c.l.b16 %v5897
    %v6279 = vunpack.c.h.b16 %v5897
    %v6280 = vunpack.c.l.b16 %v5898
    %v6281 = vunpack.c.h.b16 %v5898
    %v6282 = vunpack.c.l.b16 %v5899
    %v6283 = vunpack.c.h.b16 %v5899
    %v6284 = vunpack.c.l.b16 %v5900
    %v6285 = vunpack.c.h.b16 %v5900
    %v6286 = vunpack.c.l.b16 %v5901
    %v6287 = vunpack.c.h.b16 %v5901
    %v6288 = vunpack.c.l.b16 %v5902
    %v6289 = vunpack.c.h.b16 %v5902
    %v6290 = vunpack.c.l.b16 %v5903
    %v6291 = vunpack.c.h.b16 %v5903
    %v6292 = vunpack.c.l.b16 %v5904
    %v6293 = vunpack.c.h.b16 %v5904
    %v6294 = vunpack.c.l.b16 %v5905
    %v6295 = vunpack.c.h.b16 %v5905
    %v6296 = vunpack.c.l.b16 %v5906
    %v6297 = vunpack.c.h.b16 %v5906
    %v6298 = vunpack.c.l.b16 %v5907
    %v6299 = vunpack.c.h.b16 %v5907
    %v6300 = vunpack.c.l.b16 %v5908
    %v6301 = vunpack.c.h.b16 %v5908
    %v6302 = vunpack.c.l.b16 %v5909
    %v6303 = vunpack.c.h.b16 %v5909
    %v6304 = vunpack.c.l.b16 %v5910
    %v6305 = vunpack.c.h.b16 %v5910
    %v6306 = vunpack.c.l.b16 %v5911
    %v6307 = vunpack.c.h.b16 %v5911
    %v6308 = vunpack.c.l.b16 %v5912
    %v6309 = vunpack.c.h.b16 %v5912
    %v6310 = vunpack.c.l.b16 %v5913
    %v6311 = vunpack.c.h.b16 %v5913
    %v6312 = vunpack.c.l.b16 %v5914
    %v6313 = vunpack.c.h.b16 %v5914
    %v6314 = vunpack.c.l.b16 %v5915
    %v6315 = vunpack.c.h.b16 %v5915
    %v6316 = vunpack.c.l.b16 %v5916
    %v6317 = vunpack.c.h.b16 %v5916
    %v6318 = vunpack.c.l.b16 %v5917
    %v6319 = vunpack.c.h.b16 %v5917
    %v6320 = vunpack.c.l.b16 %v5918
    %v6321 = vunpack.c.h.b16 %v5918
    %v6322 = vunpack.c.l.b16 %v5919
    %v6323 = vunpack.c.h.b16 %v5919
    %v6324 = vunpack.c.l.b16 %v5920
    %v6325 = vunpack.c.h.b16 %v5920
    %v6326 = vunpack.c.l.b16 %v5921
    %v6327 = vunpack.c.h.b16 %v5921
    %v6328 = vpack.c.b16 %v6076, %v6072
    %v6329 = vpack.c.b16 %v6077, %v6073
    %v6330 = vpack.c.b16 %v6078, %v6074
    %v6331 = vpack.c.b16 %v6079, %v6075
    %v6332 = vpack.c.b16 %v6084, %v6080
    %v6333 = vpack.c.b16 %v6085, %v6081
    %v6334 = vpack.c.b16 %v6086, %v6082
    %v6335 = vpack.c.b16 %v6087, %v6083
    %v6336 = vpack.c.b16 %v6092, %v6088
    %v6337 = vpack.c.b16 %v6093, %v6089
    %v6338 = vpack.c.b16 %v6094, %v6090
    %v6339 = vpack.c.b16 %v6095, %v6091
    %v6340 = vpack.c.b16 %v6100, %v6096
    %v6341 = vpack.c.b16 %v6101, %v6097
    %v6342 = vpack.c.b16 %v6102, %v6098
    %v6343 = vpack.c.b16 %v6103, %v6099
    %v6344 = vpack.c.b16 %v6108, %v6104
    %v6345 = vpack.c.b16 %v6109, %v6105
    %v6346 = vpack.c.b16 %v6110, %v6106
    %v6347 = vpack.c.b16 %v6111, %v6107
    %v6348 = vpack.c.b16 %v6116, %v6112
    %v6349 = vpack.c.b16 %v6117, %v6113
    %v6350 = vpack.c.b16 %v6118, %v6114
    %v6351 = vpack.c.b16 %v6119, %v6115
    %v6352 = vpack.c.b16 %v6124, %v6120
    %v6353 = vpack.c.b16 %v6125, %v6121
    %v6354 = vpack.c.b16 %v6126, %v6122
    %v6355 = vpack.c.b16 %v6127, %v6123
    %v6356 = vpack.c.b16 %v6132, %v6128
    %v6357 = vpack.c.b16 %v6133, %v6129
    %v6358 = vpack.c.b16 %v6134, %v6130
    %v6359 = vpack.c.b16 %v6135, %v6131
    %v6360 = vpack.c.b16 %v6140, %v6136
    %v6361 = vpack.c.b16 %v6141, %v6137
    %v6362 = vpack.c.b16 %v6142, %v6138
    %v6363 = vpack.c.b16 %v6143, %v6139
    %v6364 = vpack.c.b16 %v6148, %v6144
    %v6365 = vpack.c.b16 %v6149, %v6145
    %v6366 = vpack.c.b16 %v6150, %v6146
    %v6367 = vpack.c.b16 %v6151, %v6147
    %v6368 = vpack.c.b16 %v6156, %v6152
    %v6369 = vpack.c.b16 %v6157, %v6153
    %v6370 = vpack.c.b16 %v6158, %v6154
    %v6371 = vpack.c.b16 %v6159, %v6155
    %v6372 = vpack.c.b16 %v6164, %v6160
    %v6373 = vpack.c.b16 %v6165, %v6161
    %v6374 = vpack.c.b16 %v6166, %v6162
    %v6375 = vpack.c.b16 %v6167, %v6163
    %v6376 = vpack.c.b16 %v6172, %v6168
    %v6377 = vpack.c.b16 %v6173, %v6169
    %v6378 = vpack.c.b16 %v6174, %v6170
    %v6379 = vpack.c.b16 %v6175, %v6171
    %v6380 = vpack.c.b16 %v6180, %v6176
    %v6381 = vpack.c.b16 %v6181, %v6177
    %v6382 = vpack.c.b16 %v6182, %v6178
    %v6383 = vpack.c.b16 %v6183, %v6179
    %v6384 = vpack.c.b16 %v6188, %v6184
    %v6385 = vpack.c.b16 %v6189, %v6185
    %v6386 = vpack.c.b16 %v6190, %v6186
    %v6387 = vpack.c.b16 %v6191, %v6187
    %v6388 = vpack.c.b16 %v6196, %v6192
    %v6389 = vpack.c.b16 %v6197, %v6193
    %v6390 = vpack.c.b16 %v6198, %v6194
    %v6391 = vpack.c.b16 %v6199, %v6195
    %v6392 = vpack.c.b16 %v6204, %v6200
    %v6393 = vpack.c.b16 %v6205, %v6201
    %v6394 = vpack.c.b16 %v6206, %v6202
    %v6395 = vpack.c.b16 %v6207, %v6203
    %v6396 = vpack.c.b16 %v6212, %v6208
    %v6397 = vpack.c.b16 %v6213, %v6209
    %v6398 = vpack.c.b16 %v6214, %v6210
    %v6399 = vpack.c.b16 %v6215, %v6211
    %v6400 = vpack.c.b16 %v6220, %v6216
    %v6401 = vpack.c.b16 %v6221, %v6217
    %v6402 = vpack.c.b16 %v6222, %v6218
    %v6403 = vpack.c.b16 %v6223, %v6219
    %v6404 = vpack.c.b16 %v6228, %v6224
    %v6405 = vpack.c.b16 %v6229, %v6225
    %v6406 = vpack.c.b16 %v6230, %v6226
    %v6407 = vpack.c.b16 %v6231, %v6227
    %v6408 = vpack.c.b16 %v6236, %v6232
    %v6409 = vpack.c.b16 %v6237, %v6233
    %v6410 = vpack.c.b16 %v6238, %v6234
    %v6411 = vpack.c.b16 %v6239, %v6235
    %v6412 = vpack.c.b16 %v6244, %v6240
    %v6413 = vpack.c.b16 %v6245, %v6241
    %v6414 = vpack.c.b16 %v6246, %v6242
    %v6415 = vpack.c.b16 %v6247, %v6243
    %v6416 = vpack.c.b16 %v6252, %v6248
    %v6417 = vpack.c.b16 %v6253, %v6249
    %v6418 = vpack.c.b16 %v6254, %v6250
    %v6419 = vpack.c.b16 %v6255, %v6251
    %v6420 = vpack.c.b16 %v6260, %v6256
    %v6421 = vpack.c.b16 %v6261, %v6257
    %v6422 = vpack.c.b16 %v6262, %v6258
    %v6423 = vpack.c.b16 %v6263, %v6259
    %v6424 = vpack.c.b16 %v6268, %v6264
    %v6425 = vpack.c.b16 %v6269, %v6265
    %v6426 = vpack.c.b16 %v6270, %v6266
    %v6427 = vpack.c.b16 %v6271, %v6267
    %v6428 = vpack.c.b16 %v6276, %v6272
    %v6429 = vpack.c.b16 %v6277, %v6273
    %v6430 = vpack.c.b16 %v6278, %v6274
    %v6431 = vpack.c.b16 %v6279, %v6275
    %v6432 = vpack.c.b16 %v6284, %v6280
    %v6433 = vpack.c.b16 %v6285, %v6281
    %v6434 = vpack.c.b16 %v6286, %v6282
    %v6435 = vpack.c.b16 %v6287, %v6283
    %v6436 = vpack.c.b16 %v6292, %v6288
    %v6437 = vpack.c.b16 %v6293, %v6289
    %v6438 = vpack.c.b16 %v6294, %v6290
    %v6439 = vpack.c.b16 %v6295, %v6291
    %v6440 = vpack.c.b16 %v6300, %v6296
    %v6441 = vpack.c.b16 %v6301, %v6297
    %v6442 = vpack.c.b16 %v6302, %v6298
    %v6443 = vpack.c.b16 %v6303, %v6299
    %v6444 = vpack.c.b16 %v6308, %v6304
    %v6445 = vpack.c.b16 %v6309, %v6305
    %v6446 = vpack.c.b16 %v6310, %v6306
    %v6447 = vpack.c.b16 %v6311, %v6307
    %v6448 = vpack.c.b16 %v6316, %v6312
    %v6449 = vpack.c.b16 %v6317, %v6313
    %v6450 = vpack.c.b16 %v6318, %v6314
    %v6451 = vpack.c.b16 %v6319, %v6315
    %v6452 = vpack.c.b16 %v6324, %v6320
    %v6453 = vpack.c.b16 %v6325, %v6321
    %v6454 = vpack.c.b16 %v6326, %v6322
    %v6455 = vpack.c.b16 %v6327, %v6323
    %6584 = vmatprep.subr.bf16.mxu0 %v6329
    %6585 = vmatpush1.bf16.msra.mxu0 %v6328
    %6586 = vmatprep.subr.bf16.mxu0 %v6333
    %6587 = vmatpush1.bf16.msra.mxu0 %v6332
    %6588 = vmatprep.subr.bf16.mxu0 %v6337
    %6589 = vmatpush1.bf16.msra.mxu0 %v6336
    %6590 = vmatprep.subr.bf16.mxu0 %v6341
    %6591 = vmatpush1.bf16.msra.mxu0 %v6340
    %6592 = vmatprep.subr.bf16.mxu0 %v6345
    %6593 = vmatpush1.bf16.msra.mxu0 %v6344
    %6594 = vmatprep.subr.bf16.mxu0 %v6349
    %6595 = vmatpush1.bf16.msra.mxu0 %v6348
    %6596 = vmatprep.subr.bf16.mxu0 %v6353
    %6597 = vmatpush1.bf16.msra.mxu0 %v6352
    %6598 = vmatprep.subr.bf16.mxu0 %v6357
    %6599 = vmatpush1.bf16.msra.mxu0 %v6356
    %6600 = vmatprep.subr.bf16.mxu0 %v6361
    %6601 = vmatpush1.bf16.msra.mxu0 %v6360
    %6602 = vmatprep.subr.bf16.mxu0 %v6365
    %6603 = vmatpush1.bf16.msra.mxu0 %v6364
    %6604 = vmatprep.subr.bf16.mxu0 %v6369
    %6605 = vmatpush1.bf16.msra.mxu0 %v6368
    %6606 = vmatprep.subr.bf16.mxu0 %v6373
    %6607 = vmatpush1.bf16.msra.mxu0 %v6372
    %6608 = vmatprep.subr.bf16.mxu0 %v6377
    %6609 = vmatpush1.bf16.msra.mxu0 %v6376
    %6610 = vmatprep.subr.bf16.mxu0 %v6381
    %6611 = vmatpush1.bf16.msra.mxu0 %v6380
    %6612 = vmatprep.subr.bf16.mxu0 %v6385
    %6613 = vmatpush1.bf16.msra.mxu0 %v6384
    %6614 = vmatprep.subr.bf16.mxu0 %v6389
    %6615 = vmatpush1.bf16.msra.mxu0 %v6388
    %6616 = vmatprep.mubr.bf16.mxu0 %v5791
    %6617 = vmatmul.mubr.bf16.gmra.mrb[0].mxu0 %v5790
    %v6618 = vpop.f32.mrb[0].mxu0
    %v6619 = vadd.f32 %v5927, %v6618
    %v6620 = vpop.f32.mrb[0].mxu0
    %v6621 = vadd.f32 %v5931, %v6620
    %v6622 = vpop.f32.mrb[0].mxu0
    %v6623 = vadd.f32 %v5927, %v6622
    %v6624 = vpop.f32.mrb[0].mxu0
    %v6625 = vadd.f32 %v5931, %v6624
    %6626 = vdwg.mxu0
    %6627 = vmatprep.subr.bf16.mxu0 %v6393
    %6628 = vmatpush1.bf16.msra.mxu0 %v6392
    %6629 = vmatprep.subr.bf16.mxu0 %v6397
    %6630 = vmatpush1.bf16.msra.mxu0 %v6396
    %6631 = vmatprep.subr.bf16.mxu0 %v6401
    %6632 = vmatpush1.bf16.msra.mxu0 %v6400
    %6633 = vmatprep.subr.bf16.mxu0 %v6405
    %6634 = vmatpush1.bf16.msra.mxu0 %v6404
    %6635 = vmatprep.subr.bf16.mxu0 %v6409
    %6636 = vmatpush1.bf16.msra.mxu0 %v6408
    %6637 = vmatprep.subr.bf16.mxu0 %v6413
    %6638 = vmatpush1.bf16.msra.mxu0 %v6412
    %6639 = vmatprep.subr.bf16.mxu0 %v6417
    %6640 = vmatpush1.bf16.msra.mxu0 %v6416
    %6641 = vmatprep.subr.bf16.mxu0 %v6421
    %6642 = vmatpush1.bf16.msra.mxu0 %v6420
    %6643 = vmatprep.subr.bf16.mxu0 %v6425
    %6644 = vmatpush1.bf16.msra.mxu0 %v6424
    %6645 = vmatprep.subr.bf16.mxu0 %v6429
    %6646 = vmatpush1.bf16.msra.mxu0 %v6428
    %6647 = vmatprep.subr.bf16.mxu0 %v6433
    %6648 = vmatpush1.bf16.msra.mxu0 %v6432
    %6649 = vmatprep.subr.bf16.mxu0 %v6437
    %6650 = vmatpush1.bf16.msra.mxu0 %v6436
    %6651 = vmatprep.subr.bf16.mxu0 %v6441
    %6652 = vmatpush1.bf16.msra.mxu0 %v6440
    %6653 = vmatprep.subr.bf16.mxu0 %v6445
    %6654 = vmatpush1.bf16.msra.mxu0 %v6444
    %6655 = vmatprep.subr.bf16.mxu0 %v6449
    %6656 = vmatpush1.bf16.msra.mxu0 %v6448
    %6657 = vmatprep.subr.bf16.mxu0 %v6453
    %6658 = vmatpush1.bf16.msra.mxu0 %v6452
    %6659 = vmatprep.mubr.bf16.mxu0 %v5793
    %6660 = vmatmul.mubr.bf16.gmra.mrb[0].mxu0 %v5792
    %v6661 = vpop.f32.mrb[0].mxu0
    %v6662 = vadd.f32 %v6619, %v6661
    %v6663 = vpop.f32.mrb[0].mxu0
    %v6664 = vadd.f32 %v6621, %v6663
    %v6665 = vpop.f32.mrb[0].mxu0
    %v6666 = vadd.f32 %v6623, %v6665
    %v6667 = vpop.f32.mrb[0].mxu0
    %v6668 = vadd.f32 %v6625, %v6667
    %6669 = vdwg.mxu0
    %6670 = vmatprep.subr.bf16.mxu0 %v6331
    %6671 = vmatpush1.bf16.msra.mxu0 %v6330
    %6672 = vmatprep.subr.bf16.mxu0 %v6335
    %6673 = vmatpush1.bf16.msra.mxu0 %v6334
    %6674 = vmatprep.subr.bf16.mxu0 %v6339
    %6675 = vmatpush1.bf16.msra.mxu0 %v6338
    %6676 = vmatprep.subr.bf16.mxu0 %v6343
    %6677 = vmatpush1.bf16.msra.mxu0 %v6342
    %6678 = vmatprep.subr.bf16.mxu0 %v6347
    %6679 = vmatpush1.bf16.msra.mxu0 %v6346
    %6680 = vmatprep.subr.bf16.mxu0 %v6351
    %6681 = vmatpush1.bf16.msra.mxu0 %v6350
    %6682 = vmatprep.subr.bf16.mxu0 %v6355
    %6683 = vmatpush1.bf16.msra.mxu0 %v6354
    %6684 = vmatprep.subr.bf16.mxu0 %v6359
    %6685 = vmatpush1.bf16.msra.mxu0 %v6358
    %6686 = vmatprep.subr.bf16.mxu0 %v6363
    %6687 = vmatpush1.bf16.msra.mxu0 %v6362
    %6688 = vmatprep.subr.bf16.mxu0 %v6367
    %6689 = vmatpush1.bf16.msra.mxu0 %v6366
    %6690 = vmatprep.subr.bf16.mxu0 %v6371
    %6691 = vmatpush1.bf16.msra.mxu0 %v6370
    %6692 = vmatprep.subr.bf16.mxu0 %v6375
    %6693 = vmatpush1.bf16.msra.mxu0 %v6374
    %6694 = vmatprep.subr.bf16.mxu0 %v6379
    %6695 = vmatpush1.bf16.msra.mxu0 %v6378
    %6696 = vmatprep.subr.bf16.mxu0 %v6383
    %6697 = vmatpush1.bf16.msra.mxu0 %v6382
    %6698 = vmatprep.subr.bf16.mxu0 %v6387
    %6699 = vmatpush1.bf16.msra.mxu0 %v6386
    %6700 = vmatprep.subr.bf16.mxu0 %v6391
    %6701 = vmatpush1.bf16.msra.mxu0 %v6390
    %6702 = vmatprep.mubr.bf16.mxu0 %v5791
    %6703 = vmatmul.mubr.bf16.gmra.mrb[0].mxu0 %v5790
    %v6704 = vpop.f32.mrb[0].mxu0
    %v6705 = vadd.f32 %v5935, %v6704
    %v6706 = vpop.f32.mrb[0].mxu0
    %v6707 = vadd.f32 %v5939, %v6706
    %v6708 = vpop.f32.mrb[0].mxu0
    %v6709 = vadd.f32 %v5935, %v6708
    %v6710 = vpop.f32.mrb[0].mxu0
    %v6711 = vadd.f32 %v5939, %v6710
    %6712 = vdwg.mxu0
    %6713 = vmatprep.subr.bf16.mxu0 %v6395
    %6714 = vmatpush1.bf16.msra.mxu0 %v6394
    %6715 = vmatprep.subr.bf16.mxu0 %v6399
    %6716 = vmatpush1.bf16.msra.mxu0 %v6398
    %6717 = vmatprep.subr.bf16.mxu0 %v6403
    %6718 = vmatpush1.bf16.msra.mxu0 %v6402
    %6719 = vmatprep.subr.bf16.mxu0 %v6407
    %6720 = vmatpush1.bf16.msra.mxu0 %v6406
    %6721 = vmatprep.subr.bf16.mxu0 %v6411
    %6722 = vmatpush1.bf16.msra.mxu0 %v6410
    %6723 = vmatprep.subr.bf16.mxu0 %v6415
    %6724 = vmatpush1.bf16.msra.mxu0 %v6414
    %6725 = vmatprep.subr.bf16.mxu0 %v6419
    %6726 = vmatpush1.bf16.msra.mxu0 %v6418
    %6727 = vmatprep.subr.bf16.mxu0 %v6423
    %6728 = vmatpush1.bf16.msra.mxu0 %v6422
    %6729 = vmatprep.subr.bf16.mxu0 %v6427
    %6730 = vmatpush1.bf16.msra.mxu0 %v6426
    %6731 = vmatprep.subr.bf16.mxu0 %v6431
    %6732 = vmatpush1.bf16.msra.mxu0 %v6430
    %6733 = vmatprep.subr.bf16.mxu0 %v6435
    %6734 = vmatpush1.bf16.msra.mxu0 %v6434
    %6735 = vmatprep.subr.bf16.mxu0 %v6439
    %6736 = vmatpush1.bf16.msra.mxu0 %v6438
    %6737 = vmatprep.subr.bf16.mxu0 %v6443
    %6738 = vmatpush1.bf16.msra.mxu0 %v6442
    %6739 = vmatprep.subr.bf16.mxu0 %v6447
    %6740 = vmatpush1.bf16.msra.mxu0 %v6446
    %6741 = vmatprep.subr.bf16.mxu0 %v6451
    %6742 = vmatpush1.bf16.msra.mxu0 %v6450
    %6743 = vmatprep.subr.bf16.mxu0 %v6455
    %6744 = vmatpush1.bf16.msra.mxu0 %v6454
    %6745 = vmatprep.mubr.bf16.mxu0 %v5793
    %6746 = vmatmul.mubr.bf16.gmra.mrb[0].mxu0 %v5792
    %v6747 = vpop.f32.mrb[0].mxu0
    %v6748 = vadd.f32 %v6705, %v6747
    %v6749 = vpop.f32.mrb[0].mxu0
    %v6750 = vadd.f32 %v6707, %v6749
    %v6751 = vpop.f32.mrb[0].mxu0
    %v6752 = vadd.f32 %v6709, %v6751
    %v6753 = vpop.f32.mrb[0].mxu0
    %v6754 = vadd.f32 %v6711, %v6753
    %6755 = vdwg.mxu0
    %v6756 = vmax.f32 %v6662, 0.0
    %v6757 = vmax.f32 %v6664, 0.0
    %v6758 = vmax.f32 %v6748, 0.0
    %v6759 = vmax.f32 %v6750, 0.0
    %v6760 = vmax.f32 %v6666, 0.0
    %v6761 = vmax.f32 %v6668, 0.0
    %v6762 = vmax.f32 %v6752, 0.0
    %v6763 = vmax.f32 %v6754, 0.0
    %v6764 = vpack.c.bf16 %v6760, %v6756
    %v6765 = vpack.c.bf16 %v6761, %v6757
    %v6766 = vpack.c.bf16 %v6762, %v6758
    %v6767 = vpack.c.bf16 %v6763, %v6759
    %v6768 = vld [vmem:[#allocation7] sm:$0xff]
    %v6769 = vld [vmem:[#allocation7 + $0x8] sm:$0xff]
    %v6770 = vld [vmem:[#allocation7 + $0x10] sm:$0xff]
    %v6771 = vld [vmem:[#allocation7 + $0x18] sm:$0xff]
    %v6772 = vld [vmem:[#allocation7 + $0x20] sm:$0xff]
    %v6773 = vld [vmem:[#allocation7 + $0x28] sm:$0xff]
    %v6774 = vld [vmem:[#allocation7 + $0x30] sm:$0xff]
    %v6775 = vld [vmem:[#allocation7 + $0x38] sm:$0xff]
    %v6776 = vld [vmem:[#allocation7 + $0x40] sm:$0xff]
    %v6777 = vld [vmem:[#allocation7 + $0x48] sm:$0xff]
    %v6778 = vld [vmem:[#allocation7 + $0x50] sm:$0xff]
    %v6779 = vld [vmem:[#allocation7 + $0x58] sm:$0xff]
    %v6780 = vld [vmem:[#allocation7 + $0x60] sm:$0xff]
    %v6781 = vld [vmem:[#allocation7 + $0x68] sm:$0xff]
    %v6782 = vld [vmem:[#allocation7 + $0x70] sm:$0xff]
    %v6783 = vld [vmem:[#allocation7 + $0x78] sm:$0xff]
    %v6784 = vld [vmem:[#allocation7 + $0x80] sm:$0xff]
    %v6785 = vld [vmem:[#allocation7 + $0x88] sm:$0xff]
    %v6786 = vld [vmem:[#allocation7 + $0x90] sm:$0xff]
    %v6787 = vld [vmem:[#allocation7 + $0x98] sm:$0xff]
    %v6788 = vld [vmem:[#allocation7 + $0xa0] sm:$0xff]
    %v6789 = vld [vmem:[#allocation7 + $0xa8] sm:$0xff]
    %v6790 = vld [vmem:[#allocation7 + $0xb0] sm:$0xff]
    %v6791 = vld [vmem:[#allocation7 + $0xb8] sm:$0xff]
    %v6792 = vld [vmem:[#allocation7 + $0xc0] sm:$0xff]
    %v6793 = vld [vmem:[#allocation7 + $0xc8] sm:$0xff]
    %v6794 = vld [vmem:[#allocation7 + $0xd0] sm:$0xff]
    %v6795 = vld [vmem:[#allocation7 + $0xd8] sm:$0xff]
    %v6796 = vld [vmem:[#allocation7 + $0xe0] sm:$0xff]
    %v6797 = vld [vmem:[#allocation7 + $0xe8] sm:$0xff]
    %v6798 = vld [vmem:[#allocation7 + $0xf0] sm:$0xff]
    %v6799 = vld [vmem:[#allocation7 + $0xf8] sm:$0xff]
    %v6800 = vld [vmem:[#allocation7 + $0x100] sm:$0xff]
    %v6801 = vld [vmem:[#allocation7 + $0x108] sm:$0xff]
    %v6802 = vld [vmem:[#allocation7 + $0x110] sm:$0xff]
    %v6803 = vld [vmem:[#allocation7 + $0x118] sm:$0xff]
    %v6804 = vld [vmem:[#allocation7 + $0x120] sm:$0xff]
    %v6805 = vld [vmem:[#allocation7 + $0x128] sm:$0xff]
    %v6806 = vld [vmem:[#allocation7 + $0x130] sm:$0xff]
    %v6807 = vld [vmem:[#allocation7 + $0x138] sm:$0xff]
    %v6808 = vld [vmem:[#allocation7 + $0x140] sm:$0xff]
    %v6809 = vld [vmem:[#allocation7 + $0x148] sm:$0xff]
    %v6810 = vld [vmem:[#allocation7 + $0x150] sm:$0xff]
    %v6811 = vld [vmem:[#allocation7 + $0x158] sm:$0xff]
    %v6812 = vld [vmem:[#allocation7 + $0x160] sm:$0xff]
    %v6813 = vld [vmem:[#allocation7 + $0x168] sm:$0xff]
    %v6814 = vld [vmem:[#allocation7 + $0x170] sm:$0xff]
    %v6815 = vld [vmem:[#allocation7 + $0x178] sm:$0xff]
    %v6816 = vld [vmem:[#allocation7 + $0x180] sm:$0xff]
    %v6817 = vld [vmem:[#allocation7 + $0x188] sm:$0xff]
    %v6818 = vld [vmem:[#allocation7 + $0x190] sm:$0xff]
    %v6819 = vld [vmem:[#allocation7 + $0x198] sm:$0xff]
    %v6820 = vld [vmem:[#allocation7 + $0x1a0] sm:$0xff]
    %v6821 = vld [vmem:[#allocation7 + $0x1a8] sm:$0xff]
    %v6822 = vld [vmem:[#allocation7 + $0x1b0] sm:$0xff]
    %v6823 = vld [vmem:[#allocation7 + $0x1b8] sm:$0xff]
    %v6824 = vld [vmem:[#allocation7 + $0x1c0] sm:$0xff]
    %v6825 = vld [vmem:[#allocation7 + $0x1c8] sm:$0xff]
    %v6826 = vld [vmem:[#allocation7 + $0x1d0] sm:$0xff]
    %v6827 = vld [vmem:[#allocation7 + $0x1d8] sm:$0xff]
    %v6828 = vld [vmem:[#allocation7 + $0x1e0] sm:$0xff]
    %v6829 = vld [vmem:[#allocation7 + $0x1e8] sm:$0xff]
    %v6830 = vld [vmem:[#allocation7 + $0x1f0] sm:$0xff]
    %v6831 = vld [vmem:[#allocation7 + $0x1f8] sm:$0xff]
    %v6832 = vld [vmem:[#allocation15 + $0xc] sm:$0x3]
    %v6834 = vlaneseq
    %v6835 = vshrl.u32 %v6834, 7
    %v6836 = vsub.s32 0, %v6835
    %v6837 = vrot.slane %v6832, %v6836
    %v6838 = vlaneseq
    %v6839 = vshrl.u32 %v6838, 7
    %v6840 = vsub.s32 1, %v6839
    %v6841 = vrot.slane %v6832, %v6840
    %v6908 = vunpack.c.l.b16 %v6768
    %v6909 = vunpack.c.h.b16 %v6768
    %v6910 = vunpack.c.l.b16 %v6769
    %v6911 = vunpack.c.h.b16 %v6769
    %v6912 = vunpack.c.l.b16 %v6770
    %v6913 = vunpack.c.h.b16 %v6770
    %v6914 = vunpack.c.l.b16 %v6771
    %v6915 = vunpack.c.h.b16 %v6771
    %v6916 = vunpack.c.l.b16 %v6772
    %v6917 = vunpack.c.h.b16 %v6772
    %v6918 = vunpack.c.l.b16 %v6773
    %v6919 = vunpack.c.h.b16 %v6773
    %v6920 = vunpack.c.l.b16 %v6774
    %v6921 = vunpack.c.h.b16 %v6774
    %v6922 = vunpack.c.l.b16 %v6775
    %v6923 = vunpack.c.h.b16 %v6775
    %v6924 = vunpack.c.l.b16 %v6776
    %v6925 = vunpack.c.h.b16 %v6776
    %v6926 = vunpack.c.l.b16 %v6777
    %v6927 = vunpack.c.h.b16 %v6777
    %v6928 = vunpack.c.l.b16 %v6778
    %v6929 = vunpack.c.h.b16 %v6778
    %v6930 = vunpack.c.l.b16 %v6779
    %v6931 = vunpack.c.h.b16 %v6779
    %v6932 = vunpack.c.l.b16 %v6780
    %v6933 = vunpack.c.h.b16 %v6780
    %v6934 = vunpack.c.l.b16 %v6781
    %v6935 = vunpack.c.h.b16 %v6781
    %v6936 = vunpack.c.l.b16 %v6782
    %v6937 = vunpack.c.h.b16 %v6782
    %v6938 = vunpack.c.l.b16 %v6783
    %v6939 = vunpack.c.h.b16 %v6783
    %v6940 = vunpack.c.l.b16 %v6784
    %v6941 = vunpack.c.h.b16 %v6784
    %v6942 = vunpack.c.l.b16 %v6785
    %v6943 = vunpack.c.h.b16 %v6785
    %v6944 = vunpack.c.l.b16 %v6786
    %v6945 = vunpack.c.h.b16 %v6786
    %v6946 = vunpack.c.l.b16 %v6787
    %v6947 = vunpack.c.h.b16 %v6787
    %v6948 = vunpack.c.l.b16 %v6788
    %v6949 = vunpack.c.h.b16 %v6788
    %v6950 = vunpack.c.l.b16 %v6789
    %v6951 = vunpack.c.h.b16 %v6789
    %v6952 = vunpack.c.l.b16 %v6790
    %v6953 = vunpack.c.h.b16 %v6790
    %v6954 = vunpack.c.l.b16 %v6791
    %v6955 = vunpack.c.h.b16 %v6791
    %v6956 = vunpack.c.l.b16 %v6792
    %v6957 = vunpack.c.h.b16 %v6792
    %v6958 = vunpack.c.l.b16 %v6793
    %v6959 = vunpack.c.h.b16 %v6793
    %v6960 = vunpack.c.l.b16 %v6794
    %v6961 = vunpack.c.h.b16 %v6794
    %v6962 = vunpack.c.l.b16 %v6795
    %v6963 = vunpack.c.h.b16 %v6795
    %v6964 = vunpack.c.l.b16 %v6796
    %v6965 = vunpack.c.h.b16 %v6796
    %v6966 = vunpack.c.l.b16 %v6797
    %v6967 = vunpack.c.h.b16 %v6797
    %v6968 = vunpack.c.l.b16 %v6798
    %v6969 = vunpack.c.h.b16 %v6798
    %v6970 = vunpack.c.l.b16 %v6799
    %v6971 = vunpack.c.h.b16 %v6799
    %v6972 = vunpack.c.l.b16 %v6800
    %v6973 = vunpack.c.h.b16 %v6800
    %v6974 = vunpack.c.l.b16 %v6801
    %v6975 = vunpack.c.h.b16 %v6801
    %v6976 = vunpack.c.l.b16 %v6802
    %v6977 = vunpack.c.h.b16 %v6802
    %v6978 = vunpack.c.l.b16 %v6803
    %v6979 = vunpack.c.h.b16 %v6803
    %v6980 = vunpack.c.l.b16 %v6804
    %v6981 = vunpack.c.h.b16 %v6804
    %v6982 = vunpack.c.l.b16 %v6805
    %v6983 = vunpack.c.h.b16 %v6805
    %v6984 = vunpack.c.l.b16 %v6806
    %v6985 = vunpack.c.h.b16 %v6806
    %v6986 = vunpack.c.l.b16 %v6807
    %v6987 = vunpack.c.h.b16 %v6807
    %v6988 = vunpack.c.l.b16 %v6808
    %v6989 = vunpack.c.h.b16 %v6808
    %v6990 = vunpack.c.l.b16 %v6809
    %v6991 = vunpack.c.h.b16 %v6809
    %v6992 = vunpack.c.l.b16 %v6810
    %v6993 = vunpack.c.h.b16 %v6810
    %v6994 = vunpack.c.l.b16 %v6811
    %v6995 = vunpack.c.h.b16 %v6811
    %v6996 = vunpack.c.l.b16 %v6812
    %v6997 = vunpack.c.h.b16 %v6812
    %v6998 = vunpack.c.l.b16 %v6813
    %v6999 = vunpack.c.h.b16 %v6813
    %v7000 = vunpack.c.l.b16 %v6814
    %v7001 = vunpack.c.h.b16 %v6814
    %v7002 = vunpack.c.l.b16 %v6815
    %v7003 = vunpack.c.h.b16 %v6815
    %v7004 = vunpack.c.l.b16 %v6816
    %v7005 = vunpack.c.h.b16 %v6816
    %v7006 = vunpack.c.l.b16 %v6817
    %v7007 = vunpack.c.h.b16 %v6817
    %v7008 = vunpack.c.l.b16 %v6818
    %v7009 = vunpack.c.h.b16 %v6818
    %v7010 = vunpack.c.l.b16 %v6819
    %v7011 = vunpack.c.h.b16 %v6819
    %v7012 = vunpack.c.l.b16 %v6820
    %v7013 = vunpack.c.h.b16 %v6820
    %v7014 = vunpack.c.l.b16 %v6821
    %v7015 = vunpack.c.h.b16 %v6821
    %v7016 = vunpack.c.l.b16 %v6822
    %v7017 = vunpack.c.h.b16 %v6822
    %v7018 = vunpack.c.l.b16 %v6823
    %v7019 = vunpack.c.h.b16 %v6823
    %v7020 = vunpack.c.l.b16 %v6824
    %v7021 = vunpack.c.h.b16 %v6824
    %v7022 = vunpack.c.l.b16 %v6825
    %v7023 = vunpack.c.h.b16 %v6825
    %v7024 = vunpack.c.l.b16 %v6826
    %v7025 = vunpack.c.h.b16 %v6826
    %v7026 = vunpack.c.l.b16 %v6827
    %v7027 = vunpack.c.h.b16 %v6827
    %v7028 = vunpack.c.l.b16 %v6828
    %v7029 = vunpack.c.h.b16 %v6828
    %v7030 = vunpack.c.l.b16 %v6829
    %v7031 = vunpack.c.h.b16 %v6829
    %v7032 = vunpack.c.l.b16 %v6830
    %v7033 = vunpack.c.h.b16 %v6830
    %v7034 = vunpack.c.l.b16 %v6831
    %v7035 = vunpack.c.h.b16 %v6831
    %v7036 = vpack.c.b16 %v6910, %v6908
    %v7037 = vpack.c.b16 %v6911, %v6909
    %v7038 = vpack.c.b16 %v6914, %v6912
    %v7039 = vpack.c.b16 %v6915, %v6913
    %v7040 = vpack.c.b16 %v6918, %v6916
    %v7041 = vpack.c.b16 %v6919, %v6917
    %v7042 = vpack.c.b16 %v6922, %v6920
    %v7043 = vpack.c.b16 %v6923, %v6921
    %v7044 = vpack.c.b16 %v6926, %v6924
    %v7045 = vpack.c.b16 %v6927, %v6925
    %v7046 = vpack.c.b16 %v6930, %v6928
    %v7047 = vpack.c.b16 %v6931, %v6929
    %v7048 = vpack.c.b16 %v6934, %v6932
    %v7049 = vpack.c.b16 %v6935, %v6933
    %v7050 = vpack.c.b16 %v6938, %v6936
    %v7051 = vpack.c.b16 %v6939, %v6937
    %v7052 = vpack.c.b16 %v6942, %v6940
    %v7053 = vpack.c.b16 %v6943, %v6941
    %v7054 = vpack.c.b16 %v6946, %v6944
    %v7055 = vpack.c.b16 %v6947, %v6945
    %v7056 = vpack.c.b16 %v6950, %v6948
    %v7057 = vpack.c.b16 %v6951, %v6949
    %v7058 = vpack.c.b16 %v6954, %v6952
    %v7059 = vpack.c.b16 %v6955, %v6953
    %v7060 = vpack.c.b16 %v6958, %v6956
    %v7061 = vpack.c.b16 %v6959, %v6957
    %v7062 = vpack.c.b16 %v6962, %v6960
    %v7063 = vpack.c.b16 %v6963, %v6961
    %v7064 = vpack.c.b16 %v6966, %v6964
    %v7065 = vpack.c.b16 %v6967, %v6965
    %v7066 = vpack.c.b16 %v6970, %v6968
    %v7067 = vpack.c.b16 %v6971, %v6969
    %v7068 = vpack.c.b16 %v6974, %v6972
    %v7069 = vpack.c.b16 %v6975, %v6973
    %v7070 = vpack.c.b16 %v6978, %v6976
    %v7071 = vpack.c.b16 %v6979, %v6977
    %v7072 = vpack.c.b16 %v6982, %v6980
    %v7073 = vpack.c.b16 %v6983, %v6981
    %v7074 = vpack.c.b16 %v6986, %v6984
    %v7075 = vpack.c.b16 %v6987, %v6985
    %v7076 = vpack.c.b16 %v6990, %v6988
    %v7077 = vpack.c.b16 %v6991, %v6989
    %v7078 = vpack.c.b16 %v6994, %v6992
    %v7079 = vpack.c.b16 %v6995, %v6993
    %v7080 = vpack.c.b16 %v6998, %v6996
    %v7081 = vpack.c.b16 %v6999, %v6997
    %v7082 = vpack.c.b16 %v7002, %v7000
    %v7083 = vpack.c.b16 %v7003, %v7001
    %v7084 = vpack.c.b16 %v7006, %v7004
    %v7085 = vpack.c.b16 %v7007, %v7005
    %v7086 = vpack.c.b16 %v7010, %v7008
    %v7087 = vpack.c.b16 %v7011, %v7009
    %v7088 = vpack.c.b16 %v7014, %v7012
    %v7089 = vpack.c.b16 %v7015, %v7013
    %v7090 = vpack.c.b16 %v7018, %v7016
    %v7091 = vpack.c.b16 %v7019, %v7017
    %v7092 = vpack.c.b16 %v7022, %v7020
    %v7093 = vpack.c.b16 %v7023, %v7021
    %v7094 = vpack.c.b16 %v7026, %v7024
    %v7095 = vpack.c.b16 %v7027, %v7025
    %v7096 = vpack.c.b16 %v7030, %v7028
    %v7097 = vpack.c.b16 %v7031, %v7029
    %v7098 = vpack.c.b16 %v7034, %v7032
    %v7099 = vpack.c.b16 %v7035, %v7033
    %7164 = vmatprep.subr.bf16.mxu0 %v7037
    %7165 = vmatpush1.bf16.msra.mxu0 %v7036
    %7166 = vmatprep.subr.bf16.mxu0 %v7039
    %7167 = vmatpush1.bf16.msra.mxu0 %v7038
    %7168 = vmatprep.subr.bf16.mxu0 %v7041
    %7169 = vmatpush1.bf16.msra.mxu0 %v7040
    %7170 = vmatprep.subr.bf16.mxu0 %v7043
    %7171 = vmatpush1.bf16.msra.mxu0 %v7042
    %7172 = vmatprep.subr.bf16.mxu0 %v7045
    %7173 = vmatpush1.bf16.msra.mxu0 %v7044
    %7174 = vmatprep.subr.bf16.mxu0 %v7047
    %7175 = vmatpush1.bf16.msra.mxu0 %v7046
    %7176 = vmatprep.subr.bf16.mxu0 %v7049
    %7177 = vmatpush1.bf16.msra.mxu0 %v7048
    %7178 = vmatprep.subr.bf16.mxu0 %v7051
    %7179 = vmatpush1.bf16.msra.mxu0 %v7050
    %7180 = vmatprep.subr.bf16.mxu0 %v7053
    %7181 = vmatpush1.bf16.msra.mxu0 %v7052
    %7182 = vmatprep.subr.bf16.mxu0 %v7055
    %7183 = vmatpush1.bf16.msra.mxu0 %v7054
    %7184 = vmatprep.subr.bf16.mxu0 %v7057
    %7185 = vmatpush1.bf16.msra.mxu0 %v7056
    %7186 = vmatprep.subr.bf16.mxu0 %v7059
    %7187 = vmatpush1.bf16.msra.mxu0 %v7058
    %7188 = vmatprep.subr.bf16.mxu0 %v7061
    %7189 = vmatpush1.bf16.msra.mxu0 %v7060
    %7190 = vmatprep.subr.bf16.mxu0 %v7063
    %7191 = vmatpush1.bf16.msra.mxu0 %v7062
    %7192 = vmatprep.subr.bf16.mxu0 %v7065
    %7193 = vmatpush1.bf16.msra.mxu0 %v7064
    %7194 = vmatprep.subr.bf16.mxu0 %v7067
    %7195 = vmatpush1.bf16.msra.mxu0 %v7066
    %7196 = vmatprep.mubr.bf16.mxu0 %v6765
    %7197 = vmatmul.mubr.bf16.gmra.mrb[0].mxu0 %v6764
    %v7198 = vpop.f32.mrb[0].mxu0
    %v7199 = vadd.f32 %v6837, %v7198
    %v7200 = vpop.f32.mrb[0].mxu0
    %v7201 = vadd.f32 %v6841, %v7200
    %v7202 = vpop.f32.mrb[0].mxu0
    %v7203 = vadd.f32 %v6837, %v7202
    %v7204 = vpop.f32.mrb[0].mxu0
    %v7205 = vadd.f32 %v6841, %v7204
    %7206 = vdwg.mxu0
    %7207 = vmatprep.subr.bf16.mxu0 %v7069
    %7208 = vmatpush1.bf16.msra.mxu0 %v7068
    %7209 = vmatprep.subr.bf16.mxu0 %v7071
    %7210 = vmatpush1.bf16.msra.mxu0 %v7070
    %7211 = vmatprep.subr.bf16.mxu0 %v7073
    %7212 = vmatpush1.bf16.msra.mxu0 %v7072
    %7213 = vmatprep.subr.bf16.mxu0 %v7075
    %7214 = vmatpush1.bf16.msra.mxu0 %v7074
    %7215 = vmatprep.subr.bf16.mxu0 %v7077
    %7216 = vmatpush1.bf16.msra.mxu0 %v7076
    %7217 = vmatprep.subr.bf16.mxu0 %v7079
    %7218 = vmatpush1.bf16.msra.mxu0 %v7078
    %7219 = vmatprep.subr.bf16.mxu0 %v7081
    %7220 = vmatpush1.bf16.msra.mxu0 %v7080
    %7221 = vmatprep.subr.bf16.mxu0 %v7083
    %7222 = vmatpush1.bf16.msra.mxu0 %v7082
    %7223 = vmatprep.subr.bf16.mxu0 %v7085
    %7224 = vmatpush1.bf16.msra.mxu0 %v7084
    %7225 = vmatprep.subr.bf16.mxu0 %v7087
    %7226 = vmatpush1.bf16.msra.mxu0 %v7086
    %7227 = vmatprep.subr.bf16.mxu0 %v7089
    %7228 = vmatpush1.bf16.msra.mxu0 %v7088
    %7229 = vmatprep.subr.bf16.mxu0 %v7091
    %7230 = vmatpush1.bf16.msra.mxu0 %v7090
    %7231 = vmatprep.subr.bf16.mxu0 %v7093
    %7232 = vmatpush1.bf16.msra.mxu0 %v7092
    %7233 = vmatprep.subr.bf16.mxu0 %v7095
    %7234 = vmatpush1.bf16.msra.mxu0 %v7094
    %7235 = vmatprep.subr.bf16.mxu0 %v7097
    %7236 = vmatpush1.bf16.msra.mxu0 %v7096
    %7237 = vmatprep.subr.bf16.mxu0 %v7099
    %7238 = vmatpush1.bf16.msra.mxu0 %v7098
    %7239 = vmatprep.mubr.bf16.mxu0 %v6767
    %7240 = vmatmul.mubr.bf16.gmra.mrb[0].mxu0 %v6766
    %v7241 = vpop.f32.mrb[0].mxu0
    %v7242 = vadd.f32 %v7199, %v7241
    %v7243 = vpop.f32.mrb[0].mxu0
    %v7244 = vadd.f32 %v7201, %v7243
    %v7245 = vpop.f32.mrb[0].mxu0
    %v7246 = vadd.f32 %v7203, %v7245
    %v7247 = vpop.f32.mrb[0].mxu0
    %v7248 = vadd.f32 %v7205, %v7247
    %7249 = vdwg.mxu0
    %7250 = vst [vmem:[%s12] sm:$0xff] %v7242
    %7251 = vst [vmem:[%s12 + $0x8] sm:$0xff] %v7246
    %7252 = vst [vmem:[%s13] sm:$0xff] %v7244
    %7253 = vst [vmem:[%s13 + $0x8] sm:$0xff] %v7248
    %v7254 = vmul.f32 %v7244, 0.5
    %v7255 = vmul.f32 %v7248, 0.5
    %v7256 = vmul.f32 %v7254, 1.442695
    %v7257 = vpow.pop %v7256
    %v7258 = vmul.f32 %v7255, 1.442695
    %v7259 = vpow.pop %v7258
    %v7260 = vld [vmem:[%s1] sm:$0xff]
    %v7261 = vld [vmem:[%s1 + $0x8] sm:$0xff]
    %v7262 = vmul.f32 %v7257, %v7260
    %v7263 = vmul.f32 %v7259, %v7261
    %v7264 = vadd.f32 %v7262, %v7242
    %v7265 = vadd.f32 %v7263, %v7246
    %v7266 = vpack.c.bf16 %v7265, %v7264
    %v7267 = vld [vmem:[#allocation9] sm:$0xff]
    %v7268 = vld [vmem:[#allocation9 + $0x8] sm:$0xff]
    %v7269 = vld [vmem:[#allocation9 + $0x10] sm:$0xff]
    %v7270 = vld [vmem:[#allocation9 + $0x18] sm:$0xff]
    %v7271 = vld [vmem:[#allocation9 + $0x20] sm:$0xff]
    %v7272 = vld [vmem:[#allocation9 + $0x28] sm:$0xff]
    %v7273 = vld [vmem:[#allocation9 + $0x30] sm:$0xff]
    %v7274 = vld [vmem:[#allocation9 + $0x38] sm:$0xff]
    %v7275 = vld [vmem:[#allocation9 + $0x40] sm:$0xff]
    %v7276 = vld [vmem:[#allocation9 + $0x48] sm:$0xff]
    %v7277 = vld [vmem:[#allocation9 + $0x50] sm:$0xff]
    %v7278 = vld [vmem:[#allocation9 + $0x58] sm:$0xff]
    %v7279 = vld [vmem:[#allocation9 + $0x60] sm:$0xff]
    %v7280 = vld [vmem:[#allocation9 + $0x68] sm:$0xff]
    %v7281 = vld [vmem:[#allocation9 + $0x70] sm:$0xff]
    %v7282 = vld [vmem:[#allocation9 + $0x78] sm:$0xff]
    %v7283 = vld [vmem:[#allocation9 + $0x80] sm:$0xff]
    %v7284 = vld [vmem:[#allocation9 + $0x88] sm:$0xff]
    %v7285 = vld [vmem:[#allocation9 + $0x90] sm:$0xff]
    %v7286 = vld [vmem:[#allocation9 + $0x98] sm:$0xff]
    %v7287 = vld [vmem:[#allocation9 + $0xa0] sm:$0xff]
    %v7288 = vld [vmem:[#allocation9 + $0xa8] sm:$0xff]
    %v7289 = vld [vmem:[#allocation9 + $0xb0] sm:$0xff]
    %v7290 = vld [vmem:[#allocation9 + $0xb8] sm:$0xff]
    %v7291 = vld [vmem:[#allocation9 + $0xc0] sm:$0xff]
    %v7292 = vld [vmem:[#allocation9 + $0xc8] sm:$0xff]
    %v7293 = vld [vmem:[#allocation9 + $0xd0] sm:$0xff]
    %v7294 = vld [vmem:[#allocation9 + $0xd8] sm:$0xff]
    %v7295 = vld [vmem:[#allocation9 + $0xe0] sm:$0xff]
    %v7296 = vld [vmem:[#allocation9 + $0xe8] sm:$0xff]
    %v7297 = vld [vmem:[#allocation9 + $0xf0] sm:$0xff]
    %v7298 = vld [vmem:[#allocation9 + $0xf8] sm:$0xff]
    %v7299 = vld [vmem:[#allocation15 + $0xe] sm:$0xf]
    %v7301 = vlaneseq
    %v7302 = vshrl.u32 %v7301, 7
    %v7303 = vsub.s32 0, %v7302
    %v7304 = vrot.slane %v7299, %v7303
    %v7305 = vlaneseq
    %v7306 = vshrl.u32 %v7305, 7
    %v7307 = vsub.s32 1, %v7306
    %v7308 = vrot.slane %v7299, %v7307
    %v7309 = vlaneseq
    %v7310 = vshrl.u32 %v7309, 7
    %v7311 = vsub.s32 2, %v7310
    %v7312 = vrot.slane %v7299, %v7311
    %v7313 = vlaneseq
    %v7314 = vshrl.u32 %v7313, 7
    %v7315 = vsub.s32 3, %v7314
    %v7316 = vrot.slane %v7299, %v7315
    %v7353 = vunpack.c.l.b16 %v7267
    %v7354 = vunpack.c.h.b16 %v7267
    %v7355 = vunpack.c.l.b16 %v7268
    %v7356 = vunpack.c.h.b16 %v7268
    %v7357 = vunpack.c.l.b16 %v7269
    %v7358 = vunpack.c.h.b16 %v7269
    %v7359 = vunpack.c.l.b16 %v7270
    %v7360 = vunpack.c.h.b16 %v7270
    %v7361 = vunpack.c.l.b16 %v7271
    %v7362 = vunpack.c.h.b16 %v7271
    %v7363 = vunpack.c.l.b16 %v7272
    %v7364 = vunpack.c.h.b16 %v7272
    %v7365 = vunpack.c.l.b16 %v7273
    %v7366 = vunpack.c.h.b16 %v7273
    %v7367 = vunpack.c.l.b16 %v7274
    %v7368 = vunpack.c.h.b16 %v7274
    %v7369 = vunpack.c.l.b16 %v7275
    %v7370 = vunpack.c.h.b16 %v7275
    %v7371 = vunpack.c.l.b16 %v7276
    %v7372 = vunpack.c.h.b16 %v7276
    %v7373 = vunpack.c.l.b16 %v7277
    %v7374 = vunpack.c.h.b16 %v7277
    %v7375 = vunpack.c.l.b16 %v7278
    %v7376 = vunpack.c.h.b16 %v7278
    %v7377 = vunpack.c.l.b16 %v7279
    %v7378 = vunpack.c.h.b16 %v7279
    %v7379 = vunpack.c.l.b16 %v7280
    %v7380 = vunpack.c.h.b16 %v7280
    %v7381 = vunpack.c.l.b16 %v7281
    %v7382 = vunpack.c.h.b16 %v7281
    %v7383 = vunpack.c.l.b16 %v7282
    %v7384 = vunpack.c.h.b16 %v7282
    %v7385 = vunpack.c.l.b16 %v7283
    %v7386 = vunpack.c.h.b16 %v7283
    %v7387 = vunpack.c.l.b16 %v7284
    %v7388 = vunpack.c.h.b16 %v7284
    %v7389 = vunpack.c.l.b16 %v7285
    %v7390 = vunpack.c.h.b16 %v7285
    %v7391 = vunpack.c.l.b16 %v7286
    %v7392 = vunpack.c.h.b16 %v7286
    %v7393 = vunpack.c.l.b16 %v7287
    %v7394 = vunpack.c.h.b16 %v7287
    %v7395 = vunpack.c.l.b16 %v7288
    %v7396 = vunpack.c.h.b16 %v7288
    %v7397 = vunpack.c.l.b16 %v7289
    %v7398 = vunpack.c.h.b16 %v7289
    %v7399 = vunpack.c.l.b16 %v7290
    %v7400 = vunpack.c.h.b16 %v7290
    %v7401 = vunpack.c.l.b16 %v7291
    %v7402 = vunpack.c.h.b16 %v7291
    %v7403 = vunpack.c.l.b16 %v7292
    %v7404 = vunpack.c.h.b16 %v7292
    %v7405 = vunpack.c.l.b16 %v7293
    %v7406 = vunpack.c.h.b16 %v7293
    %v7407 = vunpack.c.l.b16 %v7294
    %v7408 = vunpack.c.h.b16 %v7294
    %v7409 = vunpack.c.l.b16 %v7295
    %v7410 = vunpack.c.h.b16 %v7295
    %v7411 = vunpack.c.l.b16 %v7296
    %v7412 = vunpack.c.h.b16 %v7296
    %v7413 = vunpack.c.l.b16 %v7297
    %v7414 = vunpack.c.h.b16 %v7297
    %v7415 = vunpack.c.l.b16 %v7298
    %v7416 = vunpack.c.h.b16 %v7298
    %v7417 = vpack.c.b16 %v7357, %v7353
    %v7418 = vpack.c.b16 %v7358, %v7354
    %v7419 = vpack.c.b16 %v7359, %v7355
    %v7420 = vpack.c.b16 %v7360, %v7356
    %v7421 = vpack.c.b16 %v7365, %v7361
    %v7422 = vpack.c.b16 %v7366, %v7362
    %v7423 = vpack.c.b16 %v7367, %v7363
    %v7424 = vpack.c.b16 %v7368, %v7364
    %v7425 = vpack.c.b16 %v7373, %v7369
    %v7426 = vpack.c.b16 %v7374, %v7370
    %v7427 = vpack.c.b16 %v7375, %v7371
    %v7428 = vpack.c.b16 %v7376, %v7372
    %v7429 = vpack.c.b16 %v7381, %v7377
    %v7430 = vpack.c.b16 %v7382, %v7378
    %v7431 = vpack.c.b16 %v7383, %v7379
    %v7432 = vpack.c.b16 %v7384, %v7380
    %v7433 = vpack.c.b16 %v7389, %v7385
    %v7434 = vpack.c.b16 %v7390, %v7386
    %v7435 = vpack.c.b16 %v7391, %v7387
    %v7436 = vpack.c.b16 %v7392, %v7388
    %v7437 = vpack.c.b16 %v7397, %v7393
    %v7438 = vpack.c.b16 %v7398, %v7394
    %v7439 = vpack.c.b16 %v7399, %v7395
    %v7440 = vpack.c.b16 %v7400, %v7396
    %v7441 = vpack.c.b16 %v7405, %v7401
    %v7442 = vpack.c.b16 %v7406, %v7402
    %v7443 = vpack.c.b16 %v7407, %v7403
    %v7444 = vpack.c.b16 %v7408, %v7404
    %v7445 = vpack.c.b16 %v7413, %v7409
    %v7446 = vpack.c.b16 %v7414, %v7410
    %v7447 = vpack.c.b16 %v7415, %v7411
    %v7448 = vpack.c.b16 %v7416, %v7412
    %7481 = vmatprep.subr.bf16.mxu0 %v7418
    %7482 = vmatpush1.bf16.msra.mxu0 %v7417
    %7483 = vmatprep.subr.bf16.mxu0 %v7422
    %7484 = vmatpush1.bf16.msra.mxu0 %v7421
    %7485 = vmatprep.subr.bf16.mxu0 %v7426
    %7486 = vmatpush1.bf16.msra.mxu0 %v7425
    %7487 = vmatprep.subr.bf16.mxu0 %v7430
    %7488 = vmatpush1.bf16.msra.mxu0 %v7429
    %7489 = vmatprep.subr.bf16.mxu0 %v7434
    %7490 = vmatpush1.bf16.msra.mxu0 %v7433
    %7491 = vmatprep.subr.bf16.mxu0 %v7438
    %7492 = vmatpush1.bf16.msra.mxu0 %v7437
    %7493 = vmatprep.subr.bf16.mxu0 %v7442
    %7494 = vmatpush1.bf16.msra.mxu0 %v7441
    %7495 = vmatprep.subr.bf16.mxu0 %v7446
    %7496 = vmatpush1.bf16.msra.mxu0 %v7445
    %7497 = vmatprep.subr.bf16.mxu0 0
    %7498 = vmatpush1.bf16.msra.mxu0 0
    %7499 = vmatprep.subr.bf16.mxu0 0
    %7500 = vmatpush1.bf16.msra.mxu0 0
    %7501 = vmatprep.subr.bf16.mxu0 0
    %7502 = vmatpush1.bf16.msra.mxu0 0
    %7503 = vmatprep.subr.bf16.mxu0 0
    %7504 = vmatpush1.bf16.msra.mxu0 0
    %7505 = vmatprep.subr.bf16.mxu0 0
    %7506 = vmatpush1.bf16.msra.mxu0 0
    %7507 = vmatprep.subr.bf16.mxu0 0
    %7508 = vmatpush1.bf16.msra.mxu0 0
    %7509 = vmatprep.subr.bf16.mxu0 0
    %7510 = vmatpush1.bf16.msra.mxu0 0
    %7511 = vmatprep.subr.bf16.mxu0 0
    %7512 = vmatpush1.bf16.msra.mxu0 0
    %7513 = vmatprep.mubr.bf16.mxu0 0
    %7514 = vmatmul.mubr.bf16.gmra.mrb[0].mxu0 %v7266
    %v7515 = vpop.f32.mrb[0].mxu0
    %v7516 = vadd.f32 %v7304, %v7515
    %v7517 = vpop.f32.mrb[0].mxu0
    %v7518 = vadd.f32 %v7308, %v7517
    %v7519 = vpop.f32.mrb[0].mxu0
    %v7520 = vadd.f32 %v7304, %v7519
    %v7521 = vpop.f32.mrb[0].mxu0
    %v7522 = vadd.f32 %v7308, %v7521
    %7523 = vdwg.mxu0
    %7524 = vmatprep.subr.bf16.mxu0 %v7420
    %7525 = vmatpush1.bf16.msra.mxu0 %v7419
    %7526 = vmatprep.subr.bf16.mxu0 %v7424
    %7527 = vmatpush1.bf16.msra.mxu0 %v7423
    %7528 = vmatprep.subr.bf16.mxu0 %v7428
    %7529 = vmatpush1.bf16.msra.mxu0 %v7427
    %7530 = vmatprep.subr.bf16.mxu0 %v7432
    %7531 = vmatpush1.bf16.msra.mxu0 %v7431
    %7532 = vmatprep.subr.bf16.mxu0 %v7436
    %7533 = vmatpush1.bf16.msra.mxu0 %v7435
    %7534 = vmatprep.subr.bf16.mxu0 %v7440
    %7535 = vmatpush1.bf16.msra.mxu0 %v7439
    %7536 = vmatprep.subr.bf16.mxu0 %v7444
    %7537 = vmatpush1.bf16.msra.mxu0 %v7443
    %7538 = vmatprep.subr.bf16.mxu0 %v7448
    %7539 = vmatpush1.bf16.msra.mxu0 %v7447
    %7540 = vmatprep.subr.bf16.mxu0 0
    %7541 = vmatpush1.bf16.msra.mxu0 0
    %7542 = vmatprep.subr.bf16.mxu0 0
    %7543 = vmatpush1.bf16.msra.mxu0 0
    %7544 = vmatprep.subr.bf16.mxu0 0
    %7545 = vmatpush1.bf16.msra.mxu0 0
    %7546 = vmatprep.subr.bf16.mxu0 0
    %7547 = vmatpush1.bf16.msra.mxu0 0
    %7548 = vmatprep.subr.bf16.mxu0 0
    %7549 = vmatpush1.bf16.msra.mxu0 0
    %7550 = vmatprep.subr.bf16.mxu0 0
    %7551 = vmatpush1.bf16.msra.mxu0 0
    %7552 = vmatprep.subr.bf16.mxu0 0
    %7553 = vmatpush1.bf16.msra.mxu0 0
    %7554 = vmatprep.subr.bf16.mxu0 0
    %7555 = vmatpush1.bf16.msra.mxu0 0
    %7556 = vmatprep.mubr.bf16.mxu0 0
    %7557 = vmatmul.mubr.bf16.gmra.mrb[0].mxu0 %v7266
    %v7558 = vpop.f32.mrb[0].mxu0
    %v7559 = vadd.f32 %v7312, %v7558
    %v7560 = vpop.f32.mrb[0].mxu0
    %v7561 = vadd.f32 %v7316, %v7560
    %v7562 = vpop.f32.mrb[0].mxu0
    %v7563 = vadd.f32 %v7312, %v7562
    %v7564 = vpop.f32.mrb[0].mxu0
    %v7565 = vadd.f32 %v7316, %v7564
    %7566 = vdwg.mxu0
    %v7567 = vmax.f32 %v7516, 0.0
    %v7568 = vmax.f32 %v7518, 0.0
    %v7569 = vmax.f32 %v7559, 0.0
    %v7570 = vmax.f32 %v7561, 0.0
    %v7571 = vmax.f32 %v7520, 0.0
    %v7572 = vmax.f32 %v7522, 0.0
    %v7573 = vmax.f32 %v7563, 0.0
    %v7574 = vmax.f32 %v7565, 0.0
    %v7575 = vpack.c.bf16 %v7571, %v7567
    %v7576 = vpack.c.bf16 %v7572, %v7568
    %v7577 = vpack.c.bf16 %v7573, %v7569
    %v7578 = vpack.c.bf16 %v7574, %v7570
    %v7579 = vld [vmem:[#allocation10] sm:$0xff]
    %v7580 = vld [vmem:[#allocation10 + $0x8] sm:$0xff]
    %v7581 = vld [vmem:[#allocation10 + $0x10] sm:$0xff]
    %v7582 = vld [vmem:[#allocation10 + $0x18] sm:$0xff]
    %v7583 = vld [vmem:[#allocation10 + $0x20] sm:$0xff]
    %v7584 = vld [vmem:[#allocation10 + $0x28] sm:$0xff]
    %v7585 = vld [vmem:[#allocation10 + $0x30] sm:$0xff]
    %v7586 = vld [vmem:[#allocation10 + $0x38] sm:$0xff]
    %v7587 = vld [vmem:[#allocation10 + $0x40] sm:$0xff]
    %v7588 = vld [vmem:[#allocation10 + $0x48] sm:$0xff]
    %v7589 = vld [vmem:[#allocation10 + $0x50] sm:$0xff]
    %v7590 = vld [vmem:[#allocation10 + $0x58] sm:$0xff]
    %v7591 = vld [vmem:[#allocation10 + $0x60] sm:$0xff]
    %v7592 = vld [vmem:[#allocation10 + $0x68] sm:$0xff]
    %v7593 = vld [vmem:[#allocation10 + $0x70] sm:$0xff]
    %v7594 = vld [vmem:[#allocation10 + $0x78] sm:$0xff]
    %v7595 = vld [vmem:[#allocation10 + $0x80] sm:$0xff]
    %v7596 = vld [vmem:[#allocation10 + $0x88] sm:$0xff]
    %v7597 = vld [vmem:[#allocation10 + $0x90] sm:$0xff]
    %v7598 = vld [vmem:[#allocation10 + $0x98] sm:$0xff]
    %v7599 = vld [vmem:[#allocation10 + $0xa0] sm:$0xff]
    %v7600 = vld [vmem:[#allocation10 + $0xa8] sm:$0xff]
    %v7601 = vld [vmem:[#allocation10 + $0xb0] sm:$0xff]
    %v7602 = vld [vmem:[#allocation10 + $0xb8] sm:$0xff]
    %v7603 = vld [vmem:[#allocation10 + $0xc0] sm:$0xff]
    %v7604 = vld [vmem:[#allocation10 + $0xc8] sm:$0xff]
    %v7605 = vld [vmem:[#allocation10 + $0xd0] sm:$0xff]
    %v7606 = vld [vmem:[#allocation10 + $0xd8] sm:$0xff]
    %v7607 = vld [vmem:[#allocation10 + $0xe0] sm:$0xff]
    %v7608 = vld [vmem:[#allocation10 + $0xe8] sm:$0xff]
    %v7609 = vld [vmem:[#allocation10 + $0xf0] sm:$0xff]
    %v7610 = vld [vmem:[#allocation10 + $0xf8] sm:$0xff]
    %v7611 = vld [vmem:[#allocation10 + $0x100] sm:$0xff]
    %v7612 = vld [vmem:[#allocation10 + $0x108] sm:$0xff]
    %v7613 = vld [vmem:[#allocation10 + $0x110] sm:$0xff]
    %v7614 = vld [vmem:[#allocation10 + $0x118] sm:$0xff]
    %v7615 = vld [vmem:[#allocation10 + $0x120] sm:$0xff]
    %v7616 = vld [vmem:[#allocation10 + $0x128] sm:$0xff]
    %v7617 = vld [vmem:[#allocation10 + $0x130] sm:$0xff]
    %v7618 = vld [vmem:[#allocation10 + $0x138] sm:$0xff]
    %v7619 = vld [vmem:[#allocation10 + $0x140] sm:$0xff]
    %v7620 = vld [vmem:[#allocation10 + $0x148] sm:$0xff]
    %v7621 = vld [vmem:[#allocation10 + $0x150] sm:$0xff]
    %v7622 = vld [vmem:[#allocation10 + $0x158] sm:$0xff]
    %v7623 = vld [vmem:[#allocation10 + $0x160] sm:$0xff]
    %v7624 = vld [vmem:[#allocation10 + $0x168] sm:$0xff]
    %v7625 = vld [vmem:[#allocation10 + $0x170] sm:$0xff]
    %v7626 = vld [vmem:[#allocation10 + $0x178] sm:$0xff]
    %v7627 = vld [vmem:[#allocation10 + $0x180] sm:$0xff]
    %v7628 = vld [vmem:[#allocation10 + $0x188] sm:$0xff]
    %v7629 = vld [vmem:[#allocation10 + $0x190] sm:$0xff]
    %v7630 = vld [vmem:[#allocation10 + $0x198] sm:$0xff]
    %v7631 = vld [vmem:[#allocation10 + $0x1a0] sm:$0xff]
    %v7632 = vld [vmem:[#allocation10 + $0x1a8] sm:$0xff]
    %v7633 = vld [vmem:[#allocation10 + $0x1b0] sm:$0xff]
    %v7634 = vld [vmem:[#allocation10 + $0x1b8] sm:$0xff]
    %v7635 = vld [vmem:[#allocation10 + $0x1c0] sm:$0xff]
    %v7636 = vld [vmem:[#allocation10 + $0x1c8] sm:$0xff]
    %v7637 = vld [vmem:[#allocation10 + $0x1d0] sm:$0xff]
    %v7638 = vld [vmem:[#allocation10 + $0x1d8] sm:$0xff]
    %v7639 = vld [vmem:[#allocation10 + $0x1e0] sm:$0xff]
    %v7640 = vld [vmem:[#allocation10 + $0x1e8] sm:$0xff]
    %v7641 = vld [vmem:[#allocation10 + $0x1f0] sm:$0xff]
    %v7642 = vld [vmem:[#allocation10 + $0x1f8] sm:$0xff]
    %v7643 = vld [vmem:[#allocation10 + $0x200] sm:$0xff]
    %v7644 = vld [vmem:[#allocation10 + $0x208] sm:$0xff]
    %v7645 = vld [vmem:[#allocation10 + $0x210] sm:$0xff]
    %v7646 = vld [vmem:[#allocation10 + $0x218] sm:$0xff]
    %v7647 = vld [vmem:[#allocation10 + $0x220] sm:$0xff]
    %v7648 = vld [vmem:[#allocation10 + $0x228] sm:$0xff]
    %v7649 = vld [vmem:[#allocation10 + $0x230] sm:$0xff]
    %v7650 = vld [vmem:[#allocation10 + $0x238] sm:$0xff]
    %v7651 = vld [vmem:[#allocation10 + $0x240] sm:$0xff]
    %v7652 = vld [vmem:[#allocation10 + $0x248] sm:$0xff]
    %v7653 = vld [vmem:[#allocation10 + $0x250] sm:$0xff]
    %v7654 = vld [vmem:[#allocation10 + $0x258] sm:$0xff]
    %v7655 = vld [vmem:[#allocation10 + $0x260] sm:$0xff]
    %v7656 = vld [vmem:[#allocation10 + $0x268] sm:$0xff]
    %v7657 = vld [vmem:[#allocation10 + $0x270] sm:$0xff]
    %v7658 = vld [vmem:[#allocation10 + $0x278] sm:$0xff]
    %v7659 = vld [vmem:[#allocation10 + $0x280] sm:$0xff]
    %v7660 = vld [vmem:[#allocation10 + $0x288] sm:$0xff]
    %v7661 = vld [vmem:[#allocation10 + $0x290] sm:$0xff]
    %v7662 = vld [vmem:[#allocation10 + $0x298] sm:$0xff]
    %v7663 = vld [vmem:[#allocation10 + $0x2a0] sm:$0xff]
    %v7664 = vld [vmem:[#allocation10 + $0x2a8] sm:$0xff]
    %v7665 = vld [vmem:[#allocation10 + $0x2b0] sm:$0xff]
    %v7666 = vld [vmem:[#allocation10 + $0x2b8] sm:$0xff]
    %v7667 = vld [vmem:[#allocation10 + $0x2c0] sm:$0xff]
    %v7668 = vld [vmem:[#allocation10 + $0x2c8] sm:$0xff]
    %v7669 = vld [vmem:[#allocation10 + $0x2d0] sm:$0xff]
    %v7670 = vld [vmem:[#allocation10 + $0x2d8] sm:$0xff]
    %v7671 = vld [vmem:[#allocation10 + $0x2e0] sm:$0xff]
    %v7672 = vld [vmem:[#allocation10 + $0x2e8] sm:$0xff]
    %v7673 = vld [vmem:[#allocation10 + $0x2f0] sm:$0xff]
    %v7674 = vld [vmem:[#allocation10 + $0x2f8] sm:$0xff]
    %v7675 = vld [vmem:[#allocation10 + $0x300] sm:$0xff]
    %v7676 = vld [vmem:[#allocation10 + $0x308] sm:$0xff]
    %v7677 = vld [vmem:[#allocation10 + $0x310] sm:$0xff]
    %v7678 = vld [vmem:[#allocation10 + $0x318] sm:$0xff]
    %v7679 = vld [vmem:[#allocation10 + $0x320] sm:$0xff]
    %v7680 = vld [vmem:[#allocation10 + $0x328] sm:$0xff]
    %v7681 = vld [vmem:[#allocation10 + $0x330] sm:$0xff]
    %v7682 = vld [vmem:[#allocation10 + $0x338] sm:$0xff]
    %v7683 = vld [vmem:[#allocation10 + $0x340] sm:$0xff]
    %v7684 = vld [vmem:[#allocation10 + $0x348] sm:$0xff]
    %v7685 = vld [vmem:[#allocation10 + $0x350] sm:$0xff]
    %v7686 = vld [vmem:[#allocation10 + $0x358] sm:$0xff]
    %v7687 = vld [vmem:[#allocation10 + $0x360] sm:$0xff]
    %v7688 = vld [vmem:[#allocation10 + $0x368] sm:$0xff]
    %v7689 = vld [vmem:[#allocation10 + $0x370] sm:$0xff]
    %v7690 = vld [vmem:[#allocation10 + $0x378] sm:$0xff]
    %v7691 = vld [vmem:[#allocation10 + $0x380] sm:$0xff]
    %v7692 = vld [vmem:[#allocation10 + $0x388] sm:$0xff]
    %v7693 = vld [vmem:[#allocation10 + $0x390] sm:$0xff]
    %v7694 = vld [vmem:[#allocation10 + $0x398] sm:$0xff]
    %v7695 = vld [vmem:[#allocation10 + $0x3a0] sm:$0xff]
    %v7696 = vld [vmem:[#allocation10 + $0x3a8] sm:$0xff]
    %v7697 = vld [vmem:[#allocation10 + $0x3b0] sm:$0xff]
    %v7698 = vld [vmem:[#allocation10 + $0x3b8] sm:$0xff]
    %v7699 = vld [vmem:[#allocation10 + $0x3c0] sm:$0xff]
    %v7700 = vld [vmem:[#allocation10 + $0x3c8] sm:$0xff]
    %v7701 = vld [vmem:[#allocation10 + $0x3d0] sm:$0xff]
    %v7702 = vld [vmem:[#allocation10 + $0x3d8] sm:$0xff]
    %v7703 = vld [vmem:[#allocation10 + $0x3e0] sm:$0xff]
    %v7704 = vld [vmem:[#allocation10 + $0x3e8] sm:$0xff]
    %v7705 = vld [vmem:[#allocation10 + $0x3f0] sm:$0xff]
    %v7706 = vld [vmem:[#allocation10 + $0x3f8] sm:$0xff]
    %v7707 = vld [vmem:[#allocation15 + $0x12] sm:$0xf]
    %v7709 = vlaneseq
    %v7710 = vshrl.u32 %v7709, 7
    %v7711 = vsub.s32 0, %v7710
    %v7712 = vrot.slane %v7707, %v7711
    %v7713 = vlaneseq
    %v7714 = vshrl.u32 %v7713, 7
    %v7715 = vsub.s32 1, %v7714
    %v7716 = vrot.slane %v7707, %v7715
    %v7717 = vlaneseq
    %v7718 = vshrl.u32 %v7717, 7
    %v7719 = vsub.s32 2, %v7718
    %v7720 = vrot.slane %v7707, %v7719
    %v7721 = vlaneseq
    %v7722 = vshrl.u32 %v7721, 7
    %v7723 = vsub.s32 3, %v7722
    %v7724 = vrot.slane %v7707, %v7723
    %v7857 = vunpack.c.l.b16 %v7579
    %v7858 = vunpack.c.h.b16 %v7579
    %v7859 = vunpack.c.l.b16 %v7580
    %v7860 = vunpack.c.h.b16 %v7580
    %v7861 = vunpack.c.l.b16 %v7581
    %v7862 = vunpack.c.h.b16 %v7581
    %v7863 = vunpack.c.l.b16 %v7582
    %v7864 = vunpack.c.h.b16 %v7582
    %v7865 = vunpack.c.l.b16 %v7583
    %v7866 = vunpack.c.h.b16 %v7583
    %v7867 = vunpack.c.l.b16 %v7584
    %v7868 = vunpack.c.h.b16 %v7584
    %v7869 = vunpack.c.l.b16 %v7585
    %v7870 = vunpack.c.h.b16 %v7585
    %v7871 = vunpack.c.l.b16 %v7586
    %v7872 = vunpack.c.h.b16 %v7586
    %v7873 = vunpack.c.l.b16 %v7587
    %v7874 = vunpack.c.h.b16 %v7587
    %v7875 = vunpack.c.l.b16 %v7588
    %v7876 = vunpack.c.h.b16 %v7588
    %v7877 = vunpack.c.l.b16 %v7589
    %v7878 = vunpack.c.h.b16 %v7589
    %v7879 = vunpack.c.l.b16 %v7590
    %v7880 = vunpack.c.h.b16 %v7590
    %v7881 = vunpack.c.l.b16 %v7591
    %v7882 = vunpack.c.h.b16 %v7591
    %v7883 = vunpack.c.l.b16 %v7592
    %v7884 = vunpack.c.h.b16 %v7592
    %v7885 = vunpack.c.l.b16 %v7593
    %v7886 = vunpack.c.h.b16 %v7593
    %v7887 = vunpack.c.l.b16 %v7594
    %v7888 = vunpack.c.h.b16 %v7594
    %v7889 = vunpack.c.l.b16 %v7595
    %v7890 = vunpack.c.h.b16 %v7595
    %v7891 = vunpack.c.l.b16 %v7596
    %v7892 = vunpack.c.h.b16 %v7596
    %v7893 = vunpack.c.l.b16 %v7597
    %v7894 = vunpack.c.h.b16 %v7597
    %v7895 = vunpack.c.l.b16 %v7598
    %v7896 = vunpack.c.h.b16 %v7598
    %v7897 = vunpack.c.l.b16 %v7599
    %v7898 = vunpack.c.h.b16 %v7599
    %v7899 = vunpack.c.l.b16 %v7600
    %v7900 = vunpack.c.h.b16 %v7600
    %v7901 = vunpack.c.l.b16 %v7601
    %v7902 = vunpack.c.h.b16 %v7601
    %v7903 = vunpack.c.l.b16 %v7602
    %v7904 = vunpack.c.h.b16 %v7602
    %v7905 = vunpack.c.l.b16 %v7603
    %v7906 = vunpack.c.h.b16 %v7603
    %v7907 = vunpack.c.l.b16 %v7604
    %v7908 = vunpack.c.h.b16 %v7604
    %v7909 = vunpack.c.l.b16 %v7605
    %v7910 = vunpack.c.h.b16 %v7605
    %v7911 = vunpack.c.l.b16 %v7606
    %v7912 = vunpack.c.h.b16 %v7606
    %v7913 = vunpack.c.l.b16 %v7607
    %v7914 = vunpack.c.h.b16 %v7607
    %v7915 = vunpack.c.l.b16 %v7608
    %v7916 = vunpack.c.h.b16 %v7608
    %v7917 = vunpack.c.l.b16 %v7609
    %v7918 = vunpack.c.h.b16 %v7609
    %v7919 = vunpack.c.l.b16 %v7610
    %v7920 = vunpack.c.h.b16 %v7610
    %v7921 = vunpack.c.l.b16 %v7611
    %v7922 = vunpack.c.h.b16 %v7611
    %v7923 = vunpack.c.l.b16 %v7612
    %v7924 = vunpack.c.h.b16 %v7612
    %v7925 = vunpack.c.l.b16 %v7613
    %v7926 = vunpack.c.h.b16 %v7613
    %v7927 = vunpack.c.l.b16 %v7614
    %v7928 = vunpack.c.h.b16 %v7614
    %v7929 = vunpack.c.l.b16 %v7615
    %v7930 = vunpack.c.h.b16 %v7615
    %v7931 = vunpack.c.l.b16 %v7616
    %v7932 = vunpack.c.h.b16 %v7616
    %v7933 = vunpack.c.l.b16 %v7617
    %v7934 = vunpack.c.h.b16 %v7617
    %v7935 = vunpack.c.l.b16 %v7618
    %v7936 = vunpack.c.h.b16 %v7618
    %v7937 = vunpack.c.l.b16 %v7619
    %v7938 = vunpack.c.h.b16 %v7619
    %v7939 = vunpack.c.l.b16 %v7620
    %v7940 = vunpack.c.h.b16 %v7620
    %v7941 = vunpack.c.l.b16 %v7621
    %v7942 = vunpack.c.h.b16 %v7621
    %v7943 = vunpack.c.l.b16 %v7622
    %v7944 = vunpack.c.h.b16 %v7622
    %v7945 = vunpack.c.l.b16 %v7623
    %v7946 = vunpack.c.h.b16 %v7623
    %v7947 = vunpack.c.l.b16 %v7624
    %v7948 = vunpack.c.h.b16 %v7624
    %v7949 = vunpack.c.l.b16 %v7625
    %v7950 = vunpack.c.h.b16 %v7625
    %v7951 = vunpack.c.l.b16 %v7626
    %v7952 = vunpack.c.h.b16 %v7626
    %v7953 = vunpack.c.l.b16 %v7627
    %v7954 = vunpack.c.h.b16 %v7627
    %v7955 = vunpack.c.l.b16 %v7628
    %v7956 = vunpack.c.h.b16 %v7628
    %v7957 = vunpack.c.l.b16 %v7629
    %v7958 = vunpack.c.h.b16 %v7629
    %v7959 = vunpack.c.l.b16 %v7630
    %v7960 = vunpack.c.h.b16 %v7630
    %v7961 = vunpack.c.l.b16 %v7631
    %v7962 = vunpack.c.h.b16 %v7631
    %v7963 = vunpack.c.l.b16 %v7632
    %v7964 = vunpack.c.h.b16 %v7632
    %v7965 = vunpack.c.l.b16 %v7633
    %v7966 = vunpack.c.h.b16 %v7633
    %v7967 = vunpack.c.l.b16 %v7634
    %v7968 = vunpack.c.h.b16 %v7634
    %v7969 = vunpack.c.l.b16 %v7635
    %v7970 = vunpack.c.h.b16 %v7635
    %v7971 = vunpack.c.l.b16 %v7636
    %v7972 = vunpack.c.h.b16 %v7636
    %v7973 = vunpack.c.l.b16 %v7637
    %v7974 = vunpack.c.h.b16 %v7637
    %v7975 = vunpack.c.l.b16 %v7638
    %v7976 = vunpack.c.h.b16 %v7638
    %v7977 = vunpack.c.l.b16 %v7639
    %v7978 = vunpack.c.h.b16 %v7639
    %v7979 = vunpack.c.l.b16 %v7640
    %v7980 = vunpack.c.h.b16 %v7640
    %v7981 = vunpack.c.l.b16 %v7641
    %v7982 = vunpack.c.h.b16 %v7641
    %v7983 = vunpack.c.l.b16 %v7642
    %v7984 = vunpack.c.h.b16 %v7642
    %v7985 = vunpack.c.l.b16 %v7643
    %v7986 = vunpack.c.h.b16 %v7643
    %v7987 = vunpack.c.l.b16 %v7644
    %v7988 = vunpack.c.h.b16 %v7644
    %v7989 = vunpack.c.l.b16 %v7645
    %v7990 = vunpack.c.h.b16 %v7645
    %v7991 = vunpack.c.l.b16 %v7646
    %v7992 = vunpack.c.h.b16 %v7646
    %v7993 = vunpack.c.l.b16 %v7647
    %v7994 = vunpack.c.h.b16 %v7647
    %v7995 = vunpack.c.l.b16 %v7648
    %v7996 = vunpack.c.h.b16 %v7648
    %v7997 = vunpack.c.l.b16 %v7649
    %v7998 = vunpack.c.h.b16 %v7649
    %v7999 = vunpack.c.l.b16 %v7650
    %v8000 = vunpack.c.h.b16 %v7650
    %v8001 = vunpack.c.l.b16 %v7651
    %v8002 = vunpack.c.h.b16 %v7651
    %v8003 = vunpack.c.l.b16 %v7652
    %v8004 = vunpack.c.h.b16 %v7652
    %v8005 = vunpack.c.l.b16 %v7653
    %v8006 = vunpack.c.h.b16 %v7653
    %v8007 = vunpack.c.l.b16 %v7654
    %v8008 = vunpack.c.h.b16 %v7654
    %v8009 = vunpack.c.l.b16 %v7655
    %v8010 = vunpack.c.h.b16 %v7655
    %v8011 = vunpack.c.l.b16 %v7656
    %v8012 = vunpack.c.h.b16 %v7656
    %v8013 = vunpack.c.l.b16 %v7657
    %v8014 = vunpack.c.h.b16 %v7657
    %v8015 = vunpack.c.l.b16 %v7658
    %v8016 = vunpack.c.h.b16 %v7658
    %v8017 = vunpack.c.l.b16 %v7659
    %v8018 = vunpack.c.h.b16 %v7659
    %v8019 = vunpack.c.l.b16 %v7660
    %v8020 = vunpack.c.h.b16 %v7660
    %v8021 = vunpack.c.l.b16 %v7661
    %v8022 = vunpack.c.h.b16 %v7661
    %v8023 = vunpack.c.l.b16 %v7662
    %v8024 = vunpack.c.h.b16 %v7662
    %v8025 = vunpack.c.l.b16 %v7663
    %v8026 = vunpack.c.h.b16 %v7663
    %v8027 = vunpack.c.l.b16 %v7664
    %v8028 = vunpack.c.h.b16 %v7664
    %v8029 = vunpack.c.l.b16 %v7665
    %v8030 = vunpack.c.h.b16 %v7665
    %v8031 = vunpack.c.l.b16 %v7666
    %v8032 = vunpack.c.h.b16 %v7666
    %v8033 = vunpack.c.l.b16 %v7667
    %v8034 = vunpack.c.h.b16 %v7667
    %v8035 = vunpack.c.l.b16 %v7668
    %v8036 = vunpack.c.h.b16 %v7668
    %v8037 = vunpack.c.l.b16 %v7669
    %v8038 = vunpack.c.h.b16 %v7669
    %v8039 = vunpack.c.l.b16 %v7670
    %v8040 = vunpack.c.h.b16 %v7670
    %v8041 = vunpack.c.l.b16 %v7671
    %v8042 = vunpack.c.h.b16 %v7671
    %v8043 = vunpack.c.l.b16 %v7672
    %v8044 = vunpack.c.h.b16 %v7672
    %v8045 = vunpack.c.l.b16 %v7673
    %v8046 = vunpack.c.h.b16 %v7673
    %v8047 = vunpack.c.l.b16 %v7674
    %v8048 = vunpack.c.h.b16 %v7674
    %v8049 = vunpack.c.l.b16 %v7675
    %v8050 = vunpack.c.h.b16 %v7675
    %v8051 = vunpack.c.l.b16 %v7676
    %v8052 = vunpack.c.h.b16 %v7676
    %v8053 = vunpack.c.l.b16 %v7677
    %v8054 = vunpack.c.h.b16 %v7677
    %v8055 = vunpack.c.l.b16 %v7678
    %v8056 = vunpack.c.h.b16 %v7678
    %v8057 = vunpack.c.l.b16 %v7679
    %v8058 = vunpack.c.h.b16 %v7679
    %v8059 = vunpack.c.l.b16 %v7680
    %v8060 = vunpack.c.h.b16 %v7680
    %v8061 = vunpack.c.l.b16 %v7681
    %v8062 = vunpack.c.h.b16 %v7681
    %v8063 = vunpack.c.l.b16 %v7682
    %v8064 = vunpack.c.h.b16 %v7682
    %v8065 = vunpack.c.l.b16 %v7683
    %v8066 = vunpack.c.h.b16 %v7683
    %v8067 = vunpack.c.l.b16 %v7684
    %v8068 = vunpack.c.h.b16 %v7684
    %v8069 = vunpack.c.l.b16 %v7685
    %v8070 = vunpack.c.h.b16 %v7685
    %v8071 = vunpack.c.l.b16 %v7686
    %v8072 = vunpack.c.h.b16 %v7686
    %v8073 = vunpack.c.l.b16 %v7687
    %v8074 = vunpack.c.h.b16 %v7687
    %v8075 = vunpack.c.l.b16 %v7688
    %v8076 = vunpack.c.h.b16 %v7688
    %v8077 = vunpack.c.l.b16 %v7689
    %v8078 = vunpack.c.h.b16 %v7689
    %v8079 = vunpack.c.l.b16 %v7690
    %v8080 = vunpack.c.h.b16 %v7690
    %v8081 = vunpack.c.l.b16 %v7691
    %v8082 = vunpack.c.h.b16 %v7691
    %v8083 = vunpack.c.l.b16 %v7692
    %v8084 = vunpack.c.h.b16 %v7692
    %v8085 = vunpack.c.l.b16 %v7693
    %v8086 = vunpack.c.h.b16 %v7693
    %v8087 = vunpack.c.l.b16 %v7694
    %v8088 = vunpack.c.h.b16 %v7694
    %v8089 = vunpack.c.l.b16 %v7695
    %v8090 = vunpack.c.h.b16 %v7695
    %v8091 = vunpack.c.l.b16 %v7696
    %v8092 = vunpack.c.h.b16 %v7696
    %v8093 = vunpack.c.l.b16 %v7697
    %v8094 = vunpack.c.h.b16 %v7697
    %v8095 = vunpack.c.l.b16 %v7698
    %v8096 = vunpack.c.h.b16 %v7698
    %v8097 = vunpack.c.l.b16 %v7699
    %v8098 = vunpack.c.h.b16 %v7699
    %v8099 = vunpack.c.l.b16 %v7700
    %v8100 = vunpack.c.h.b16 %v7700
    %v8101 = vunpack.c.l.b16 %v7701
    %v8102 = vunpack.c.h.b16 %v7701
    %v8103 = vunpack.c.l.b16 %v7702
    %v8104 = vunpack.c.h.b16 %v7702
    %v8105 = vunpack.c.l.b16 %v7703
    %v8106 = vunpack.c.h.b16 %v7703
    %v8107 = vunpack.c.l.b16 %v7704
    %v8108 = vunpack.c.h.b16 %v7704
    %v8109 = vunpack.c.l.b16 %v7705
    %v8110 = vunpack.c.h.b16 %v7705
    %v8111 = vunpack.c.l.b16 %v7706
    %v8112 = vunpack.c.h.b16 %v7706
    %v8113 = vpack.c.b16 %v7861, %v7857
    %v8114 = vpack.c.b16 %v7862, %v7858
    %v8115 = vpack.c.b16 %v7863, %v7859
    %v8116 = vpack.c.b16 %v7864, %v7860
    %v8117 = vpack.c.b16 %v7869, %v7865
    %v8118 = vpack.c.b16 %v7870, %v7866
    %v8119 = vpack.c.b16 %v7871, %v7867
    %v8120 = vpack.c.b16 %v7872, %v7868
    %v8121 = vpack.c.b16 %v7877, %v7873
    %v8122 = vpack.c.b16 %v7878, %v7874
    %v8123 = vpack.c.b16 %v7879, %v7875
    %v8124 = vpack.c.b16 %v7880, %v7876
    %v8125 = vpack.c.b16 %v7885, %v7881
    %v8126 = vpack.c.b16 %v7886, %v7882
    %v8127 = vpack.c.b16 %v7887, %v7883
    %v8128 = vpack.c.b16 %v7888, %v7884
    %v8129 = vpack.c.b16 %v7893, %v7889
    %v8130 = vpack.c.b16 %v7894, %v7890
    %v8131 = vpack.c.b16 %v7895, %v7891
    %v8132 = vpack.c.b16 %v7896, %v7892
    %v8133 = vpack.c.b16 %v7901, %v7897
    %v8134 = vpack.c.b16 %v7902, %v7898
    %v8135 = vpack.c.b16 %v7903, %v7899
    %v8136 = vpack.c.b16 %v7904, %v7900
    %v8137 = vpack.c.b16 %v7909, %v7905
    %v8138 = vpack.c.b16 %v7910, %v7906
    %v8139 = vpack.c.b16 %v7911, %v7907
    %v8140 = vpack.c.b16 %v7912, %v7908
    %v8141 = vpack.c.b16 %v7917, %v7913
    %v8142 = vpack.c.b16 %v7918, %v7914
    %v8143 = vpack.c.b16 %v7919, %v7915
    %v8144 = vpack.c.b16 %v7920, %v7916
    %v8145 = vpack.c.b16 %v7925, %v7921
    %v8146 = vpack.c.b16 %v7926, %v7922
    %v8147 = vpack.c.b16 %v7927, %v7923
    %v8148 = vpack.c.b16 %v7928, %v7924
    %v8149 = vpack.c.b16 %v7933, %v7929
    %v8150 = vpack.c.b16 %v7934, %v7930
    %v8151 = vpack.c.b16 %v7935, %v7931
    %v8152 = vpack.c.b16 %v7936, %v7932
    %v8153 = vpack.c.b16 %v7941, %v7937
    %v8154 = vpack.c.b16 %v7942, %v7938
    %v8155 = vpack.c.b16 %v7943, %v7939
    %v8156 = vpack.c.b16 %v7944, %v7940
    %v8157 = vpack.c.b16 %v7949, %v7945
    %v8158 = vpack.c.b16 %v7950, %v7946
    %v8159 = vpack.c.b16 %v7951, %v7947
    %v8160 = vpack.c.b16 %v7952, %v7948
    %v8161 = vpack.c.b16 %v7957, %v7953
    %v8162 = vpack.c.b16 %v7958, %v7954
    %v8163 = vpack.c.b16 %v7959, %v7955
    %v8164 = vpack.c.b16 %v7960, %v7956
    %v8165 = vpack.c.b16 %v7965, %v7961
    %v8166 = vpack.c.b16 %v7966, %v7962
    %v8167 = vpack.c.b16 %v7967, %v7963
    %v8168 = vpack.c.b16 %v7968, %v7964
    %v8169 = vpack.c.b16 %v7973, %v7969
    %v8170 = vpack.c.b16 %v7974, %v7970
    %v8171 = vpack.c.b16 %v7975, %v7971
    %v8172 = vpack.c.b16 %v7976, %v7972
    %v8173 = vpack.c.b16 %v7981, %v7977
    %v8174 = vpack.c.b16 %v7982, %v7978
    %v8175 = vpack.c.b16 %v7983, %v7979
    %v8176 = vpack.c.b16 %v7984, %v7980
    %v8177 = vpack.c.b16 %v7989, %v7985
    %v8178 = vpack.c.b16 %v7990, %v7986
    %v8179 = vpack.c.b16 %v7991, %v7987
    %v8180 = vpack.c.b16 %v7992, %v7988
    %v8181 = vpack.c.b16 %v7997, %v7993
    %v8182 = vpack.c.b16 %v7998, %v7994
    %v8183 = vpack.c.b16 %v7999, %v7995
    %v8184 = vpack.c.b16 %v8000, %v7996
    %v8185 = vpack.c.b16 %v8005, %v8001
    %v8186 = vpack.c.b16 %v8006, %v8002
    %v8187 = vpack.c.b16 %v8007, %v8003
    %v8188 = vpack.c.b16 %v8008, %v8004
    %v8189 = vpack.c.b16 %v8013, %v8009
    %v8190 = vpack.c.b16 %v8014, %v8010
    %v8191 = vpack.c.b16 %v8015, %v8011
    %v8192 = vpack.c.b16 %v8016, %v8012
    %v8193 = vpack.c.b16 %v8021, %v8017
    %v8194 = vpack.c.b16 %v8022, %v8018
    %v8195 = vpack.c.b16 %v8023, %v8019
    %v8196 = vpack.c.b16 %v8024, %v8020
    %v8197 = vpack.c.b16 %v8029, %v8025
    %v8198 = vpack.c.b16 %v8030, %v8026
    %v8199 = vpack.c.b16 %v8031, %v8027
    %v8200 = vpack.c.b16 %v8032, %v8028
    %v8201 = vpack.c.b16 %v8037, %v8033
    %v8202 = vpack.c.b16 %v8038, %v8034
    %v8203 = vpack.c.b16 %v8039, %v8035
    %v8204 = vpack.c.b16 %v8040, %v8036
    %v8205 = vpack.c.b16 %v8045, %v8041
    %v8206 = vpack.c.b16 %v8046, %v8042
    %v8207 = vpack.c.b16 %v8047, %v8043
    %v8208 = vpack.c.b16 %v8048, %v8044
    %v8209 = vpack.c.b16 %v8053, %v8049
    %v8210 = vpack.c.b16 %v8054, %v8050
    %v8211 = vpack.c.b16 %v8055, %v8051
    %v8212 = vpack.c.b16 %v8056, %v8052
    %v8213 = vpack.c.b16 %v8061, %v8057
    %v8214 = vpack.c.b16 %v8062, %v8058
    %v8215 = vpack.c.b16 %v8063, %v8059
    %v8216 = vpack.c.b16 %v8064, %v8060
    %v8217 = vpack.c.b16 %v8069, %v8065
    %v8218 = vpack.c.b16 %v8070, %v8066
    %v8219 = vpack.c.b16 %v8071, %v8067
    %v8220 = vpack.c.b16 %v8072, %v8068
    %v8221 = vpack.c.b16 %v8077, %v8073
    %v8222 = vpack.c.b16 %v8078, %v8074
    %v8223 = vpack.c.b16 %v8079, %v8075
    %v8224 = vpack.c.b16 %v8080, %v8076
    %v8225 = vpack.c.b16 %v8085, %v8081
    %v8226 = vpack.c.b16 %v8086, %v8082
    %v8227 = vpack.c.b16 %v8087, %v8083
    %v8228 = vpack.c.b16 %v8088, %v8084
    %v8229 = vpack.c.b16 %v8093, %v8089
    %v8230 = vpack.c.b16 %v8094, %v8090
    %v8231 = vpack.c.b16 %v8095, %v8091
    %v8232 = vpack.c.b16 %v8096, %v8092
    %v8233 = vpack.c.b16 %v8101, %v8097
    %v8234 = vpack.c.b16 %v8102, %v8098
    %v8235 = vpack.c.b16 %v8103, %v8099
    %v8236 = vpack.c.b16 %v8104, %v8100
    %v8237 = vpack.c.b16 %v8109, %v8105
    %v8238 = vpack.c.b16 %v8110, %v8106
    %v8239 = vpack.c.b16 %v8111, %v8107
    %v8240 = vpack.c.b16 %v8112, %v8108
    %8369 = vmatprep.subr.bf16.mxu0 %v8114
    %8370 = vmatpush1.bf16.msra.mxu0 %v8113
    %8371 = vmatprep.subr.bf16.mxu0 %v8118
    %8372 = vmatpush1.bf16.msra.mxu0 %v8117
    %8373 = vmatprep.subr.bf16.mxu0 %v8122
    %8374 = vmatpush1.bf16.msra.mxu0 %v8121
    %8375 = vmatprep.subr.bf16.mxu0 %v8126
    %8376 = vmatpush1.bf16.msra.mxu0 %v8125
    %8377 = vmatprep.subr.bf16.mxu0 %v8130
    %8378 = vmatpush1.bf16.msra.mxu0 %v8129
    %8379 = vmatprep.subr.bf16.mxu0 %v8134
    %8380 = vmatpush1.bf16.msra.mxu0 %v8133
    %8381 = vmatprep.subr.bf16.mxu0 %v8138
    %8382 = vmatpush1.bf16.msra.mxu0 %v8137
    %8383 = vmatprep.subr.bf16.mxu0 %v8142
    %8384 = vmatpush1.bf16.msra.mxu0 %v8141
    %8385 = vmatprep.subr.bf16.mxu0 %v8146
    %8386 = vmatpush1.bf16.msra.mxu0 %v8145
    %8387 = vmatprep.subr.bf16.mxu0 %v8150
    %8388 = vmatpush1.bf16.msra.mxu0 %v8149
    %8389 = vmatprep.subr.bf16.mxu0 %v8154
    %8390 = vmatpush1.bf16.msra.mxu0 %v8153
    %8391 = vmatprep.subr.bf16.mxu0 %v8158
    %8392 = vmatpush1.bf16.msra.mxu0 %v8157
    %8393 = vmatprep.subr.bf16.mxu0 %v8162
    %8394 = vmatpush1.bf16.msra.mxu0 %v8161
    %8395 = vmatprep.subr.bf16.mxu0 %v8166
    %8396 = vmatpush1.bf16.msra.mxu0 %v8165
    %8397 = vmatprep.subr.bf16.mxu0 %v8170
    %8398 = vmatpush1.bf16.msra.mxu0 %v8169
    %8399 = vmatprep.subr.bf16.mxu0 %v8174
    %8400 = vmatpush1.bf16.msra.mxu0 %v8173
    %8401 = vmatprep.mubr.bf16.mxu0 %v7576
    %8402 = vmatmul.mubr.bf16.gmra.mrb[0].mxu0 %v7575
    %v8403 = vpop.f32.mrb[0].mxu0
    %v8404 = vadd.f32 %v7712, %v8403
    %v8405 = vpop.f32.mrb[0].mxu0
    %v8406 = vadd.f32 %v7716, %v8405
    %v8407 = vpop.f32.mrb[0].mxu0
    %v8408 = vadd.f32 %v7712, %v8407
    %v8409 = vpop.f32.mrb[0].mxu0
    %v8410 = vadd.f32 %v7716, %v8409
    %8411 = vdwg.mxu0
    %8412 = vmatprep.subr.bf16.mxu0 %v8178
    %8413 = vmatpush1.bf16.msra.mxu0 %v8177
    %8414 = vmatprep.subr.bf16.mxu0 %v8182
    %8415 = vmatpush1.bf16.msra.mxu0 %v8181
    %8416 = vmatprep.subr.bf16.mxu0 %v8186
    %8417 = vmatpush1.bf16.msra.mxu0 %v8185
    %8418 = vmatprep.subr.bf16.mxu0 %v8190
    %8419 = vmatpush1.bf16.msra.mxu0 %v8189
    %8420 = vmatprep.subr.bf16.mxu0 %v8194
    %8421 = vmatpush1.bf16.msra.mxu0 %v8193
    %8422 = vmatprep.subr.bf16.mxu0 %v8198
    %8423 = vmatpush1.bf16.msra.mxu0 %v8197
    %8424 = vmatprep.subr.bf16.mxu0 %v8202
    %8425 = vmatpush1.bf16.msra.mxu0 %v8201
    %8426 = vmatprep.subr.bf16.mxu0 %v8206
    %8427 = vmatpush1.bf16.msra.mxu0 %v8205
    %8428 = vmatprep.subr.bf16.mxu0 %v8210
    %8429 = vmatpush1.bf16.msra.mxu0 %v8209
    %8430 = vmatprep.subr.bf16.mxu0 %v8214
    %8431 = vmatpush1.bf16.msra.mxu0 %v8213
    %8432 = vmatprep.subr.bf16.mxu0 %v8218
    %8433 = vmatpush1.bf16.msra.mxu0 %v8217
    %8434 = vmatprep.subr.bf16.mxu0 %v8222
    %8435 = vmatpush1.bf16.msra.mxu0 %v8221
    %8436 = vmatprep.subr.bf16.mxu0 %v8226
    %8437 = vmatpush1.bf16.msra.mxu0 %v8225
    %8438 = vmatprep.subr.bf16.mxu0 %v8230
    %8439 = vmatpush1.bf16.msra.mxu0 %v8229
    %8440 = vmatprep.subr.bf16.mxu0 %v8234
    %8441 = vmatpush1.bf16.msra.mxu0 %v8233
    %8442 = vmatprep.subr.bf16.mxu0 %v8238
    %8443 = vmatpush1.bf16.msra.mxu0 %v8237
    %8444 = vmatprep.mubr.bf16.mxu0 %v7578
    %8445 = vmatmul.mubr.bf16.gmra.mrb[0].mxu0 %v7577
    %v8446 = vpop.f32.mrb[0].mxu0
    %v8447 = vadd.f32 %v8404, %v8446
    %v8448 = vpop.f32.mrb[0].mxu0
    %v8449 = vadd.f32 %v8406, %v8448
    %v8450 = vpop.f32.mrb[0].mxu0
    %v8451 = vadd.f32 %v8408, %v8450
    %v8452 = vpop.f32.mrb[0].mxu0
    %v8453 = vadd.f32 %v8410, %v8452
    %8454 = vdwg.mxu0
    %8455 = vmatprep.subr.bf16.mxu0 %v8116
    %8456 = vmatpush1.bf16.msra.mxu0 %v8115
    %8457 = vmatprep.subr.bf16.mxu0 %v8120
    %8458 = vmatpush1.bf16.msra.mxu0 %v8119
    %8459 = vmatprep.subr.bf16.mxu0 %v8124
    %8460 = vmatpush1.bf16.msra.mxu0 %v8123
    %8461 = vmatprep.subr.bf16.mxu0 %v8128
    %8462 = vmatpush1.bf16.msra.mxu0 %v8127
    %8463 = vmatprep.subr.bf16.mxu0 %v8132
    %8464 = vmatpush1.bf16.msra.mxu0 %v8131
    %8465 = vmatprep.subr.bf16.mxu0 %v8136
    %8466 = vmatpush1.bf16.msra.mxu0 %v8135
    %8467 = vmatprep.subr.bf16.mxu0 %v8140
    %8468 = vmatpush1.bf16.msra.mxu0 %v8139
    %8469 = vmatprep.subr.bf16.mxu0 %v8144
    %8470 = vmatpush1.bf16.msra.mxu0 %v8143
    %8471 = vmatprep.subr.bf16.mxu0 %v8148
    %8472 = vmatpush1.bf16.msra.mxu0 %v8147
    %8473 = vmatprep.subr.bf16.mxu0 %v8152
    %8474 = vmatpush1.bf16.msra.mxu0 %v8151
    %8475 = vmatprep.subr.bf16.mxu0 %v8156
    %8476 = vmatpush1.bf16.msra.mxu0 %v8155
    %8477 = vmatprep.subr.bf16.mxu0 %v8160
    %8478 = vmatpush1.bf16.msra.mxu0 %v8159
    %8479 = vmatprep.subr.bf16.mxu0 %v8164
    %8480 = vmatpush1.bf16.msra.mxu0 %v8163
    %8481 = vmatprep.subr.bf16.mxu0 %v8168
    %8482 = vmatpush1.bf16.msra.mxu0 %v8167
    %8483 = vmatprep.subr.bf16.mxu0 %v8172
    %8484 = vmatpush1.bf16.msra.mxu0 %v8171
    %8485 = vmatprep.subr.bf16.mxu0 %v8176
    %8486 = vmatpush1.bf16.msra.mxu0 %v8175
    %8487 = vmatprep.mubr.bf16.mxu0 %v7576
    %8488 = vmatmul.mubr.bf16.gmra.mrb[0].mxu0 %v7575
    %v8489 = vpop.f32.mrb[0].mxu0
    %v8490 = vadd.f32 %v7720, %v8489
    %v8491 = vpop.f32.mrb[0].mxu0
    %v8492 = vadd.f32 %v7724, %v8491
    %v8493 = vpop.f32.mrb[0].mxu0
    %v8494 = vadd.f32 %v7720, %v8493
    %v8495 = vpop.f32.mrb[0].mxu0
    %v8496 = vadd.f32 %v7724, %v8495
    %8497 = vdwg.mxu0
    %8498 = vmatprep.subr.bf16.mxu0 %v8180
    %8499 = vmatpush1.bf16.msra.mxu0 %v8179
    %8500 = vmatprep.subr.bf16.mxu0 %v8184
    %8501 = vmatpush1.bf16.msra.mxu0 %v8183
    %8502 = vmatprep.subr.bf16.mxu0 %v8188
    %8503 = vmatpush1.bf16.msra.mxu0 %v8187
    %8504 = vmatprep.subr.bf16.mxu0 %v8192
    %8505 = vmatpush1.bf16.msra.mxu0 %v8191
    %8506 = vmatprep.subr.bf16.mxu0 %v8196
    %8507 = vmatpush1.bf16.msra.mxu0 %v8195
    %8508 = vmatprep.subr.bf16.mxu0 %v8200
    %8509 = vmatpush1.bf16.msra.mxu0 %v8199
    %8510 = vmatprep.subr.bf16.mxu0 %v8204
    %8511 = vmatpush1.bf16.msra.mxu0 %v8203
    %8512 = vmatprep.subr.bf16.mxu0 %v8208
    %8513 = vmatpush1.bf16.msra.mxu0 %v8207
    %8514 = vmatprep.subr.bf16.mxu0 %v8212
    %8515 = vmatpush1.bf16.msra.mxu0 %v8211
    %8516 = vmatprep.subr.bf16.mxu0 %v8216
    %8517 = vmatpush1.bf16.msra.mxu0 %v8215
    %8518 = vmatprep.subr.bf16.mxu0 %v8220
    %8519 = vmatpush1.bf16.msra.mxu0 %v8219
    %8520 = vmatprep.subr.bf16.mxu0 %v8224
    %8521 = vmatpush1.bf16.msra.mxu0 %v8223
    %8522 = vmatprep.subr.bf16.mxu0 %v8228
    %8523 = vmatpush1.bf16.msra.mxu0 %v8227
    %8524 = vmatprep.subr.bf16.mxu0 %v8232
    %8525 = vmatpush1.bf16.msra.mxu0 %v8231
    %8526 = vmatprep.subr.bf16.mxu0 %v8236
    %8527 = vmatpush1.bf16.msra.mxu0 %v8235
    %8528 = vmatprep.subr.bf16.mxu0 %v8240
    %8529 = vmatpush1.bf16.msra.mxu0 %v8239
    %8530 = vmatprep.mubr.bf16.mxu0 %v7578
    %8531 = vmatmul.mubr.bf16.gmra.mrb[0].mxu0 %v7577
    %v8532 = vpop.f32.mrb[0].mxu0
    %v8533 = vadd.f32 %v8490, %v8532
    %v8534 = vpop.f32.mrb[0].mxu0
    %v8535 = vadd.f32 %v8492, %v8534
    %v8536 = vpop.f32.mrb[0].mxu0
    %v8537 = vadd.f32 %v8494, %v8536
    %v8538 = vpop.f32.mrb[0].mxu0
    %v8539 = vadd.f32 %v8496, %v8538
    %8540 = vdwg.mxu0
    %v8541 = vmax.f32 %v8447, 0.0
    %v8542 = vmax.f32 %v8449, 0.0
    %v8543 = vmax.f32 %v8533, 0.0
    %v8544 = vmax.f32 %v8535, 0.0
    %v8545 = vmax.f32 %v8451, 0.0
    %v8546 = vmax.f32 %v8453, 0.0
    %v8547 = vmax.f32 %v8537, 0.0
    %v8548 = vmax.f32 %v8539, 0.0
    %v8549 = vpack.c.bf16 %v8545, %v8541
    %v8550 = vpack.c.bf16 %v8546, %v8542
    %v8551 = vpack.c.bf16 %v8547, %v8543
    %v8552 = vpack.c.bf16 %v8548, %v8544
    %v8553 = vld [vmem:[#allocation12] sm:$0xff]
    %v8554 = vld [vmem:[#allocation12 + $0x8] sm:$0xff]
    %v8555 = vld [vmem:[#allocation12 + $0x10] sm:$0xff]
    %v8556 = vld [vmem:[#allocation12 + $0x18] sm:$0xff]
    %v8557 = vld [vmem:[#allocation12 + $0x20] sm:$0xff]
    %v8558 = vld [vmem:[#allocation12 + $0x28] sm:$0xff]
    %v8559 = vld [vmem:[#allocation12 + $0x30] sm:$0xff]
    %v8560 = vld [vmem:[#allocation12 + $0x38] sm:$0xff]
    %v8561 = vld [vmem:[#allocation12 + $0x40] sm:$0xff]
    %v8562 = vld [vmem:[#allocation12 + $0x48] sm:$0xff]
    %v8563 = vld [vmem:[#allocation12 + $0x50] sm:$0xff]
    %v8564 = vld [vmem:[#allocation12 + $0x58] sm:$0xff]
    %v8565 = vld [vmem:[#allocation12 + $0x60] sm:$0xff]
    %v8566 = vld [vmem:[#allocation12 + $0x68] sm:$0xff]
    %v8567 = vld [vmem:[#allocation12 + $0x70] sm:$0xff]
    %v8568 = vld [vmem:[#allocation12 + $0x78] sm:$0xff]
    %v8569 = vld [vmem:[#allocation12 + $0x80] sm:$0xff]
    %v8570 = vld [vmem:[#allocation12 + $0x88] sm:$0xff]
    %v8571 = vld [vmem:[#allocation12 + $0x90] sm:$0xff]
    %v8572 = vld [vmem:[#allocation12 + $0x98] sm:$0xff]
    %v8573 = vld [vmem:[#allocation12 + $0xa0] sm:$0xff]
    %v8574 = vld [vmem:[#allocation12 + $0xa8] sm:$0xff]
    %v8575 = vld [vmem:[#allocation12 + $0xb0] sm:$0xff]
    %v8576 = vld [vmem:[#allocation12 + $0xb8] sm:$0xff]
    %v8577 = vld [vmem:[#allocation12 + $0xc0] sm:$0xff]
    %v8578 = vld [vmem:[#allocation12 + $0xc8] sm:$0xff]
    %v8579 = vld [vmem:[#allocation12 + $0xd0] sm:$0xff]
    %v8580 = vld [vmem:[#allocation12 + $0xd8] sm:$0xff]
    %v8581 = vld [vmem:[#allocation12 + $0xe0] sm:$0xff]
    %v8582 = vld [vmem:[#allocation12 + $0xe8] sm:$0xff]
    %v8583 = vld [vmem:[#allocation12 + $0xf0] sm:$0xff]
    %v8584 = vld [vmem:[#allocation12 + $0xf8] sm:$0xff]
    %v8585 = vld [vmem:[#allocation12 + $0x100] sm:$0xff]
    %v8586 = vld [vmem:[#allocation12 + $0x108] sm:$0xff]
    %v8587 = vld [vmem:[#allocation12 + $0x110] sm:$0xff]
    %v8588 = vld [vmem:[#allocation12 + $0x118] sm:$0xff]
    %v8589 = vld [vmem:[#allocation12 + $0x120] sm:$0xff]
    %v8590 = vld [vmem:[#allocation12 + $0x128] sm:$0xff]
    %v8591 = vld [vmem:[#allocation12 + $0x130] sm:$0xff]
    %v8592 = vld [vmem:[#allocation12 + $0x138] sm:$0xff]
    %v8593 = vld [vmem:[#allocation12 + $0x140] sm:$0xff]
    %v8594 = vld [vmem:[#allocation12 + $0x148] sm:$0xff]
    %v8595 = vld [vmem:[#allocation12 + $0x150] sm:$0xff]
    %v8596 = vld [vmem:[#allocation12 + $0x158] sm:$0xff]
    %v8597 = vld [vmem:[#allocation12 + $0x160] sm:$0xff]
    %v8598 = vld [vmem:[#allocation12 + $0x168] sm:$0xff]
    %v8599 = vld [vmem:[#allocation12 + $0x170] sm:$0xff]
    %v8600 = vld [vmem:[#allocation12 + $0x178] sm:$0xff]
    %v8601 = vld [vmem:[#allocation12 + $0x180] sm:$0xff]
    %v8602 = vld [vmem:[#allocation12 + $0x188] sm:$0xff]
    %v8603 = vld [vmem:[#allocation12 + $0x190] sm:$0xff]
    %v8604 = vld [vmem:[#allocation12 + $0x198] sm:$0xff]
    %v8605 = vld [vmem:[#allocation12 + $0x1a0] sm:$0xff]
    %v8606 = vld [vmem:[#allocation12 + $0x1a8] sm:$0xff]
    %v8607 = vld [vmem:[#allocation12 + $0x1b0] sm:$0xff]
    %v8608 = vld [vmem:[#allocation12 + $0x1b8] sm:$0xff]
    %v8609 = vld [vmem:[#allocation12 + $0x1c0] sm:$0xff]
    %v8610 = vld [vmem:[#allocation12 + $0x1c8] sm:$0xff]
    %v8611 = vld [vmem:[#allocation12 + $0x1d0] sm:$0xff]
    %v8612 = vld [vmem:[#allocation12 + $0x1d8] sm:$0xff]
    %v8613 = vld [vmem:[#allocation12 + $0x1e0] sm:$0xff]
    %v8614 = vld [vmem:[#allocation12 + $0x1e8] sm:$0xff]
    %v8615 = vld [vmem:[#allocation12 + $0x1f0] sm:$0xff]
    %v8616 = vld [vmem:[#allocation12 + $0x1f8] sm:$0xff]
    %v8617 = vld [vmem:[#allocation12 + $0x200] sm:$0xff]
    %v8618 = vld [vmem:[#allocation12 + $0x208] sm:$0xff]
    %v8619 = vld [vmem:[#allocation12 + $0x210] sm:$0xff]
    %v8620 = vld [vmem:[#allocation12 + $0x218] sm:$0xff]
    %v8621 = vld [vmem:[#allocation12 + $0x220] sm:$0xff]
    %v8622 = vld [vmem:[#allocation12 + $0x228] sm:$0xff]
    %v8623 = vld [vmem:[#allocation12 + $0x230] sm:$0xff]
    %v8624 = vld [vmem:[#allocation12 + $0x238] sm:$0xff]
    %v8625 = vld [vmem:[#allocation12 + $0x240] sm:$0xff]
    %v8626 = vld [vmem:[#allocation12 + $0x248] sm:$0xff]
    %v8627 = vld [vmem:[#allocation12 + $0x250] sm:$0xff]
    %v8628 = vld [vmem:[#allocation12 + $0x258] sm:$0xff]
    %v8629 = vld [vmem:[#allocation12 + $0x260] sm:$0xff]
    %v8630 = vld [vmem:[#allocation12 + $0x268] sm:$0xff]
    %v8631 = vld [vmem:[#allocation12 + $0x270] sm:$0xff]
    %v8632 = vld [vmem:[#allocation12 + $0x278] sm:$0xff]
    %v8633 = vld [vmem:[#allocation12 + $0x280] sm:$0xff]
    %v8634 = vld [vmem:[#allocation12 + $0x288] sm:$0xff]
    %v8635 = vld [vmem:[#allocation12 + $0x290] sm:$0xff]
    %v8636 = vld [vmem:[#allocation12 + $0x298] sm:$0xff]
    %v8637 = vld [vmem:[#allocation12 + $0x2a0] sm:$0xff]
    %v8638 = vld [vmem:[#allocation12 + $0x2a8] sm:$0xff]
    %v8639 = vld [vmem:[#allocation12 + $0x2b0] sm:$0xff]
    %v8640 = vld [vmem:[#allocation12 + $0x2b8] sm:$0xff]
    %v8641 = vld [vmem:[#allocation12 + $0x2c0] sm:$0xff]
    %v8642 = vld [vmem:[#allocation12 + $0x2c8] sm:$0xff]
    %v8643 = vld [vmem:[#allocation12 + $0x2d0] sm:$0xff]
    %v8644 = vld [vmem:[#allocation12 + $0x2d8] sm:$0xff]
    %v8645 = vld [vmem:[#allocation12 + $0x2e0] sm:$0xff]
    %v8646 = vld [vmem:[#allocation12 + $0x2e8] sm:$0xff]
    %v8647 = vld [vmem:[#allocation12 + $0x2f0] sm:$0xff]
    %v8648 = vld [vmem:[#allocation12 + $0x2f8] sm:$0xff]
    %v8649 = vld [vmem:[#allocation12 + $0x300] sm:$0xff]
    %v8650 = vld [vmem:[#allocation12 + $0x308] sm:$0xff]
    %v8651 = vld [vmem:[#allocation12 + $0x310] sm:$0xff]
    %v8652 = vld [vmem:[#allocation12 + $0x318] sm:$0xff]
    %v8653 = vld [vmem:[#allocation12 + $0x320] sm:$0xff]
    %v8654 = vld [vmem:[#allocation12 + $0x328] sm:$0xff]
    %v8655 = vld [vmem:[#allocation12 + $0x330] sm:$0xff]
    %v8656 = vld [vmem:[#allocation12 + $0x338] sm:$0xff]
    %v8657 = vld [vmem:[#allocation12 + $0x340] sm:$0xff]
    %v8658 = vld [vmem:[#allocation12 + $0x348] sm:$0xff]
    %v8659 = vld [vmem:[#allocation12 + $0x350] sm:$0xff]
    %v8660 = vld [vmem:[#allocation12 + $0x358] sm:$0xff]
    %v8661 = vld [vmem:[#allocation12 + $0x360] sm:$0xff]
    %v8662 = vld [vmem:[#allocation12 + $0x368] sm:$0xff]
    %v8663 = vld [vmem:[#allocation12 + $0x370] sm:$0xff]
    %v8664 = vld [vmem:[#allocation12 + $0x378] sm:$0xff]
    %v8665 = vld [vmem:[#allocation12 + $0x380] sm:$0xff]
    %v8666 = vld [vmem:[#allocation12 + $0x388] sm:$0xff]
    %v8667 = vld [vmem:[#allocation12 + $0x390] sm:$0xff]
    %v8668 = vld [vmem:[#allocation12 + $0x398] sm:$0xff]
    %v8669 = vld [vmem:[#allocation12 + $0x3a0] sm:$0xff]
    %v8670 = vld [vmem:[#allocation12 + $0x3a8] sm:$0xff]
    %v8671 = vld [vmem:[#allocation12 + $0x3b0] sm:$0xff]
    %v8672 = vld [vmem:[#allocation12 + $0x3b8] sm:$0xff]
    %v8673 = vld [vmem:[#allocation12 + $0x3c0] sm:$0xff]
    %v8674 = vld [vmem:[#allocation12 + $0x3c8] sm:$0xff]
    %v8675 = vld [vmem:[#allocation12 + $0x3d0] sm:$0xff]
    %v8676 = vld [vmem:[#allocation12 + $0x3d8] sm:$0xff]
    %v8677 = vld [vmem:[#allocation12 + $0x3e0] sm:$0xff]
    %v8678 = vld [vmem:[#allocation12 + $0x3e8] sm:$0xff]
    %v8679 = vld [vmem:[#allocation12 + $0x3f0] sm:$0xff]
    %v8680 = vld [vmem:[#allocation12 + $0x3f8] sm:$0xff]
    %v8681 = vld [vmem:[#allocation15 + $0x16] sm:$0xf]
    %v8683 = vlaneseq
    %v8684 = vshrl.u32 %v8683, 7
    %v8685 = vsub.s32 0, %v8684
    %v8686 = vrot.slane %v8681, %v8685
    %v8687 = vlaneseq
    %v8688 = vshrl.u32 %v8687, 7
    %v8689 = vsub.s32 1, %v8688
    %v8690 = vrot.slane %v8681, %v8689
    %v8691 = vlaneseq
    %v8692 = vshrl.u32 %v8691, 7
    %v8693 = vsub.s32 2, %v8692
    %v8694 = vrot.slane %v8681, %v8693
    %v8695 = vlaneseq
    %v8696 = vshrl.u32 %v8695, 7
    %v8697 = vsub.s32 3, %v8696
    %v8698 = vrot.slane %v8681, %v8697
    %v8831 = vunpack.c.l.b16 %v8553
    %v8832 = vunpack.c.h.b16 %v8553
    %v8833 = vunpack.c.l.b16 %v8554
    %v8834 = vunpack.c.h.b16 %v8554
    %v8835 = vunpack.c.l.b16 %v8555
    %v8836 = vunpack.c.h.b16 %v8555
    %v8837 = vunpack.c.l.b16 %v8556
    %v8838 = vunpack.c.h.b16 %v8556
    %v8839 = vunpack.c.l.b16 %v8557
    %v8840 = vunpack.c.h.b16 %v8557
    %v8841 = vunpack.c.l.b16 %v8558
    %v8842 = vunpack.c.h.b16 %v8558
    %v8843 = vunpack.c.l.b16 %v8559
    %v8844 = vunpack.c.h.b16 %v8559
    %v8845 = vunpack.c.l.b16 %v8560
    %v8846 = vunpack.c.h.b16 %v8560
    %v8847 = vunpack.c.l.b16 %v8561
    %v8848 = vunpack.c.h.b16 %v8561
    %v8849 = vunpack.c.l.b16 %v8562
    %v8850 = vunpack.c.h.b16 %v8562
    %v8851 = vunpack.c.l.b16 %v8563
    %v8852 = vunpack.c.h.b16 %v8563
    %v8853 = vunpack.c.l.b16 %v8564
    %v8854 = vunpack.c.h.b16 %v8564
    %v8855 = vunpack.c.l.b16 %v8565
    %v8856 = vunpack.c.h.b16 %v8565
    %v8857 = vunpack.c.l.b16 %v8566
    %v8858 = vunpack.c.h.b16 %v8566
    %v8859 = vunpack.c.l.b16 %v8567
    %v8860 = vunpack.c.h.b16 %v8567
    %v8861 = vunpack.c.l.b16 %v8568
    %v8862 = vunpack.c.h.b16 %v8568
    %v8863 = vunpack.c.l.b16 %v8569
    %v8864 = vunpack.c.h.b16 %v8569
    %v8865 = vunpack.c.l.b16 %v8570
    %v8866 = vunpack.c.h.b16 %v8570
    %v8867 = vunpack.c.l.b16 %v8571
    %v8868 = vunpack.c.h.b16 %v8571
    %v8869 = vunpack.c.l.b16 %v8572
    %v8870 = vunpack.c.h.b16 %v8572
    %v8871 = vunpack.c.l.b16 %v8573
    %v8872 = vunpack.c.h.b16 %v8573
    %v8873 = vunpack.c.l.b16 %v8574
    %v8874 = vunpack.c.h.b16 %v8574
    %v8875 = vunpack.c.l.b16 %v8575
    %v8876 = vunpack.c.h.b16 %v8575
    %v8877 = vunpack.c.l.b16 %v8576
    %v8878 = vunpack.c.h.b16 %v8576
    %v8879 = vunpack.c.l.b16 %v8577
    %v8880 = vunpack.c.h.b16 %v8577
    %v8881 = vunpack.c.l.b16 %v8578
    %v8882 = vunpack.c.h.b16 %v8578
    %v8883 = vunpack.c.l.b16 %v8579
    %v8884 = vunpack.c.h.b16 %v8579
    %v8885 = vunpack.c.l.b16 %v8580
    %v8886 = vunpack.c.h.b16 %v8580
    %v8887 = vunpack.c.l.b16 %v8581
    %v8888 = vunpack.c.h.b16 %v8581
    %v8889 = vunpack.c.l.b16 %v8582
    %v8890 = vunpack.c.h.b16 %v8582
    %v8891 = vunpack.c.l.b16 %v8583
    %v8892 = vunpack.c.h.b16 %v8583
    %v8893 = vunpack.c.l.b16 %v8584
    %v8894 = vunpack.c.h.b16 %v8584
    %v8895 = vunpack.c.l.b16 %v8585
    %v8896 = vunpack.c.h.b16 %v8585
    %v8897 = vunpack.c.l.b16 %v8586
    %v8898 = vunpack.c.h.b16 %v8586
    %v8899 = vunpack.c.l.b16 %v8587
    %v8900 = vunpack.c.h.b16 %v8587
    %v8901 = vunpack.c.l.b16 %v8588
    %v8902 = vunpack.c.h.b16 %v8588
    %v8903 = vunpack.c.l.b16 %v8589
    %v8904 = vunpack.c.h.b16 %v8589
    %v8905 = vunpack.c.l.b16 %v8590
    %v8906 = vunpack.c.h.b16 %v8590
    %v8907 = vunpack.c.l.b16 %v8591
    %v8908 = vunpack.c.h.b16 %v8591
    %v8909 = vunpack.c.l.b16 %v8592
    %v8910 = vunpack.c.h.b16 %v8592
    %v8911 = vunpack.c.l.b16 %v8593
    %v8912 = vunpack.c.h.b16 %v8593
    %v8913 = vunpack.c.l.b16 %v8594
    %v8914 = vunpack.c.h.b16 %v8594
    %v8915 = vunpack.c.l.b16 %v8595
    %v8916 = vunpack.c.h.b16 %v8595
    %v8917 = vunpack.c.l.b16 %v8596
    %v8918 = vunpack.c.h.b16 %v8596
    %v8919 = vunpack.c.l.b16 %v8597
    %v8920 = vunpack.c.h.b16 %v8597
    %v8921 = vunpack.c.l.b16 %v8598
    %v8922 = vunpack.c.h.b16 %v8598
    %v8923 = vunpack.c.l.b16 %v8599
    %v8924 = vunpack.c.h.b16 %v8599
    %v8925 = vunpack.c.l.b16 %v8600
    %v8926 = vunpack.c.h.b16 %v8600
    %v8927 = vunpack.c.l.b16 %v8601
    %v8928 = vunpack.c.h.b16 %v8601
    %v8929 = vunpack.c.l.b16 %v8602
    %v8930 = vunpack.c.h.b16 %v8602
    %v8931 = vunpack.c.l.b16 %v8603
    %v8932 = vunpack.c.h.b16 %v8603
    %v8933 = vunpack.c.l.b16 %v8604
    %v8934 = vunpack.c.h.b16 %v8604
    %v8935 = vunpack.c.l.b16 %v8605
    %v8936 = vunpack.c.h.b16 %v8605
    %v8937 = vunpack.c.l.b16 %v8606
    %v8938 = vunpack.c.h.b16 %v8606
    %v8939 = vunpack.c.l.b16 %v8607
    %v8940 = vunpack.c.h.b16 %v8607
    %v8941 = vunpack.c.l.b16 %v8608
    %v8942 = vunpack.c.h.b16 %v8608
    %v8943 = vunpack.c.l.b16 %v8609
    %v8944 = vunpack.c.h.b16 %v8609
    %v8945 = vunpack.c.l.b16 %v8610
    %v8946 = vunpack.c.h.b16 %v8610
    %v8947 = vunpack.c.l.b16 %v8611
    %v8948 = vunpack.c.h.b16 %v8611
    %v8949 = vunpack.c.l.b16 %v8612
    %v8950 = vunpack.c.h.b16 %v8612
    %v8951 = vunpack.c.l.b16 %v8613
    %v8952 = vunpack.c.h.b16 %v8613
    %v8953 = vunpack.c.l.b16 %v8614
    %v8954 = vunpack.c.h.b16 %v8614
    %v8955 = vunpack.c.l.b16 %v8615
    %v8956 = vunpack.c.h.b16 %v8615
    %v8957 = vunpack.c.l.b16 %v8616
    %v8958 = vunpack.c.h.b16 %v8616
    %v8959 = vunpack.c.l.b16 %v8617
    %v8960 = vunpack.c.h.b16 %v8617
    %v8961 = vunpack.c.l.b16 %v8618
    %v8962 = vunpack.c.h.b16 %v8618
    %v8963 = vunpack.c.l.b16 %v8619
    %v8964 = vunpack.c.h.b16 %v8619
    %v8965 = vunpack.c.l.b16 %v8620
    %v8966 = vunpack.c.h.b16 %v8620
    %v8967 = vunpack.c.l.b16 %v8621
    %v8968 = vunpack.c.h.b16 %v8621
    %v8969 = vunpack.c.l.b16 %v8622
    %v8970 = vunpack.c.h.b16 %v8622
    %v8971 = vunpack.c.l.b16 %v8623
    %v8972 = vunpack.c.h.b16 %v8623
    %v8973 = vunpack.c.l.b16 %v8624
    %v8974 = vunpack.c.h.b16 %v8624
    %v8975 = vunpack.c.l.b16 %v8625
    %v8976 = vunpack.c.h.b16 %v8625
    %v8977 = vunpack.c.l.b16 %v8626
    %v8978 = vunpack.c.h.b16 %v8626
    %v8979 = vunpack.c.l.b16 %v8627
    %v8980 = vunpack.c.h.b16 %v8627
    %v8981 = vunpack.c.l.b16 %v8628
    %v8982 = vunpack.c.h.b16 %v8628
    %v8983 = vunpack.c.l.b16 %v8629
    %v8984 = vunpack.c.h.b16 %v8629
    %v8985 = vunpack.c.l.b16 %v8630
    %v8986 = vunpack.c.h.b16 %v8630
    %v8987 = vunpack.c.l.b16 %v8631
    %v8988 = vunpack.c.h.b16 %v8631
    %v8989 = vunpack.c.l.b16 %v8632
    %v8990 = vunpack.c.h.b16 %v8632
    %v8991 = vunpack.c.l.b16 %v8633
    %v8992 = vunpack.c.h.b16 %v8633
    %v8993 = vunpack.c.l.b16 %v8634
    %v8994 = vunpack.c.h.b16 %v8634
    %v8995 = vunpack.c.l.b16 %v8635
    %v8996 = vunpack.c.h.b16 %v8635
    %v8997 = vunpack.c.l.b16 %v8636
    %v8998 = vunpack.c.h.b16 %v8636
    %v8999 = vunpack.c.l.b16 %v8637
    %v9000 = vunpack.c.h.b16 %v8637
    %v9001 = vunpack.c.l.b16 %v8638
    %v9002 = vunpack.c.h.b16 %v8638
    %v9003 = vunpack.c.l.b16 %v8639
    %v9004 = vunpack.c.h.b16 %v8639
    %v9005 = vunpack.c.l.b16 %v8640
    %v9006 = vunpack.c.h.b16 %v8640
    %v9007 = vunpack.c.l.b16 %v8641
    %v9008 = vunpack.c.h.b16 %v8641
    %v9009 = vunpack.c.l.b16 %v8642
    %v9010 = vunpack.c.h.b16 %v8642
    %v9011 = vunpack.c.l.b16 %v8643
    %v9012 = vunpack.c.h.b16 %v8643
    %v9013 = vunpack.c.l.b16 %v8644
    %v9014 = vunpack.c.h.b16 %v8644
    %v9015 = vunpack.c.l.b16 %v8645
    %v9016 = vunpack.c.h.b16 %v8645
    %v9017 = vunpack.c.l.b16 %v8646
    %v9018 = vunpack.c.h.b16 %v8646
    %v9019 = vunpack.c.l.b16 %v8647
    %v9020 = vunpack.c.h.b16 %v8647
    %v9021 = vunpack.c.l.b16 %v8648
    %v9022 = vunpack.c.h.b16 %v8648
    %v9023 = vunpack.c.l.b16 %v8649
    %v9024 = vunpack.c.h.b16 %v8649
    %v9025 = vunpack.c.l.b16 %v8650
    %v9026 = vunpack.c.h.b16 %v8650
    %v9027 = vunpack.c.l.b16 %v8651
    %v9028 = vunpack.c.h.b16 %v8651
    %v9029 = vunpack.c.l.b16 %v8652
    %v9030 = vunpack.c.h.b16 %v8652
    %v9031 = vunpack.c.l.b16 %v8653
    %v9032 = vunpack.c.h.b16 %v8653
    %v9033 = vunpack.c.l.b16 %v8654
    %v9034 = vunpack.c.h.b16 %v8654
    %v9035 = vunpack.c.l.b16 %v8655
    %v9036 = vunpack.c.h.b16 %v8655
    %v9037 = vunpack.c.l.b16 %v8656
    %v9038 = vunpack.c.h.b16 %v8656
    %v9039 = vunpack.c.l.b16 %v8657
    %v9040 = vunpack.c.h.b16 %v8657
    %v9041 = vunpack.c.l.b16 %v8658
    %v9042 = vunpack.c.h.b16 %v8658
    %v9043 = vunpack.c.l.b16 %v8659
    %v9044 = vunpack.c.h.b16 %v8659
    %v9045 = vunpack.c.l.b16 %v8660
    %v9046 = vunpack.c.h.b16 %v8660
    %v9047 = vunpack.c.l.b16 %v8661
    %v9048 = vunpack.c.h.b16 %v8661
    %v9049 = vunpack.c.l.b16 %v8662
    %v9050 = vunpack.c.h.b16 %v8662
    %v9051 = vunpack.c.l.b16 %v8663
    %v9052 = vunpack.c.h.b16 %v8663
    %v9053 = vunpack.c.l.b16 %v8664
    %v9054 = vunpack.c.h.b16 %v8664
    %v9055 = vunpack.c.l.b16 %v8665
    %v9056 = vunpack.c.h.b16 %v8665
    %v9057 = vunpack.c.l.b16 %v8666
    %v9058 = vunpack.c.h.b16 %v8666
    %v9059 = vunpack.c.l.b16 %v8667
    %v9060 = vunpack.c.h.b16 %v8667
    %v9061 = vunpack.c.l.b16 %v8668
    %v9062 = vunpack.c.h.b16 %v8668
    %v9063 = vunpack.c.l.b16 %v8669
    %v9064 = vunpack.c.h.b16 %v8669
    %v9065 = vunpack.c.l.b16 %v8670
    %v9066 = vunpack.c.h.b16 %v8670
    %v9067 = vunpack.c.l.b16 %v8671
    %v9068 = vunpack.c.h.b16 %v8671
    %v9069 = vunpack.c.l.b16 %v8672
    %v9070 = vunpack.c.h.b16 %v8672
    %v9071 = vunpack.c.l.b16 %v8673
    %v9072 = vunpack.c.h.b16 %v8673
    %v9073 = vunpack.c.l.b16 %v8674
    %v9074 = vunpack.c.h.b16 %v8674
    %v9075 = vunpack.c.l.b16 %v8675
    %v9076 = vunpack.c.h.b16 %v8675
    %v9077 = vunpack.c.l.b16 %v8676
    %v9078 = vunpack.c.h.b16 %v8676
    %v9079 = vunpack.c.l.b16 %v8677
    %v9080 = vunpack.c.h.b16 %v8677
    %v9081 = vunpack.c.l.b16 %v8678
    %v9082 = vunpack.c.h.b16 %v8678
    %v9083 = vunpack.c.l.b16 %v8679
    %v9084 = vunpack.c.h.b16 %v8679
    %v9085 = vunpack.c.l.b16 %v8680
    %v9086 = vunpack.c.h.b16 %v8680
    %v9087 = vpack.c.b16 %v8835, %v8831
    %v9088 = vpack.c.b16 %v8836, %v8832
    %v9089 = vpack.c.b16 %v8837, %v8833
    %v9090 = vpack.c.b16 %v8838, %v8834
    %v9091 = vpack.c.b16 %v8843, %v8839
    %v9092 = vpack.c.b16 %v8844, %v8840
    %v9093 = vpack.c.b16 %v8845, %v8841
    %v9094 = vpack.c.b16 %v8846, %v8842
    %v9095 = vpack.c.b16 %v8851, %v8847
    %v9096 = vpack.c.b16 %v8852, %v8848
    %v9097 = vpack.c.b16 %v8853, %v8849
    %v9098 = vpack.c.b16 %v8854, %v8850
    %v9099 = vpack.c.b16 %v8859, %v8855
    %v9100 = vpack.c.b16 %v8860, %v8856
    %v9101 = vpack.c.b16 %v8861, %v8857
    %v9102 = vpack.c.b16 %v8862, %v8858
    %v9103 = vpack.c.b16 %v8867, %v8863
    %v9104 = vpack.c.b16 %v8868, %v8864
    %v9105 = vpack.c.b16 %v8869, %v8865
    %v9106 = vpack.c.b16 %v8870, %v8866
    %v9107 = vpack.c.b16 %v8875, %v8871
    %v9108 = vpack.c.b16 %v8876, %v8872
    %v9109 = vpack.c.b16 %v8877, %v8873
    %v9110 = vpack.c.b16 %v8878, %v8874
    %v9111 = vpack.c.b16 %v8883, %v8879
    %v9112 = vpack.c.b16 %v8884, %v8880
    %v9113 = vpack.c.b16 %v8885, %v8881
    %v9114 = vpack.c.b16 %v8886, %v8882
    %v9115 = vpack.c.b16 %v8891, %v8887
    %v9116 = vpack.c.b16 %v8892, %v8888
    %v9117 = vpack.c.b16 %v8893, %v8889
    %v9118 = vpack.c.b16 %v8894, %v8890
    %v9119 = vpack.c.b16 %v8899, %v8895
    %v9120 = vpack.c.b16 %v8900, %v8896
    %v9121 = vpack.c.b16 %v8901, %v8897
    %v9122 = vpack.c.b16 %v8902, %v8898
    %v9123 = vpack.c.b16 %v8907, %v8903
    %v9124 = vpack.c.b16 %v8908, %v8904
    %v9125 = vpack.c.b16 %v8909, %v8905
    %v9126 = vpack.c.b16 %v8910, %v8906
    %v9127 = vpack.c.b16 %v8915, %v8911
    %v9128 = vpack.c.b16 %v8916, %v8912
    %v9129 = vpack.c.b16 %v8917, %v8913
    %v9130 = vpack.c.b16 %v8918, %v8914
    %v9131 = vpack.c.b16 %v8923, %v8919
    %v9132 = vpack.c.b16 %v8924, %v8920
    %v9133 = vpack.c.b16 %v8925, %v8921
    %v9134 = vpack.c.b16 %v8926, %v8922
    %v9135 = vpack.c.b16 %v8931, %v8927
    %v9136 = vpack.c.b16 %v8932, %v8928
    %v9137 = vpack.c.b16 %v8933, %v8929
    %v9138 = vpack.c.b16 %v8934, %v8930
    %v9139 = vpack.c.b16 %v8939, %v8935
    %v9140 = vpack.c.b16 %v8940, %v8936
    %v9141 = vpack.c.b16 %v8941, %v8937
    %v9142 = vpack.c.b16 %v8942, %v8938
    %v9143 = vpack.c.b16 %v8947, %v8943
    %v9144 = vpack.c.b16 %v8948, %v8944
    %v9145 = vpack.c.b16 %v8949, %v8945
    %v9146 = vpack.c.b16 %v8950, %v8946
    %v9147 = vpack.c.b16 %v8955, %v8951
    %v9148 = vpack.c.b16 %v8956, %v8952
    %v9149 = vpack.c.b16 %v8957, %v8953
    %v9150 = vpack.c.b16 %v8958, %v8954
    %v9151 = vpack.c.b16 %v8963, %v8959
    %v9152 = vpack.c.b16 %v8964, %v8960
    %v9153 = vpack.c.b16 %v8965, %v8961
    %v9154 = vpack.c.b16 %v8966, %v8962
    %v9155 = vpack.c.b16 %v8971, %v8967
    %v9156 = vpack.c.b16 %v8972, %v8968
    %v9157 = vpack.c.b16 %v8973, %v8969
    %v9158 = vpack.c.b16 %v8974, %v8970
    %v9159 = vpack.c.b16 %v8979, %v8975
    %v9160 = vpack.c.b16 %v8980, %v8976
    %v9161 = vpack.c.b16 %v8981, %v8977
    %v9162 = vpack.c.b16 %v8982, %v8978
    %v9163 = vpack.c.b16 %v8987, %v8983
    %v9164 = vpack.c.b16 %v8988, %v8984
    %v9165 = vpack.c.b16 %v8989, %v8985
    %v9166 = vpack.c.b16 %v8990, %v8986
    %v9167 = vpack.c.b16 %v8995, %v8991
    %v9168 = vpack.c.b16 %v8996, %v8992
    %v9169 = vpack.c.b16 %v8997, %v8993
    %v9170 = vpack.c.b16 %v8998, %v8994
    %v9171 = vpack.c.b16 %v9003, %v8999
    %v9172 = vpack.c.b16 %v9004, %v9000
    %v9173 = vpack.c.b16 %v9005, %v9001
    %v9174 = vpack.c.b16 %v9006, %v9002
    %v9175 = vpack.c.b16 %v9011, %v9007
    %v9176 = vpack.c.b16 %v9012, %v9008
    %v9177 = vpack.c.b16 %v9013, %v9009
    %v9178 = vpack.c.b16 %v9014, %v9010
    %v9179 = vpack.c.b16 %v9019, %v9015
    %v9180 = vpack.c.b16 %v9020, %v9016
    %v9181 = vpack.c.b16 %v9021, %v9017
    %v9182 = vpack.c.b16 %v9022, %v9018
    %v9183 = vpack.c.b16 %v9027, %v9023
    %v9184 = vpack.c.b16 %v9028, %v9024
    %v9185 = vpack.c.b16 %v9029, %v9025
    %v9186 = vpack.c.b16 %v9030, %v9026
    %v9187 = vpack.c.b16 %v9035, %v9031
    %v9188 = vpack.c.b16 %v9036, %v9032
    %v9189 = vpack.c.b16 %v9037, %v9033
    %v9190 = vpack.c.b16 %v9038, %v9034
    %v9191 = vpack.c.b16 %v9043, %v9039
    %v9192 = vpack.c.b16 %v9044, %v9040
    %v9193 = vpack.c.b16 %v9045, %v9041
    %v9194 = vpack.c.b16 %v9046, %v9042
    %v9195 = vpack.c.b16 %v9051, %v9047
    %v9196 = vpack.c.b16 %v9052, %v9048
    %v9197 = vpack.c.b16 %v9053, %v9049
    %v9198 = vpack.c.b16 %v9054, %v9050
    %v9199 = vpack.c.b16 %v9059, %v9055
    %v9200 = vpack.c.b16 %v9060, %v9056
    %v9201 = vpack.c.b16 %v9061, %v9057
    %v9202 = vpack.c.b16 %v9062, %v9058
    %v9203 = vpack.c.b16 %v9067, %v9063
    %v9204 = vpack.c.b16 %v9068, %v9064
    %v9205 = vpack.c.b16 %v9069, %v9065
    %v9206 = vpack.c.b16 %v9070, %v9066
    %v9207 = vpack.c.b16 %v9075, %v9071
    %v9208 = vpack.c.b16 %v9076, %v9072
    %v9209 = vpack.c.b16 %v9077, %v9073
    %v9210 = vpack.c.b16 %v9078, %v9074
    %v9211 = vpack.c.b16 %v9083, %v9079
    %v9212 = vpack.c.b16 %v9084, %v9080
    %v9213 = vpack.c.b16 %v9085, %v9081
    %v9214 = vpack.c.b16 %v9086, %v9082
    %9343 = vmatprep.subr.bf16.mxu0 %v9088
    %9344 = vmatpush1.bf16.msra.mxu0 %v9087
    %9345 = vmatprep.subr.bf16.mxu0 %v9092
    %9346 = vmatpush1.bf16.msra.mxu0 %v9091
    %9347 = vmatprep.subr.bf16.mxu0 %v9096
    %9348 = vmatpush1.bf16.msra.mxu0 %v9095
    %9349 = vmatprep.subr.bf16.mxu0 %v9100
    %9350 = vmatpush1.bf16.msra.mxu0 %v9099
    %9351 = vmatprep.subr.bf16.mxu0 %v9104
    %9352 = vmatpush1.bf16.msra.mxu0 %v9103
    %9353 = vmatprep.subr.bf16.mxu0 %v9108
    %9354 = vmatpush1.bf16.msra.mxu0 %v9107
    %9355 = vmatprep.subr.bf16.mxu0 %v9112
    %9356 = vmatpush1.bf16.msra.mxu0 %v9111
    %9357 = vmatprep.subr.bf16.mxu0 %v9116
    %9358 = vmatpush1.bf16.msra.mxu0 %v9115
    %9359 = vmatprep.subr.bf16.mxu0 %v9120
    %9360 = vmatpush1.bf16.msra.mxu0 %v9119
    %9361 = vmatprep.subr.bf16.mxu0 %v9124
    %9362 = vmatpush1.bf16.msra.mxu0 %v9123
    %9363 = vmatprep.subr.bf16.mxu0 %v9128
    %9364 = vmatpush1.bf16.msra.mxu0 %v9127
    %9365 = vmatprep.subr.bf16.mxu0 %v9132
    %9366 = vmatpush1.bf16.msra.mxu0 %v9131
    %9367 = vmatprep.subr.bf16.mxu0 %v9136
    %9368 = vmatpush1.bf16.msra.mxu0 %v9135
    %9369 = vmatprep.subr.bf16.mxu0 %v9140
    %9370 = vmatpush1.bf16.msra.mxu0 %v9139
    %9371 = vmatprep.subr.bf16.mxu0 %v9144
    %9372 = vmatpush1.bf16.msra.mxu0 %v9143
    %9373 = vmatprep.subr.bf16.mxu0 %v9148
    %9374 = vmatpush1.bf16.msra.mxu0 %v9147
    %9375 = vmatprep.mubr.bf16.mxu0 %v8550
    %9376 = vmatmul.mubr.bf16.gmra.mrb[0].mxu0 %v8549
    %v9377 = vpop.f32.mrb[0].mxu0
    %v9378 = vadd.f32 %v8686, %v9377
    %v9379 = vpop.f32.mrb[0].mxu0
    %v9380 = vadd.f32 %v8690, %v9379
    %v9381 = vpop.f32.mrb[0].mxu0
    %v9382 = vadd.f32 %v8686, %v9381
    %v9383 = vpop.f32.mrb[0].mxu0
    %v9384 = vadd.f32 %v8690, %v9383
    %9385 = vdwg.mxu0
    %9386 = vmatprep.subr.bf16.mxu0 %v9152
    %9387 = vmatpush1.bf16.msra.mxu0 %v9151
    %9388 = vmatprep.subr.bf16.mxu0 %v9156
    %9389 = vmatpush1.bf16.msra.mxu0 %v9155
    %9390 = vmatprep.subr.bf16.mxu0 %v9160
    %9391 = vmatpush1.bf16.msra.mxu0 %v9159
    %9392 = vmatprep.subr.bf16.mxu0 %v9164
    %9393 = vmatpush1.bf16.msra.mxu0 %v9163
    %9394 = vmatprep.subr.bf16.mxu0 %v9168
    %9395 = vmatpush1.bf16.msra.mxu0 %v9167
    %9396 = vmatprep.subr.bf16.mxu0 %v9172
    %9397 = vmatpush1.bf16.msra.mxu0 %v9171
    %9398 = vmatprep.subr.bf16.mxu0 %v9176
    %9399 = vmatpush1.bf16.msra.mxu0 %v9175
    %9400 = vmatprep.subr.bf16.mxu0 %v9180
    %9401 = vmatpush1.bf16.msra.mxu0 %v9179
    %9402 = vmatprep.subr.bf16.mxu0 %v9184
    %9403 = vmatpush1.bf16.msra.mxu0 %v9183
    %9404 = vmatprep.subr.bf16.mxu0 %v9188
    %9405 = vmatpush1.bf16.msra.mxu0 %v9187
    %9406 = vmatprep.subr.bf16.mxu0 %v9192
    %9407 = vmatpush1.bf16.msra.mxu0 %v9191
    %9408 = vmatprep.subr.bf16.mxu0 %v9196
    %9409 = vmatpush1.bf16.msra.mxu0 %v9195
    %9410 = vmatprep.subr.bf16.mxu0 %v9200
    %9411 = vmatpush1.bf16.msra.mxu0 %v9199
    %9412 = vmatprep.subr.bf16.mxu0 %v9204
    %9413 = vmatpush1.bf16.msra.mxu0 %v9203
    %9414 = vmatprep.subr.bf16.mxu0 %v9208
    %9415 = vmatpush1.bf16.msra.mxu0 %v9207
    %9416 = vmatprep.subr.bf16.mxu0 %v9212
    %9417 = vmatpush1.bf16.msra.mxu0 %v9211
    %9418 = vmatprep.mubr.bf16.mxu0 %v8552
    %9419 = vmatmul.mubr.bf16.gmra.mrb[0].mxu0 %v8551
    %v9420 = vpop.f32.mrb[0].mxu0
    %v9421 = vadd.f32 %v9378, %v9420
    %v9422 = vpop.f32.mrb[0].mxu0
    %v9423 = vadd.f32 %v9380, %v9422
    %v9424 = vpop.f32.mrb[0].mxu0
    %v9425 = vadd.f32 %v9382, %v9424
    %v9426 = vpop.f32.mrb[0].mxu0
    %v9427 = vadd.f32 %v9384, %v9426
    %9428 = vdwg.mxu0
    %9429 = vmatprep.subr.bf16.mxu0 %v9090
    %9430 = vmatpush1.bf16.msra.mxu0 %v9089
    %9431 = vmatprep.subr.bf16.mxu0 %v9094
    %9432 = vmatpush1.bf16.msra.mxu0 %v9093
    %9433 = vmatprep.subr.bf16.mxu0 %v9098
    %9434 = vmatpush1.bf16.msra.mxu0 %v9097
    %9435 = vmatprep.subr.bf16.mxu0 %v9102
    %9436 = vmatpush1.bf16.msra.mxu0 %v9101
    %9437 = vmatprep.subr.bf16.mxu0 %v9106
    %9438 = vmatpush1.bf16.msra.mxu0 %v9105
    %9439 = vmatprep.subr.bf16.mxu0 %v9110
    %9440 = vmatpush1.bf16.msra.mxu0 %v9109
    %9441 = vmatprep.subr.bf16.mxu0 %v9114
    %9442 = vmatpush1.bf16.msra.mxu0 %v9113
    %9443 = vmatprep.subr.bf16.mxu0 %v9118
    %9444 = vmatpush1.bf16.msra.mxu0 %v9117
    %9445 = vmatprep.subr.bf16.mxu0 %v9122
    %9446 = vmatpush1.bf16.msra.mxu0 %v9121
    %9447 = vmatprep.subr.bf16.mxu0 %v9126
    %9448 = vmatpush1.bf16.msra.mxu0 %v9125
    %9449 = vmatprep.subr.bf16.mxu0 %v9130
    %9450 = vmatpush1.bf16.msra.mxu0 %v9129
    %9451 = vmatprep.subr.bf16.mxu0 %v9134
    %9452 = vmatpush1.bf16.msra.mxu0 %v9133
    %9453 = vmatprep.subr.bf16.mxu0 %v9138
    %9454 = vmatpush1.bf16.msra.mxu0 %v9137
    %9455 = vmatprep.subr.bf16.mxu0 %v9142
    %9456 = vmatpush1.bf16.msra.mxu0 %v9141
    %9457 = vmatprep.subr.bf16.mxu0 %v9146
    %9458 = vmatpush1.bf16.msra.mxu0 %v9145
    %9459 = vmatprep.subr.bf16.mxu0 %v9150
    %9460 = vmatpush1.bf16.msra.mxu0 %v9149
    %9461 = vmatprep.mubr.bf16.mxu0 %v8550
    %9462 = vmatmul.mubr.bf16.gmra.mrb[0].mxu0 %v8549
    %v9463 = vpop.f32.mrb[0].mxu0
    %v9464 = vadd.f32 %v8694, %v9463
    %v9465 = vpop.f32.mrb[0].mxu0
    %v9466 = vadd.f32 %v8698, %v9465
    %v9467 = vpop.f32.mrb[0].mxu0
    %v9468 = vadd.f32 %v8694, %v9467
    %v9469 = vpop.f32.mrb[0].mxu0
    %v9470 = vadd.f32 %v8698, %v9469
    %9471 = vdwg.mxu0
    %9472 = vmatprep.subr.bf16.mxu0 %v9154
    %9473 = vmatpush1.bf16.msra.mxu0 %v9153
    %9474 = vmatprep.subr.bf16.mxu0 %v9158
    %9475 = vmatpush1.bf16.msra.mxu0 %v9157
    %9476 = vmatprep.subr.bf16.mxu0 %v9162
    %9477 = vmatpush1.bf16.msra.mxu0 %v9161
    %9478 = vmatprep.subr.bf16.mxu0 %v9166
    %9479 = vmatpush1.bf16.msra.mxu0 %v9165
    %9480 = vmatprep.subr.bf16.mxu0 %v9170
    %9481 = vmatpush1.bf16.msra.mxu0 %v9169
    %9482 = vmatprep.subr.bf16.mxu0 %v9174
    %9483 = vmatpush1.bf16.msra.mxu0 %v9173
    %9484 = vmatprep.subr.bf16.mxu0 %v9178
    %9485 = vmatpush1.bf16.msra.mxu0 %v9177
    %9486 = vmatprep.subr.bf16.mxu0 %v9182
    %9487 = vmatpush1.bf16.msra.mxu0 %v9181
    %9488 = vmatprep.subr.bf16.mxu0 %v9186
    %9489 = vmatpush1.bf16.msra.mxu0 %v9185
    %9490 = vmatprep.subr.bf16.mxu0 %v9190
    %9491 = vmatpush1.bf16.msra.mxu0 %v9189
    %9492 = vmatprep.subr.bf16.mxu0 %v9194
    %9493 = vmatpush1.bf16.msra.mxu0 %v9193
    %9494 = vmatprep.subr.bf16.mxu0 %v9198
    %9495 = vmatpush1.bf16.msra.mxu0 %v9197
    %9496 = vmatprep.subr.bf16.mxu0 %v9202
    %9497 = vmatpush1.bf16.msra.mxu0 %v9201
    %9498 = vmatprep.subr.bf16.mxu0 %v9206
    %9499 = vmatpush1.bf16.msra.mxu0 %v9205
    %9500 = vmatprep.subr.bf16.mxu0 %v9210
    %9501 = vmatpush1.bf16.msra.mxu0 %v9209
    %9502 = vmatprep.subr.bf16.mxu0 %v9214
    %9503 = vmatpush1.bf16.msra.mxu0 %v9213
    %9504 = vmatprep.mubr.bf16.mxu0 %v8552
    %9505 = vmatmul.mubr.bf16.gmra.mrb[0].mxu0 %v8551
    %v9506 = vpop.f32.mrb[0].mxu0
    %v9507 = vadd.f32 %v9464, %v9506
    %v9508 = vpop.f32.mrb[0].mxu0
    %v9509 = vadd.f32 %v9466, %v9508
    %v9510 = vpop.f32.mrb[0].mxu0
    %v9511 = vadd.f32 %v9468, %v9510
    %v9512 = vpop.f32.mrb[0].mxu0
    %v9513 = vadd.f32 %v9470, %v9512
    %9514 = vdwg.mxu0
    %v9515 = vmax.f32 %v9421, 0.0
    %v9516 = vmax.f32 %v9423, 0.0
    %v9517 = vmax.f32 %v9507, 0.0
    %v9518 = vmax.f32 %v9509, 0.0
    %v9519 = vmax.f32 %v9425, 0.0
    %v9520 = vmax.f32 %v9427, 0.0
    %v9521 = vmax.f32 %v9511, 0.0
    %v9522 = vmax.f32 %v9513, 0.0
    %v9523 = vpack.c.bf16 %v9519, %v9515
    %v9524 = vpack.c.bf16 %v9520, %v9516
    %v9525 = vpack.c.bf16 %v9521, %v9517
    %v9526 = vpack.c.bf16 %v9522, %v9518
    %v9527 = vld [vmem:[#allocation13] sm:$0xff]
    %v9528 = vld [vmem:[#allocation13 + $0x8] sm:$0xff]
    %v9529 = vld [vmem:[#allocation13 + $0x10] sm:$0xff]
    %v9530 = vld [vmem:[#allocation13 + $0x18] sm:$0xff]
    %v9531 = vld [vmem:[#allocation13 + $0x20] sm:$0xff]
    %v9532 = vld [vmem:[#allocation13 + $0x28] sm:$0xff]
    %v9533 = vld [vmem:[#allocation13 + $0x30] sm:$0xff]
    %v9534 = vld [vmem:[#allocation13 + $0x38] sm:$0xff]
    %v9535 = vld [vmem:[#allocation13 + $0x40] sm:$0xff]
    %v9536 = vld [vmem:[#allocation13 + $0x48] sm:$0xf]
    %v9537 = vld [vmem:[#allocation13 + $0x4c] sm:$0xff]
    %v9538 = vld [vmem:[#allocation13 + $0x54] sm:$0xff]
    %v9539 = vld [vmem:[#allocation13 + $0x5c] sm:$0xff]
    %v9540 = vld [vmem:[#allocation13 + $0x64] sm:$0xff]
    %v9541 = vld [vmem:[#allocation13 + $0x6c] sm:$0xff]
    %v9542 = vld [vmem:[#allocation13 + $0x74] sm:$0xff]
    %v9543 = vld [vmem:[#allocation13 + $0x7c] sm:$0xff]
    %v9544 = vld [vmem:[#allocation13 + $0x84] sm:$0xff]
    %v9545 = vld [vmem:[#allocation13 + $0x8c] sm:$0xff]
    %v9546 = vld [vmem:[#allocation13 + $0x94] sm:$0xf]
    %v9547 = vld [vmem:[#allocation13 + $0x98] sm:$0xff]
    %v9548 = vld [vmem:[#allocation13 + $0xa0] sm:$0xff]
    %v9549 = vld [vmem:[#allocation13 + $0xa8] sm:$0xff]
    %v9550 = vld [vmem:[#allocation13 + $0xb0] sm:$0xff]
    %v9551 = vld [vmem:[#allocation13 + $0xb8] sm:$0xff]
    %v9552 = vld [vmem:[#allocation13 + $0xc0] sm:$0xff]
    %v9553 = vld [vmem:[#allocation13 + $0xc8] sm:$0xff]
    %v9554 = vld [vmem:[#allocation13 + $0xd0] sm:$0xff]
    %v9555 = vld [vmem:[#allocation13 + $0xd8] sm:$0xff]
    %v9556 = vld [vmem:[#allocation13 + $0xe0] sm:$0xf]
    %v9557 = vld [vmem:[#allocation13 + $0xe4] sm:$0xff]
    %v9558 = vld [vmem:[#allocation13 + $0xec] sm:$0xff]
    %v9559 = vld [vmem:[#allocation13 + $0xf4] sm:$0xff]
    %v9560 = vld [vmem:[#allocation13 + $0xfc] sm:$0xff]
    %v9561 = vld [vmem:[#allocation13 + $0x104] sm:$0xff]
    %v9562 = vld [vmem:[#allocation13 + $0x10c] sm:$0xff]
    %v9563 = vld [vmem:[#allocation13 + $0x114] sm:$0xff]
    %v9564 = vld [vmem:[#allocation13 + $0x11c] sm:$0xff]
    %v9565 = vld [vmem:[#allocation13 + $0x124] sm:$0xff]
    %v9566 = vld [vmem:[#allocation13 + $0x12c] sm:$0xf]
    %v9567 = vld [vmem:[#allocation13 + $0x130] sm:$0xff]
    %v9568 = vld [vmem:[#allocation13 + $0x138] sm:$0xff]
    %v9569 = vld [vmem:[#allocation13 + $0x140] sm:$0xff]
    %v9570 = vld [vmem:[#allocation13 + $0x148] sm:$0xff]
    %v9571 = vld [vmem:[#allocation13 + $0x150] sm:$0xff]
    %v9572 = vld [vmem:[#allocation13 + $0x158] sm:$0xff]
    %v9573 = vld [vmem:[#allocation13 + $0x160] sm:$0xff]
    %v9574 = vld [vmem:[#allocation13 + $0x168] sm:$0xff]
    %v9575 = vld [vmem:[#allocation13 + $0x170] sm:$0xff]
    %v9576 = vld [vmem:[#allocation13 + $0x178] sm:$0xf]
    %v9577 = vld [vmem:[#allocation13 + $0x17c] sm:$0xff]
    %v9578 = vld [vmem:[#allocation13 + $0x184] sm:$0xff]
    %v9579 = vld [vmem:[#allocation13 + $0x18c] sm:$0xff]
    %v9580 = vld [vmem:[#allocation13 + $0x194] sm:$0xff]
    %v9581 = vld [vmem:[#allocation13 + $0x19c] sm:$0xff]
    %v9582 = vld [vmem:[#allocation13 + $0x1a4] sm:$0xff]
    %v9583 = vld [vmem:[#allocation13 + $0x1ac] sm:$0xff]
    %v9584 = vld [vmem:[#allocation13 + $0x1b4] sm:$0xff]
    %v9585 = vld [vmem:[#allocation13 + $0x1bc] sm:$0xff]
    %v9586 = vld [vmem:[#allocation13 + $0x1c4] sm:$0xf]
    %v9587 = vld [vmem:[#allocation13 + $0x1c8] sm:$0xff]
    %v9588 = vld [vmem:[#allocation13 + $0x1d0] sm:$0xff]
    %v9589 = vld [vmem:[#allocation13 + $0x1d8] sm:$0xff]
    %v9590 = vld [vmem:[#allocation13 + $0x1e0] sm:$0xff]
    %v9591 = vld [vmem:[#allocation13 + $0x1e8] sm:$0xff]
    %v9592 = vld [vmem:[#allocation13 + $0x1f0] sm:$0xff]
    %v9593 = vld [vmem:[#allocation13 + $0x1f8] sm:$0xff]
    %v9594 = vld [vmem:[#allocation13 + $0x200] sm:$0xff]
    %v9595 = vld [vmem:[#allocation13 + $0x208] sm:$0xff]
    %v9596 = vld [vmem:[#allocation13 + $0x210] sm:$0xf]
    %v9597 = vld [vmem:[#allocation13 + $0x214] sm:$0xff]
    %v9598 = vld [vmem:[#allocation13 + $0x21c] sm:$0xff]
    %v9599 = vld [vmem:[#allocation13 + $0x224] sm:$0xff]
    %v9600 = vld [vmem:[#allocation13 + $0x22c] sm:$0xff]
    %v9601 = vld [vmem:[#allocation13 + $0x234] sm:$0xff]
    %v9602 = vld [vmem:[#allocation13 + $0x23c] sm:$0xff]
    %v9603 = vld [vmem:[#allocation13 + $0x244] sm:$0xff]
    %v9604 = vld [vmem:[#allocation13 + $0x24c] sm:$0xff]
    %v9605 = vld [vmem:[#allocation13 + $0x254] sm:$0xff]
    %v9606 = vld [vmem:[#allocation13 + $0x25c] sm:$0xf]
    %v9607 = vld [vmem:[#allocation13 + $0x260] sm:$0xff]
    %v9608 = vld [vmem:[#allocation13 + $0x268] sm:$0xff]
    %v9609 = vld [vmem:[#allocation13 + $0x270] sm:$0xff]
    %v9610 = vld [vmem:[#allocation13 + $0x278] sm:$0xff]
    %v9611 = vld [vmem:[#allocation13 + $0x280] sm:$0xff]
    %v9612 = vld [vmem:[#allocation13 + $0x288] sm:$0xff]
    %v9613 = vld [vmem:[#allocation13 + $0x290] sm:$0xff]
    %v9614 = vld [vmem:[#allocation13 + $0x298] sm:$0xff]
    %v9615 = vld [vmem:[#allocation13 + $0x2a0] sm:$0xff]
    %v9616 = vld [vmem:[#allocation13 + $0x2a8] sm:$0xf]
    %v9617 = vld [vmem:[#allocation13 + $0x2ac] sm:$0xff]
    %v9618 = vld [vmem:[#allocation13 + $0x2b4] sm:$0xff]
    %v9619 = vld [vmem:[#allocation13 + $0x2bc] sm:$0xff]
    %v9620 = vld [vmem:[#allocation13 + $0x2c4] sm:$0xff]
    %v9621 = vld [vmem:[#allocation13 + $0x2cc] sm:$0xff]
    %v9622 = vld [vmem:[#allocation13 + $0x2d4] sm:$0xff]
    %v9623 = vld [vmem:[#allocation13 + $0x2dc] sm:$0xff]
    %v9624 = vld [vmem:[#allocation13 + $0x2e4] sm:$0xff]
    %v9625 = vld [vmem:[#allocation13 + $0x2ec] sm:$0xff]
    %v9626 = vld [vmem:[#allocation13 + $0x2f4] sm:$0xf]
    %v9627 = vld [vmem:[#allocation13 + $0x2f8] sm:$0xff]
    %v9628 = vld [vmem:[#allocation13 + $0x300] sm:$0xff]
    %v9629 = vld [vmem:[#allocation13 + $0x308] sm:$0xff]
    %v9630 = vld [vmem:[#allocation13 + $0x310] sm:$0xff]
    %v9631 = vld [vmem:[#allocation13 + $0x318] sm:$0xff]
    %v9632 = vld [vmem:[#allocation13 + $0x320] sm:$0xff]
    %v9633 = vld [vmem:[#allocation13 + $0x328] sm:$0xff]
    %v9634 = vld [vmem:[#allocation13 + $0x330] sm:$0xff]
    %v9635 = vld [vmem:[#allocation13 + $0x338] sm:$0xff]
    %v9636 = vld [vmem:[#allocation13 + $0x340] sm:$0xf]
    %v9637 = vld [vmem:[#allocation13 + $0x344] sm:$0xff]
    %v9638 = vld [vmem:[#allocation13 + $0x34c] sm:$0xff]
    %v9639 = vld [vmem:[#allocation13 + $0x354] sm:$0xff]
    %v9640 = vld [vmem:[#allocation13 + $0x35c] sm:$0xff]
    %v9641 = vld [vmem:[#allocation13 + $0x364] sm:$0xff]
    %v9642 = vld [vmem:[#allocation13 + $0x36c] sm:$0xff]
    %v9643 = vld [vmem:[#allocation13 + $0x374] sm:$0xff]
    %v9644 = vld [vmem:[#allocation13 + $0x37c] sm:$0xff]
    %v9645 = vld [vmem:[#allocation13 + $0x384] sm:$0xff]
    %v9646 = vld [vmem:[#allocation13 + $0x38c] sm:$0xf]
    %v9647 = vld [vmem:[#allocation13 + $0x390] sm:$0xff]
    %v9648 = vld [vmem:[#allocation13 + $0x398] sm:$0xff]
    %v9649 = vld [vmem:[#allocation13 + $0x3a0] sm:$0xff]
    %v9650 = vld [vmem:[#allocation13 + $0x3a8] sm:$0xff]
    %v9651 = vld [vmem:[#allocation13 + $0x3b0] sm:$0xff]
    %v9652 = vld [vmem:[#allocation13 + $0x3b8] sm:$0xff]
    %v9653 = vld [vmem:[#allocation13 + $0x3c0] sm:$0xff]
    %v9654 = vld [vmem:[#allocation13 + $0x3c8] sm:$0xff]
    %v9655 = vld [vmem:[#allocation13 + $0x3d0] sm:$0xff]
    %v9656 = vld [vmem:[#allocation13 + $0x3d8] sm:$0xf]
    %v9657 = vld [vmem:[#allocation13 + $0x3dc] sm:$0xff]
    %v9658 = vld [vmem:[#allocation13 + $0x3e4] sm:$0xff]
    %v9659 = vld [vmem:[#allocation13 + $0x3ec] sm:$0xff]
    %v9660 = vld [vmem:[#allocation13 + $0x3f4] sm:$0xff]
    %v9661 = vld [vmem:[#allocation13 + $0x3fc] sm:$0xff]
    %v9662 = vld [vmem:[#allocation13 + $0x404] sm:$0xff]
    %v9663 = vld [vmem:[#allocation13 + $0x40c] sm:$0xff]
    %v9664 = vld [vmem:[#allocation13 + $0x414] sm:$0xff]
    %v9665 = vld [vmem:[#allocation13 + $0x41c] sm:$0xff]
    %v9666 = vld [vmem:[#allocation13 + $0x424] sm:$0xf]
    %v9667 = vld [vmem:[#allocation13 + $0x428] sm:$0xff]
    %v9668 = vld [vmem:[#allocation13 + $0x430] sm:$0xff]
    %v9669 = vld [vmem:[#allocation13 + $0x438] sm:$0xff]
    %v9670 = vld [vmem:[#allocation13 + $0x440] sm:$0xff]
    %v9671 = vld [vmem:[#allocation13 + $0x448] sm:$0xff]
    %v9672 = vld [vmem:[#allocation13 + $0x450] sm:$0xff]
    %v9673 = vld [vmem:[#allocation13 + $0x458] sm:$0xff]
    %v9674 = vld [vmem:[#allocation13 + $0x460] sm:$0xff]
    %v9675 = vld [vmem:[#allocation13 + $0x468] sm:$0xff]
    %v9676 = vld [vmem:[#allocation13 + $0x470] sm:$0xf]
    %v9677 = vld [vmem:[#allocation13 + $0x474] sm:$0xff]
    %v9678 = vld [vmem:[#allocation13 + $0x47c] sm:$0xff]
    %v9679 = vld [vmem:[#allocation13 + $0x484] sm:$0xff]
    %v9680 = vld [vmem:[#allocation13 + $0x48c] sm:$0xff]
    %v9681 = vld [vmem:[#allocation13 + $0x494] sm:$0xff]
    %v9682 = vld [vmem:[#allocation13 + $0x49c] sm:$0xff]
    %v9683 = vld [vmem:[#allocation13 + $0x4a4] sm:$0xff]
    %v9684 = vld [vmem:[#allocation13 + $0x4ac] sm:$0xff]
    %v9685 = vld [vmem:[#allocation13 + $0x4b4] sm:$0xff]
    %v9686 = vld [vmem:[#allocation13 + $0x4bc] sm:$0xf]
    %v9687 = vld [vmem:[#allocation13 + $0x4c0] sm:$0xff]
    %v9688 = vld [vmem:[#allocation13 + $0x4c8] sm:$0xff]
    %v9689 = vld [vmem:[#allocation13 + $0x4d0] sm:$0xff]
    %v9690 = vld [vmem:[#allocation13 + $0x4d8] sm:$0xff]
    %v9691 = vld [vmem:[#allocation13 + $0x4e0] sm:$0xff]
    %v9692 = vld [vmem:[#allocation13 + $0x4e8] sm:$0xff]
    %v9693 = vld [vmem:[#allocation13 + $0x4f0] sm:$0xff]
    %v9694 = vld [vmem:[#allocation13 + $0x4f8] sm:$0xff]
    %v9695 = vld [vmem:[#allocation13 + $0x500] sm:$0xff]
    %v9696 = vld [vmem:[#allocation13 + $0x508] sm:$0xf]
    %v9697 = vld [vmem:[#allocation13 + $0x50c] sm:$0xff]
    %v9698 = vld [vmem:[#allocation13 + $0x514] sm:$0xff]
    %v9699 = vld [vmem:[#allocation13 + $0x51c] sm:$0xff]
    %v9700 = vld [vmem:[#allocation13 + $0x524] sm:$0xff]
    %v9701 = vld [vmem:[#allocation13 + $0x52c] sm:$0xff]
    %v9702 = vld [vmem:[#allocation13 + $0x534] sm:$0xff]
    %v9703 = vld [vmem:[#allocation13 + $0x53c] sm:$0xff]
    %v9704 = vld [vmem:[#allocation13 + $0x544] sm:$0xff]
    %v9705 = vld [vmem:[#allocation13 + $0x54c] sm:$0xff]
    %v9706 = vld [vmem:[#allocation13 + $0x554] sm:$0xf]
    %v9707 = vld [vmem:[#allocation13 + $0x558] sm:$0xff]
    %v9708 = vld [vmem:[#allocation13 + $0x560] sm:$0xff]
    %v9709 = vld [vmem:[#allocation13 + $0x568] sm:$0xff]
    %v9710 = vld [vmem:[#allocation13 + $0x570] sm:$0xff]
    %v9711 = vld [vmem:[#allocation13 + $0x578] sm:$0xff]
    %v9712 = vld [vmem:[#allocation13 + $0x580] sm:$0xff]
    %v9713 = vld [vmem:[#allocation13 + $0x588] sm:$0xff]
    %v9714 = vld [vmem:[#allocation13 + $0x590] sm:$0xff]
    %v9715 = vld [vmem:[#allocation13 + $0x598] sm:$0xff]
    %v9716 = vld [vmem:[#allocation13 + $0x5a0] sm:$0xf]
    %v9717 = vld [vmem:[#allocation13 + $0x5a4] sm:$0xff]
    %v9718 = vld [vmem:[#allocation13 + $0x5ac] sm:$0xff]
    %v9719 = vld [vmem:[#allocation13 + $0x5b4] sm:$0xff]
    %v9720 = vld [vmem:[#allocation13 + $0x5bc] sm:$0xff]
    %v9721 = vld [vmem:[#allocation13 + $0x5c4] sm:$0xff]
    %v9722 = vld [vmem:[#allocation13 + $0x5cc] sm:$0xff]
    %v9723 = vld [vmem:[#allocation13 + $0x5d4] sm:$0xff]
    %v9724 = vld [vmem:[#allocation13 + $0x5dc] sm:$0xff]
    %v9725 = vld [vmem:[#allocation13 + $0x5e4] sm:$0xff]
    %v9726 = vld [vmem:[#allocation13 + $0x5ec] sm:$0xf]
    %v9727 = vld [vmem:[#allocation13 + $0x5f0] sm:$0xff]
    %v9728 = vld [vmem:[#allocation13 + $0x5f8] sm:$0xff]
    %v9729 = vld [vmem:[#allocation13 + $0x600] sm:$0xff]
    %v9730 = vld [vmem:[#allocation13 + $0x608] sm:$0xff]
    %v9731 = vld [vmem:[#allocation13 + $0x610] sm:$0xff]
    %v9732 = vld [vmem:[#allocation13 + $0x618] sm:$0xff]
    %v9733 = vld [vmem:[#allocation13 + $0x620] sm:$0xff]
    %v9734 = vld [vmem:[#allocation13 + $0x628] sm:$0xff]
    %v9735 = vld [vmem:[#allocation13 + $0x630] sm:$0xff]
    %v9736 = vld [vmem:[#allocation13 + $0x638] sm:$0xf]
    %v9737 = vld [vmem:[#allocation13 + $0x63c] sm:$0xff]
    %v9738 = vld [vmem:[#allocation13 + $0x644] sm:$0xff]
    %v9739 = vld [vmem:[#allocation13 + $0x64c] sm:$0xff]
    %v9740 = vld [vmem:[#allocation13 + $0x654] sm:$0xff]
    %v9741 = vld [vmem:[#allocation13 + $0x65c] sm:$0xff]
    %v9742 = vld [vmem:[#allocation13 + $0x664] sm:$0xff]
    %v9743 = vld [vmem:[#allocation13 + $0x66c] sm:$0xff]
    %v9744 = vld [vmem:[#allocation13 + $0x674] sm:$0xff]
    %v9745 = vld [vmem:[#allocation13 + $0x67c] sm:$0xff]
    %v9746 = vld [vmem:[#allocation13 + $0x684] sm:$0xf]
    %v9747 = vld [vmem:[#allocation13 + $0x688] sm:$0xff]
    %v9748 = vld [vmem:[#allocation13 + $0x690] sm:$0xff]
    %v9749 = vld [vmem:[#allocation13 + $0x698] sm:$0xff]
    %v9750 = vld [vmem:[#allocation13 + $0x6a0] sm:$0xff]
    %v9751 = vld [vmem:[#allocation13 + $0x6a8] sm:$0xff]
    %v9752 = vld [vmem:[#allocation13 + $0x6b0] sm:$0xff]
    %v9753 = vld [vmem:[#allocation13 + $0x6b8] sm:$0xff]
    %v9754 = vld [vmem:[#allocation13 + $0x6c0] sm:$0xff]
    %v9755 = vld [vmem:[#allocation13 + $0x6c8] sm:$0xff]
    %v9756 = vld [vmem:[#allocation13 + $0x6d0] sm:$0xf]
    %v9757 = vld [vmem:[#allocation13 + $0x6d4] sm:$0xff]
    %v9758 = vld [vmem:[#allocation13 + $0x6dc] sm:$0xff]
    %v9759 = vld [vmem:[#allocation13 + $0x6e4] sm:$0xff]
    %v9760 = vld [vmem:[#allocation13 + $0x6ec] sm:$0xff]
    %v9761 = vld [vmem:[#allocation13 + $0x6f4] sm:$0xff]
    %v9762 = vld [vmem:[#allocation13 + $0x6fc] sm:$0xff]
    %v9763 = vld [vmem:[#allocation13 + $0x704] sm:$0xff]
    %v9764 = vld [vmem:[#allocation13 + $0x70c] sm:$0xff]
    %v9765 = vld [vmem:[#allocation13 + $0x714] sm:$0xff]
    %v9766 = vld [vmem:[#allocation13 + $0x71c] sm:$0xf]
    %v9767 = vld [vmem:[#allocation13 + $0x720] sm:$0xff]
    %v9768 = vld [vmem:[#allocation13 + $0x728] sm:$0xff]
    %v9769 = vld [vmem:[#allocation13 + $0x730] sm:$0xff]
    %v9770 = vld [vmem:[#allocation13 + $0x738] sm:$0xff]
    %v9771 = vld [vmem:[#allocation13 + $0x740] sm:$0xff]
    %v9772 = vld [vmem:[#allocation13 + $0x748] sm:$0xff]
    %v9773 = vld [vmem:[#allocation13 + $0x750] sm:$0xff]
    %v9774 = vld [vmem:[#allocation13 + $0x758] sm:$0xff]
    %v9775 = vld [vmem:[#allocation13 + $0x760] sm:$0xff]
    %v9776 = vld [vmem:[#allocation13 + $0x768] sm:$0xf]
    %v9777 = vld [vmem:[#allocation13 + $0x76c] sm:$0xff]
    %v9778 = vld [vmem:[#allocation13 + $0x774] sm:$0xff]
    %v9779 = vld [vmem:[#allocation13 + $0x77c] sm:$0xff]
    %v9780 = vld [vmem:[#allocation13 + $0x784] sm:$0xff]
    %v9781 = vld [vmem:[#allocation13 + $0x78c] sm:$0xff]
    %v9782 = vld [vmem:[#allocation13 + $0x794] sm:$0xff]
    %v9783 = vld [vmem:[#allocation13 + $0x79c] sm:$0xff]
    %v9784 = vld [vmem:[#allocation13 + $0x7a4] sm:$0xff]
    %v9785 = vld [vmem:[#allocation13 + $0x7ac] sm:$0xff]
    %v9786 = vld [vmem:[#allocation13 + $0x7b4] sm:$0xf]
    %v9787 = vld [vmem:[#allocation13 + $0x7b8] sm:$0xff]
    %v9788 = vld [vmem:[#allocation13 + $0x7c0] sm:$0xff]
    %v9789 = vld [vmem:[#allocation13 + $0x7c8] sm:$0xff]
    %v9790 = vld [vmem:[#allocation13 + $0x7d0] sm:$0xff]
    %v9791 = vld [vmem:[#allocation13 + $0x7d8] sm:$0xff]
    %v9792 = vld [vmem:[#allocation13 + $0x7e0] sm:$0xff]
    %v9793 = vld [vmem:[#allocation13 + $0x7e8] sm:$0xff]
    %v9794 = vld [vmem:[#allocation13 + $0x7f0] sm:$0xff]
    %v9795 = vld [vmem:[#allocation13 + $0x7f8] sm:$0xff]
    %v9796 = vld [vmem:[#allocation13 + $0x800] sm:$0xf]
    %v9797 = vld [vmem:[#allocation13 + $0x804] sm:$0xff]
    %v9798 = vld [vmem:[#allocation13 + $0x80c] sm:$0xff]
    %v9799 = vld [vmem:[#allocation13 + $0x814] sm:$0xff]
    %v9800 = vld [vmem:[#allocation13 + $0x81c] sm:$0xff]
    %v9801 = vld [vmem:[#allocation13 + $0x824] sm:$0xff]
    %v9802 = vld [vmem:[#allocation13 + $0x82c] sm:$0xff]
    %v9803 = vld [vmem:[#allocation13 + $0x834] sm:$0xff]
    %v9804 = vld [vmem:[#allocation13 + $0x83c] sm:$0xff]
    %v9805 = vld [vmem:[#allocation13 + $0x844] sm:$0xff]
    %v9806 = vld [vmem:[#allocation13 + $0x84c] sm:$0xf]
    %v9807 = vld [vmem:[#allocation13 + $0x850] sm:$0xff]
    %v9808 = vld [vmem:[#allocation13 + $0x858] sm:$0xff]
    %v9809 = vld [vmem:[#allocation13 + $0x860] sm:$0xff]
    %v9810 = vld [vmem:[#allocation13 + $0x868] sm:$0xff]
    %v9811 = vld [vmem:[#allocation13 + $0x870] sm:$0xff]
    %v9812 = vld [vmem:[#allocation13 + $0x878] sm:$0xff]
    %v9813 = vld [vmem:[#allocation13 + $0x880] sm:$0xff]
    %v9814 = vld [vmem:[#allocation13 + $0x888] sm:$0xff]
    %v9815 = vld [vmem:[#allocation13 + $0x890] sm:$0xff]
    %v9816 = vld [vmem:[#allocation13 + $0x898] sm:$0xf]
    %v9817 = vld [vmem:[#allocation13 + $0x89c] sm:$0xff]
    %v9818 = vld [vmem:[#allocation13 + $0x8a4] sm:$0xff]
    %v9819 = vld [vmem:[#allocation13 + $0x8ac] sm:$0xff]
    %v9820 = vld [vmem:[#allocation13 + $0x8b4] sm:$0xff]
    %v9821 = vld [vmem:[#allocation13 + $0x8bc] sm:$0xff]
    %v9822 = vld [vmem:[#allocation13 + $0x8c4] sm:$0xff]
    %v9823 = vld [vmem:[#allocation13 + $0x8cc] sm:$0xff]
    %v9824 = vld [vmem:[#allocation13 + $0x8d4] sm:$0xff]
    %v9825 = vld [vmem:[#allocation13 + $0x8dc] sm:$0xff]
    %v9826 = vld [vmem:[#allocation13 + $0x8e4] sm:$0xf]
    %v9827 = vld [vmem:[#allocation13 + $0x8e8] sm:$0xff]
    %v9828 = vld [vmem:[#allocation13 + $0x8f0] sm:$0xff]
    %v9829 = vld [vmem:[#allocation13 + $0x8f8] sm:$0xff]
    %v9830 = vld [vmem:[#allocation13 + $0x900] sm:$0xff]
    %v9831 = vld [vmem:[#allocation13 + $0x908] sm:$0xff]
    %v9832 = vld [vmem:[#allocation13 + $0x910] sm:$0xff]
    %v9833 = vld [vmem:[#allocation13 + $0x918] sm:$0xff]
    %v9834 = vld [vmem:[#allocation13 + $0x920] sm:$0xff]
    %v9835 = vld [vmem:[#allocation13 + $0x928] sm:$0xff]
    %v9836 = vld [vmem:[#allocation13 + $0x930] sm:$0xf]
    %v9837 = vld [vmem:[#allocation13 + $0x934] sm:$0xff]
    %v9838 = vld [vmem:[#allocation13 + $0x93c] sm:$0xff]
    %v9839 = vld [vmem:[#allocation13 + $0x944] sm:$0xff]
    %v9840 = vld [vmem:[#allocation13 + $0x94c] sm:$0xff]
    %v9841 = vld [vmem:[#allocation13 + $0x954] sm:$0xff]
    %v9842 = vld [vmem:[#allocation13 + $0x95c] sm:$0xff]
    %v9843 = vld [vmem:[#allocation13 + $0x964] sm:$0xff]
    %v9844 = vld [vmem:[#allocation13 + $0x96c] sm:$0xff]
    %v9845 = vld [vmem:[#allocation13 + $0x974] sm:$0xff]
    %v9846 = vld [vmem:[#allocation13 + $0x97c] sm:$0xf]
    %v9847 = vld [vmem:[#allocation13 + $0x980] sm:$0xff]
    %v9848 = vld [vmem:[#allocation13 + $0x988] sm:$0xff]
    %v9849 = vld [vmem:[#allocation13 + $0x990] sm:$0xff]
    %v9850 = vld [vmem:[#allocation13 + $0x998] sm:$0xff]
    %v9851 = vld [vmem:[#allocation13 + $0x9a0] sm:$0xff]
    %v9852 = vld [vmem:[#allocation13 + $0x9a8] sm:$0xff]
    %v9853 = vld [vmem:[#allocation13 + $0x9b0] sm:$0xff]
    %v9854 = vld [vmem:[#allocation13 + $0x9b8] sm:$0xff]
    %v9855 = vld [vmem:[#allocation13 + $0x9c0] sm:$0xff]
    %v9856 = vld [vmem:[#allocation13 + $0x9c8] sm:$0xf]
    %v9857 = vld [vmem:[#allocation13 + $0x9cc] sm:$0xff]
    %v9858 = vld [vmem:[#allocation13 + $0x9d4] sm:$0xff]
    %v9859 = vld [vmem:[#allocation13 + $0x9dc] sm:$0xff]
    %v9860 = vld [vmem:[#allocation13 + $0x9e4] sm:$0xff]
    %v9861 = vld [vmem:[#allocation13 + $0x9ec] sm:$0xff]
    %v9862 = vld [vmem:[#allocation13 + $0x9f4] sm:$0xff]
    %v9863 = vld [vmem:[#allocation13 + $0x9fc] sm:$0xff]
    %v9864 = vld [vmem:[#allocation13 + $0xa04] sm:$0xff]
    %v9865 = vld [vmem:[#allocation13 + $0xa0c] sm:$0xff]
    %v9866 = vld [vmem:[#allocation13 + $0xa14] sm:$0xf]
    %v9867 = vld [vmem:[#allocation13 + $0xa18] sm:$0xff]
    %v9868 = vld [vmem:[#allocation13 + $0xa20] sm:$0xff]
    %v9869 = vld [vmem:[#allocation13 + $0xa28] sm:$0xff]
    %v9870 = vld [vmem:[#allocation13 + $0xa30] sm:$0xff]
    %v9871 = vld [vmem:[#allocation13 + $0xa38] sm:$0xff]
    %v9872 = vld [vmem:[#allocation13 + $0xa40] sm:$0xff]
    %v9873 = vld [vmem:[#allocation13 + $0xa48] sm:$0xff]
    %v9874 = vld [vmem:[#allocation13 + $0xa50] sm:$0xff]
    %v9875 = vld [vmem:[#allocation13 + $0xa58] sm:$0xff]
    %v9876 = vld [vmem:[#allocation13 + $0xa60] sm:$0xf]
    %v9877 = vld [vmem:[#allocation13 + $0xa64] sm:$0xff]
    %v9878 = vld [vmem:[#allocation13 + $0xa6c] sm:$0xff]
    %v9879 = vld [vmem:[#allocation13 + $0xa74] sm:$0xff]
    %v9880 = vld [vmem:[#allocation13 + $0xa7c] sm:$0xff]
    %v9881 = vld [vmem:[#allocation13 + $0xa84] sm:$0xff]
    %v9882 = vld [vmem:[#allocation13 + $0xa8c] sm:$0xff]
    %v9883 = vld [vmem:[#allocation13 + $0xa94] sm:$0xff]
    %v9884 = vld [vmem:[#allocation13 + $0xa9c] sm:$0xff]
    %v9885 = vld [vmem:[#allocation13 + $0xaa4] sm:$0xff]
    %v9886 = vld [vmem:[#allocation13 + $0xaac] sm:$0xf]
    %v9887 = vld [vmem:[#allocation13 + $0xab0] sm:$0xff]
    %v9888 = vld [vmem:[#allocation13 + $0xab8] sm:$0xff]
    %v9889 = vld [vmem:[#allocation13 + $0xac0] sm:$0xff]
    %v9890 = vld [vmem:[#allocation13 + $0xac8] sm:$0xff]
    %v9891 = vld [vmem:[#allocation13 + $0xad0] sm:$0xff]
    %v9892 = vld [vmem:[#allocation13 + $0xad8] sm:$0xff]
    %v9893 = vld [vmem:[#allocation13 + $0xae0] sm:$0xff]
    %v9894 = vld [vmem:[#allocation13 + $0xae8] sm:$0xff]
    %v9895 = vld [vmem:[#allocation13 + $0xaf0] sm:$0xff]
    %v9896 = vld [vmem:[#allocation13 + $0xaf8] sm:$0xf]
    %v9897 = vld [vmem:[#allocation13 + $0xafc] sm:$0xff]
    %v9898 = vld [vmem:[#allocation13 + $0xb04] sm:$0xff]
    %v9899 = vld [vmem:[#allocation13 + $0xb0c] sm:$0xff]
    %v9900 = vld [vmem:[#allocation13 + $0xb14] sm:$0xff]
    %v9901 = vld [vmem:[#allocation13 + $0xb1c] sm:$0xff]
    %v9902 = vld [vmem:[#allocation13 + $0xb24] sm:$0xff]
    %v9903 = vld [vmem:[#allocation13 + $0xb2c] sm:$0xff]
    %v9904 = vld [vmem:[#allocation13 + $0xb34] sm:$0xff]
    %v9905 = vld [vmem:[#allocation13 + $0xb3c] sm:$0xff]
    %v9906 = vld [vmem:[#allocation13 + $0xb44] sm:$0xf]
    %v9907 = vld [vmem:[#allocation13 + $0xb48] sm:$0xff]
    %v9908 = vld [vmem:[#allocation13 + $0xb50] sm:$0xff]
    %v9909 = vld [vmem:[#allocation13 + $0xb58] sm:$0xff]
    %v9910 = vld [vmem:[#allocation13 + $0xb60] sm:$0xff]
    %v9911 = vld [vmem:[#allocation13 + $0xb68] sm:$0xff]
    %v9912 = vld [vmem:[#allocation13 + $0xb70] sm:$0xff]
    %v9913 = vld [vmem:[#allocation13 + $0xb78] sm:$0xff]
    %v9914 = vld [vmem:[#allocation13 + $0xb80] sm:$0xff]
    %v9915 = vld [vmem:[#allocation13 + $0xb88] sm:$0xff]
    %v9916 = vld [vmem:[#allocation13 + $0xb90] sm:$0xf]
    %v9917 = vld [vmem:[#allocation13 + $0xb94] sm:$0xff]
    %v9918 = vld [vmem:[#allocation13 + $0xb9c] sm:$0xff]
    %v9919 = vld [vmem:[#allocation13 + $0xba4] sm:$0xff]
    %v9920 = vld [vmem:[#allocation13 + $0xbac] sm:$0xff]
    %v9921 = vld [vmem:[#allocation13 + $0xbb4] sm:$0xff]
    %v9922 = vld [vmem:[#allocation13 + $0xbbc] sm:$0xff]
    %v9923 = vld [vmem:[#allocation13 + $0xbc4] sm:$0xff]
    %v9924 = vld [vmem:[#allocation13 + $0xbcc] sm:$0xff]
    %v9925 = vld [vmem:[#allocation13 + $0xbd4] sm:$0xff]
    %v9926 = vld [vmem:[#allocation13 + $0xbdc] sm:$0xf]
    %v9927 = vld [vmem:[#allocation13 + $0xbe0] sm:$0xff]
    %v9928 = vld [vmem:[#allocation13 + $0xbe8] sm:$0xff]
    %v9929 = vld [vmem:[#allocation13 + $0xbf0] sm:$0xff]
    %v9930 = vld [vmem:[#allocation13 + $0xbf8] sm:$0xff]
    %v9931 = vld [vmem:[#allocation13 + $0xc00] sm:$0xff]
    %v9932 = vld [vmem:[#allocation13 + $0xc08] sm:$0xff]
    %v9933 = vld [vmem:[#allocation13 + $0xc10] sm:$0xff]
    %v9934 = vld [vmem:[#allocation13 + $0xc18] sm:$0xff]
    %v9935 = vld [vmem:[#allocation13 + $0xc20] sm:$0xff]
    %v9936 = vld [vmem:[#allocation13 + $0xc28] sm:$0xf]
    %v9937 = vld [vmem:[#allocation13 + $0xc2c] sm:$0xff]
    %v9938 = vld [vmem:[#allocation13 + $0xc34] sm:$0xff]
    %v9939 = vld [vmem:[#allocation13 + $0xc3c] sm:$0xff]
    %v9940 = vld [vmem:[#allocation13 + $0xc44] sm:$0xff]
    %v9941 = vld [vmem:[#allocation13 + $0xc4c] sm:$0xff]
    %v9942 = vld [vmem:[#allocation13 + $0xc54] sm:$0xff]
    %v9943 = vld [vmem:[#allocation13 + $0xc5c] sm:$0xff]
    %v9944 = vld [vmem:[#allocation13 + $0xc64] sm:$0xff]
    %v9945 = vld [vmem:[#allocation13 + $0xc6c] sm:$0xff]
    %v9946 = vld [vmem:[#allocation13 + $0xc74] sm:$0xf]
    %v9947 = vld [vmem:[#allocation13 + $0xc78] sm:$0xff]
    %v9948 = vld [vmem:[#allocation13 + $0xc80] sm:$0xff]
    %v9949 = vld [vmem:[#allocation13 + $0xc88] sm:$0xff]
    %v9950 = vld [vmem:[#allocation13 + $0xc90] sm:$0xff]
    %v9951 = vld [vmem:[#allocation13 + $0xc98] sm:$0xff]
    %v9952 = vld [vmem:[#allocation13 + $0xca0] sm:$0xff]
    %v9953 = vld [vmem:[#allocation13 + $0xca8] sm:$0xff]
    %v9954 = vld [vmem:[#allocation13 + $0xcb0] sm:$0xff]
    %v9955 = vld [vmem:[#allocation13 + $0xcb8] sm:$0xff]
    %v9956 = vld [vmem:[#allocation13 + $0xcc0] sm:$0xf]
    %v9957 = vld [vmem:[#allocation13 + $0xcc4] sm:$0xff]
    %v9958 = vld [vmem:[#allocation13 + $0xccc] sm:$0xff]
    %v9959 = vld [vmem:[#allocation13 + $0xcd4] sm:$0xff]
    %v9960 = vld [vmem:[#allocation13 + $0xcdc] sm:$0xff]
    %v9961 = vld [vmem:[#allocation13 + $0xce4] sm:$0xff]
    %v9962 = vld [vmem:[#allocation13 + $0xcec] sm:$0xff]
    %v9963 = vld [vmem:[#allocation13 + $0xcf4] sm:$0xff]
    %v9964 = vld [vmem:[#allocation13 + $0xcfc] sm:$0xff]
    %v9965 = vld [vmem:[#allocation13 + $0xd04] sm:$0xff]
    %v9966 = vld [vmem:[#allocation13 + $0xd0c] sm:$0xf]
    %v9967 = vld [vmem:[#allocation13 + $0xd10] sm:$0xff]
    %v9968 = vld [vmem:[#allocation13 + $0xd18] sm:$0xff]
    %v9969 = vld [vmem:[#allocation13 + $0xd20] sm:$0xff]
    %v9970 = vld [vmem:[#allocation13 + $0xd28] sm:$0xff]
    %v9971 = vld [vmem:[#allocation13 + $0xd30] sm:$0xff]
    %v9972 = vld [vmem:[#allocation13 + $0xd38] sm:$0xff]
    %v9973 = vld [vmem:[#allocation13 + $0xd40] sm:$0xff]
    %v9974 = vld [vmem:[#allocation13 + $0xd48] sm:$0xff]
    %v9975 = vld [vmem:[#allocation13 + $0xd50] sm:$0xff]
    %v9976 = vld [vmem:[#allocation13 + $0xd58] sm:$0xf]
    %v9977 = vld [vmem:[#allocation13 + $0xd5c] sm:$0xff]
    %v9978 = vld [vmem:[#allocation13 + $0xd64] sm:$0xff]
    %v9979 = vld [vmem:[#allocation13 + $0xd6c] sm:$0xff]
    %v9980 = vld [vmem:[#allocation13 + $0xd74] sm:$0xff]
    %v9981 = vld [vmem:[#allocation13 + $0xd7c] sm:$0xff]
    %v9982 = vld [vmem:[#allocation13 + $0xd84] sm:$0xff]
    %v9983 = vld [vmem:[#allocation13 + $0xd8c] sm:$0xff]
    %v9984 = vld [vmem:[#allocation13 + $0xd94] sm:$0xff]
    %v9985 = vld [vmem:[#allocation13 + $0xd9c] sm:$0xff]
    %v9986 = vld [vmem:[#allocation13 + $0xda4] sm:$0xf]
    %v9987 = vld [vmem:[#allocation13 + $0xda8] sm:$0xff]
    %v9988 = vld [vmem:[#allocation13 + $0xdb0] sm:$0xff]
    %v9989 = vld [vmem:[#allocation13 + $0xdb8] sm:$0xff]
    %v9990 = vld [vmem:[#allocation13 + $0xdc0] sm:$0xff]
    %v9991 = vld [vmem:[#allocation13 + $0xdc8] sm:$0xff]
    %v9992 = vld [vmem:[#allocation13 + $0xdd0] sm:$0xff]
    %v9993 = vld [vmem:[#allocation13 + $0xdd8] sm:$0xff]
    %v9994 = vld [vmem:[#allocation13 + $0xde0] sm:$0xff]
    %v9995 = vld [vmem:[#allocation13 + $0xde8] sm:$0xff]
    %v9996 = vld [vmem:[#allocation13 + $0xdf0] sm:$0xf]
    %v9997 = vld [vmem:[#allocation13 + $0xdf4] sm:$0xff]
    %v9998 = vld [vmem:[#allocation13 + $0xdfc] sm:$0xff]
    %v9999 = vld [vmem:[#allocation13 + $0xe04] sm:$0xff]
    %v10000 = vld [vmem:[#allocation13 + $0xe0c] sm:$0xff]
    %v10001 = vld [vmem:[#allocation13 + $0xe14] sm:$0xff]
    %v10002 = vld [vmem:[#allocation13 + $0xe1c] sm:$0xff]
    %v10003 = vld [vmem:[#allocation13 + $0xe24] sm:$0xff]
    %v10004 = vld [vmem:[#allocation13 + $0xe2c] sm:$0xff]
    %v10005 = vld [vmem:[#allocation13 + $0xe34] sm:$0xff]
    %v10006 = vld [vmem:[#allocation13 + $0xe3c] sm:$0xf]
    %v10007 = vld [vmem:[#allocation13 + $0xe40] sm:$0xff]
    %v10008 = vld [vmem:[#allocation13 + $0xe48] sm:$0xff]
    %v10009 = vld [vmem:[#allocation13 + $0xe50] sm:$0xff]
    %v10010 = vld [vmem:[#allocation13 + $0xe58] sm:$0xff]
    %v10011 = vld [vmem:[#allocation13 + $0xe60] sm:$0xff]
    %v10012 = vld [vmem:[#allocation13 + $0xe68] sm:$0xff]
    %v10013 = vld [vmem:[#allocation13 + $0xe70] sm:$0xff]
    %v10014 = vld [vmem:[#allocation13 + $0xe78] sm:$0xff]
    %v10015 = vld [vmem:[#allocation13 + $0xe80] sm:$0xff]
    %v10016 = vld [vmem:[#allocation13 + $0xe88] sm:$0xf]
    %v10017 = vld [vmem:[#allocation13 + $0xe8c] sm:$0xff]
    %v10018 = vld [vmem:[#allocation13 + $0xe94] sm:$0xff]
    %v10019 = vld [vmem:[#allocation13 + $0xe9c] sm:$0xff]
    %v10020 = vld [vmem:[#allocation13 + $0xea4] sm:$0xff]
    %v10021 = vld [vmem:[#allocation13 + $0xeac] sm:$0xff]
    %v10022 = vld [vmem:[#allocation13 + $0xeb4] sm:$0xff]
    %v10023 = vld [vmem:[#allocation13 + $0xebc] sm:$0xff]
    %v10024 = vld [vmem:[#allocation13 + $0xec4] sm:$0xff]
    %v10025 = vld [vmem:[#allocation13 + $0xecc] sm:$0xff]
    %v10026 = vld [vmem:[#allocation13 + $0xed4] sm:$0xf]
    %v10027 = vld [vmem:[#allocation13 + $0xed8] sm:$0xff]
    %v10028 = vld [vmem:[#allocation13 + $0xee0] sm:$0xff]
    %v10029 = vld [vmem:[#allocation13 + $0xee8] sm:$0xff]
    %v10030 = vld [vmem:[#allocation13 + $0xef0] sm:$0xff]
    %v10031 = vld [vmem:[#allocation13 + $0xef8] sm:$0xff]
    %v10032 = vld [vmem:[#allocation13 + $0xf00] sm:$0xff]
    %v10033 = vld [vmem:[#allocation13 + $0xf08] sm:$0xff]
    %v10034 = vld [vmem:[#allocation13 + $0xf10] sm:$0xff]
    %v10035 = vld [vmem:[#allocation13 + $0xf18] sm:$0xff]
    %v10036 = vld [vmem:[#allocation13 + $0xf20] sm:$0xf]
    %v10037 = vld [vmem:[#allocation13 + $0xf24] sm:$0xff]
    %v10038 = vld [vmem:[#allocation13 + $0xf2c] sm:$0xff]
    %v10039 = vld [vmem:[#allocation13 + $0xf34] sm:$0xff]
    %v10040 = vld [vmem:[#allocation13 + $0xf3c] sm:$0xff]
    %v10041 = vld [vmem:[#allocation13 + $0xf44] sm:$0xff]
    %v10042 = vld [vmem:[#allocation13 + $0xf4c] sm:$0xff]
    %v10043 = vld [vmem:[#allocation13 + $0xf54] sm:$0xff]
    %v10044 = vld [vmem:[#allocation13 + $0xf5c] sm:$0xff]
    %v10045 = vld [vmem:[#allocation13 + $0xf64] sm:$0xff]
    %v10046 = vld [vmem:[#allocation13 + $0xf6c] sm:$0xf]
    %v10047 = vld [vmem:[#allocation13 + $0xf70] sm:$0xff]
    %v10048 = vld [vmem:[#allocation13 + $0xf78] sm:$0xff]
    %v10049 = vld [vmem:[#allocation13 + $0xf80] sm:$0xff]
    %v10050 = vld [vmem:[#allocation13 + $0xf88] sm:$0xff]
    %v10051 = vld [vmem:[#allocation13 + $0xf90] sm:$0xff]
    %v10052 = vld [vmem:[#allocation13 + $0xf98] sm:$0xff]
    %v10053 = vld [vmem:[#allocation13 + $0xfa0] sm:$0xff]
    %v10054 = vld [vmem:[#allocation13 + $0xfa8] sm:$0xff]
    %v10055 = vld [vmem:[#allocation13 + $0xfb0] sm:$0xff]
    %v10056 = vld [vmem:[#allocation13 + $0xfb8] sm:$0xf]
    %v10057 = vld [vmem:[#allocation13 + $0xfbc] sm:$0xff]
    %v10058 = vld [vmem:[#allocation13 + $0xfc4] sm:$0xff]
    %v10059 = vld [vmem:[#allocation13 + $0xfcc] sm:$0xff]
    %v10060 = vld [vmem:[#allocation13 + $0xfd4] sm:$0xff]
    %v10061 = vld [vmem:[#allocation13 + $0xfdc] sm:$0xff]
    %v10062 = vld [vmem:[#allocation13 + $0xfe4] sm:$0xff]
    %v10063 = vld [vmem:[#allocation13 + $0xfec] sm:$0xff]
    %v10064 = vld [vmem:[#allocation13 + $0xff4] sm:$0xff]
    %v10065 = vld [vmem:[#allocation13 + $0xffc] sm:$0xff]
    %v10066 = vld [vmem:[#allocation13 + $0x1004] sm:$0xf]
    %v10067 = vld [vmem:[#allocation13 + $0x1008] sm:$0xff]
    %v10068 = vld [vmem:[#allocation13 + $0x1010] sm:$0xff]
    %v10069 = vld [vmem:[#allocation13 + $0x1018] sm:$0xff]
    %v10070 = vld [vmem:[#allocation13 + $0x1020] sm:$0xff]
    %v10071 = vld [vmem:[#allocation13 + $0x1028] sm:$0xff]
    %v10072 = vld [vmem:[#allocation13 + $0x1030] sm:$0xff]
    %v10073 = vld [vmem:[#allocation13 + $0x1038] sm:$0xff]
    %v10074 = vld [vmem:[#allocation13 + $0x1040] sm:$0xff]
    %v10075 = vld [vmem:[#allocation13 + $0x1048] sm:$0xff]
    %v10076 = vld [vmem:[#allocation13 + $0x1050] sm:$0xf]
    %v10077 = vld [vmem:[#allocation13 + $0x1054] sm:$0xff]
    %v10078 = vld [vmem:[#allocation13 + $0x105c] sm:$0xff]
    %v10079 = vld [vmem:[#allocation13 + $0x1064] sm:$0xff]
    %v10080 = vld [vmem:[#allocation13 + $0x106c] sm:$0xff]
    %v10081 = vld [vmem:[#allocation13 + $0x1074] sm:$0xff]
    %v10082 = vld [vmem:[#allocation13 + $0x107c] sm:$0xff]
    %v10083 = vld [vmem:[#allocation13 + $0x1084] sm:$0xff]
    %v10084 = vld [vmem:[#allocation13 + $0x108c] sm:$0xff]
    %v10085 = vld [vmem:[#allocation13 + $0x1094] sm:$0xff]
    %v10086 = vld [vmem:[#allocation13 + $0x109c] sm:$0xf]
    %v10087 = vld [vmem:[#allocation13 + $0x10a0] sm:$0xff]
    %v10088 = vld [vmem:[#allocation13 + $0x10a8] sm:$0xff]
    %v10089 = vld [vmem:[#allocation13 + $0x10b0] sm:$0xff]
    %v10090 = vld [vmem:[#allocation13 + $0x10b8] sm:$0xff]
    %v10091 = vld [vmem:[#allocation13 + $0x10c0] sm:$0xff]
    %v10092 = vld [vmem:[#allocation13 + $0x10c8] sm:$0xff]
    %v10093 = vld [vmem:[#allocation13 + $0x10d0] sm:$0xff]
    %v10094 = vld [vmem:[#allocation13 + $0x10d8] sm:$0xff]
    %v10095 = vld [vmem:[#allocation13 + $0x10e0] sm:$0xff]
    %v10096 = vld [vmem:[#allocation13 + $0x10e8] sm:$0xf]
    %v10097 = vld [vmem:[#allocation13 + $0x10ec] sm:$0xff]
    %v10098 = vld [vmem:[#allocation13 + $0x10f4] sm:$0xff]
    %v10099 = vld [vmem:[#allocation13 + $0x10fc] sm:$0xff]
    %v10100 = vld [vmem:[#allocation13 + $0x1104] sm:$0xff]
    %v10101 = vld [vmem:[#allocation13 + $0x110c] sm:$0xff]
    %v10102 = vld [vmem:[#allocation13 + $0x1114] sm:$0xff]
    %v10103 = vld [vmem:[#allocation13 + $0x111c] sm:$0xff]
    %v10104 = vld [vmem:[#allocation13 + $0x1124] sm:$0xff]
    %v10105 = vld [vmem:[#allocation13 + $0x112c] sm:$0xff]
    %v10106 = vld [vmem:[#allocation13 + $0x1134] sm:$0xf]
    %v10107 = vld [vmem:[#allocation13 + $0x1138] sm:$0xff]
    %v10108 = vld [vmem:[#allocation13 + $0x1140] sm:$0xff]
    %v10109 = vld [vmem:[#allocation13 + $0x1148] sm:$0xff]
    %v10110 = vld [vmem:[#allocation13 + $0x1150] sm:$0xff]
    %v10111 = vld [vmem:[#allocation13 + $0x1158] sm:$0xff]
    %v10112 = vld [vmem:[#allocation13 + $0x1160] sm:$0xff]
    %v10113 = vld [vmem:[#allocation13 + $0x1168] sm:$0xff]
    %v10114 = vld [vmem:[#allocation13 + $0x1170] sm:$0xff]
    %v10115 = vld [vmem:[#allocation13 + $0x1178] sm:$0xff]
    %v10116 = vld [vmem:[#allocation13 + $0x1180] sm:$0xf]
    %v10117 = vld [vmem:[#allocation13 + $0x1184] sm:$0xff]
    %v10118 = vld [vmem:[#allocation13 + $0x118c] sm:$0xff]
    %v10119 = vld [vmem:[#allocation13 + $0x1194] sm:$0xff]
    %v10120 = vld [vmem:[#allocation13 + $0x119c] sm:$0xff]
    %v10121 = vld [vmem:[#allocation13 + $0x11a4] sm:$0xff]
    %v10122 = vld [vmem:[#allocation13 + $0x11ac] sm:$0xff]
    %v10123 = vld [vmem:[#allocation13 + $0x11b4] sm:$0xff]
    %v10124 = vld [vmem:[#allocation13 + $0x11bc] sm:$0xff]
    %v10125 = vld [vmem:[#allocation13 + $0x11c4] sm:$0xff]
    %v10126 = vld [vmem:[#allocation13 + $0x11cc] sm:$0xf]
    %v10127 = vld [vmem:[#allocation13 + $0x11d0] sm:$0xff]
    %v10128 = vld [vmem:[#allocation13 + $0x11d8] sm:$0xff]
    %v10129 = vld [vmem:[#allocation13 + $0x11e0] sm:$0xff]
    %v10130 = vld [vmem:[#allocation13 + $0x11e8] sm:$0xff]
    %v10131 = vld [vmem:[#allocation13 + $0x11f0] sm:$0xff]
    %v10132 = vld [vmem:[#allocation13 + $0x11f8] sm:$0xff]
    %v10133 = vld [vmem:[#allocation13 + $0x1200] sm:$0xff]
    %v10134 = vld [vmem:[#allocation13 + $0x1208] sm:$0xff]
    %v10135 = vld [vmem:[#allocation13 + $0x1210] sm:$0xff]
    %v10136 = vld [vmem:[#allocation13 + $0x1218] sm:$0xf]
    %v10137 = vld [vmem:[#allocation13 + $0x121c] sm:$0xff]
    %v10138 = vld [vmem:[#allocation13 + $0x1224] sm:$0xff]
    %v10139 = vld [vmem:[#allocation13 + $0x122c] sm:$0xff]
    %v10140 = vld [vmem:[#allocation13 + $0x1234] sm:$0xff]
    %v10141 = vld [vmem:[#allocation13 + $0x123c] sm:$0xff]
    %v10142 = vld [vmem:[#allocation13 + $0x1244] sm:$0xff]
    %v10143 = vld [vmem:[#allocation13 + $0x124c] sm:$0xff]
    %v10144 = vld [vmem:[#allocation13 + $0x1254] sm:$0xff]
    %v10145 = vld [vmem:[#allocation13 + $0x125c] sm:$0xff]
    %v10146 = vld [vmem:[#allocation13 + $0x1264] sm:$0xf]
    %v10147 = vld [vmem:[#allocation13 + $0x1268] sm:$0xff]
    %v10148 = vld [vmem:[#allocation13 + $0x1270] sm:$0xff]
    %v10149 = vld [vmem:[#allocation13 + $0x1278] sm:$0xff]
    %v10150 = vld [vmem:[#allocation13 + $0x1280] sm:$0xff]
    %v10151 = vld [vmem:[#allocation13 + $0x1288] sm:$0xff]
    %v10152 = vld [vmem:[#allocation13 + $0x1290] sm:$0xff]
    %v10153 = vld [vmem:[#allocation13 + $0x1298] sm:$0xff]
    %v10154 = vld [vmem:[#allocation13 + $0x12a0] sm:$0xff]
    %v10155 = vld [vmem:[#allocation13 + $0x12a8] sm:$0xff]
    %v10156 = vld [vmem:[#allocation13 + $0x12b0] sm:$0xf]
    %v10157 = vld [vmem:[#allocation13 + $0x12b4] sm:$0xff]
    %v10158 = vld [vmem:[#allocation13 + $0x12bc] sm:$0xff]
    %v10159 = vld [vmem:[#allocation13 + $0x12c4] sm:$0xff]
    %v10160 = vld [vmem:[#allocation13 + $0x12cc] sm:$0xff]
    %v10161 = vld [vmem:[#allocation13 + $0x12d4] sm:$0xff]
    %v10162 = vld [vmem:[#allocation13 + $0x12dc] sm:$0xff]
    %v10163 = vld [vmem:[#allocation13 + $0x12e4] sm:$0xff]
    %v10164 = vld [vmem:[#allocation13 + $0x12ec] sm:$0xff]
    %v10165 = vld [vmem:[#allocation13 + $0x12f4] sm:$0xff]
    %v10166 = vld [vmem:[#allocation13 + $0x12fc] sm:$0xf]
    %v10167 = vld [vmem:[#allocation15 + $0x1a] sm:$0xff]
    %v10168 = vld [vmem:[#allocation15 + $0x22] sm:$0xff]
    %v10169 = vld [vmem:[#allocation15 + $0x2a] sm:$0x7]
    %v10173 = vlaneseq
    %v10174 = vshrl.u32 %v10173, 7
    %v10175 = vsub.s32 0, %v10174
    %v10176 = vrot.slane %v10167, %v10175
    %v10177 = vlaneseq
    %v10178 = vshrl.u32 %v10177, 7
    %v10179 = vsub.s32 1, %v10178
    %v10180 = vrot.slane %v10167, %v10179
    %v10181 = vlaneseq
    %v10182 = vshrl.u32 %v10181, 7
    %v10183 = vsub.s32 2, %v10182
    %v10184 = vrot.slane %v10167, %v10183
    %v10185 = vlaneseq
    %v10186 = vshrl.u32 %v10185, 7
    %v10187 = vsub.s32 3, %v10186
    %v10188 = vrot.slane %v10167, %v10187
    %v10189 = vlaneseq
    %v10190 = vshrl.u32 %v10189, 7
    %v10191 = vsub.s32 4, %v10190
    %v10192 = vrot.slane %v10167, %v10191
    %v10193 = vlaneseq
    %v10194 = vshrl.u32 %v10193, 7
    %v10195 = vsub.s32 5, %v10194
    %v10196 = vrot.slane %v10167, %v10195
    %v10197 = vlaneseq
    %v10198 = vshrl.u32 %v10197, 7
    %v10199 = vsub.s32 6, %v10198
    %v10200 = vrot.slane %v10167, %v10199
    %v10201 = vlaneseq
    %v10202 = vshrl.u32 %v10201, 7
    %v10203 = vsub.s32 7, %v10202
    %v10204 = vrot.slane %v10167, %v10203
    %v10205 = vlaneseq
    %v10206 = vshrl.u32 %v10205, 7
    %v10207 = vsub.s32 0, %v10206
    %v10208 = vrot.slane %v10168, %v10207
    %v10209 = vlaneseq
    %v10210 = vshrl.u32 %v10209, 7
    %v10211 = vsub.s32 1, %v10210
    %v10212 = vrot.slane %v10168, %v10211
    %v10213 = vlaneseq
    %v10214 = vshrl.u32 %v10213, 7
    %v10215 = vsub.s32 2, %v10214
    %v10216 = vrot.slane %v10168, %v10215
    %v10217 = vlaneseq
    %v10218 = vshrl.u32 %v10217, 7
    %v10219 = vsub.s32 3, %v10218
    %v10220 = vrot.slane %v10168, %v10219
    %v10221 = vlaneseq
    %v10222 = vshrl.u32 %v10221, 7
    %v10223 = vsub.s32 4, %v10222
    %v10224 = vrot.slane %v10168, %v10223
    %v10225 = vlaneseq
    %v10226 = vshrl.u32 %v10225, 7
    %v10227 = vsub.s32 5, %v10226
    %v10228 = vrot.slane %v10168, %v10227
    %v10229 = vlaneseq
    %v10230 = vshrl.u32 %v10229, 7
    %v10231 = vsub.s32 6, %v10230
    %v10232 = vrot.slane %v10168, %v10231
    %v10233 = vlaneseq
    %v10234 = vshrl.u32 %v10233, 7
    %v10235 = vsub.s32 7, %v10234
    %v10236 = vrot.slane %v10168, %v10235
    %v10237 = vlaneseq
    %v10238 = vshrl.u32 %v10237, 7
    %v10239 = vsub.s32 0, %v10238
    %v10240 = vrot.slane %v10169, %v10239
    %v10241 = vlaneseq
    %v10242 = vshrl.u32 %v10241, 7
    %v10243 = vsub.s32 1, %v10242
    %v10244 = vrot.slane %v10169, %v10243
    %v10245 = vlaneseq
    %v10246 = vshrl.u32 %v10245, 7
    %v10247 = vsub.s32 2, %v10246
    %v10248 = vrot.slane %v10169, %v10247
    %v10908 = vunpack.c.l.b16 %v9527
    %v10909 = vunpack.c.h.b16 %v9527
    %v10910 = vunpack.c.l.b16 %v9528
    %v10911 = vunpack.c.h.b16 %v9528
    %v10912 = vunpack.c.l.b16 %v9529
    %v10913 = vunpack.c.h.b16 %v9529
    %v10914 = vunpack.c.l.b16 %v9530
    %v10915 = vunpack.c.h.b16 %v9530
    %v10916 = vunpack.c.l.b16 %v9531
    %v10917 = vunpack.c.h.b16 %v9531
    %v10918 = vunpack.c.l.b16 %v9532
    %v10919 = vunpack.c.h.b16 %v9532
    %v10920 = vunpack.c.l.b16 %v9533
    %v10921 = vunpack.c.h.b16 %v9533
    %v10922 = vunpack.c.l.b16 %v9534
    %v10923 = vunpack.c.h.b16 %v9534
    %v10924 = vunpack.c.l.b16 %v9535
    %v10925 = vunpack.c.h.b16 %v9535
    %v10926 = vunpack.c.l.b16 %v9536
    %v10927 = vunpack.c.l.b16 %v9537
    %v10928 = vunpack.c.h.b16 %v9537
    %v10929 = vunpack.c.l.b16 %v9538
    %v10930 = vunpack.c.h.b16 %v9538
    %v10931 = vunpack.c.l.b16 %v9539
    %v10932 = vunpack.c.h.b16 %v9539
    %v10933 = vunpack.c.l.b16 %v9540
    %v10934 = vunpack.c.h.b16 %v9540
    %v10935 = vunpack.c.l.b16 %v9541
    %v10936 = vunpack.c.h.b16 %v9541
    %v10937 = vunpack.c.l.b16 %v9542
    %v10938 = vunpack.c.h.b16 %v9542
    %v10939 = vunpack.c.l.b16 %v9543
    %v10940 = vunpack.c.h.b16 %v9543
    %v10941 = vunpack.c.l.b16 %v9544
    %v10942 = vunpack.c.h.b16 %v9544
    %v10943 = vunpack.c.l.b16 %v9545
    %v10944 = vunpack.c.h.b16 %v9545
    %v10945 = vunpack.c.l.b16 %v9546
    %v10946 = vunpack.c.l.b16 %v9547
    %v10947 = vunpack.c.h.b16 %v9547
    %v10948 = vunpack.c.l.b16 %v9548
    %v10949 = vunpack.c.h.b16 %v9548
    %v10950 = vunpack.c.l.b16 %v9549
    %v10951 = vunpack.c.h.b16 %v9549
    %v10952 = vunpack.c.l.b16 %v9550
    %v10953 = vunpack.c.h.b16 %v9550
    %v10954 = vunpack.c.l.b16 %v9551
    %v10955 = vunpack.c.h.b16 %v9551
    %v10956 = vunpack.c.l.b16 %v9552
    %v10957 = vunpack.c.h.b16 %v9552
    %v10958 = vunpack.c.l.b16 %v9553
    %v10959 = vunpack.c.h.b16 %v9553
    %v10960 = vunpack.c.l.b16 %v9554
    %v10961 = vunpack.c.h.b16 %v9554
    %v10962 = vunpack.c.l.b16 %v9555
    %v10963 = vunpack.c.h.b16 %v9555
    %v10964 = vunpack.c.l.b16 %v9556
    %v10965 = vunpack.c.l.b16 %v9557
    %v10966 = vunpack.c.h.b16 %v9557
    %v10967 = vunpack.c.l.b16 %v9558
    %v10968 = vunpack.c.h.b16 %v9558
    %v10969 = vunpack.c.l.b16 %v9559
    %v10970 = vunpack.c.h.b16 %v9559
    %v10971 = vunpack.c.l.b16 %v9560
    %v10972 = vunpack.c.h.b16 %v9560
    %v10973 = vunpack.c.l.b16 %v9561
    %v10974 = vunpack.c.h.b16 %v9561
    %v10975 = vunpack.c.l.b16 %v9562
    %v10976 = vunpack.c.h.b16 %v9562
    %v10977 = vunpack.c.l.b16 %v9563
    %v10978 = vunpack.c.h.b16 %v9563
    %v10979 = vunpack.c.l.b16 %v9564
    %v10980 = vunpack.c.h.b16 %v9564
    %v10981 = vunpack.c.l.b16 %v9565
    %v10982 = vunpack.c.h.b16 %v9565
    %v10983 = vunpack.c.l.b16 %v9566
    %v10984 = vunpack.c.l.b16 %v9567
    %v10985 = vunpack.c.h.b16 %v9567
    %v10986 = vunpack.c.l.b16 %v9568
    %v10987 = vunpack.c.h.b16 %v9568
    %v10988 = vunpack.c.l.b16 %v9569
    %v10989 = vunpack.c.h.b16 %v9569
    %v10990 = vunpack.c.l.b16 %v9570
    %v10991 = vunpack.c.h.b16 %v9570
    %v10992 = vunpack.c.l.b16 %v9571
    %v10993 = vunpack.c.h.b16 %v9571
    %v10994 = vunpack.c.l.b16 %v9572
    %v10995 = vunpack.c.h.b16 %v9572
    %v10996 = vunpack.c.l.b16 %v9573
    %v10997 = vunpack.c.h.b16 %v9573
    %v10998 = vunpack.c.l.b16 %v9574
    %v10999 = vunpack.c.h.b16 %v9574
    %v11000 = vunpack.c.l.b16 %v9575
    %v11001 = vunpack.c.h.b16 %v9575
    %v11002 = vunpack.c.l.b16 %v9576
    %v11003 = vunpack.c.l.b16 %v9577
    %v11004 = vunpack.c.h.b16 %v9577
    %v11005 = vunpack.c.l.b16 %v9578
    %v11006 = vunpack.c.h.b16 %v9578
    %v11007 = vunpack.c.l.b16 %v9579
    %v11008 = vunpack.c.h.b16 %v9579
    %v11009 = vunpack.c.l.b16 %v9580
    %v11010 = vunpack.c.h.b16 %v9580
    %v11011 = vunpack.c.l.b16 %v9581
    %v11012 = vunpack.c.h.b16 %v9581
    %v11013 = vunpack.c.l.b16 %v9582
    %v11014 = vunpack.c.h.b16 %v9582
    %v11015 = vunpack.c.l.b16 %v9583
    %v11016 = vunpack.c.h.b16 %v9583
    %v11017 = vunpack.c.l.b16 %v9584
    %v11018 = vunpack.c.h.b16 %v9584
    %v11019 = vunpack.c.l.b16 %v9585
    %v11020 = vunpack.c.h.b16 %v9585
    %v11021 = vunpack.c.l.b16 %v9586
    %v11022 = vunpack.c.l.b16 %v9587
    %v11023 = vunpack.c.h.b16 %v9587
    %v11024 = vunpack.c.l.b16 %v9588
    %v11025 = vunpack.c.h.b16 %v9588
    %v11026 = vunpack.c.l.b16 %v9589
    %v11027 = vunpack.c.h.b16 %v9589
    %v11028 = vunpack.c.l.b16 %v9590
    %v11029 = vunpack.c.h.b16 %v9590
    %v11030 = vunpack.c.l.b16 %v9591
    %v11031 = vunpack.c.h.b16 %v9591
    %v11032 = vunpack.c.l.b16 %v9592
    %v11033 = vunpack.c.h.b16 %v9592
    %v11034 = vunpack.c.l.b16 %v9593
    %v11035 = vunpack.c.h.b16 %v9593
    %v11036 = vunpack.c.l.b16 %v9594
    %v11037 = vunpack.c.h.b16 %v9594
    %v11038 = vunpack.c.l.b16 %v9595
    %v11039 = vunpack.c.h.b16 %v9595
    %v11040 = vunpack.c.l.b16 %v9596
    %v11041 = vunpack.c.l.b16 %v9597
    %v11042 = vunpack.c.h.b16 %v9597
    %v11043 = vunpack.c.l.b16 %v9598
    %v11044 = vunpack.c.h.b16 %v9598
    %v11045 = vunpack.c.l.b16 %v9599
    %v11046 = vunpack.c.h.b16 %v9599
    %v11047 = vunpack.c.l.b16 %v9600
    %v11048 = vunpack.c.h.b16 %v9600
    %v11049 = vunpack.c.l.b16 %v9601
    %v11050 = vunpack.c.h.b16 %v9601
    %v11051 = vunpack.c.l.b16 %v9602
    %v11052 = vunpack.c.h.b16 %v9602
    %v11053 = vunpack.c.l.b16 %v9603
    %v11054 = vunpack.c.h.b16 %v9603
    %v11055 = vunpack.c.l.b16 %v9604
    %v11056 = vunpack.c.h.b16 %v9604
    %v11057 = vunpack.c.l.b16 %v9605
    %v11058 = vunpack.c.h.b16 %v9605
    %v11059 = vunpack.c.l.b16 %v9606
    %v11060 = vunpack.c.l.b16 %v9607
    %v11061 = vunpack.c.h.b16 %v9607
    %v11062 = vunpack.c.l.b16 %v9608
    %v11063 = vunpack.c.h.b16 %v9608
    %v11064 = vunpack.c.l.b16 %v9609
    %v11065 = vunpack.c.h.b16 %v9609
    %v11066 = vunpack.c.l.b16 %v9610
    %v11067 = vunpack.c.h.b16 %v9610
    %v11068 = vunpack.c.l.b16 %v9611
    %v11069 = vunpack.c.h.b16 %v9611
    %v11070 = vunpack.c.l.b16 %v9612
    %v11071 = vunpack.c.h.b16 %v9612
    %v11072 = vunpack.c.l.b16 %v9613
    %v11073 = vunpack.c.h.b16 %v9613
    %v11074 = vunpack.c.l.b16 %v9614
    %v11075 = vunpack.c.h.b16 %v9614
    %v11076 = vunpack.c.l.b16 %v9615
    %v11077 = vunpack.c.h.b16 %v9615
    %v11078 = vunpack.c.l.b16 %v9616
    %v11079 = vunpack.c.l.b16 %v9617
    %v11080 = vunpack.c.h.b16 %v9617
    %v11081 = vunpack.c.l.b16 %v9618
    %v11082 = vunpack.c.h.b16 %v9618
    %v11083 = vunpack.c.l.b16 %v9619
    %v11084 = vunpack.c.h.b16 %v9619
    %v11085 = vunpack.c.l.b16 %v9620
    %v11086 = vunpack.c.h.b16 %v9620
    %v11087 = vunpack.c.l.b16 %v9621
    %v11088 = vunpack.c.h.b16 %v9621
    %v11089 = vunpack.c.l.b16 %v9622
    %v11090 = vunpack.c.h.b16 %v9622
    %v11091 = vunpack.c.l.b16 %v9623
    %v11092 = vunpack.c.h.b16 %v9623
    %v11093 = vunpack.c.l.b16 %v9624
    %v11094 = vunpack.c.h.b16 %v9624
    %v11095 = vunpack.c.l.b16 %v9625
    %v11096 = vunpack.c.h.b16 %v9625
    %v11097 = vunpack.c.l.b16 %v9626
    %v11098 = vunpack.c.l.b16 %v9627
    %v11099 = vunpack.c.h.b16 %v9627
    %v11100 = vunpack.c.l.b16 %v9628
    %v11101 = vunpack.c.h.b16 %v9628
    %v11102 = vunpack.c.l.b16 %v9629
    %v11103 = vunpack.c.h.b16 %v9629
    %v11104 = vunpack.c.l.b16 %v9630
    %v11105 = vunpack.c.h.b16 %v9630
    %v11106 = vunpack.c.l.b16 %v9631
    %v11107 = vunpack.c.h.b16 %v9631
    %v11108 = vunpack.c.l.b16 %v9632
    %v11109 = vunpack.c.h.b16 %v9632
    %v11110 = vunpack.c.l.b16 %v9633
    %v11111 = vunpack.c.h.b16 %v9633
    %v11112 = vunpack.c.l.b16 %v9634
    %v11113 = vunpack.c.h.b16 %v9634
    %v11114 = vunpack.c.l.b16 %v9635
    %v11115 = vunpack.c.h.b16 %v9635
    %v11116 = vunpack.c.l.b16 %v9636
    %v11117 = vunpack.c.l.b16 %v9637
    %v11118 = vunpack.c.h.b16 %v9637
    %v11119 = vunpack.c.l.b16 %v9638
    %v11120 = vunpack.c.h.b16 %v9638
    %v11121 = vunpack.c.l.b16 %v9639
    %v11122 = vunpack.c.h.b16 %v9639
    %v11123 = vunpack.c.l.b16 %v9640
    %v11124 = vunpack.c.h.b16 %v9640
    %v11125 = vunpack.c.l.b16 %v9641
    %v11126 = vunpack.c.h.b16 %v9641
    %v11127 = vunpack.c.l.b16 %v9642
    %v11128 = vunpack.c.h.b16 %v9642
    %v11129 = vunpack.c.l.b16 %v9643
    %v11130 = vunpack.c.h.b16 %v9643
    %v11131 = vunpack.c.l.b16 %v9644
    %v11132 = vunpack.c.h.b16 %v9644
    %v11133 = vunpack.c.l.b16 %v9645
    %v11134 = vunpack.c.h.b16 %v9645
    %v11135 = vunpack.c.l.b16 %v9646
    %v11136 = vunpack.c.l.b16 %v9647
    %v11137 = vunpack.c.h.b16 %v9647
    %v11138 = vunpack.c.l.b16 %v9648
    %v11139 = vunpack.c.h.b16 %v9648
    %v11140 = vunpack.c.l.b16 %v9649
    %v11141 = vunpack.c.h.b16 %v9649
    %v11142 = vunpack.c.l.b16 %v9650
    %v11143 = vunpack.c.h.b16 %v9650
    %v11144 = vunpack.c.l.b16 %v9651
    %v11145 = vunpack.c.h.b16 %v9651
    %v11146 = vunpack.c.l.b16 %v9652
    %v11147 = vunpack.c.h.b16 %v9652
    %v11148 = vunpack.c.l.b16 %v9653
    %v11149 = vunpack.c.h.b16 %v9653
    %v11150 = vunpack.c.l.b16 %v9654
    %v11151 = vunpack.c.h.b16 %v9654
    %v11152 = vunpack.c.l.b16 %v9655
    %v11153 = vunpack.c.h.b16 %v9655
    %v11154 = vunpack.c.l.b16 %v9656
    %v11155 = vunpack.c.l.b16 %v9657
    %v11156 = vunpack.c.h.b16 %v9657
    %v11157 = vunpack.c.l.b16 %v9658
    %v11158 = vunpack.c.h.b16 %v9658
    %v11159 = vunpack.c.l.b16 %v9659
    %v11160 = vunpack.c.h.b16 %v9659
    %v11161 = vunpack.c.l.b16 %v9660
    %v11162 = vunpack.c.h.b16 %v9660
    %v11163 = vunpack.c.l.b16 %v9661
    %v11164 = vunpack.c.h.b16 %v9661
    %v11165 = vunpack.c.l.b16 %v9662
    %v11166 = vunpack.c.h.b16 %v9662
    %v11167 = vunpack.c.l.b16 %v9663
    %v11168 = vunpack.c.h.b16 %v9663
    %v11169 = vunpack.c.l.b16 %v9664
    %v11170 = vunpack.c.h.b16 %v9664
    %v11171 = vunpack.c.l.b16 %v9665
    %v11172 = vunpack.c.h.b16 %v9665
    %v11173 = vunpack.c.l.b16 %v9666
    %v11174 = vunpack.c.l.b16 %v9667
    %v11175 = vunpack.c.h.b16 %v9667
    %v11176 = vunpack.c.l.b16 %v9668
    %v11177 = vunpack.c.h.b16 %v9668
    %v11178 = vunpack.c.l.b16 %v9669
    %v11179 = vunpack.c.h.b16 %v9669
    %v11180 = vunpack.c.l.b16 %v9670
    %v11181 = vunpack.c.h.b16 %v9670
    %v11182 = vunpack.c.l.b16 %v9671
    %v11183 = vunpack.c.h.b16 %v9671
    %v11184 = vunpack.c.l.b16 %v9672
    %v11185 = vunpack.c.h.b16 %v9672
    %v11186 = vunpack.c.l.b16 %v9673
    %v11187 = vunpack.c.h.b16 %v9673
    %v11188 = vunpack.c.l.b16 %v9674
    %v11189 = vunpack.c.h.b16 %v9674
    %v11190 = vunpack.c.l.b16 %v9675
    %v11191 = vunpack.c.h.b16 %v9675
    %v11192 = vunpack.c.l.b16 %v9676
    %v11193 = vunpack.c.l.b16 %v9677
    %v11194 = vunpack.c.h.b16 %v9677
    %v11195 = vunpack.c.l.b16 %v9678
    %v11196 = vunpack.c.h.b16 %v9678
    %v11197 = vunpack.c.l.b16 %v9679
    %v11198 = vunpack.c.h.b16 %v9679
    %v11199 = vunpack.c.l.b16 %v9680
    %v11200 = vunpack.c.h.b16 %v9680
    %v11201 = vunpack.c.l.b16 %v9681
    %v11202 = vunpack.c.h.b16 %v9681
    %v11203 = vunpack.c.l.b16 %v9682
    %v11204 = vunpack.c.h.b16 %v9682
    %v11205 = vunpack.c.l.b16 %v9683
    %v11206 = vunpack.c.h.b16 %v9683
    %v11207 = vunpack.c.l.b16 %v9684
    %v11208 = vunpack.c.h.b16 %v9684
    %v11209 = vunpack.c.l.b16 %v9685
    %v11210 = vunpack.c.h.b16 %v9685
    %v11211 = vunpack.c.l.b16 %v9686
    %v11212 = vunpack.c.l.b16 %v9687
    %v11213 = vunpack.c.h.b16 %v9687
    %v11214 = vunpack.c.l.b16 %v9688
    %v11215 = vunpack.c.h.b16 %v9688
    %v11216 = vunpack.c.l.b16 %v9689
    %v11217 = vunpack.c.h.b16 %v9689
    %v11218 = vunpack.c.l.b16 %v9690
    %v11219 = vunpack.c.h.b16 %v9690
    %v11220 = vunpack.c.l.b16 %v9691
    %v11221 = vunpack.c.h.b16 %v9691
    %v11222 = vunpack.c.l.b16 %v9692
    %v11223 = vunpack.c.h.b16 %v9692
    %v11224 = vunpack.c.l.b16 %v9693
    %v11225 = vunpack.c.h.b16 %v9693
    %v11226 = vunpack.c.l.b16 %v9694
    %v11227 = vunpack.c.h.b16 %v9694
    %v11228 = vunpack.c.l.b16 %v9695
    %v11229 = vunpack.c.h.b16 %v9695
    %v11230 = vunpack.c.l.b16 %v9696
    %v11231 = vunpack.c.l.b16 %v9697
    %v11232 = vunpack.c.h.b16 %v9697
    %v11233 = vunpack.c.l.b16 %v9698
    %v11234 = vunpack.c.h.b16 %v9698
    %v11235 = vunpack.c.l.b16 %v9699
    %v11236 = vunpack.c.h.b16 %v9699
    %v11237 = vunpack.c.l.b16 %v9700
    %v11238 = vunpack.c.h.b16 %v9700
    %v11239 = vunpack.c.l.b16 %v9701
    %v11240 = vunpack.c.h.b16 %v9701
    %v11241 = vunpack.c.l.b16 %v9702
    %v11242 = vunpack.c.h.b16 %v9702
    %v11243 = vunpack.c.l.b16 %v9703
    %v11244 = vunpack.c.h.b16 %v9703
    %v11245 = vunpack.c.l.b16 %v9704
    %v11246 = vunpack.c.h.b16 %v9704
    %v11247 = vunpack.c.l.b16 %v9705
    %v11248 = vunpack.c.h.b16 %v9705
    %v11249 = vunpack.c.l.b16 %v9706
    %v11250 = vunpack.c.l.b16 %v9707
    %v11251 = vunpack.c.h.b16 %v9707
    %v11252 = vunpack.c.l.b16 %v9708
    %v11253 = vunpack.c.h.b16 %v9708
    %v11254 = vunpack.c.l.b16 %v9709
    %v11255 = vunpack.c.h.b16 %v9709
    %v11256 = vunpack.c.l.b16 %v9710
    %v11257 = vunpack.c.h.b16 %v9710
    %v11258 = vunpack.c.l.b16 %v9711
    %v11259 = vunpack.c.h.b16 %v9711
    %v11260 = vunpack.c.l.b16 %v9712
    %v11261 = vunpack.c.h.b16 %v9712
    %v11262 = vunpack.c.l.b16 %v9713
    %v11263 = vunpack.c.h.b16 %v9713
    %v11264 = vunpack.c.l.b16 %v9714
    %v11265 = vunpack.c.h.b16 %v9714
    %v11266 = vunpack.c.l.b16 %v9715
    %v11267 = vunpack.c.h.b16 %v9715
    %v11268 = vunpack.c.l.b16 %v9716
    %v11269 = vunpack.c.l.b16 %v9717
    %v11270 = vunpack.c.h.b16 %v9717
    %v11271 = vunpack.c.l.b16 %v9718
    %v11272 = vunpack.c.h.b16 %v9718
    %v11273 = vunpack.c.l.b16 %v9719
    %v11274 = vunpack.c.h.b16 %v9719
    %v11275 = vunpack.c.l.b16 %v9720
    %v11276 = vunpack.c.h.b16 %v9720
    %v11277 = vunpack.c.l.b16 %v9721
    %v11278 = vunpack.c.h.b16 %v9721
    %v11279 = vunpack.c.l.b16 %v9722
    %v11280 = vunpack.c.h.b16 %v9722
    %v11281 = vunpack.c.l.b16 %v9723
    %v11282 = vunpack.c.h.b16 %v9723
    %v11283 = vunpack.c.l.b16 %v9724
    %v11284 = vunpack.c.h.b16 %v9724
    %v11285 = vunpack.c.l.b16 %v9725
    %v11286 = vunpack.c.h.b16 %v9725
    %v11287 = vunpack.c.l.b16 %v9726
    %v11288 = vunpack.c.l.b16 %v9727
    %v11289 = vunpack.c.h.b16 %v9727
    %v11290 = vunpack.c.l.b16 %v9728
    %v11291 = vunpack.c.h.b16 %v9728
    %v11292 = vunpack.c.l.b16 %v9729
    %v11293 = vunpack.c.h.b16 %v9729
    %v11294 = vunpack.c.l.b16 %v9730
    %v11295 = vunpack.c.h.b16 %v9730
    %v11296 = vunpack.c.l.b16 %v9731
    %v11297 = vunpack.c.h.b16 %v9731
    %v11298 = vunpack.c.l.b16 %v9732
    %v11299 = vunpack.c.h.b16 %v9732
    %v11300 = vunpack.c.l.b16 %v9733
    %v11301 = vunpack.c.h.b16 %v9733
    %v11302 = vunpack.c.l.b16 %v9734
    %v11303 = vunpack.c.h.b16 %v9734
    %v11304 = vunpack.c.l.b16 %v9735
    %v11305 = vunpack.c.h.b16 %v9735
    %v11306 = vunpack.c.l.b16 %v9736
    %v11307 = vunpack.c.l.b16 %v9737
    %v11308 = vunpack.c.h.b16 %v9737
    %v11309 = vunpack.c.l.b16 %v9738
    %v11310 = vunpack.c.h.b16 %v9738
    %v11311 = vunpack.c.l.b16 %v9739
    %v11312 = vunpack.c.h.b16 %v9739
    %v11313 = vunpack.c.l.b16 %v9740
    %v11314 = vunpack.c.h.b16 %v9740
    %v11315 = vunpack.c.l.b16 %v9741
    %v11316 = vunpack.c.h.b16 %v9741
    %v11317 = vunpack.c.l.b16 %v9742
    %v11318 = vunpack.c.h.b16 %v9742
    %v11319 = vunpack.c.l.b16 %v9743
    %v11320 = vunpack.c.h.b16 %v9743
    %v11321 = vunpack.c.l.b16 %v9744
    %v11322 = vunpack.c.h.b16 %v9744
    %v11323 = vunpack.c.l.b16 %v9745
    %v11324 = vunpack.c.h.b16 %v9745
    %v11325 = vunpack.c.l.b16 %v9746
    %v11326 = vunpack.c.l.b16 %v9747
    %v11327 = vunpack.c.h.b16 %v9747
    %v11328 = vunpack.c.l.b16 %v9748
    %v11329 = vunpack.c.h.b16 %v9748
    %v11330 = vunpack.c.l.b16 %v9749
    %v11331 = vunpack.c.h.b16 %v9749
    %v11332 = vunpack.c.l.b16 %v9750
    %v11333 = vunpack.c.h.b16 %v9750
    %v11334 = vunpack.c.l.b16 %v9751
    %v11335 = vunpack.c.h.b16 %v9751
    %v11336 = vunpack.c.l.b16 %v9752
    %v11337 = vunpack.c.h.b16 %v9752
    %v11338 = vunpack.c.l.b16 %v9753
    %v11339 = vunpack.c.h.b16 %v9753
    %v11340 = vunpack.c.l.b16 %v9754
    %v11341 = vunpack.c.h.b16 %v9754
    %v11342 = vunpack.c.l.b16 %v9755
    %v11343 = vunpack.c.h.b16 %v9755
    %v11344 = vunpack.c.l.b16 %v9756
    %v11345 = vunpack.c.l.b16 %v9757
    %v11346 = vunpack.c.h.b16 %v9757
    %v11347 = vunpack.c.l.b16 %v9758
    %v11348 = vunpack.c.h.b16 %v9758
    %v11349 = vunpack.c.l.b16 %v9759
    %v11350 = vunpack.c.h.b16 %v9759
    %v11351 = vunpack.c.l.b16 %v9760
    %v11352 = vunpack.c.h.b16 %v9760
    %v11353 = vunpack.c.l.b16 %v9761
    %v11354 = vunpack.c.h.b16 %v9761
    %v11355 = vunpack.c.l.b16 %v9762
    %v11356 = vunpack.c.h.b16 %v9762
    %v11357 = vunpack.c.l.b16 %v9763
    %v11358 = vunpack.c.h.b16 %v9763
    %v11359 = vunpack.c.l.b16 %v9764
    %v11360 = vunpack.c.h.b16 %v9764
    %v11361 = vunpack.c.l.b16 %v9765
    %v11362 = vunpack.c.h.b16 %v9765
    %v11363 = vunpack.c.l.b16 %v9766
    %v11364 = vunpack.c.l.b16 %v9767
    %v11365 = vunpack.c.h.b16 %v9767
    %v11366 = vunpack.c.l.b16 %v9768
    %v11367 = vunpack.c.h.b16 %v9768
    %v11368 = vunpack.c.l.b16 %v9769
    %v11369 = vunpack.c.h.b16 %v9769
    %v11370 = vunpack.c.l.b16 %v9770
    %v11371 = vunpack.c.h.b16 %v9770
    %v11372 = vunpack.c.l.b16 %v9771
    %v11373 = vunpack.c.h.b16 %v9771
    %v11374 = vunpack.c.l.b16 %v9772
    %v11375 = vunpack.c.h.b16 %v9772
    %v11376 = vunpack.c.l.b16 %v9773
    %v11377 = vunpack.c.h.b16 %v9773
    %v11378 = vunpack.c.l.b16 %v9774
    %v11379 = vunpack.c.h.b16 %v9774
    %v11380 = vunpack.c.l.b16 %v9775
    %v11381 = vunpack.c.h.b16 %v9775
    %v11382 = vunpack.c.l.b16 %v9776
    %v11383 = vunpack.c.l.b16 %v9777
    %v11384 = vunpack.c.h.b16 %v9777
    %v11385 = vunpack.c.l.b16 %v9778
    %v11386 = vunpack.c.h.b16 %v9778
    %v11387 = vunpack.c.l.b16 %v9779
    %v11388 = vunpack.c.h.b16 %v9779
    %v11389 = vunpack.c.l.b16 %v9780
    %v11390 = vunpack.c.h.b16 %v9780
    %v11391 = vunpack.c.l.b16 %v9781
    %v11392 = vunpack.c.h.b16 %v9781
    %v11393 = vunpack.c.l.b16 %v9782
    %v11394 = vunpack.c.h.b16 %v9782
    %v11395 = vunpack.c.l.b16 %v9783
    %v11396 = vunpack.c.h.b16 %v9783
    %v11397 = vunpack.c.l.b16 %v9784
    %v11398 = vunpack.c.h.b16 %v9784
    %v11399 = vunpack.c.l.b16 %v9785
    %v11400 = vunpack.c.h.b16 %v9785
    %v11401 = vunpack.c.l.b16 %v9786
    %v11402 = vunpack.c.l.b16 %v9787
    %v11403 = vunpack.c.h.b16 %v9787
    %v11404 = vunpack.c.l.b16 %v9788
    %v11405 = vunpack.c.h.b16 %v9788
    %v11406 = vunpack.c.l.b16 %v9789
    %v11407 = vunpack.c.h.b16 %v9789
    %v11408 = vunpack.c.l.b16 %v9790
    %v11409 = vunpack.c.h.b16 %v9790
    %v11410 = vunpack.c.l.b16 %v9791
    %v11411 = vunpack.c.h.b16 %v9791
    %v11412 = vunpack.c.l.b16 %v9792
    %v11413 = vunpack.c.h.b16 %v9792
    %v11414 = vunpack.c.l.b16 %v9793
    %v11415 = vunpack.c.h.b16 %v9793
    %v11416 = vunpack.c.l.b16 %v9794
    %v11417 = vunpack.c.h.b16 %v9794
    %v11418 = vunpack.c.l.b16 %v9795
    %v11419 = vunpack.c.h.b16 %v9795
    %v11420 = vunpack.c.l.b16 %v9796
    %v11421 = vunpack.c.l.b16 %v9797
    %v11422 = vunpack.c.h.b16 %v9797
    %v11423 = vunpack.c.l.b16 %v9798
    %v11424 = vunpack.c.h.b16 %v9798
    %v11425 = vunpack.c.l.b16 %v9799
    %v11426 = vunpack.c.h.b16 %v9799
    %v11427 = vunpack.c.l.b16 %v9800
    %v11428 = vunpack.c.h.b16 %v9800
    %v11429 = vunpack.c.l.b16 %v9801
    %v11430 = vunpack.c.h.b16 %v9801
    %v11431 = vunpack.c.l.b16 %v9802
    %v11432 = vunpack.c.h.b16 %v9802
    %v11433 = vunpack.c.l.b16 %v9803
    %v11434 = vunpack.c.h.b16 %v9803
    %v11435 = vunpack.c.l.b16 %v9804
    %v11436 = vunpack.c.h.b16 %v9804
    %v11437 = vunpack.c.l.b16 %v9805
    %v11438 = vunpack.c.h.b16 %v9805
    %v11439 = vunpack.c.l.b16 %v9806
    %v11440 = vunpack.c.l.b16 %v9807
    %v11441 = vunpack.c.h.b16 %v9807
    %v11442 = vunpack.c.l.b16 %v9808
    %v11443 = vunpack.c.h.b16 %v9808
    %v11444 = vunpack.c.l.b16 %v9809
    %v11445 = vunpack.c.h.b16 %v9809
    %v11446 = vunpack.c.l.b16 %v9810
    %v11447 = vunpack.c.h.b16 %v9810
    %v11448 = vunpack.c.l.b16 %v9811
    %v11449 = vunpack.c.h.b16 %v9811
    %v11450 = vunpack.c.l.b16 %v9812
    %v11451 = vunpack.c.h.b16 %v9812
    %v11452 = vunpack.c.l.b16 %v9813
    %v11453 = vunpack.c.h.b16 %v9813
    %v11454 = vunpack.c.l.b16 %v9814
    %v11455 = vunpack.c.h.b16 %v9814
    %v11456 = vunpack.c.l.b16 %v9815
    %v11457 = vunpack.c.h.b16 %v9815
    %v11458 = vunpack.c.l.b16 %v9816
    %v11459 = vunpack.c.l.b16 %v9817
    %v11460 = vunpack.c.h.b16 %v9817
    %v11461 = vunpack.c.l.b16 %v9818
    %v11462 = vunpack.c.h.b16 %v9818
    %v11463 = vunpack.c.l.b16 %v9819
    %v11464 = vunpack.c.h.b16 %v9819
    %v11465 = vunpack.c.l.b16 %v9820
    %v11466 = vunpack.c.h.b16 %v9820
    %v11467 = vunpack.c.l.b16 %v9821
    %v11468 = vunpack.c.h.b16 %v9821
    %v11469 = vunpack.c.l.b16 %v9822
    %v11470 = vunpack.c.h.b16 %v9822
    %v11471 = vunpack.c.l.b16 %v9823
    %v11472 = vunpack.c.h.b16 %v9823
    %v11473 = vunpack.c.l.b16 %v9824
    %v11474 = vunpack.c.h.b16 %v9824
    %v11475 = vunpack.c.l.b16 %v9825
    %v11476 = vunpack.c.h.b16 %v9825
    %v11477 = vunpack.c.l.b16 %v9826
    %v11478 = vunpack.c.l.b16 %v9827
    %v11479 = vunpack.c.h.b16 %v9827
    %v11480 = vunpack.c.l.b16 %v9828
    %v11481 = vunpack.c.h.b16 %v9828
    %v11482 = vunpack.c.l.b16 %v9829
    %v11483 = vunpack.c.h.b16 %v9829
    %v11484 = vunpack.c.l.b16 %v9830
    %v11485 = vunpack.c.h.b16 %v9830
    %v11486 = vunpack.c.l.b16 %v9831
    %v11487 = vunpack.c.h.b16 %v9831
    %v11488 = vunpack.c.l.b16 %v9832
    %v11489 = vunpack.c.h.b16 %v9832
    %v11490 = vunpack.c.l.b16 %v9833
    %v11491 = vunpack.c.h.b16 %v9833
    %v11492 = vunpack.c.l.b16 %v9834
    %v11493 = vunpack.c.h.b16 %v9834
    %v11494 = vunpack.c.l.b16 %v9835
    %v11495 = vunpack.c.h.b16 %v9835
    %v11496 = vunpack.c.l.b16 %v9836
    %v11497 = vunpack.c.l.b16 %v9837
    %v11498 = vunpack.c.h.b16 %v9837
    %v11499 = vunpack.c.l.b16 %v9838
    %v11500 = vunpack.c.h.b16 %v9838
    %v11501 = vunpack.c.l.b16 %v9839
    %v11502 = vunpack.c.h.b16 %v9839
    %v11503 = vunpack.c.l.b16 %v9840
    %v11504 = vunpack.c.h.b16 %v9840
    %v11505 = vunpack.c.l.b16 %v9841
    %v11506 = vunpack.c.h.b16 %v9841
    %v11507 = vunpack.c.l.b16 %v9842
    %v11508 = vunpack.c.h.b16 %v9842
    %v11509 = vunpack.c.l.b16 %v9843
    %v11510 = vunpack.c.h.b16 %v9843
    %v11511 = vunpack.c.l.b16 %v9844
    %v11512 = vunpack.c.h.b16 %v9844
    %v11513 = vunpack.c.l.b16 %v9845
    %v11514 = vunpack.c.h.b16 %v9845
    %v11515 = vunpack.c.l.b16 %v9846
    %v11516 = vunpack.c.l.b16 %v9847
    %v11517 = vunpack.c.h.b16 %v9847
    %v11518 = vunpack.c.l.b16 %v9848
    %v11519 = vunpack.c.h.b16 %v9848
    %v11520 = vunpack.c.l.b16 %v9849
    %v11521 = vunpack.c.h.b16 %v9849
    %v11522 = vunpack.c.l.b16 %v9850
    %v11523 = vunpack.c.h.b16 %v9850
    %v11524 = vunpack.c.l.b16 %v9851
    %v11525 = vunpack.c.h.b16 %v9851
    %v11526 = vunpack.c.l.b16 %v9852
    %v11527 = vunpack.c.h.b16 %v9852
    %v11528 = vunpack.c.l.b16 %v9853
    %v11529 = vunpack.c.h.b16 %v9853
    %v11530 = vunpack.c.l.b16 %v9854
    %v11531 = vunpack.c.h.b16 %v9854
    %v11532 = vunpack.c.l.b16 %v9855
    %v11533 = vunpack.c.h.b16 %v9855
    %v11534 = vunpack.c.l.b16 %v9856
    %v11535 = vunpack.c.l.b16 %v9857
    %v11536 = vunpack.c.h.b16 %v9857
    %v11537 = vunpack.c.l.b16 %v9858
    %v11538 = vunpack.c.h.b16 %v9858
    %v11539 = vunpack.c.l.b16 %v9859
    %v11540 = vunpack.c.h.b16 %v9859
    %v11541 = vunpack.c.l.b16 %v9860
    %v11542 = vunpack.c.h.b16 %v9860
    %v11543 = vunpack.c.l.b16 %v9861
    %v11544 = vunpack.c.h.b16 %v9861
    %v11545 = vunpack.c.l.b16 %v9862
    %v11546 = vunpack.c.h.b16 %v9862
    %v11547 = vunpack.c.l.b16 %v9863
    %v11548 = vunpack.c.h.b16 %v9863
    %v11549 = vunpack.c.l.b16 %v9864
    %v11550 = vunpack.c.h.b16 %v9864
    %v11551 = vunpack.c.l.b16 %v9865
    %v11552 = vunpack.c.h.b16 %v9865
    %v11553 = vunpack.c.l.b16 %v9866
    %v11554 = vunpack.c.l.b16 %v9867
    %v11555 = vunpack.c.h.b16 %v9867
    %v11556 = vunpack.c.l.b16 %v9868
    %v11557 = vunpack.c.h.b16 %v9868
    %v11558 = vunpack.c.l.b16 %v9869
    %v11559 = vunpack.c.h.b16 %v9869
    %v11560 = vunpack.c.l.b16 %v9870
    %v11561 = vunpack.c.h.b16 %v9870
    %v11562 = vunpack.c.l.b16 %v9871
    %v11563 = vunpack.c.h.b16 %v9871
    %v11564 = vunpack.c.l.b16 %v9872
    %v11565 = vunpack.c.h.b16 %v9872
    %v11566 = vunpack.c.l.b16 %v9873
    %v11567 = vunpack.c.h.b16 %v9873
    %v11568 = vunpack.c.l.b16 %v9874
    %v11569 = vunpack.c.h.b16 %v9874
    %v11570 = vunpack.c.l.b16 %v9875
    %v11571 = vunpack.c.h.b16 %v9875
    %v11572 = vunpack.c.l.b16 %v9876
    %v11573 = vunpack.c.l.b16 %v9877
    %v11574 = vunpack.c.h.b16 %v9877
    %v11575 = vunpack.c.l.b16 %v9878
    %v11576 = vunpack.c.h.b16 %v9878
    %v11577 = vunpack.c.l.b16 %v9879
    %v11578 = vunpack.c.h.b16 %v9879
    %v11579 = vunpack.c.l.b16 %v9880
    %v11580 = vunpack.c.h.b16 %v9880
    %v11581 = vunpack.c.l.b16 %v9881
    %v11582 = vunpack.c.h.b16 %v9881
    %v11583 = vunpack.c.l.b16 %v9882
    %v11584 = vunpack.c.h.b16 %v9882
    %v11585 = vunpack.c.l.b16 %v9883
    %v11586 = vunpack.c.h.b16 %v9883
    %v11587 = vunpack.c.l.b16 %v9884
    %v11588 = vunpack.c.h.b16 %v9884
    %v11589 = vunpack.c.l.b16 %v9885
    %v11590 = vunpack.c.h.b16 %v9885
    %v11591 = vunpack.c.l.b16 %v9886
    %v11592 = vunpack.c.l.b16 %v9887
    %v11593 = vunpack.c.h.b16 %v9887
    %v11594 = vunpack.c.l.b16 %v9888
    %v11595 = vunpack.c.h.b16 %v9888
    %v11596 = vunpack.c.l.b16 %v9889
    %v11597 = vunpack.c.h.b16 %v9889
    %v11598 = vunpack.c.l.b16 %v9890
    %v11599 = vunpack.c.h.b16 %v9890
    %v11600 = vunpack.c.l.b16 %v9891
    %v11601 = vunpack.c.h.b16 %v9891
    %v11602 = vunpack.c.l.b16 %v9892
    %v11603 = vunpack.c.h.b16 %v9892
    %v11604 = vunpack.c.l.b16 %v9893
    %v11605 = vunpack.c.h.b16 %v9893
    %v11606 = vunpack.c.l.b16 %v9894
    %v11607 = vunpack.c.h.b16 %v9894
    %v11608 = vunpack.c.l.b16 %v9895
    %v11609 = vunpack.c.h.b16 %v9895
    %v11610 = vunpack.c.l.b16 %v9896
    %v11611 = vunpack.c.l.b16 %v9897
    %v11612 = vunpack.c.h.b16 %v9897
    %v11613 = vunpack.c.l.b16 %v9898
    %v11614 = vunpack.c.h.b16 %v9898
    %v11615 = vunpack.c.l.b16 %v9899
    %v11616 = vunpack.c.h.b16 %v9899
    %v11617 = vunpack.c.l.b16 %v9900
    %v11618 = vunpack.c.h.b16 %v9900
    %v11619 = vunpack.c.l.b16 %v9901
    %v11620 = vunpack.c.h.b16 %v9901
    %v11621 = vunpack.c.l.b16 %v9902
    %v11622 = vunpack.c.h.b16 %v9902
    %v11623 = vunpack.c.l.b16 %v9903
    %v11624 = vunpack.c.h.b16 %v9903
    %v11625 = vunpack.c.l.b16 %v9904
    %v11626 = vunpack.c.h.b16 %v9904
    %v11627 = vunpack.c.l.b16 %v9905
    %v11628 = vunpack.c.h.b16 %v9905
    %v11629 = vunpack.c.l.b16 %v9906
    %v11630 = vunpack.c.l.b16 %v9907
    %v11631 = vunpack.c.h.b16 %v9907
    %v11632 = vunpack.c.l.b16 %v9908
    %v11633 = vunpack.c.h.b16 %v9908
    %v11634 = vunpack.c.l.b16 %v9909
    %v11635 = vunpack.c.h.b16 %v9909
    %v11636 = vunpack.c.l.b16 %v9910
    %v11637 = vunpack.c.h.b16 %v9910
    %v11638 = vunpack.c.l.b16 %v9911
    %v11639 = vunpack.c.h.b16 %v9911
    %v11640 = vunpack.c.l.b16 %v9912
    %v11641 = vunpack.c.h.b16 %v9912
    %v11642 = vunpack.c.l.b16 %v9913
    %v11643 = vunpack.c.h.b16 %v9913
    %v11644 = vunpack.c.l.b16 %v9914
    %v11645 = vunpack.c.h.b16 %v9914
    %v11646 = vunpack.c.l.b16 %v9915
    %v11647 = vunpack.c.h.b16 %v9915
    %v11648 = vunpack.c.l.b16 %v9916
    %v11649 = vunpack.c.l.b16 %v9917
    %v11650 = vunpack.c.h.b16 %v9917
    %v11651 = vunpack.c.l.b16 %v9918
    %v11652 = vunpack.c.h.b16 %v9918
    %v11653 = vunpack.c.l.b16 %v9919
    %v11654 = vunpack.c.h.b16 %v9919
    %v11655 = vunpack.c.l.b16 %v9920
    %v11656 = vunpack.c.h.b16 %v9920
    %v11657 = vunpack.c.l.b16 %v9921
    %v11658 = vunpack.c.h.b16 %v9921
    %v11659 = vunpack.c.l.b16 %v9922
    %v11660 = vunpack.c.h.b16 %v9922
    %v11661 = vunpack.c.l.b16 %v9923
    %v11662 = vunpack.c.h.b16 %v9923
    %v11663 = vunpack.c.l.b16 %v9924
    %v11664 = vunpack.c.h.b16 %v9924
    %v11665 = vunpack.c.l.b16 %v9925
    %v11666 = vunpack.c.h.b16 %v9925
    %v11667 = vunpack.c.l.b16 %v9926
    %v11668 = vunpack.c.l.b16 %v9927
    %v11669 = vunpack.c.h.b16 %v9927
    %v11670 = vunpack.c.l.b16 %v9928
    %v11671 = vunpack.c.h.b16 %v9928
    %v11672 = vunpack.c.l.b16 %v9929
    %v11673 = vunpack.c.h.b16 %v9929
    %v11674 = vunpack.c.l.b16 %v9930
    %v11675 = vunpack.c.h.b16 %v9930
    %v11676 = vunpack.c.l.b16 %v9931
    %v11677 = vunpack.c.h.b16 %v9931
    %v11678 = vunpack.c.l.b16 %v9932
    %v11679 = vunpack.c.h.b16 %v9932
    %v11680 = vunpack.c.l.b16 %v9933
    %v11681 = vunpack.c.h.b16 %v9933
    %v11682 = vunpack.c.l.b16 %v9934
    %v11683 = vunpack.c.h.b16 %v9934
    %v11684 = vunpack.c.l.b16 %v9935
    %v11685 = vunpack.c.h.b16 %v9935
    %v11686 = vunpack.c.l.b16 %v9936
    %v11687 = vunpack.c.l.b16 %v9937
    %v11688 = vunpack.c.h.b16 %v9937
    %v11689 = vunpack.c.l.b16 %v9938
    %v11690 = vunpack.c.h.b16 %v9938
    %v11691 = vunpack.c.l.b16 %v9939
    %v11692 = vunpack.c.h.b16 %v9939
    %v11693 = vunpack.c.l.b16 %v9940
    %v11694 = vunpack.c.h.b16 %v9940
    %v11695 = vunpack.c.l.b16 %v9941
    %v11696 = vunpack.c.h.b16 %v9941
    %v11697 = vunpack.c.l.b16 %v9942
    %v11698 = vunpack.c.h.b16 %v9942
    %v11699 = vunpack.c.l.b16 %v9943
    %v11700 = vunpack.c.h.b16 %v9943
    %v11701 = vunpack.c.l.b16 %v9944
    %v11702 = vunpack.c.h.b16 %v9944
    %v11703 = vunpack.c.l.b16 %v9945
    %v11704 = vunpack.c.h.b16 %v9945
    %v11705 = vunpack.c.l.b16 %v9946
    %v11706 = vunpack.c.l.b16 %v9947
    %v11707 = vunpack.c.h.b16 %v9947
    %v11708 = vunpack.c.l.b16 %v9948
    %v11709 = vunpack.c.h.b16 %v9948
    %v11710 = vunpack.c.l.b16 %v9949
    %v11711 = vunpack.c.h.b16 %v9949
    %v11712 = vunpack.c.l.b16 %v9950
    %v11713 = vunpack.c.h.b16 %v9950
    %v11714 = vunpack.c.l.b16 %v9951
    %v11715 = vunpack.c.h.b16 %v9951
    %v11716 = vunpack.c.l.b16 %v9952
    %v11717 = vunpack.c.h.b16 %v9952
    %v11718 = vunpack.c.l.b16 %v9953
    %v11719 = vunpack.c.h.b16 %v9953
    %v11720 = vunpack.c.l.b16 %v9954
    %v11721 = vunpack.c.h.b16 %v9954
    %v11722 = vunpack.c.l.b16 %v9955
    %v11723 = vunpack.c.h.b16 %v9955
    %v11724 = vunpack.c.l.b16 %v9956
    %v11725 = vunpack.c.l.b16 %v9957
    %v11726 = vunpack.c.h.b16 %v9957
    %v11727 = vunpack.c.l.b16 %v9958
    %v11728 = vunpack.c.h.b16 %v9958
    %v11729 = vunpack.c.l.b16 %v9959
    %v11730 = vunpack.c.h.b16 %v9959
    %v11731 = vunpack.c.l.b16 %v9960
    %v11732 = vunpack.c.h.b16 %v9960
    %v11733 = vunpack.c.l.b16 %v9961
    %v11734 = vunpack.c.h.b16 %v9961
    %v11735 = vunpack.c.l.b16 %v9962
    %v11736 = vunpack.c.h.b16 %v9962
    %v11737 = vunpack.c.l.b16 %v9963
    %v11738 = vunpack.c.h.b16 %v9963
    %v11739 = vunpack.c.l.b16 %v9964
    %v11740 = vunpack.c.h.b16 %v9964
    %v11741 = vunpack.c.l.b16 %v9965
    %v11742 = vunpack.c.h.b16 %v9965
    %v11743 = vunpack.c.l.b16 %v9966
    %v11744 = vunpack.c.l.b16 %v9967
    %v11745 = vunpack.c.h.b16 %v9967
    %v11746 = vunpack.c.l.b16 %v9968
    %v11747 = vunpack.c.h.b16 %v9968
    %v11748 = vunpack.c.l.b16 %v9969
    %v11749 = vunpack.c.h.b16 %v9969
    %v11750 = vunpack.c.l.b16 %v9970
    %v11751 = vunpack.c.h.b16 %v9970
    %v11752 = vunpack.c.l.b16 %v9971
    %v11753 = vunpack.c.h.b16 %v9971
    %v11754 = vunpack.c.l.b16 %v9972
    %v11755 = vunpack.c.h.b16 %v9972
    %v11756 = vunpack.c.l.b16 %v9973
    %v11757 = vunpack.c.h.b16 %v9973
    %v11758 = vunpack.c.l.b16 %v9974
    %v11759 = vunpack.c.h.b16 %v9974
    %v11760 = vunpack.c.l.b16 %v9975
    %v11761 = vunpack.c.h.b16 %v9975
    %v11762 = vunpack.c.l.b16 %v9976
    %v11763 = vunpack.c.l.b16 %v9977
    %v11764 = vunpack.c.h.b16 %v9977
    %v11765 = vunpack.c.l.b16 %v9978
    %v11766 = vunpack.c.h.b16 %v9978
    %v11767 = vunpack.c.l.b16 %v9979
    %v11768 = vunpack.c.h.b16 %v9979
    %v11769 = vunpack.c.l.b16 %v9980
    %v11770 = vunpack.c.h.b16 %v9980
    %v11771 = vunpack.c.l.b16 %v9981
    %v11772 = vunpack.c.h.b16 %v9981
    %v11773 = vunpack.c.l.b16 %v9982
    %v11774 = vunpack.c.h.b16 %v9982
    %v11775 = vunpack.c.l.b16 %v9983
    %v11776 = vunpack.c.h.b16 %v9983
    %v11777 = vunpack.c.l.b16 %v9984
    %v11778 = vunpack.c.h.b16 %v9984
    %v11779 = vunpack.c.l.b16 %v9985
    %v11780 = vunpack.c.h.b16 %v9985
    %v11781 = vunpack.c.l.b16 %v9986
    %v11782 = vunpack.c.l.b16 %v9987
    %v11783 = vunpack.c.h.b16 %v9987
    %v11784 = vunpack.c.l.b16 %v9988
    %v11785 = vunpack.c.h.b16 %v9988
    %v11786 = vunpack.c.l.b16 %v9989
    %v11787 = vunpack.c.h.b16 %v9989
    %v11788 = vunpack.c.l.b16 %v9990
    %v11789 = vunpack.c.h.b16 %v9990
    %v11790 = vunpack.c.l.b16 %v9991
    %v11791 = vunpack.c.h.b16 %v9991
    %v11792 = vunpack.c.l.b16 %v9992
    %v11793 = vunpack.c.h.b16 %v9992
    %v11794 = vunpack.c.l.b16 %v9993
    %v11795 = vunpack.c.h.b16 %v9993
    %v11796 = vunpack.c.l.b16 %v9994
    %v11797 = vunpack.c.h.b16 %v9994
    %v11798 = vunpack.c.l.b16 %v9995
    %v11799 = vunpack.c.h.b16 %v9995
    %v11800 = vunpack.c.l.b16 %v9996
    %v11801 = vunpack.c.l.b16 %v9997
    %v11802 = vunpack.c.h.b16 %v9997
    %v11803 = vunpack.c.l.b16 %v9998
    %v11804 = vunpack.c.h.b16 %v9998
    %v11805 = vunpack.c.l.b16 %v9999
    %v11806 = vunpack.c.h.b16 %v9999
    %v11807 = vunpack.c.l.b16 %v10000
    %v11808 = vunpack.c.h.b16 %v10000
    %v11809 = vunpack.c.l.b16 %v10001
    %v11810 = vunpack.c.h.b16 %v10001
    %v11811 = vunpack.c.l.b16 %v10002
    %v11812 = vunpack.c.h.b16 %v10002
    %v11813 = vunpack.c.l.b16 %v10003
    %v11814 = vunpack.c.h.b16 %v10003
    %v11815 = vunpack.c.l.b16 %v10004
    %v11816 = vunpack.c.h.b16 %v10004
    %v11817 = vunpack.c.l.b16 %v10005
    %v11818 = vunpack.c.h.b16 %v10005
    %v11819 = vunpack.c.l.b16 %v10006
    %v11820 = vunpack.c.l.b16 %v10007
    %v11821 = vunpack.c.h.b16 %v10007
    %v11822 = vunpack.c.l.b16 %v10008
    %v11823 = vunpack.c.h.b16 %v10008
    %v11824 = vunpack.c.l.b16 %v10009
    %v11825 = vunpack.c.h.b16 %v10009
    %v11826 = vunpack.c.l.b16 %v10010
    %v11827 = vunpack.c.h.b16 %v10010
    %v11828 = vunpack.c.l.b16 %v10011
    %v11829 = vunpack.c.h.b16 %v10011
    %v11830 = vunpack.c.l.b16 %v10012
    %v11831 = vunpack.c.h.b16 %v10012
    %v11832 = vunpack.c.l.b16 %v10013
    %v11833 = vunpack.c.h.b16 %v10013
    %v11834 = vunpack.c.l.b16 %v10014
    %v11835 = vunpack.c.h.b16 %v10014
    %v11836 = vunpack.c.l.b16 %v10015
    %v11837 = vunpack.c.h.b16 %v10015
    %v11838 = vunpack.c.l.b16 %v10016
    %v11839 = vunpack.c.l.b16 %v10017
    %v11840 = vunpack.c.h.b16 %v10017
    %v11841 = vunpack.c.l.b16 %v10018
    %v11842 = vunpack.c.h.b16 %v10018
    %v11843 = vunpack.c.l.b16 %v10019
    %v11844 = vunpack.c.h.b16 %v10019
    %v11845 = vunpack.c.l.b16 %v10020
    %v11846 = vunpack.c.h.b16 %v10020
    %v11847 = vunpack.c.l.b16 %v10021
    %v11848 = vunpack.c.h.b16 %v10021
    %v11849 = vunpack.c.l.b16 %v10022
    %v11850 = vunpack.c.h.b16 %v10022
    %v11851 = vunpack.c.l.b16 %v10023
    %v11852 = vunpack.c.h.b16 %v10023
    %v11853 = vunpack.c.l.b16 %v10024
    %v11854 = vunpack.c.h.b16 %v10024
    %v11855 = vunpack.c.l.b16 %v10025
    %v11856 = vunpack.c.h.b16 %v10025
    %v11857 = vunpack.c.l.b16 %v10026
    %v11858 = vunpack.c.l.b16 %v10027
    %v11859 = vunpack.c.h.b16 %v10027
    %v11860 = vunpack.c.l.b16 %v10028
    %v11861 = vunpack.c.h.b16 %v10028
    %v11862 = vunpack.c.l.b16 %v10029
    %v11863 = vunpack.c.h.b16 %v10029
    %v11864 = vunpack.c.l.b16 %v10030
    %v11865 = vunpack.c.h.b16 %v10030
    %v11866 = vunpack.c.l.b16 %v10031
    %v11867 = vunpack.c.h.b16 %v10031
    %v11868 = vunpack.c.l.b16 %v10032
    %v11869 = vunpack.c.h.b16 %v10032
    %v11870 = vunpack.c.l.b16 %v10033
    %v11871 = vunpack.c.h.b16 %v10033
    %v11872 = vunpack.c.l.b16 %v10034
    %v11873 = vunpack.c.h.b16 %v10034
    %v11874 = vunpack.c.l.b16 %v10035
    %v11875 = vunpack.c.h.b16 %v10035
    %v11876 = vunpack.c.l.b16 %v10036
    %v11877 = vunpack.c.l.b16 %v10037
    %v11878 = vunpack.c.h.b16 %v10037
    %v11879 = vunpack.c.l.b16 %v10038
    %v11880 = vunpack.c.h.b16 %v10038
    %v11881 = vunpack.c.l.b16 %v10039
    %v11882 = vunpack.c.h.b16 %v10039
    %v11883 = vunpack.c.l.b16 %v10040
    %v11884 = vunpack.c.h.b16 %v10040
    %v11885 = vunpack.c.l.b16 %v10041
    %v11886 = vunpack.c.h.b16 %v10041
    %v11887 = vunpack.c.l.b16 %v10042
    %v11888 = vunpack.c.h.b16 %v10042
    %v11889 = vunpack.c.l.b16 %v10043
    %v11890 = vunpack.c.h.b16 %v10043
    %v11891 = vunpack.c.l.b16 %v10044
    %v11892 = vunpack.c.h.b16 %v10044
    %v11893 = vunpack.c.l.b16 %v10045
    %v11894 = vunpack.c.h.b16 %v10045
    %v11895 = vunpack.c.l.b16 %v10046
    %v11896 = vunpack.c.l.b16 %v10047
    %v11897 = vunpack.c.h.b16 %v10047
    %v11898 = vunpack.c.l.b16 %v10048
    %v11899 = vunpack.c.h.b16 %v10048
    %v11900 = vunpack.c.l.b16 %v10049
    %v11901 = vunpack.c.h.b16 %v10049
    %v11902 = vunpack.c.l.b16 %v10050
    %v11903 = vunpack.c.h.b16 %v10050
    %v11904 = vunpack.c.l.b16 %v10051
    %v11905 = vunpack.c.h.b16 %v10051
    %v11906 = vunpack.c.l.b16 %v10052
    %v11907 = vunpack.c.h.b16 %v10052
    %v11908 = vunpack.c.l.b16 %v10053
    %v11909 = vunpack.c.h.b16 %v10053
    %v11910 = vunpack.c.l.b16 %v10054
    %v11911 = vunpack.c.h.b16 %v10054
    %v11912 = vunpack.c.l.b16 %v10055
    %v11913 = vunpack.c.h.b16 %v10055
    %v11914 = vunpack.c.l.b16 %v10056
    %v11915 = vunpack.c.l.b16 %v10057
    %v11916 = vunpack.c.h.b16 %v10057
    %v11917 = vunpack.c.l.b16 %v10058
    %v11918 = vunpack.c.h.b16 %v10058
    %v11919 = vunpack.c.l.b16 %v10059
    %v11920 = vunpack.c.h.b16 %v10059
    %v11921 = vunpack.c.l.b16 %v10060
    %v11922 = vunpack.c.h.b16 %v10060
    %v11923 = vunpack.c.l.b16 %v10061
    %v11924 = vunpack.c.h.b16 %v10061
    %v11925 = vunpack.c.l.b16 %v10062
    %v11926 = vunpack.c.h.b16 %v10062
    %v11927 = vunpack.c.l.b16 %v10063
    %v11928 = vunpack.c.h.b16 %v10063
    %v11929 = vunpack.c.l.b16 %v10064
    %v11930 = vunpack.c.h.b16 %v10064
    %v11931 = vunpack.c.l.b16 %v10065
    %v11932 = vunpack.c.h.b16 %v10065
    %v11933 = vunpack.c.l.b16 %v10066
    %v11934 = vunpack.c.l.b16 %v10067
    %v11935 = vunpack.c.h.b16 %v10067
    %v11936 = vunpack.c.l.b16 %v10068
    %v11937 = vunpack.c.h.b16 %v10068
    %v11938 = vunpack.c.l.b16 %v10069
    %v11939 = vunpack.c.h.b16 %v10069
    %v11940 = vunpack.c.l.b16 %v10070
    %v11941 = vunpack.c.h.b16 %v10070
    %v11942 = vunpack.c.l.b16 %v10071
    %v11943 = vunpack.c.h.b16 %v10071
    %v11944 = vunpack.c.l.b16 %v10072
    %v11945 = vunpack.c.h.b16 %v10072
    %v11946 = vunpack.c.l.b16 %v10073
    %v11947 = vunpack.c.h.b16 %v10073
    %v11948 = vunpack.c.l.b16 %v10074
    %v11949 = vunpack.c.h.b16 %v10074
    %v11950 = vunpack.c.l.b16 %v10075
    %v11951 = vunpack.c.h.b16 %v10075
    %v11952 = vunpack.c.l.b16 %v10076
    %v11953 = vunpack.c.l.b16 %v10077
    %v11954 = vunpack.c.h.b16 %v10077
    %v11955 = vunpack.c.l.b16 %v10078
    %v11956 = vunpack.c.h.b16 %v10078
    %v11957 = vunpack.c.l.b16 %v10079
    %v11958 = vunpack.c.h.b16 %v10079
    %v11959 = vunpack.c.l.b16 %v10080
    %v11960 = vunpack.c.h.b16 %v10080
    %v11961 = vunpack.c.l.b16 %v10081
    %v11962 = vunpack.c.h.b16 %v10081
    %v11963 = vunpack.c.l.b16 %v10082
    %v11964 = vunpack.c.h.b16 %v10082
    %v11965 = vunpack.c.l.b16 %v10083
    %v11966 = vunpack.c.h.b16 %v10083
    %v11967 = vunpack.c.l.b16 %v10084
    %v11968 = vunpack.c.h.b16 %v10084
    %v11969 = vunpack.c.l.b16 %v10085
    %v11970 = vunpack.c.h.b16 %v10085
    %v11971 = vunpack.c.l.b16 %v10086
    %v11972 = vunpack.c.l.b16 %v10087
    %v11973 = vunpack.c.h.b16 %v10087
    %v11974 = vunpack.c.l.b16 %v10088
    %v11975 = vunpack.c.h.b16 %v10088
    %v11976 = vunpack.c.l.b16 %v10089
    %v11977 = vunpack.c.h.b16 %v10089
    %v11978 = vunpack.c.l.b16 %v10090
    %v11979 = vunpack.c.h.b16 %v10090
    %v11980 = vunpack.c.l.b16 %v10091
    %v11981 = vunpack.c.h.b16 %v10091
    %v11982 = vunpack.c.l.b16 %v10092
    %v11983 = vunpack.c.h.b16 %v10092
    %v11984 = vunpack.c.l.b16 %v10093
    %v11985 = vunpack.c.h.b16 %v10093
    %v11986 = vunpack.c.l.b16 %v10094
    %v11987 = vunpack.c.h.b16 %v10094
    %v11988 = vunpack.c.l.b16 %v10095
    %v11989 = vunpack.c.h.b16 %v10095
    %v11990 = vunpack.c.l.b16 %v10096
    %v11991 = vunpack.c.l.b16 %v10097
    %v11992 = vunpack.c.h.b16 %v10097
    %v11993 = vunpack.c.l.b16 %v10098
    %v11994 = vunpack.c.h.b16 %v10098
    %v11995 = vunpack.c.l.b16 %v10099
    %v11996 = vunpack.c.h.b16 %v10099
    %v11997 = vunpack.c.l.b16 %v10100
    %v11998 = vunpack.c.h.b16 %v10100
    %v11999 = vunpack.c.l.b16 %v10101
    %v12000 = vunpack.c.h.b16 %v10101
    %v12001 = vunpack.c.l.b16 %v10102
    %v12002 = vunpack.c.h.b16 %v10102
    %v12003 = vunpack.c.l.b16 %v10103
    %v12004 = vunpack.c.h.b16 %v10103
    %v12005 = vunpack.c.l.b16 %v10104
    %v12006 = vunpack.c.h.b16 %v10104
    %v12007 = vunpack.c.l.b16 %v10105
    %v12008 = vunpack.c.h.b16 %v10105
    %v12009 = vunpack.c.l.b16 %v10106
    %v12010 = vunpack.c.l.b16 %v10107
    %v12011 = vunpack.c.h.b16 %v10107
    %v12012 = vunpack.c.l.b16 %v10108
    %v12013 = vunpack.c.h.b16 %v10108
    %v12014 = vunpack.c.l.b16 %v10109
    %v12015 = vunpack.c.h.b16 %v10109
    %v12016 = vunpack.c.l.b16 %v10110
    %v12017 = vunpack.c.h.b16 %v10110
    %v12018 = vunpack.c.l.b16 %v10111
    %v12019 = vunpack.c.h.b16 %v10111
    %v12020 = vunpack.c.l.b16 %v10112
    %v12021 = vunpack.c.h.b16 %v10112
    %v12022 = vunpack.c.l.b16 %v10113
    %v12023 = vunpack.c.h.b16 %v10113
    %v12024 = vunpack.c.l.b16 %v10114
    %v12025 = vunpack.c.h.b16 %v10114
    %v12026 = vunpack.c.l.b16 %v10115
    %v12027 = vunpack.c.h.b16 %v10115
    %v12028 = vunpack.c.l.b16 %v10116
    %v12029 = vunpack.c.l.b16 %v10117
    %v12030 = vunpack.c.h.b16 %v10117
    %v12031 = vunpack.c.l.b16 %v10118
    %v12032 = vunpack.c.h.b16 %v10118
    %v12033 = vunpack.c.l.b16 %v10119
    %v12034 = vunpack.c.h.b16 %v10119
    %v12035 = vunpack.c.l.b16 %v10120
    %v12036 = vunpack.c.h.b16 %v10120
    %v12037 = vunpack.c.l.b16 %v10121
    %v12038 = vunpack.c.h.b16 %v10121
    %v12039 = vunpack.c.l.b16 %v10122
    %v12040 = vunpack.c.h.b16 %v10122
    %v12041 = vunpack.c.l.b16 %v10123
    %v12042 = vunpack.c.h.b16 %v10123
    %v12043 = vunpack.c.l.b16 %v10124
    %v12044 = vunpack.c.h.b16 %v10124
    %v12045 = vunpack.c.l.b16 %v10125
    %v12046 = vunpack.c.h.b16 %v10125
    %v12047 = vunpack.c.l.b16 %v10126
    %v12048 = vunpack.c.l.b16 %v10127
    %v12049 = vunpack.c.h.b16 %v10127
    %v12050 = vunpack.c.l.b16 %v10128
    %v12051 = vunpack.c.h.b16 %v10128
    %v12052 = vunpack.c.l.b16 %v10129
    %v12053 = vunpack.c.h.b16 %v10129
    %v12054 = vunpack.c.l.b16 %v10130
    %v12055 = vunpack.c.h.b16 %v10130
    %v12056 = vunpack.c.l.b16 %v10131
    %v12057 = vunpack.c.h.b16 %v10131
    %v12058 = vunpack.c.l.b16 %v10132
    %v12059 = vunpack.c.h.b16 %v10132
    %v12060 = vunpack.c.l.b16 %v10133
    %v12061 = vunpack.c.h.b16 %v10133
    %v12062 = vunpack.c.l.b16 %v10134
    %v12063 = vunpack.c.h.b16 %v10134
    %v12064 = vunpack.c.l.b16 %v10135
    %v12065 = vunpack.c.h.b16 %v10135
    %v12066 = vunpack.c.l.b16 %v10136
    %v12067 = vunpack.c.l.b16 %v10137
    %v12068 = vunpack.c.h.b16 %v10137
    %v12069 = vunpack.c.l.b16 %v10138
    %v12070 = vunpack.c.h.b16 %v10138
    %v12071 = vunpack.c.l.b16 %v10139
    %v12072 = vunpack.c.h.b16 %v10139
    %v12073 = vunpack.c.l.b16 %v10140
    %v12074 = vunpack.c.h.b16 %v10140
    %v12075 = vunpack.c.l.b16 %v10141
    %v12076 = vunpack.c.h.b16 %v10141
    %v12077 = vunpack.c.l.b16 %v10142
    %v12078 = vunpack.c.h.b16 %v10142
    %v12079 = vunpack.c.l.b16 %v10143
    %v12080 = vunpack.c.h.b16 %v10143
    %v12081 = vunpack.c.l.b16 %v10144
    %v12082 = vunpack.c.h.b16 %v10144
    %v12083 = vunpack.c.l.b16 %v10145
    %v12084 = vunpack.c.h.b16 %v10145
    %v12085 = vunpack.c.l.b16 %v10146
    %v12086 = vunpack.c.l.b16 %v10147
    %v12087 = vunpack.c.h.b16 %v10147
    %v12088 = vunpack.c.l.b16 %v10148
    %v12089 = vunpack.c.h.b16 %v10148
    %v12090 = vunpack.c.l.b16 %v10149
    %v12091 = vunpack.c.h.b16 %v10149
    %v12092 = vunpack.c.l.b16 %v10150
    %v12093 = vunpack.c.h.b16 %v10150
    %v12094 = vunpack.c.l.b16 %v10151
    %v12095 = vunpack.c.h.b16 %v10151
    %v12096 = vunpack.c.l.b16 %v10152
    %v12097 = vunpack.c.h.b16 %v10152
    %v12098 = vunpack.c.l.b16 %v10153
    %v12099 = vunpack.c.h.b16 %v10153
    %v12100 = vunpack.c.l.b16 %v10154
    %v12101 = vunpack.c.h.b16 %v10154
    %v12102 = vunpack.c.l.b16 %v10155
    %v12103 = vunpack.c.h.b16 %v10155
    %v12104 = vunpack.c.l.b16 %v10156
    %v12105 = vunpack.c.l.b16 %v10157
    %v12106 = vunpack.c.h.b16 %v10157
    %v12107 = vunpack.c.l.b16 %v10158
    %v12108 = vunpack.c.h.b16 %v10158
    %v12109 = vunpack.c.l.b16 %v10159
    %v12110 = vunpack.c.h.b16 %v10159
    %v12111 = vunpack.c.l.b16 %v10160
    %v12112 = vunpack.c.h.b16 %v10160
    %v12113 = vunpack.c.l.b16 %v10161
    %v12114 = vunpack.c.h.b16 %v10161
    %v12115 = vunpack.c.l.b16 %v10162
    %v12116 = vunpack.c.h.b16 %v10162
    %v12117 = vunpack.c.l.b16 %v10163
    %v12118 = vunpack.c.h.b16 %v10163
    %v12119 = vunpack.c.l.b16 %v10164
    %v12120 = vunpack.c.h.b16 %v10164
    %v12121 = vunpack.c.l.b16 %v10165
    %v12122 = vunpack.c.h.b16 %v10165
    %v12123 = vunpack.c.l.b16 %v10166
    %v12124 = vpack.c.b16 %v10927, %v10908
    %v12125 = vpack.c.b16 %v10928, %v10909
    %v12126 = vpack.c.b16 %v10929, %v10910
    %v12127 = vpack.c.b16 %v10930, %v10911
    %v12128 = vpack.c.b16 %v10931, %v10912
    %v12129 = vpack.c.b16 %v10932, %v10913
    %v12130 = vpack.c.b16 %v10933, %v10914
    %v12131 = vpack.c.b16 %v10934, %v10915
    %v12132 = vpack.c.b16 %v10935, %v10916
    %v12133 = vpack.c.b16 %v10936, %v10917
    %v12134 = vpack.c.b16 %v10937, %v10918
    %v12135 = vpack.c.b16 %v10938, %v10919
    %v12136 = vpack.c.b16 %v10939, %v10920
    %v12137 = vpack.c.b16 %v10940, %v10921
    %v12138 = vpack.c.b16 %v10941, %v10922
    %v12139 = vpack.c.b16 %v10942, %v10923
    %v12140 = vpack.c.b16 %v10943, %v10924
    %v12141 = vpack.c.b16 %v10944, %v10925
    %v12142 = vpack.c.b16 %v10945, %v10926
    %v12143 = vpack.c.b16 %v10965, %v10946
    %v12144 = vpack.c.b16 %v10966, %v10947
    %v12145 = vpack.c.b16 %v10967, %v10948
    %v12146 = vpack.c.b16 %v10968, %v10949
    %v12147 = vpack.c.b16 %v10969, %v10950
    %v12148 = vpack.c.b16 %v10970, %v10951
    %v12149 = vpack.c.b16 %v10971, %v10952
    %v12150 = vpack.c.b16 %v10972, %v10953
    %v12151 = vpack.c.b16 %v10973, %v10954
    %v12152 = vpack.c.b16 %v10974, %v10955
    %v12153 = vpack.c.b16 %v10975, %v10956
    %v12154 = vpack.c.b16 %v10976, %v10957
    %v12155 = vpack.c.b16 %v10977, %v10958
    %v12156 = vpack.c.b16 %v10978, %v10959
    %v12157 = vpack.c.b16 %v10979, %v10960
    %v12158 = vpack.c.b16 %v10980, %v10961
    %v12159 = vpack.c.b16 %v10981, %v10962
    %v12160 = vpack.c.b16 %v10982, %v10963
    %v12161 = vpack.c.b16 %v10983, %v10964
    %v12162 = vpack.c.b16 %v11003, %v10984
    %v12163 = vpack.c.b16 %v11004, %v10985
    %v12164 = vpack.c.b16 %v11005, %v10986
    %v12165 = vpack.c.b16 %v11006, %v10987
    %v12166 = vpack.c.b16 %v11007, %v10988
    %v12167 = vpack.c.b16 %v11008, %v10989
    %v12168 = vpack.c.b16 %v11009, %v10990
    %v12169 = vpack.c.b16 %v11010, %v10991
    %v12170 = vpack.c.b16 %v11011, %v10992
    %v12171 = vpack.c.b16 %v11012, %v10993
    %v12172 = vpack.c.b16 %v11013, %v10994
    %v12173 = vpack.c.b16 %v11014, %v10995
    %v12174 = vpack.c.b16 %v11015, %v10996
    %v12175 = vpack.c.b16 %v11016, %v10997
    %v12176 = vpack.c.b16 %v11017, %v10998
    %v12177 = vpack.c.b16 %v11018, %v10999
    %v12178 = vpack.c.b16 %v11019, %v11000
    %v12179 = vpack.c.b16 %v11020, %v11001
    %v12180 = vpack.c.b16 %v11021, %v11002
    %v12181 = vpack.c.b16 %v11041, %v11022
    %v12182 = vpack.c.b16 %v11042, %v11023
    %v12183 = vpack.c.b16 %v11043, %v11024
    %v12184 = vpack.c.b16 %v11044, %v11025
    %v12185 = vpack.c.b16 %v11045, %v11026
    %v12186 = vpack.c.b16 %v11046, %v11027
    %v12187 = vpack.c.b16 %v11047, %v11028
    %v12188 = vpack.c.b16 %v11048, %v11029
    %v12189 = vpack.c.b16 %v11049, %v11030
    %v12190 = vpack.c.b16 %v11050, %v11031
    %v12191 = vpack.c.b16 %v11051, %v11032
    %v12192 = vpack.c.b16 %v11052, %v11033
    %v12193 = vpack.c.b16 %v11053, %v11034
    %v12194 = vpack.c.b16 %v11054, %v11035
    %v12195 = vpack.c.b16 %v11055, %v11036
    %v12196 = vpack.c.b16 %v11056, %v11037
    %v12197 = vpack.c.b16 %v11057, %v11038
    %v12198 = vpack.c.b16 %v11058, %v11039
    %v12199 = vpack.c.b16 %v11059, %v11040
    %v12200 = vpack.c.b16 %v11079, %v11060
    %v12201 = vpack.c.b16 %v11080, %v11061
    %v12202 = vpack.c.b16 %v11081, %v11062
    %v12203 = vpack.c.b16 %v11082, %v11063
    %v12204 = vpack.c.b16 %v11083, %v11064
    %v12205 = vpack.c.b16 %v11084, %v11065
    %v12206 = vpack.c.b16 %v11085, %v11066
    %v12207 = vpack.c.b16 %v11086, %v11067
    %v12208 = vpack.c.b16 %v11087, %v11068
    %v12209 = vpack.c.b16 %v11088, %v11069
    %v12210 = vpack.c.b16 %v11089, %v11070
    %v12211 = vpack.c.b16 %v11090, %v11071
    %v12212 = vpack.c.b16 %v11091, %v11072
    %v12213 = vpack.c.b16 %v11092, %v11073
    %v12214 = vpack.c.b16 %v11093, %v11074
    %v12215 = vpack.c.b16 %v11094, %v11075
    %v12216 = vpack.c.b16 %v11095, %v11076
    %v12217 = vpack.c.b16 %v11096, %v11077
    %v12218 = vpack.c.b16 %v11097, %v11078
    %v12219 = vpack.c.b16 %v11117, %v11098
    %v12220 = vpack.c.b16 %v11118, %v11099
    %v12221 = vpack.c.b16 %v11119, %v11100
    %v12222 = vpack.c.b16 %v11120, %v11101
    %v12223 = vpack.c.b16 %v11121, %v11102
    %v12224 = vpack.c.b16 %v11122, %v11103
    %v12225 = vpack.c.b16 %v11123, %v11104
    %v12226 = vpack.c.b16 %v11124, %v11105
    %v12227 = vpack.c.b16 %v11125, %v11106
    %v12228 = vpack.c.b16 %v11126, %v11107
    %v12229 = vpack.c.b16 %v11127, %v11108
    %v12230 = vpack.c.b16 %v11128, %v11109
    %v12231 = vpack.c.b16 %v11129, %v11110
    %v12232 = vpack.c.b16 %v11130, %v11111
    %v12233 = vpack.c.b16 %v11131, %v11112
    %v12234 = vpack.c.b16 %v11132, %v11113
    %v12235 = vpack.c.b16 %v11133, %v11114
    %v12236 = vpack.c.b16 %v11134, %v11115
    %v12237 = vpack.c.b16 %v11135, %v11116
    %v12238 = vpack.c.b16 %v11155, %v11136
    %v12239 = vpack.c.b16 %v11156, %v11137
    %v12240 = vpack.c.b16 %v11157, %v11138
    %v12241 = vpack.c.b16 %v11158, %v11139
    %v12242 = vpack.c.b16 %v11159, %v11140
    %v12243 = vpack.c.b16 %v11160, %v11141
    %v12244 = vpack.c.b16 %v11161, %v11142
    %v12245 = vpack.c.b16 %v11162, %v11143
    %v12246 = vpack.c.b16 %v11163, %v11144
    %v12247 = vpack.c.b16 %v11164, %v11145
    %v12248 = vpack.c.b16 %v11165, %v11146
    %v12249 = vpack.c.b16 %v11166, %v11147
    %v12250 = vpack.c.b16 %v11167, %v11148
    %v12251 = vpack.c.b16 %v11168, %v11149
    %v12252 = vpack.c.b16 %v11169, %v11150
    %v12253 = vpack.c.b16 %v11170, %v11151
    %v12254 = vpack.c.b16 %v11171, %v11152
    %v12255 = vpack.c.b16 %v11172, %v11153
    %v12256 = vpack.c.b16 %v11173, %v11154
    %v12257 = vpack.c.b16 %v11193, %v11174
    %v12258 = vpack.c.b16 %v11194, %v11175
    %v12259 = vpack.c.b16 %v11195, %v11176
    %v12260 = vpack.c.b16 %v11196, %v11177
    %v12261 = vpack.c.b16 %v11197, %v11178
    %v12262 = vpack.c.b16 %v11198, %v11179
    %v12263 = vpack.c.b16 %v11199, %v11180
    %v12264 = vpack.c.b16 %v11200, %v11181
    %v12265 = vpack.c.b16 %v11201, %v11182
    %v12266 = vpack.c.b16 %v11202, %v11183
    %v12267 = vpack.c.b16 %v11203, %v11184
    %v12268 = vpack.c.b16 %v11204, %v11185
    %v12269 = vpack.c.b16 %v11205, %v11186
    %v12270 = vpack.c.b16 %v11206, %v11187
    %v12271 = vpack.c.b16 %v11207, %v11188
    %v12272 = vpack.c.b16 %v11208, %v11189
    %v12273 = vpack.c.b16 %v11209, %v11190
    %v12274 = vpack.c.b16 %v11210, %v11191
    %v12275 = vpack.c.b16 %v11211, %v11192
    %v12276 = vpack.c.b16 %v11231, %v11212
    %v12277 = vpack.c.b16 %v11232, %v11213
    %v12278 = vpack.c.b16 %v11233, %v11214
    %v12279 = vpack.c.b16 %v11234, %v11215
    %v12280 = vpack.c.b16 %v11235, %v11216
    %v12281 = vpack.c.b16 %v11236, %v11217
    %v12282 = vpack.c.b16 %v11237, %v11218
    %v12283 = vpack.c.b16 %v11238, %v11219
    %v12284 = vpack.c.b16 %v11239, %v11220
    %v12285 = vpack.c.b16 %v11240, %v11221
    %v12286 = vpack.c.b16 %v11241, %v11222
    %v12287 = vpack.c.b16 %v11242, %v11223
    %v12288 = vpack.c.b16 %v11243, %v11224
    %v12289 = vpack.c.b16 %v11244, %v11225
    %v12290 = vpack.c.b16 %v11245, %v11226
    %v12291 = vpack.c.b16 %v11246, %v11227
    %v12292 = vpack.c.b16 %v11247, %v11228
    %v12293 = vpack.c.b16 %v11248, %v11229
    %v12294 = vpack.c.b16 %v11249, %v11230
    %v12295 = vpack.c.b16 %v11269, %v11250
    %v12296 = vpack.c.b16 %v11270, %v11251
    %v12297 = vpack.c.b16 %v11271, %v11252
    %v12298 = vpack.c.b16 %v11272, %v11253
    %v12299 = vpack.c.b16 %v11273, %v11254
    %v12300 = vpack.c.b16 %v11274, %v11255
    %v12301 = vpack.c.b16 %v11275, %v11256
    %v12302 = vpack.c.b16 %v11276, %v11257
    %v12303 = vpack.c.b16 %v11277, %v11258
    %v12304 = vpack.c.b16 %v11278, %v11259
    %v12305 = vpack.c.b16 %v11279, %v11260
    %v12306 = vpack.c.b16 %v11280, %v11261
    %v12307 = vpack.c.b16 %v11281, %v11262
    %v12308 = vpack.c.b16 %v11282, %v11263
    %v12309 = vpack.c.b16 %v11283, %v11264
    %v12310 = vpack.c.b16 %v11284, %v11265
    %v12311 = vpack.c.b16 %v11285, %v11266
    %v12312 = vpack.c.b16 %v11286, %v11267
    %v12313 = vpack.c.b16 %v11287, %v11268
    %v12314 = vpack.c.b16 %v11307, %v11288
    %v12315 = vpack.c.b16 %v11308, %v11289
    %v12316 = vpack.c.b16 %v11309, %v11290
    %v12317 = vpack.c.b16 %v11310, %v11291
    %v12318 = vpack.c.b16 %v11311, %v11292
    %v12319 = vpack.c.b16 %v11312, %v11293
    %v12320 = vpack.c.b16 %v11313, %v11294
    %v12321 = vpack.c.b16 %v11314, %v11295
    %v12322 = vpack.c.b16 %v11315, %v11296
    %v12323 = vpack.c.b16 %v11316, %v11297
    %v12324 = vpack.c.b16 %v11317, %v11298
    %v12325 = vpack.c.b16 %v11318, %v11299
    %v12326 = vpack.c.b16 %v11319, %v11300
    %v12327 = vpack.c.b16 %v11320, %v11301
    %v12328 = vpack.c.b16 %v11321, %v11302
    %v12329 = vpack.c.b16 %v11322, %v11303
    %v12330 = vpack.c.b16 %v11323, %v11304
    %v12331 = vpack.c.b16 %v11324, %v11305
    %v12332 = vpack.c.b16 %v11325, %v11306
    %v12333 = vpack.c.b16 %v11345, %v11326
    %v12334 = vpack.c.b16 %v11346, %v11327
    %v12335 = vpack.c.b16 %v11347, %v11328
    %v12336 = vpack.c.b16 %v11348, %v11329
    %v12337 = vpack.c.b16 %v11349, %v11330
    %v12338 = vpack.c.b16 %v11350, %v11331
    %v12339 = vpack.c.b16 %v11351, %v11332
    %v12340 = vpack.c.b16 %v11352, %v11333
    %v12341 = vpack.c.b16 %v11353, %v11334
    %v12342 = vpack.c.b16 %v11354, %v11335
    %v12343 = vpack.c.b16 %v11355, %v11336
    %v12344 = vpack.c.b16 %v11356, %v11337
    %v12345 = vpack.c.b16 %v11357, %v11338
    %v12346 = vpack.c.b16 %v11358, %v11339
    %v12347 = vpack.c.b16 %v11359, %v11340
    %v12348 = vpack.c.b16 %v11360, %v11341
    %v12349 = vpack.c.b16 %v11361, %v11342
    %v12350 = vpack.c.b16 %v11362, %v11343
    %v12351 = vpack.c.b16 %v11363, %v11344
    %v12352 = vpack.c.b16 %v11383, %v11364
    %v12353 = vpack.c.b16 %v11384, %v11365
    %v12354 = vpack.c.b16 %v11385, %v11366
    %v12355 = vpack.c.b16 %v11386, %v11367
    %v12356 = vpack.c.b16 %v11387, %v11368
    %v12357 = vpack.c.b16 %v11388, %v11369
    %v12358 = vpack.c.b16 %v11389, %v11370
    %v12359 = vpack.c.b16 %v11390, %v11371
    %v12360 = vpack.c.b16 %v11391, %v11372
    %v12361 = vpack.c.b16 %v11392, %v11373
    %v12362 = vpack.c.b16 %v11393, %v11374
    %v12363 = vpack.c.b16 %v11394, %v11375
    %v12364 = vpack.c.b16 %v11395, %v11376
    %v12365 = vpack.c.b16 %v11396, %v11377
    %v12366 = vpack.c.b16 %v11397, %v11378
    %v12367 = vpack.c.b16 %v11398, %v11379
    %v12368 = vpack.c.b16 %v11399, %v11380
    %v12369 = vpack.c.b16 %v11400, %v11381
    %v12370 = vpack.c.b16 %v11401, %v11382
    %v12371 = vpack.c.b16 %v11421, %v11402
    %v12372 = vpack.c.b16 %v11422, %v11403
    %v12373 = vpack.c.b16 %v11423, %v11404
    %v12374 = vpack.c.b16 %v11424, %v11405
    %v12375 = vpack.c.b16 %v11425, %v11406
    %v12376 = vpack.c.b16 %v11426, %v11407
    %v12377 = vpack.c.b16 %v11427, %v11408
    %v12378 = vpack.c.b16 %v11428, %v11409
    %v12379 = vpack.c.b16 %v11429, %v11410
    %v12380 = vpack.c.b16 %v11430, %v11411
    %v12381 = vpack.c.b16 %v11431, %v11412
    %v12382 = vpack.c.b16 %v11432, %v11413
    %v12383 = vpack.c.b16 %v11433, %v11414
    %v12384 = vpack.c.b16 %v11434, %v11415
    %v12385 = vpack.c.b16 %v11435, %v11416
    %v12386 = vpack.c.b16 %v11436, %v11417
    %v12387 = vpack.c.b16 %v11437, %v11418
    %v12388 = vpack.c.b16 %v11438, %v11419
    %v12389 = vpack.c.b16 %v11439, %v11420
    %v12390 = vpack.c.b16 %v11459, %v11440
    %v12391 = vpack.c.b16 %v11460, %v11441
    %v12392 = vpack.c.b16 %v11461, %v11442
    %v12393 = vpack.c.b16 %v11462, %v11443
    %v12394 = vpack.c.b16 %v11463, %v11444
    %v12395 = vpack.c.b16 %v11464, %v11445
    %v12396 = vpack.c.b16 %v11465, %v11446
    %v12397 = vpack.c.b16 %v11466, %v11447
    %v12398 = vpack.c.b16 %v11467, %v11448
    %v12399 = vpack.c.b16 %v11468, %v11449
    %v12400 = vpack.c.b16 %v11469, %v11450
    %v12401 = vpack.c.b16 %v11470, %v11451
    %v12402 = vpack.c.b16 %v11471, %v11452
    %v12403 = vpack.c.b16 %v11472, %v11453
    %v12404 = vpack.c.b16 %v11473, %v11454
    %v12405 = vpack.c.b16 %v11474, %v11455
    %v12406 = vpack.c.b16 %v11475, %v11456
    %v12407 = vpack.c.b16 %v11476, %v11457
    %v12408 = vpack.c.b16 %v11477, %v11458
    %v12409 = vpack.c.b16 %v11497, %v11478
    %v12410 = vpack.c.b16 %v11498, %v11479
    %v12411 = vpack.c.b16 %v11499, %v11480
    %v12412 = vpack.c.b16 %v11500, %v11481
    %v12413 = vpack.c.b16 %v11501, %v11482
    %v12414 = vpack.c.b16 %v11502, %v11483
    %v12415 = vpack.c.b16 %v11503, %v11484
    %v12416 = vpack.c.b16 %v11504, %v11485
    %v12417 = vpack.c.b16 %v11505, %v11486
    %v12418 = vpack.c.b16 %v11506, %v11487
    %v12419 = vpack.c.b16 %v11507, %v11488
    %v12420 = vpack.c.b16 %v11508, %v11489
    %v12421 = vpack.c.b16 %v11509, %v11490
    %v12422 = vpack.c.b16 %v11510, %v11491
    %v12423 = vpack.c.b16 %v11511, %v11492
    %v12424 = vpack.c.b16 %v11512, %v11493
    %v12425 = vpack.c.b16 %v11513, %v11494
    %v12426 = vpack.c.b16 %v11514, %v11495
    %v12427 = vpack.c.b16 %v11515, %v11496
    %v12428 = vpack.c.b16 %v11535, %v11516
    %v12429 = vpack.c.b16 %v11536, %v11517
    %v12430 = vpack.c.b16 %v11537, %v11518
    %v12431 = vpack.c.b16 %v11538, %v11519
    %v12432 = vpack.c.b16 %v11539, %v11520
    %v12433 = vpack.c.b16 %v11540, %v11521
    %v12434 = vpack.c.b16 %v11541, %v11522
    %v12435 = vpack.c.b16 %v11542, %v11523
    %v12436 = vpack.c.b16 %v11543, %v11524
    %v12437 = vpack.c.b16 %v11544, %v11525
    %v12438 = vpack.c.b16 %v11545, %v11526
    %v12439 = vpack.c.b16 %v11546, %v11527
    %v12440 = vpack.c.b16 %v11547, %v11528
    %v12441 = vpack.c.b16 %v11548, %v11529
    %v12442 = vpack.c.b16 %v11549, %v11530
    %v12443 = vpack.c.b16 %v11550, %v11531
    %v12444 = vpack.c.b16 %v11551, %v11532
    %v12445 = vpack.c.b16 %v11552, %v11533
    %v12446 = vpack.c.b16 %v11553, %v11534
    %v12447 = vpack.c.b16 %v11573, %v11554
    %v12448 = vpack.c.b16 %v11574, %v11555
    %v12449 = vpack.c.b16 %v11575, %v11556
    %v12450 = vpack.c.b16 %v11576, %v11557
    %v12451 = vpack.c.b16 %v11577, %v11558
    %v12452 = vpack.c.b16 %v11578, %v11559
    %v12453 = vpack.c.b16 %v11579, %v11560
    %v12454 = vpack.c.b16 %v11580, %v11561
    %v12455 = vpack.c.b16 %v11581, %v11562
    %v12456 = vpack.c.b16 %v11582, %v11563
    %v12457 = vpack.c.b16 %v11583, %v11564
    %v12458 = vpack.c.b16 %v11584, %v11565
    %v12459 = vpack.c.b16 %v11585, %v11566
    %v12460 = vpack.c.b16 %v11586, %v11567
    %v12461 = vpack.c.b16 %v11587, %v11568
    %v12462 = vpack.c.b16 %v11588, %v11569
    %v12463 = vpack.c.b16 %v11589, %v11570
    %v12464 = vpack.c.b16 %v11590, %v11571
    %v12465 = vpack.c.b16 %v11591, %v11572
    %v12466 = vpack.c.b16 %v11611, %v11592
    %v12467 = vpack.c.b16 %v11612, %v11593
    %v12468 = vpack.c.b16 %v11613, %v11594
    %v12469 = vpack.c.b16 %v11614, %v11595
    %v12470 = vpack.c.b16 %v11615, %v11596
    %v12471 = vpack.c.b16 %v11616, %v11597
    %v12472 = vpack.c.b16 %v11617, %v11598
    %v12473 = vpack.c.b16 %v11618, %v11599
    %v12474 = vpack.c.b16 %v11619, %v11600
    %v12475 = vpack.c.b16 %v11620, %v11601
    %v12476 = vpack.c.b16 %v11621, %v11602
    %v12477 = vpack.c.b16 %v11622, %v11603
    %v12478 = vpack.c.b16 %v11623, %v11604
    %v12479 = vpack.c.b16 %v11624, %v11605
    %v12480 = vpack.c.b16 %v11625, %v11606
    %v12481 = vpack.c.b16 %v11626, %v11607
    %v12482 = vpack.c.b16 %v11627, %v11608
    %v12483 = vpack.c.b16 %v11628, %v11609
    %v12484 = vpack.c.b16 %v11629, %v11610
    %v12485 = vpack.c.b16 %v11649, %v11630
    %v12486 = vpack.c.b16 %v11650, %v11631
    %v12487 = vpack.c.b16 %v11651, %v11632
    %v12488 = vpack.c.b16 %v11652, %v11633
    %v12489 = vpack.c.b16 %v11653, %v11634
    %v12490 = vpack.c.b16 %v11654, %v11635
    %v12491 = vpack.c.b16 %v11655, %v11636
    %v12492 = vpack.c.b16 %v11656, %v11637
    %v12493 = vpack.c.b16 %v11657, %v11638
    %v12494 = vpack.c.b16 %v11658, %v11639
    %v12495 = vpack.c.b16 %v11659, %v11640
    %v12496 = vpack.c.b16 %v11660, %v11641
    %v12497 = vpack.c.b16 %v11661, %v11642
    %v12498 = vpack.c.b16 %v11662, %v11643
    %v12499 = vpack.c.b16 %v11663, %v11644
    %v12500 = vpack.c.b16 %v11664, %v11645
    %v12501 = vpack.c.b16 %v11665, %v11646
    %v12502 = vpack.c.b16 %v11666, %v11647
    %v12503 = vpack.c.b16 %v11667, %v11648
    %v12504 = vpack.c.b16 %v11687, %v11668
    %v12505 = vpack.c.b16 %v11688, %v11669
    %v12506 = vpack.c.b16 %v11689, %v11670
    %v12507 = vpack.c.b16 %v11690, %v11671
    %v12508 = vpack.c.b16 %v11691, %v11672
    %v12509 = vpack.c.b16 %v11692, %v11673
    %v12510 = vpack.c.b16 %v11693, %v11674
    %v12511 = vpack.c.b16 %v11694, %v11675
    %v12512 = vpack.c.b16 %v11695, %v11676
    %v12513 = vpack.c.b16 %v11696, %v11677
    %v12514 = vpack.c.b16 %v11697, %v11678
    %v12515 = vpack.c.b16 %v11698, %v11679
    %v12516 = vpack.c.b16 %v11699, %v11680
    %v12517 = vpack.c.b16 %v11700, %v11681
    %v12518 = vpack.c.b16 %v11701, %v11682
    %v12519 = vpack.c.b16 %v11702, %v11683
    %v12520 = vpack.c.b16 %v11703, %v11684
    %v12521 = vpack.c.b16 %v11704, %v11685
    %v12522 = vpack.c.b16 %v11705, %v11686
    %v12523 = vpack.c.b16 %v11725, %v11706
    %v12524 = vpack.c.b16 %v11726, %v11707
    %v12525 = vpack.c.b16 %v11727, %v11708
    %v12526 = vpack.c.b16 %v11728, %v11709
    %v12527 = vpack.c.b16 %v11729, %v11710
    %v12528 = vpack.c.b16 %v11730, %v11711
    %v12529 = vpack.c.b16 %v11731, %v11712
    %v12530 = vpack.c.b16 %v11732, %v11713
    %v12531 = vpack.c.b16 %v11733, %v11714
    %v12532 = vpack.c.b16 %v11734, %v11715
    %v12533 = vpack.c.b16 %v11735, %v11716
    %v12534 = vpack.c.b16 %v11736, %v11717
    %v12535 = vpack.c.b16 %v11737, %v11718
    %v12536 = vpack.c.b16 %v11738, %v11719
    %v12537 = vpack.c.b16 %v11739, %v11720
    %v12538 = vpack.c.b16 %v11740, %v11721
    %v12539 = vpack.c.b16 %v11741, %v11722
    %v12540 = vpack.c.b16 %v11742, %v11723
    %v12541 = vpack.c.b16 %v11743, %v11724
    %v12542 = vpack.c.b16 %v11763, %v11744
    %v12543 = vpack.c.b16 %v11764, %v11745
    %v12544 = vpack.c.b16 %v11765, %v11746
    %v12545 = vpack.c.b16 %v11766, %v11747
    %v12546 = vpack.c.b16 %v11767, %v11748
    %v12547 = vpack.c.b16 %v11768, %v11749
    %v12548 = vpack.c.b16 %v11769, %v11750
    %v12549 = vpack.c.b16 %v11770, %v11751
    %v12550 = vpack.c.b16 %v11771, %v11752
    %v12551 = vpack.c.b16 %v11772, %v11753
    %v12552 = vpack.c.b16 %v11773, %v11754
    %v12553 = vpack.c.b16 %v11774, %v11755
    %v12554 = vpack.c.b16 %v11775, %v11756
    %v12555 = vpack.c.b16 %v11776, %v11757
    %v12556 = vpack.c.b16 %v11777, %v11758
    %v12557 = vpack.c.b16 %v11778, %v11759
    %v12558 = vpack.c.b16 %v11779, %v11760
    %v12559 = vpack.c.b16 %v11780, %v11761
    %v12560 = vpack.c.b16 %v11781, %v11762
    %v12561 = vpack.c.b16 %v11801, %v11782
    %v12562 = vpack.c.b16 %v11802, %v11783
    %v12563 = vpack.c.b16 %v11803, %v11784
    %v12564 = vpack.c.b16 %v11804, %v11785
    %v12565 = vpack.c.b16 %v11805, %v11786
    %v12566 = vpack.c.b16 %v11806, %v11787
    %v12567 = vpack.c.b16 %v11807, %v11788
    %v12568 = vpack.c.b16 %v11808, %v11789
    %v12569 = vpack.c.b16 %v11809, %v11790
    %v12570 = vpack.c.b16 %v11810, %v11791
    %v12571 = vpack.c.b16 %v11811, %v11792
    %v12572 = vpack.c.b16 %v11812, %v11793
    %v12573 = vpack.c.b16 %v11813, %v11794
    %v12574 = vpack.c.b16 %v11814, %v11795
    %v12575 = vpack.c.b16 %v11815, %v11796
    %v12576 = vpack.c.b16 %v11816, %v11797
    %v12577 = vpack.c.b16 %v11817, %v11798
    %v12578 = vpack.c.b16 %v11818, %v11799
    %v12579 = vpack.c.b16 %v11819, %v11800
    %v12580 = vpack.c.b16 %v11839, %v11820
    %v12581 = vpack.c.b16 %v11840, %v11821
    %v12582 = vpack.c.b16 %v11841, %v11822
    %v12583 = vpack.c.b16 %v11842, %v11823
    %v12584 = vpack.c.b16 %v11843, %v11824
    %v12585 = vpack.c.b16 %v11844, %v11825
    %v12586 = vpack.c.b16 %v11845, %v11826
    %v12587 = vpack.c.b16 %v11846, %v11827
    %v12588 = vpack.c.b16 %v11847, %v11828
    %v12589 = vpack.c.b16 %v11848, %v11829
    %v12590 = vpack.c.b16 %v11849, %v11830
    %v12591 = vpack.c.b16 %v11850, %v11831
    %v12592 = vpack.c.b16 %v11851, %v11832
    %v12593 = vpack.c.b16 %v11852, %v11833
    %v12594 = vpack.c.b16 %v11853, %v11834
    %v12595 = vpack.c.b16 %v11854, %v11835
    %v12596 = vpack.c.b16 %v11855, %v11836
    %v12597 = vpack.c.b16 %v11856, %v11837
    %v12598 = vpack.c.b16 %v11857, %v11838
    %v12599 = vpack.c.b16 %v11877, %v11858
    %v12600 = vpack.c.b16 %v11878, %v11859
    %v12601 = vpack.c.b16 %v11879, %v11860
    %v12602 = vpack.c.b16 %v11880, %v11861
    %v12603 = vpack.c.b16 %v11881, %v11862
    %v12604 = vpack.c.b16 %v11882, %v11863
    %v12605 = vpack.c.b16 %v11883, %v11864
    %v12606 = vpack.c.b16 %v11884, %v11865
    %v12607 = vpack.c.b16 %v11885, %v11866
    %v12608 = vpack.c.b16 %v11886, %v11867
    %v12609 = vpack.c.b16 %v11887, %v11868
    %v12610 = vpack.c.b16 %v11888, %v11869
    %v12611 = vpack.c.b16 %v11889, %v11870
    %v12612 = vpack.c.b16 %v11890, %v11871
    %v12613 = vpack.c.b16 %v11891, %v11872
    %v12614 = vpack.c.b16 %v11892, %v11873
    %v12615 = vpack.c.b16 %v11893, %v11874
    %v12616 = vpack.c.b16 %v11894, %v11875
    %v12617 = vpack.c.b16 %v11895, %v11876
    %v12618 = vpack.c.b16 %v11915, %v11896
    %v12619 = vpack.c.b16 %v11916, %v11897
    %v12620 = vpack.c.b16 %v11917, %v11898
    %v12621 = vpack.c.b16 %v11918, %v11899
    %v12622 = vpack.c.b16 %v11919, %v11900
    %v12623 = vpack.c.b16 %v11920, %v11901
    %v12624 = vpack.c.b16 %v11921, %v11902
    %v12625 = vpack.c.b16 %v11922, %v11903
    %v12626 = vpack.c.b16 %v11923, %v11904
    %v12627 = vpack.c.b16 %v11924, %v11905
    %v12628 = vpack.c.b16 %v11925, %v11906
    %v12629 = vpack.c.b16 %v11926, %v11907
    %v12630 = vpack.c.b16 %v11927, %v11908
    %v12631 = vpack.c.b16 %v11928, %v11909
    %v12632 = vpack.c.b16 %v11929, %v11910
    %v12633 = vpack.c.b16 %v11930, %v11911
    %v12634 = vpack.c.b16 %v11931, %v11912
    %v12635 = vpack.c.b16 %v11932, %v11913
    %v12636 = vpack.c.b16 %v11933, %v11914
    %v12637 = vpack.c.b16 %v11953, %v11934
    %v12638 = vpack.c.b16 %v11954, %v11935
    %v12639 = vpack.c.b16 %v11955, %v11936
    %v12640 = vpack.c.b16 %v11956, %v11937
    %v12641 = vpack.c.b16 %v11957, %v11938
    %v12642 = vpack.c.b16 %v11958, %v11939
    %v12643 = vpack.c.b16 %v11959, %v11940
    %v12644 = vpack.c.b16 %v11960, %v11941
    %v12645 = vpack.c.b16 %v11961, %v11942
    %v12646 = vpack.c.b16 %v11962, %v11943
    %v12647 = vpack.c.b16 %v11963, %v11944
    %v12648 = vpack.c.b16 %v11964, %v11945
    %v12649 = vpack.c.b16 %v11965, %v11946
    %v12650 = vpack.c.b16 %v11966, %v11947
    %v12651 = vpack.c.b16 %v11967, %v11948
    %v12652 = vpack.c.b16 %v11968, %v11949
    %v12653 = vpack.c.b16 %v11969, %v11950
    %v12654 = vpack.c.b16 %v11970, %v11951
    %v12655 = vpack.c.b16 %v11971, %v11952
    %v12656 = vpack.c.b16 %v11991, %v11972
    %v12657 = vpack.c.b16 %v11992, %v11973
    %v12658 = vpack.c.b16 %v11993, %v11974
    %v12659 = vpack.c.b16 %v11994, %v11975
    %v12660 = vpack.c.b16 %v11995, %v11976
    %v12661 = vpack.c.b16 %v11996, %v11977
    %v12662 = vpack.c.b16 %v11997, %v11978
    %v12663 = vpack.c.b16 %v11998, %v11979
    %v12664 = vpack.c.b16 %v11999, %v11980
    %v12665 = vpack.c.b16 %v12000, %v11981
    %v12666 = vpack.c.b16 %v12001, %v11982
    %v12667 = vpack.c.b16 %v12002, %v11983
    %v12668 = vpack.c.b16 %v12003, %v11984
    %v12669 = vpack.c.b16 %v12004, %v11985
    %v12670 = vpack.c.b16 %v12005, %v11986
    %v12671 = vpack.c.b16 %v12006, %v11987
    %v12672 = vpack.c.b16 %v12007, %v11988
    %v12673 = vpack.c.b16 %v12008, %v11989
    %v12674 = vpack.c.b16 %v12009, %v11990
    %v12675 = vpack.c.b16 %v12029, %v12010
    %v12676 = vpack.c.b16 %v12030, %v12011
    %v12677 = vpack.c.b16 %v12031, %v12012
    %v12678 = vpack.c.b16 %v12032, %v12013
    %v12679 = vpack.c.b16 %v12033, %v12014
    %v12680 = vpack.c.b16 %v12034, %v12015
    %v12681 = vpack.c.b16 %v12035, %v12016
    %v12682 = vpack.c.b16 %v12036, %v12017
    %v12683 = vpack.c.b16 %v12037, %v12018
    %v12684 = vpack.c.b16 %v12038, %v12019
    %v12685 = vpack.c.b16 %v12039, %v12020
    %v12686 = vpack.c.b16 %v12040, %v12021
    %v12687 = vpack.c.b16 %v12041, %v12022
    %v12688 = vpack.c.b16 %v12042, %v12023
    %v12689 = vpack.c.b16 %v12043, %v12024
    %v12690 = vpack.c.b16 %v12044, %v12025
    %v12691 = vpack.c.b16 %v12045, %v12026
    %v12692 = vpack.c.b16 %v12046, %v12027
    %v12693 = vpack.c.b16 %v12047, %v12028
    %v12694 = vpack.c.b16 %v12067, %v12048
    %v12695 = vpack.c.b16 %v12068, %v12049
    %v12696 = vpack.c.b16 %v12069, %v12050
    %v12697 = vpack.c.b16 %v12070, %v12051
    %v12698 = vpack.c.b16 %v12071, %v12052
    %v12699 = vpack.c.b16 %v12072, %v12053
    %v12700 = vpack.c.b16 %v12073, %v12054
    %v12701 = vpack.c.b16 %v12074, %v12055
    %v12702 = vpack.c.b16 %v12075, %v12056
    %v12703 = vpack.c.b16 %v12076, %v12057
    %v12704 = vpack.c.b16 %v12077, %v12058
    %v12705 = vpack.c.b16 %v12078, %v12059
    %v12706 = vpack.c.b16 %v12079, %v12060
    %v12707 = vpack.c.b16 %v12080, %v12061
    %v12708 = vpack.c.b16 %v12081, %v12062
    %v12709 = vpack.c.b16 %v12082, %v12063
    %v12710 = vpack.c.b16 %v12083, %v12064
    %v12711 = vpack.c.b16 %v12084, %v12065
    %v12712 = vpack.c.b16 %v12085, %v12066
    %v12713 = vpack.c.b16 %v12105, %v12086
    %v12714 = vpack.c.b16 %v12106, %v12087
    %v12715 = vpack.c.b16 %v12107, %v12088
    %v12716 = vpack.c.b16 %v12108, %v12089
    %v12717 = vpack.c.b16 %v12109, %v12090
    %v12718 = vpack.c.b16 %v12110, %v12091
    %v12719 = vpack.c.b16 %v12111, %v12092
    %v12720 = vpack.c.b16 %v12112, %v12093
    %v12721 = vpack.c.b16 %v12113, %v12094
    %v12722 = vpack.c.b16 %v12114, %v12095
    %v12723 = vpack.c.b16 %v12115, %v12096
    %v12724 = vpack.c.b16 %v12116, %v12097
    %v12725 = vpack.c.b16 %v12117, %v12098
    %v12726 = vpack.c.b16 %v12118, %v12099
    %v12727 = vpack.c.b16 %v12119, %v12100
    %v12728 = vpack.c.b16 %v12120, %v12101
    %v12729 = vpack.c.b16 %v12121, %v12102
    %v12730 = vpack.c.b16 %v12122, %v12103
    %v12731 = vpack.c.b16 %v12123, %v12104
    %13340 = vmatprep.subr.bf16.mxu0 %v12125
    %13341 = vmatpush1.bf16.msra.mxu0 %v12124
    %13342 = vmatprep.subr.bf16.mxu0 %v12144
    %13343 = vmatpush1.bf16.msra.mxu0 %v12143
    %13344 = vmatprep.subr.bf16.mxu0 %v12163
    %13345 = vmatpush1.bf16.msra.mxu0 %v12162
    %13346 = vmatprep.subr.bf16.mxu0 %v12182
    %13347 = vmatpush1.bf16.msra.mxu0 %v12181
    %13348 = vmatprep.subr.bf16.mxu0 %v12201
    %13349 = vmatpush1.bf16.msra.mxu0 %v12200
    %13350 = vmatprep.subr.bf16.mxu0 %v12220
    %13351 = vmatpush1.bf16.msra.mxu0 %v12219
    %13352 = vmatprep.subr.bf16.mxu0 %v12239
    %13353 = vmatpush1.bf16.msra.mxu0 %v12238
    %13354 = vmatprep.subr.bf16.mxu0 %v12258
    %13355 = vmatpush1.bf16.msra.mxu0 %v12257
    %13356 = vmatprep.subr.bf16.mxu0 %v12277
    %13357 = vmatpush1.bf16.msra.mxu0 %v12276
    %13358 = vmatprep.subr.bf16.mxu0 %v12296
    %13359 = vmatpush1.bf16.msra.mxu0 %v12295
    %13360 = vmatprep.subr.bf16.mxu0 %v12315
    %13361 = vmatpush1.bf16.msra.mxu0 %v12314
    %13362 = vmatprep.subr.bf16.mxu0 %v12334
    %13363 = vmatpush1.bf16.msra.mxu0 %v12333
    %13364 = vmatprep.subr.bf16.mxu0 %v12353
    %13365 = vmatpush1.bf16.msra.mxu0 %v12352
    %13366 = vmatprep.subr.bf16.mxu0 %v12372
    %13367 = vmatpush1.bf16.msra.mxu0 %v12371
    %13368 = vmatprep.subr.bf16.mxu0 %v12391
    %13369 = vmatpush1.bf16.msra.mxu0 %v12390
    %13370 = vmatprep.subr.bf16.mxu0 %v12410
    %13371 = vmatpush1.bf16.msra.mxu0 %v12409
    %13372 = vmatprep.mubr.bf16.mxu0 %v9524
    %13373 = vmatmul.mubr.bf16.gmra.mrb[0].mxu0 %v9523
    %v13374 = vpop.f32.mrb[0].mxu0
    %v13375 = vadd.f32 %v10176, %v13374
    %v13376 = vpop.f32.mrb[0].mxu0
    %v13377 = vadd.f32 %v10180, %v13376
    %v13378 = vpop.f32.mrb[0].mxu0
    %v13379 = vadd.f32 %v10176, %v13378
    %v13380 = vpop.f32.mrb[0].mxu0
    %v13381 = vadd.f32 %v10180, %v13380
    %13382 = vdwg.mxu0
    %13383 = vmatprep.subr.bf16.mxu0 %v12429
    %13384 = vmatpush1.bf16.msra.mxu0 %v12428
    %13385 = vmatprep.subr.bf16.mxu0 %v12448
    %13386 = vmatpush1.bf16.msra.mxu0 %v12447
    %13387 = vmatprep.subr.bf16.mxu0 %v12467
    %13388 = vmatpush1.bf16.msra.mxu0 %v12466
    %13389 = vmatprep.subr.bf16.mxu0 %v12486
    %13390 = vmatpush1.bf16.msra.mxu0 %v12485
    %13391 = vmatprep.subr.bf16.mxu0 %v12505
    %13392 = vmatpush1.bf16.msra.mxu0 %v12504
    %13393 = vmatprep.subr.bf16.mxu0 %v12524
    %13394 = vmatpush1.bf16.msra.mxu0 %v12523
    %13395 = vmatprep.subr.bf16.mxu0 %v12543
    %13396 = vmatpush1.bf16.msra.mxu0 %v12542
    %13397 = vmatprep.subr.bf16.mxu0 %v12562
    %13398 = vmatpush1.bf16.msra.mxu0 %v12561
    %13399 = vmatprep.subr.bf16.mxu0 %v12581
    %13400 = vmatpush1.bf16.msra.mxu0 %v12580
    %13401 = vmatprep.subr.bf16.mxu0 %v12600
    %13402 = vmatpush1.bf16.msra.mxu0 %v12599
    %13403 = vmatprep.subr.bf16.mxu0 %v12619
    %13404 = vmatpush1.bf16.msra.mxu0 %v12618
    %13405 = vmatprep.subr.bf16.mxu0 %v12638
    %13406 = vmatpush1.bf16.msra.mxu0 %v12637
    %13407 = vmatprep.subr.bf16.mxu0 %v12657
    %13408 = vmatpush1.bf16.msra.mxu0 %v12656
    %13409 = vmatprep.subr.bf16.mxu0 %v12676
    %13410 = vmatpush1.bf16.msra.mxu0 %v12675
    %13411 = vmatprep.subr.bf16.mxu0 %v12695
    %13412 = vmatpush1.bf16.msra.mxu0 %v12694
    %13413 = vmatprep.subr.bf16.mxu0 %v12714
    %13414 = vmatpush1.bf16.msra.mxu0 %v12713
    %13415 = vmatprep.mubr.bf16.mxu0 %v9526
    %13416 = vmatmul.mubr.bf16.gmra.mrb[0].mxu0 %v9525
    %v13417 = vpop.f32.mrb[0].mxu0
    %v13418 = vadd.f32 %v13375, %v13417
    %v13419 = vpop.f32.mrb[0].mxu0
    %v13420 = vadd.f32 %v13377, %v13419
    %v13421 = vpop.f32.mrb[0].mxu0
    %v13422 = vadd.f32 %v13379, %v13421
    %v13423 = vpop.f32.mrb[0].mxu0
    %v13424 = vadd.f32 %v13381, %v13423
    %13425 = vdwg.mxu0
    %13426 = vmatprep.subr.bf16.mxu0 %v12127
    %13427 = vmatpush1.bf16.msra.mxu0 %v12126
    %13428 = vmatprep.subr.bf16.mxu0 %v12146
    %13429 = vmatpush1.bf16.msra.mxu0 %v12145
    %13430 = vmatprep.subr.bf16.mxu0 %v12165
    %13431 = vmatpush1.bf16.msra.mxu0 %v12164
    %13432 = vmatprep.subr.bf16.mxu0 %v12184
    %13433 = vmatpush1.bf16.msra.mxu0 %v12183
    %13434 = vmatprep.subr.bf16.mxu0 %v12203
    %13435 = vmatpush1.bf16.msra.mxu0 %v12202
    %13436 = vmatprep.subr.bf16.mxu0 %v12222
    %13437 = vmatpush1.bf16.msra.mxu0 %v12221
    %13438 = vmatprep.subr.bf16.mxu0 %v12241
    %13439 = vmatpush1.bf16.msra.mxu0 %v12240
    %13440 = vmatprep.subr.bf16.mxu0 %v12260
    %13441 = vmatpush1.bf16.msra.mxu0 %v12259
    %13442 = vmatprep.subr.bf16.mxu0 %v12279
    %13443 = vmatpush1.bf16.msra.mxu0 %v12278
    %13444 = vmatprep.subr.bf16.mxu0 %v12298
    %13445 = vmatpush1.bf16.msra.mxu0 %v12297
    %13446 = vmatprep.subr.bf16.mxu0 %v12317
    %13447 = vmatpush1.bf16.msra.mxu0 %v12316
    %13448 = vmatprep.subr.bf16.mxu0 %v12336
    %13449 = vmatpush1.bf16.msra.mxu0 %v12335
    %13450 = vmatprep.subr.bf16.mxu0 %v12355
    %13451 = vmatpush1.bf16.msra.mxu0 %v12354
    %13452 = vmatprep.subr.bf16.mxu0 %v12374
    %13453 = vmatpush1.bf16.msra.mxu0 %v12373
    %13454 = vmatprep.subr.bf16.mxu0 %v12393
    %13455 = vmatpush1.bf16.msra.mxu0 %v12392
    %13456 = vmatprep.subr.bf16.mxu0 %v12412
    %13457 = vmatpush1.bf16.msra.mxu0 %v12411
    %13458 = vmatprep.mubr.bf16.mxu0 %v9524
    %13459 = vmatmul.mubr.bf16.gmra.mrb[0].mxu0 %v9523
    %v13460 = vpop.f32.mrb[0].mxu0
    %v13461 = vadd.f32 %v10184, %v13460
    %v13462 = vpop.f32.mrb[0].mxu0
    %v13463 = vadd.f32 %v10188, %v13462
    %v13464 = vpop.f32.mrb[0].mxu0
    %v13465 = vadd.f32 %v10184, %v13464
    %v13466 = vpop.f32.mrb[0].mxu0
    %v13467 = vadd.f32 %v10188, %v13466
    %13468 = vdwg.mxu0
    %13469 = vmatprep.subr.bf16.mxu0 %v12431
    %13470 = vmatpush1.bf16.msra.mxu0 %v12430
    %13471 = vmatprep.subr.bf16.mxu0 %v12450
    %13472 = vmatpush1.bf16.msra.mxu0 %v12449
    %13473 = vmatprep.subr.bf16.mxu0 %v12469
    %13474 = vmatpush1.bf16.msra.mxu0 %v12468
    %13475 = vmatprep.subr.bf16.mxu0 %v12488
    %13476 = vmatpush1.bf16.msra.mxu0 %v12487
    %13477 = vmatprep.subr.bf16.mxu0 %v12507
    %13478 = vmatpush1.bf16.msra.mxu0 %v12506
    %13479 = vmatprep.subr.bf16.mxu0 %v12526
    %13480 = vmatpush1.bf16.msra.mxu0 %v12525
    %13481 = vmatprep.subr.bf16.mxu0 %v12545
    %13482 = vmatpush1.bf16.msra.mxu0 %v12544
    %13483 = vmatprep.subr.bf16.mxu0 %v12564
    %13484 = vmatpush1.bf16.msra.mxu0 %v12563
    %13485 = vmatprep.subr.bf16.mxu0 %v12583
    %13486 = vmatpush1.bf16.msra.mxu0 %v12582
    %13487 = vmatprep.subr.bf16.mxu0 %v12602
    %13488 = vmatpush1.bf16.msra.mxu0 %v12601
    %13489 = vmatprep.subr.bf16.mxu0 %v12621
    %13490 = vmatpush1.bf16.msra.mxu0 %v12620
    %13491 = vmatprep.subr.bf16.mxu0 %v12640
    %13492 = vmatpush1.bf16.msra.mxu0 %v12639
    %13493 = vmatprep.subr.bf16.mxu0 %v12659
    %13494 = vmatpush1.bf16.msra.mxu0 %v12658
    %13495 = vmatprep.subr.bf16.mxu0 %v12678
    %13496 = vmatpush1.bf16.msra.mxu0 %v12677
    %13497 = vmatprep.subr.bf16.mxu0 %v12697
    %13498 = vmatpush1.bf16.msra.mxu0 %v12696
    %13499 = vmatprep.subr.bf16.mxu0 %v12716
    %13500 = vmatpush1.bf16.msra.mxu0 %v12715
    %13501 = vmatprep.mubr.bf16.mxu0 %v9526
    %13502 = vmatmul.mubr.bf16.gmra.mrb[0].mxu0 %v9525
    %v13503 = vpop.f32.mrb[0].mxu0
    %v13504 = vadd.f32 %v13461, %v13503
    %v13505 = vpop.f32.mrb[0].mxu0
    %v13506 = vadd.f32 %v13463, %v13505
    %v13507 = vpop.f32.mrb[0].mxu0
    %v13508 = vadd.f32 %v13465, %v13507
    %v13509 = vpop.f32.mrb[0].mxu0
    %v13510 = vadd.f32 %v13467, %v13509
    %13511 = vdwg.mxu0
    %13512 = vmatprep.subr.bf16.mxu0 %v12129
    %13513 = vmatpush1.bf16.msra.mxu0 %v12128
    %13514 = vmatprep.subr.bf16.mxu0 %v12148
    %13515 = vmatpush1.bf16.msra.mxu0 %v12147
    %13516 = vmatprep.subr.bf16.mxu0 %v12167
    %13517 = vmatpush1.bf16.msra.mxu0 %v12166
    %13518 = vmatprep.subr.bf16.mxu0 %v12186
    %13519 = vmatpush1.bf16.msra.mxu0 %v12185
    %13520 = vmatprep.subr.bf16.mxu0 %v12205
    %13521 = vmatpush1.bf16.msra.mxu0 %v12204
    %13522 = vmatprep.subr.bf16.mxu0 %v12224
    %13523 = vmatpush1.bf16.msra.mxu0 %v12223
    %13524 = vmatprep.subr.bf16.mxu0 %v12243
    %13525 = vmatpush1.bf16.msra.mxu0 %v12242
    %13526 = vmatprep.subr.bf16.mxu0 %v12262
    %13527 = vmatpush1.bf16.msra.mxu0 %v12261
    %13528 = vmatprep.subr.bf16.mxu0 %v12281
    %13529 = vmatpush1.bf16.msra.mxu0 %v12280
    %13530 = vmatprep.subr.bf16.mxu0 %v12300
    %13531 = vmatpush1.bf16.msra.mxu0 %v12299
    %13532 = vmatprep.subr.bf16.mxu0 %v12319
    %13533 = vmatpush1.bf16.msra.mxu0 %v12318
    %13534 = vmatprep.subr.bf16.mxu0 %v12338
    %13535 = vmatpush1.bf16.msra.mxu0 %v12337
    %13536 = vmatprep.subr.bf16.mxu0 %v12357
    %13537 = vmatpush1.bf16.msra.mxu0 %v12356
    %13538 = vmatprep.subr.bf16.mxu0 %v12376
    %13539 = vmatpush1.bf16.msra.mxu0 %v12375
    %13540 = vmatprep.subr.bf16.mxu0 %v12395
    %13541 = vmatpush1.bf16.msra.mxu0 %v12394
    %13542 = vmatprep.subr.bf16.mxu0 %v12414
    %13543 = vmatpush1.bf16.msra.mxu0 %v12413
    %13544 = vmatprep.mubr.bf16.mxu0 %v9524
    %13545 = vmatmul.mubr.bf16.gmra.mrb[0].mxu0 %v9523
    %v13546 = vpop.f32.mrb[0].mxu0
    %v13547 = vadd.f32 %v10192, %v13546
    %v13548 = vpop.f32.mrb[0].mxu0
    %v13549 = vadd.f32 %v10196, %v13548
    %v13550 = vpop.f32.mrb[0].mxu0
    %v13551 = vadd.f32 %v10192, %v13550
    %v13552 = vpop.f32.mrb[0].mxu0
    %v13553 = vadd.f32 %v10196, %v13552
    %13554 = vdwg.mxu0
    %13555 = vmatprep.subr.bf16.mxu0 %v12433
    %13556 = vmatpush1.bf16.msra.mxu0 %v12432
    %13557 = vmatprep.subr.bf16.mxu0 %v12452
    %13558 = vmatpush1.bf16.msra.mxu0 %v12451
    %13559 = vmatprep.subr.bf16.mxu0 %v12471
    %13560 = vmatpush1.bf16.msra.mxu0 %v12470
    %13561 = vmatprep.subr.bf16.mxu0 %v12490
    %13562 = vmatpush1.bf16.msra.mxu0 %v12489
    %13563 = vmatprep.subr.bf16.mxu0 %v12509
    %13564 = vmatpush1.bf16.msra.mxu0 %v12508
    %13565 = vmatprep.subr.bf16.mxu0 %v12528
    %13566 = vmatpush1.bf16.msra.mxu0 %v12527
    %13567 = vmatprep.subr.bf16.mxu0 %v12547
    %13568 = vmatpush1.bf16.msra.mxu0 %v12546
    %13569 = vmatprep.subr.bf16.mxu0 %v12566
    %13570 = vmatpush1.bf16.msra.mxu0 %v12565
    %13571 = vmatprep.subr.bf16.mxu0 %v12585
    %13572 = vmatpush1.bf16.msra.mxu0 %v12584
    %13573 = vmatprep.subr.bf16.mxu0 %v12604
    %13574 = vmatpush1.bf16.msra.mxu0 %v12603
    %13575 = vmatprep.subr.bf16.mxu0 %v12623
    %13576 = vmatpush1.bf16.msra.mxu0 %v12622
    %13577 = vmatprep.subr.bf16.mxu0 %v12642
    %13578 = vmatpush1.bf16.msra.mxu0 %v12641
    %13579 = vmatprep.subr.bf16.mxu0 %v12661
    %13580 = vmatpush1.bf16.msra.mxu0 %v12660
    %13581 = vmatprep.subr.bf16.mxu0 %v12680
    %13582 = vmatpush1.bf16.msra.mxu0 %v12679
    %13583 = vmatprep.subr.bf16.mxu0 %v12699
    %13584 = vmatpush1.bf16.msra.mxu0 %v12698
    %13585 = vmatprep.subr.bf16.mxu0 %v12718
    %13586 = vmatpush1.bf16.msra.mxu0 %v12717
    %13587 = vmatprep.mubr.bf16.mxu0 %v9526
    %13588 = vmatmul.mubr.bf16.gmra.mrb[0].mxu0 %v9525
    %v13589 = vpop.f32.mrb[0].mxu0
    %v13590 = vadd.f32 %v13547, %v13589
    %v13591 = vpop.f32.mrb[0].mxu0
    %v13592 = vadd.f32 %v13549, %v13591
    %v13593 = vpop.f32.mrb[0].mxu0
    %v13594 = vadd.f32 %v13551, %v13593
    %v13595 = vpop.f32.mrb[0].mxu0
    %v13596 = vadd.f32 %v13553, %v13595
    %13597 = vdwg.mxu0
    %13598 = vmatprep.subr.bf16.mxu0 %v12131
    %13599 = vmatpush1.bf16.msra.mxu0 %v12130
    %13600 = vmatprep.subr.bf16.mxu0 %v12150
    %13601 = vmatpush1.bf16.msra.mxu0 %v12149
    %13602 = vmatprep.subr.bf16.mxu0 %v12169
    %13603 = vmatpush1.bf16.msra.mxu0 %v12168
    %13604 = vmatprep.subr.bf16.mxu0 %v12188
    %13605 = vmatpush1.bf16.msra.mxu0 %v12187
    %13606 = vmatprep.subr.bf16.mxu0 %v12207
    %13607 = vmatpush1.bf16.msra.mxu0 %v12206
    %13608 = vmatprep.subr.bf16.mxu0 %v12226
    %13609 = vmatpush1.bf16.msra.mxu0 %v12225
    %13610 = vmatprep.subr.bf16.mxu0 %v12245
    %13611 = vmatpush1.bf16.msra.mxu0 %v12244
    %13612 = vmatprep.subr.bf16.mxu0 %v12264
    %13613 = vmatpush1.bf16.msra.mxu0 %v12263
    %13614 = vmatprep.subr.bf16.mxu0 %v12283
    %13615 = vmatpush1.bf16.msra.mxu0 %v12282
    %13616 = vmatprep.subr.bf16.mxu0 %v12302
    %13617 = vmatpush1.bf16.msra.mxu0 %v12301
    %13618 = vmatprep.subr.bf16.mxu0 %v12321
    %13619 = vmatpush1.bf16.msra.mxu0 %v12320
    %13620 = vmatprep.subr.bf16.mxu0 %v12340
    %13621 = vmatpush1.bf16.msra.mxu0 %v12339
    %13622 = vmatprep.subr.bf16.mxu0 %v12359
    %13623 = vmatpush1.bf16.msra.mxu0 %v12358
    %13624 = vmatprep.subr.bf16.mxu0 %v12378
    %13625 = vmatpush1.bf16.msra.mxu0 %v12377
    %13626 = vmatprep.subr.bf16.mxu0 %v12397
    %13627 = vmatpush1.bf16.msra.mxu0 %v12396
    %13628 = vmatprep.subr.bf16.mxu0 %v12416
    %13629 = vmatpush1.bf16.msra.mxu0 %v12415
    %13630 = vmatprep.mubr.bf16.mxu0 %v9524
    %13631 = vmatmul.mubr.bf16.gmra.mrb[0].mxu0 %v9523
    %v13632 = vpop.f32.mrb[0].mxu0
    %v13633 = vadd.f32 %v10200, %v13632
    %v13634 = vpop.f32.mrb[0].mxu0
    %v13635 = vadd.f32 %v10204, %v13634
    %v13636 = vpop.f32.mrb[0].mxu0
    %v13637 = vadd.f32 %v10200, %v13636
    %v13638 = vpop.f32.mrb[0].mxu0
    %v13639 = vadd.f32 %v10204, %v13638
    %13640 = vdwg.mxu0
    %13641 = vmatprep.subr.bf16.mxu0 %v12435
    %13642 = vmatpush1.bf16.msra.mxu0 %v12434
    %13643 = vmatprep.subr.bf16.mxu0 %v12454
    %13644 = vmatpush1.bf16.msra.mxu0 %v12453
    %13645 = vmatprep.subr.bf16.mxu0 %v12473
    %13646 = vmatpush1.bf16.msra.mxu0 %v12472
    %13647 = vmatprep.subr.bf16.mxu0 %v12492
    %13648 = vmatpush1.bf16.msra.mxu0 %v12491
    %13649 = vmatprep.subr.bf16.mxu0 %v12511
    %13650 = vmatpush1.bf16.msra.mxu0 %v12510
    %13651 = vmatprep.subr.bf16.mxu0 %v12530
    %13652 = vmatpush1.bf16.msra.mxu0 %v12529
    %13653 = vmatprep.subr.bf16.mxu0 %v12549
    %13654 = vmatpush1.bf16.msra.mxu0 %v12548
    %13655 = vmatprep.subr.bf16.mxu0 %v12568
    %13656 = vmatpush1.bf16.msra.mxu0 %v12567
    %13657 = vmatprep.subr.bf16.mxu0 %v12587
    %13658 = vmatpush1.bf16.msra.mxu0 %v12586
    %13659 = vmatprep.subr.bf16.mxu0 %v12606
    %13660 = vmatpush1.bf16.msra.mxu0 %v12605
    %13661 = vmatprep.subr.bf16.mxu0 %v12625
    %13662 = vmatpush1.bf16.msra.mxu0 %v12624
    %13663 = vmatprep.subr.bf16.mxu0 %v12644
    %13664 = vmatpush1.bf16.msra.mxu0 %v12643
    %13665 = vmatprep.subr.bf16.mxu0 %v12663
    %13666 = vmatpush1.bf16.msra.mxu0 %v12662
    %13667 = vmatprep.subr.bf16.mxu0 %v12682
    %13668 = vmatpush1.bf16.msra.mxu0 %v12681
    %13669 = vmatprep.subr.bf16.mxu0 %v12701
    %13670 = vmatpush1.bf16.msra.mxu0 %v12700
    %13671 = vmatprep.subr.bf16.mxu0 %v12720
    %13672 = vmatpush1.bf16.msra.mxu0 %v12719
    %13673 = vmatprep.mubr.bf16.mxu0 %v9526
    %13674 = vmatmul.mubr.bf16.gmra.mrb[0].mxu0 %v9525
    %v13675 = vpop.f32.mrb[0].mxu0
    %v13676 = vadd.f32 %v13633, %v13675
    %v13677 = vpop.f32.mrb[0].mxu0
    %v13678 = vadd.f32 %v13635, %v13677
    %v13679 = vpop.f32.mrb[0].mxu0
    %v13680 = vadd.f32 %v13637, %v13679
    %v13681 = vpop.f32.mrb[0].mxu0
    %v13682 = vadd.f32 %v13639, %v13681
    %13683 = vdwg.mxu0
    %13684 = vmatprep.subr.bf16.mxu0 %v12133
    %13685 = vmatpush1.bf16.msra.mxu0 %v12132
    %13686 = vmatprep.subr.bf16.mxu0 %v12152
    %13687 = vmatpush1.bf16.msra.mxu0 %v12151
    %13688 = vmatprep.subr.bf16.mxu0 %v12171
    %13689 = vmatpush1.bf16.msra.mxu0 %v12170
    %13690 = vmatprep.subr.bf16.mxu0 %v12190
    %13691 = vmatpush1.bf16.msra.mxu0 %v12189
    %13692 = vmatprep.subr.bf16.mxu0 %v12209
    %13693 = vmatpush1.bf16.msra.mxu0 %v12208
    %13694 = vmatprep.subr.bf16.mxu0 %v12228
    %13695 = vmatpush1.bf16.msra.mxu0 %v12227
    %13696 = vmatprep.subr.bf16.mxu0 %v12247
    %13697 = vmatpush1.bf16.msra.mxu0 %v12246
    %13698 = vmatprep.subr.bf16.mxu0 %v12266
    %13699 = vmatpush1.bf16.msra.mxu0 %v12265
    %13700 = vmatprep.subr.bf16.mxu0 %v12285
    %13701 = vmatpush1.bf16.msra.mxu0 %v12284
    %13702 = vmatprep.subr.bf16.mxu0 %v12304
    %13703 = vmatpush1.bf16.msra.mxu0 %v12303
    %13704 = vmatprep.subr.bf16.mxu0 %v12323
    %13705 = vmatpush1.bf16.msra.mxu0 %v12322
    %13706 = vmatprep.subr.bf16.mxu0 %v12342
    %13707 = vmatpush1.bf16.msra.mxu0 %v12341
    %13708 = vmatprep.subr.bf16.mxu0 %v12361
    %13709 = vmatpush1.bf16.msra.mxu0 %v12360
    %13710 = vmatprep.subr.bf16.mxu0 %v12380
    %13711 = vmatpush1.bf16.msra.mxu0 %v12379
    %13712 = vmatprep.subr.bf16.mxu0 %v12399
    %13713 = vmatpush1.bf16.msra.mxu0 %v12398
    %13714 = vmatprep.subr.bf16.mxu0 %v12418
    %13715 = vmatpush1.bf16.msra.mxu0 %v12417
    %13716 = vmatprep.mubr.bf16.mxu0 %v9524
    %13717 = vmatmul.mubr.bf16.gmra.mrb[0].mxu0 %v9523
    %v13718 = vpop.f32.mrb[0].mxu0
    %v13719 = vadd.f32 %v10208, %v13718
    %v13720 = vpop.f32.mrb[0].mxu0
    %v13721 = vadd.f32 %v10212, %v13720
    %v13722 = vpop.f32.mrb[0].mxu0
    %v13723 = vadd.f32 %v10208, %v13722
    %v13724 = vpop.f32.mrb[0].mxu0
    %v13725 = vadd.f32 %v10212, %v13724
    %13726 = vdwg.mxu0
    %13727 = vmatprep.subr.bf16.mxu0 %v12437
    %13728 = vmatpush1.bf16.msra.mxu0 %v12436
    %13729 = vmatprep.subr.bf16.mxu0 %v12456
    %13730 = vmatpush1.bf16.msra.mxu0 %v12455
    %13731 = vmatprep.subr.bf16.mxu0 %v12475
    %13732 = vmatpush1.bf16.msra.mxu0 %v12474
    %13733 = vmatprep.subr.bf16.mxu0 %v12494
    %13734 = vmatpush1.bf16.msra.mxu0 %v12493
    %13735 = vmatprep.subr.bf16.mxu0 %v12513
    %13736 = vmatpush1.bf16.msra.mxu0 %v12512
    %13737 = vmatprep.subr.bf16.mxu0 %v12532
    %13738 = vmatpush1.bf16.msra.mxu0 %v12531
    %13739 = vmatprep.subr.bf16.mxu0 %v12551
    %13740 = vmatpush1.bf16.msra.mxu0 %v12550
    %13741 = vmatprep.subr.bf16.mxu0 %v12570
    %13742 = vmatpush1.bf16.msra.mxu0 %v12569
    %13743 = vmatprep.subr.bf16.mxu0 %v12589
    %13744 = vmatpush1.bf16.msra.mxu0 %v12588
    %13745 = vmatprep.subr.bf16.mxu0 %v12608
    %13746 = vmatpush1.bf16.msra.mxu0 %v12607
    %13747 = vmatprep.subr.bf16.mxu0 %v12627
    %13748 = vmatpush1.bf16.msra.mxu0 %v12626
    %13749 = vmatprep.subr.bf16.mxu0 %v12646
    %13750 = vmatpush1.bf16.msra.mxu0 %v12645
    %13751 = vmatprep.subr.bf16.mxu0 %v12665
    %13752 = vmatpush1.bf16.msra.mxu0 %v12664
    %13753 = vmatprep.subr.bf16.mxu0 %v12684
    %13754 = vmatpush1.bf16.msra.mxu0 %v12683
    %13755 = vmatprep.subr.bf16.mxu0 %v12703
    %13756 = vmatpush1.bf16.msra.mxu0 %v12702
    %13757 = vmatprep.subr.bf16.mxu0 %v12722
    %13758 = vmatpush1.bf16.msra.mxu0 %v12721
    %13759 = vmatprep.mubr.bf16.mxu0 %v9526
    %13760 = vmatmul.mubr.bf16.gmra.mrb[0].mxu0 %v9525
    %v13761 = vpop.f32.mrb[0].mxu0
    %v13762 = vadd.f32 %v13719, %v13761
    %v13763 = vpop.f32.mrb[0].mxu0
    %v13764 = vadd.f32 %v13721, %v13763
    %v13765 = vpop.f32.mrb[0].mxu0
    %v13766 = vadd.f32 %v13723, %v13765
    %v13767 = vpop.f32.mrb[0].mxu0
    %v13768 = vadd.f32 %v13725, %v13767
    %13769 = vdwg.mxu0
    %13770 = vmatprep.subr.bf16.mxu0 %v12135
    %13771 = vmatpush1.bf16.msra.mxu0 %v12134
    %13772 = vmatprep.subr.bf16.mxu0 %v12154
    %13773 = vmatpush1.bf16.msra.mxu0 %v12153
    %13774 = vmatprep.subr.bf16.mxu0 %v12173
    %13775 = vmatpush1.bf16.msra.mxu0 %v12172
    %13776 = vmatprep.subr.bf16.mxu0 %v12192
    %13777 = vmatpush1.bf16.msra.mxu0 %v12191
    %13778 = vmatprep.subr.bf16.mxu0 %v12211
    %13779 = vmatpush1.bf16.msra.mxu0 %v12210
    %13780 = vmatprep.subr.bf16.mxu0 %v12230
    %13781 = vmatpush1.bf16.msra.mxu0 %v12229
    %13782 = vmatprep.subr.bf16.mxu0 %v12249
    %13783 = vmatpush1.bf16.msra.mxu0 %v12248
    %13784 = vmatprep.subr.bf16.mxu0 %v12268
    %13785 = vmatpush1.bf16.msra.mxu0 %v12267
    %13786 = vmatprep.subr.bf16.mxu0 %v12287
    %13787 = vmatpush1.bf16.msra.mxu0 %v12286
    %13788 = vmatprep.subr.bf16.mxu0 %v12306
    %13789 = vmatpush1.bf16.msra.mxu0 %v12305
    %13790 = vmatprep.subr.bf16.mxu0 %v12325
    %13791 = vmatpush1.bf16.msra.mxu0 %v12324
    %13792 = vmatprep.subr.bf16.mxu0 %v12344
    %13793 = vmatpush1.bf16.msra.mxu0 %v12343
    %13794 = vmatprep.subr.bf16.mxu0 %v12363
    %13795 = vmatpush1.bf16.msra.mxu0 %v12362
    %13796 = vmatprep.subr.bf16.mxu0 %v12382
    %13797 = vmatpush1.bf16.msra.mxu0 %v12381
    %13798 = vmatprep.subr.bf16.mxu0 %v12401
    %13799 = vmatpush1.bf16.msra.mxu0 %v12400
    %13800 = vmatprep.subr.bf16.mxu0 %v12420
    %13801 = vmatpush1.bf16.msra.mxu0 %v12419
    %13802 = vmatprep.mubr.bf16.mxu0 %v9524
    %13803 = vmatmul.mubr.bf16.gmra.mrb[0].mxu0 %v9523
    %v13804 = vpop.f32.mrb[0].mxu0
    %v13805 = vadd.f32 %v10216, %v13804
    %v13806 = vpop.f32.mrb[0].mxu0
    %v13807 = vadd.f32 %v10220, %v13806
    %v13808 = vpop.f32.mrb[0].mxu0
    %v13809 = vadd.f32 %v10216, %v13808
    %v13810 = vpop.f32.mrb[0].mxu0
    %v13811 = vadd.f32 %v10220, %v13810
    %13812 = vdwg.mxu0
    %13813 = vmatprep.subr.bf16.mxu0 %v12439
    %13814 = vmatpush1.bf16.msra.mxu0 %v12438
    %13815 = vmatprep.subr.bf16.mxu0 %v12458
    %13816 = vmatpush1.bf16.msra.mxu0 %v12457
    %13817 = vmatprep.subr.bf16.mxu0 %v12477
    %13818 = vmatpush1.bf16.msra.mxu0 %v12476
    %13819 = vmatprep.subr.bf16.mxu0 %v12496
    %13820 = vmatpush1.bf16.msra.mxu0 %v12495
    %13821 = vmatprep.subr.bf16.mxu0 %v12515
    %13822 = vmatpush1.bf16.msra.mxu0 %v12514
    %13823 = vmatprep.subr.bf16.mxu0 %v12534
    %13824 = vmatpush1.bf16.msra.mxu0 %v12533
    %13825 = vmatprep.subr.bf16.mxu0 %v12553
    %13826 = vmatpush1.bf16.msra.mxu0 %v12552
    %13827 = vmatprep.subr.bf16.mxu0 %v12572
    %13828 = vmatpush1.bf16.msra.mxu0 %v12571
    %13829 = vmatprep.subr.bf16.mxu0 %v12591
    %13830 = vmatpush1.bf16.msra.mxu0 %v12590
    %13831 = vmatprep.subr.bf16.mxu0 %v12610
    %13832 = vmatpush1.bf16.msra.mxu0 %v12609
    %13833 = vmatprep.subr.bf16.mxu0 %v12629
    %13834 = vmatpush1.bf16.msra.mxu0 %v12628
    %13835 = vmatprep.subr.bf16.mxu0 %v12648
    %13836 = vmatpush1.bf16.msra.mxu0 %v12647
    %13837 = vmatprep.subr.bf16.mxu0 %v12667
    %13838 = vmatpush1.bf16.msra.mxu0 %v12666
    %13839 = vmatprep.subr.bf16.mxu0 %v12686
    %13840 = vmatpush1.bf16.msra.mxu0 %v12685
    %13841 = vmatprep.subr.bf16.mxu0 %v12705
    %13842 = vmatpush1.bf16.msra.mxu0 %v12704
    %13843 = vmatprep.subr.bf16.mxu0 %v12724
    %13844 = vmatpush1.bf16.msra.mxu0 %v12723
    %13845 = vmatprep.mubr.bf16.mxu0 %v9526
    %13846 = vmatmul.mubr.bf16.gmra.mrb[0].mxu0 %v9525
    %v13847 = vpop.f32.mrb[0].mxu0
    %v13848 = vadd.f32 %v13805, %v13847
    %v13849 = vpop.f32.mrb[0].mxu0
    %v13850 = vadd.f32 %v13807, %v13849
    %v13851 = vpop.f32.mrb[0].mxu0
    %v13852 = vadd.f32 %v13809, %v13851
    %v13853 = vpop.f32.mrb[0].mxu0
    %v13854 = vadd.f32 %v13811, %v13853
    %13855 = vdwg.mxu0
    %13856 = vmatprep.subr.bf16.mxu0 %v12137
    %13857 = vmatpush1.bf16.msra.mxu0 %v12136
    %13858 = vmatprep.subr.bf16.mxu0 %v12156
    %13859 = vmatpush1.bf16.msra.mxu0 %v12155
    %13860 = vmatprep.subr.bf16.mxu0 %v12175
    %13861 = vmatpush1.bf16.msra.mxu0 %v12174
    %13862 = vmatprep.subr.bf16.mxu0 %v12194
    %13863 = vmatpush1.bf16.msra.mxu0 %v12193
    %13864 = vmatprep.subr.bf16.mxu0 %v12213
    %13865 = vmatpush1.bf16.msra.mxu0 %v12212
    %13866 = vmatprep.subr.bf16.mxu0 %v12232
    %13867 = vmatpush1.bf16.msra.mxu0 %v12231
    %13868 = vmatprep.subr.bf16.mxu0 %v12251
    %13869 = vmatpush1.bf16.msra.mxu0 %v12250
    %13870 = vmatprep.subr.bf16.mxu0 %v12270
    %13871 = vmatpush1.bf16.msra.mxu0 %v12269
    %13872 = vmatprep.subr.bf16.mxu0 %v12289
    %13873 = vmatpush1.bf16.msra.mxu0 %v12288
    %13874 = vmatprep.subr.bf16.mxu0 %v12308
    %13875 = vmatpush1.bf16.msra.mxu0 %v12307
    %13876 = vmatprep.subr.bf16.mxu0 %v12327
    %13877 = vmatpush1.bf16.msra.mxu0 %v12326
    %13878 = vmatprep.subr.bf16.mxu0 %v12346
    %13879 = vmatpush1.bf16.msra.mxu0 %v12345
    %13880 = vmatprep.subr.bf16.mxu0 %v12365
    %13881 = vmatpush1.bf16.msra.mxu0 %v12364
    %13882 = vmatprep.subr.bf16.mxu0 %v12384
    %13883 = vmatpush1.bf16.msra.mxu0 %v12383
    %13884 = vmatprep.subr.bf16.mxu0 %v12403
    %13885 = vmatpush1.bf16.msra.mxu0 %v12402
    %13886 = vmatprep.subr.bf16.mxu0 %v12422
    %13887 = vmatpush1.bf16.msra.mxu0 %v12421
    %13888 = vmatprep.mubr.bf16.mxu0 %v9524
    %13889 = vmatmul.mubr.bf16.gmra.mrb[0].mxu0 %v9523
    %v13890 = vpop.f32.mrb[0].mxu0
    %v13891 = vadd.f32 %v10224, %v13890
    %v13892 = vpop.f32.mrb[0].mxu0
    %v13893 = vadd.f32 %v10228, %v13892
    %v13894 = vpop.f32.mrb[0].mxu0
    %v13895 = vadd.f32 %v10224, %v13894
    %v13896 = vpop.f32.mrb[0].mxu0
    %v13897 = vadd.f32 %v10228, %v13896
    %13898 = vdwg.mxu0
    %13899 = vmatprep.subr.bf16.mxu0 %v12441
    %13900 = vmatpush1.bf16.msra.mxu0 %v12440
    %13901 = vmatprep.subr.bf16.mxu0 %v12460
    %13902 = vmatpush1.bf16.msra.mxu0 %v12459
    %13903 = vmatprep.subr.bf16.mxu0 %v12479
    %13904 = vmatpush1.bf16.msra.mxu0 %v12478
    %13905 = vmatprep.subr.bf16.mxu0 %v12498
    %13906 = vmatpush1.bf16.msra.mxu0 %v12497
    %13907 = vmatprep.subr.bf16.mxu0 %v12517
    %13908 = vmatpush1.bf16.msra.mxu0 %v12516
    %13909 = vmatprep.subr.bf16.mxu0 %v12536
    %13910 = vmatpush1.bf16.msra.mxu0 %v12535
    %13911 = vmatprep.subr.bf16.mxu0 %v12555
    %13912 = vmatpush1.bf16.msra.mxu0 %v12554
    %13913 = vmatprep.subr.bf16.mxu0 %v12574
    %13914 = vmatpush1.bf16.msra.mxu0 %v12573
    %13915 = vmatprep.subr.bf16.mxu0 %v12593
    %13916 = vmatpush1.bf16.msra.mxu0 %v12592
    %13917 = vmatprep.subr.bf16.mxu0 %v12612
    %13918 = vmatpush1.bf16.msra.mxu0 %v12611
    %13919 = vmatprep.subr.bf16.mxu0 %v12631
    %13920 = vmatpush1.bf16.msra.mxu0 %v12630
    %13921 = vmatprep.subr.bf16.mxu0 %v12650
    %13922 = vmatpush1.bf16.msra.mxu0 %v12649
    %13923 = vmatprep.subr.bf16.mxu0 %v12669
    %13924 = vmatpush1.bf16.msra.mxu0 %v12668
    %13925 = vmatprep.subr.bf16.mxu0 %v12688
    %13926 = vmatpush1.bf16.msra.mxu0 %v12687
    %13927 = vmatprep.subr.bf16.mxu0 %v12707
    %13928 = vmatpush1.bf16.msra.mxu0 %v12706
    %13929 = vmatprep.subr.bf16.mxu0 %v12726
    %13930 = vmatpush1.bf16.msra.mxu0 %v12725
    %13931 = vmatprep.mubr.bf16.mxu0 %v9526
    %13932 = vmatmul.mubr.bf16.gmra.mrb[0].mxu0 %v9525
    %v13933 = vpop.f32.mrb[0].mxu0
    %v13934 = vadd.f32 %v13891, %v13933
    %v13935 = vpop.f32.mrb[0].mxu0
    %v13936 = vadd.f32 %v13893, %v13935
    %v13937 = vpop.f32.mrb[0].mxu0
    %v13938 = vadd.f32 %v13895, %v13937
    %v13939 = vpop.f32.mrb[0].mxu0
    %v13940 = vadd.f32 %v13897, %v13939
    %13941 = vdwg.mxu0
    %13942 = vmatprep.subr.bf16.mxu0 %v12139
    %13943 = vmatpush1.bf16.msra.mxu0 %v12138
    %13944 = vmatprep.subr.bf16.mxu0 %v12158
    %13945 = vmatpush1.bf16.msra.mxu0 %v12157
    %13946 = vmatprep.subr.bf16.mxu0 %v12177
    %13947 = vmatpush1.bf16.msra.mxu0 %v12176
    %13948 = vmatprep.subr.bf16.mxu0 %v12196
    %13949 = vmatpush1.bf16.msra.mxu0 %v12195
    %13950 = vmatprep.subr.bf16.mxu0 %v12215
    %13951 = vmatpush1.bf16.msra.mxu0 %v12214
    %13952 = vmatprep.subr.bf16.mxu0 %v12234
    %13953 = vmatpush1.bf16.msra.mxu0 %v12233
    %13954 = vmatprep.subr.bf16.mxu0 %v12253
    %13955 = vmatpush1.bf16.msra.mxu0 %v12252
    %13956 = vmatprep.subr.bf16.mxu0 %v12272
    %13957 = vmatpush1.bf16.msra.mxu0 %v12271
    %13958 = vmatprep.subr.bf16.mxu0 %v12291
    %13959 = vmatpush1.bf16.msra.mxu0 %v12290
    %13960 = vmatprep.subr.bf16.mxu0 %v12310
    %13961 = vmatpush1.bf16.msra.mxu0 %v12309
    %13962 = vmatprep.subr.bf16.mxu0 %v12329
    %13963 = vmatpush1.bf16.msra.mxu0 %v12328
    %13964 = vmatprep.subr.bf16.mxu0 %v12348
    %13965 = vmatpush1.bf16.msra.mxu0 %v12347
    %13966 = vmatprep.subr.bf16.mxu0 %v12367
    %13967 = vmatpush1.bf16.msra.mxu0 %v12366
    %13968 = vmatprep.subr.bf16.mxu0 %v12386
    %13969 = vmatpush1.bf16.msra.mxu0 %v12385
    %13970 = vmatprep.subr.bf16.mxu0 %v12405
    %13971 = vmatpush1.bf16.msra.mxu0 %v12404
    %13972 = vmatprep.subr.bf16.mxu0 %v12424
    %13973 = vmatpush1.bf16.msra.mxu0 %v12423
    %13974 = vmatprep.mubr.bf16.mxu0 %v9524
    %13975 = vmatmul.mubr.bf16.gmra.mrb[0].mxu0 %v9523
    %v13976 = vpop.f32.mrb[0].mxu0
    %v13977 = vadd.f32 %v10232, %v13976
    %v13978 = vpop.f32.mrb[0].mxu0
    %v13979 = vadd.f32 %v10236, %v13978
    %v13980 = vpop.f32.mrb[0].mxu0
    %v13981 = vadd.f32 %v10232, %v13980
    %v13982 = vpop.f32.mrb[0].mxu0
    %v13983 = vadd.f32 %v10236, %v13982
    %13984 = vdwg.mxu0
    %13985 = vmatprep.subr.bf16.mxu0 %v12443
    %13986 = vmatpush1.bf16.msra.mxu0 %v12442
    %13987 = vmatprep.subr.bf16.mxu0 %v12462
    %13988 = vmatpush1.bf16.msra.mxu0 %v12461
    %13989 = vmatprep.subr.bf16.mxu0 %v12481
    %13990 = vmatpush1.bf16.msra.mxu0 %v12480
    %13991 = vmatprep.subr.bf16.mxu0 %v12500
    %13992 = vmatpush1.bf16.msra.mxu0 %v12499
    %13993 = vmatprep.subr.bf16.mxu0 %v12519
    %13994 = vmatpush1.bf16.msra.mxu0 %v12518
    %13995 = vmatprep.subr.bf16.mxu0 %v12538
    %13996 = vmatpush1.bf16.msra.mxu0 %v12537
    %13997 = vmatprep.subr.bf16.mxu0 %v12557
    %13998 = vmatpush1.bf16.msra.mxu0 %v12556
    %13999 = vmatprep.subr.bf16.mxu0 %v12576
    %14000 = vmatpush1.bf16.msra.mxu0 %v12575
    %14001 = vmatprep.subr.bf16.mxu0 %v12595
    %14002 = vmatpush1.bf16.msra.mxu0 %v12594
    %14003 = vmatprep.subr.bf16.mxu0 %v12614
    %14004 = vmatpush1.bf16.msra.mxu0 %v12613
    %14005 = vmatprep.subr.bf16.mxu0 %v12633
    %14006 = vmatpush1.bf16.msra.mxu0 %v12632
    %14007 = vmatprep.subr.bf16.mxu0 %v12652
    %14008 = vmatpush1.bf16.msra.mxu0 %v12651
    %14009 = vmatprep.subr.bf16.mxu0 %v12671
    %14010 = vmatpush1.bf16.msra.mxu0 %v12670
    %14011 = vmatprep.subr.bf16.mxu0 %v12690
    %14012 = vmatpush1.bf16.msra.mxu0 %v12689
    %14013 = vmatprep.subr.bf16.mxu0 %v12709
    %14014 = vmatpush1.bf16.msra.mxu0 %v12708
    %14015 = vmatprep.subr.bf16.mxu0 %v12728
    %14016 = vmatpush1.bf16.msra.mxu0 %v12727
    %14017 = vmatprep.mubr.bf16.mxu0 %v9526
    %14018 = vmatmul.mubr.bf16.gmra.mrb[0].mxu0 %v9525
    %v14019 = vpop.f32.mrb[0].mxu0
    %v14020 = vadd.f32 %v13977, %v14019
    %v14021 = vpop.f32.mrb[0].mxu0
    %v14022 = vadd.f32 %v13979, %v14021
    %v14023 = vpop.f32.mrb[0].mxu0
    %v14024 = vadd.f32 %v13981, %v14023
    %v14025 = vpop.f32.mrb[0].mxu0
    %v14026 = vadd.f32 %v13983, %v14025
    %14027 = vdwg.mxu0
    %14028 = vmatprep.subr.bf16.mxu0 %v12141
    %14029 = vmatpush1.bf16.msra.mxu0 %v12140
    %14030 = vmatprep.subr.bf16.mxu0 %v12160
    %14031 = vmatpush1.bf16.msra.mxu0 %v12159
    %14032 = vmatprep.subr.bf16.mxu0 %v12179
    %14033 = vmatpush1.bf16.msra.mxu0 %v12178
    %14034 = vmatprep.subr.bf16.mxu0 %v12198
    %14035 = vmatpush1.bf16.msra.mxu0 %v12197
    %14036 = vmatprep.subr.bf16.mxu0 %v12217
    %14037 = vmatpush1.bf16.msra.mxu0 %v12216
    %14038 = vmatprep.subr.bf16.mxu0 %v12236
    %14039 = vmatpush1.bf16.msra.mxu0 %v12235
    %14040 = vmatprep.subr.bf16.mxu0 %v12255
    %14041 = vmatpush1.bf16.msra.mxu0 %v12254
    %14042 = vmatprep.subr.bf16.mxu0 %v12274
    %14043 = vmatpush1.bf16.msra.mxu0 %v12273
    %14044 = vmatprep.subr.bf16.mxu0 %v12293
    %14045 = vmatpush1.bf16.msra.mxu0 %v12292
    %14046 = vmatprep.subr.bf16.mxu0 %v12312
    %14047 = vmatpush1.bf16.msra.mxu0 %v12311
    %14048 = vmatprep.subr.bf16.mxu0 %v12331
    %14049 = vmatpush1.bf16.msra.mxu0 %v12330
    %14050 = vmatprep.subr.bf16.mxu0 %v12350
    %14051 = vmatpush1.bf16.msra.mxu0 %v12349
    %14052 = vmatprep.subr.bf16.mxu0 %v12369
    %14053 = vmatpush1.bf16.msra.mxu0 %v12368
    %14054 = vmatprep.subr.bf16.mxu0 %v12388
    %14055 = vmatpush1.bf16.msra.mxu0 %v12387
    %14056 = vmatprep.subr.bf16.mxu0 %v12407
    %14057 = vmatpush1.bf16.msra.mxu0 %v12406
    %14058 = vmatprep.subr.bf16.mxu0 %v12426
    %14059 = vmatpush1.bf16.msra.mxu0 %v12425
    %14060 = vmatprep.mubr.bf16.mxu0 %v9524
    %14061 = vmatmul.mubr.bf16.gmra.mrb[0].mxu0 %v9523
    %v14062 = vpop.f32.mrb[0].mxu0
    %v14063 = vadd.f32 %v10240, %v14062
    %v14064 = vpop.f32.mrb[0].mxu0
    %v14065 = vadd.f32 %v10244, %v14064
    %v14066 = vpop.f32.mrb[0].mxu0
    %v14067 = vadd.f32 %v10240, %v14066
    %v14068 = vpop.f32.mrb[0].mxu0
    %v14069 = vadd.f32 %v10244, %v14068
    %14070 = vdwg.mxu0
    %14071 = vmatprep.subr.bf16.mxu0 %v12445
    %14072 = vmatpush1.bf16.msra.mxu0 %v12444
    %14073 = vmatprep.subr.bf16.mxu0 %v12464
    %14074 = vmatpush1.bf16.msra.mxu0 %v12463
    %14075 = vmatprep.subr.bf16.mxu0 %v12483
    %14076 = vmatpush1.bf16.msra.mxu0 %v12482
    %14077 = vmatprep.subr.bf16.mxu0 %v12502
    %14078 = vmatpush1.bf16.msra.mxu0 %v12501
    %14079 = vmatprep.subr.bf16.mxu0 %v12521
    %14080 = vmatpush1.bf16.msra.mxu0 %v12520
    %14081 = vmatprep.subr.bf16.mxu0 %v12540
    %14082 = vmatpush1.bf16.msra.mxu0 %v12539
    %14083 = vmatprep.subr.bf16.mxu0 %v12559
    %14084 = vmatpush1.bf16.msra.mxu0 %v12558
    %14085 = vmatprep.subr.bf16.mxu0 %v12578
    %14086 = vmatpush1.bf16.msra.mxu0 %v12577
    %14087 = vmatprep.subr.bf16.mxu0 %v12597
    %14088 = vmatpush1.bf16.msra.mxu0 %v12596
    %14089 = vmatprep.subr.bf16.mxu0 %v12616
    %14090 = vmatpush1.bf16.msra.mxu0 %v12615
    %14091 = vmatprep.subr.bf16.mxu0 %v12635
    %14092 = vmatpush1.bf16.msra.mxu0 %v12634
    %14093 = vmatprep.subr.bf16.mxu0 %v12654
    %14094 = vmatpush1.bf16.msra.mxu0 %v12653
    %14095 = vmatprep.subr.bf16.mxu0 %v12673
    %14096 = vmatpush1.bf16.msra.mxu0 %v12672
    %14097 = vmatprep.subr.bf16.mxu0 %v12692
    %14098 = vmatpush1.bf16.msra.mxu0 %v12691
    %14099 = vmatprep.subr.bf16.mxu0 %v12711
    %14100 = vmatpush1.bf16.msra.mxu0 %v12710
    %14101 = vmatprep.subr.bf16.mxu0 %v12730
    %14102 = vmatpush1.bf16.msra.mxu0 %v12729
    %14103 = vmatprep.mubr.bf16.mxu0 %v9526
    %14104 = vmatmul.mubr.bf16.gmra.mrb[0].mxu0 %v9525
    %v14105 = vpop.f32.mrb[0].mxu0
    %v14106 = vadd.f32 %v14063, %v14105
    %v14107 = vpop.f32.mrb[0].mxu0
    %v14108 = vadd.f32 %v14065, %v14107
    %v14109 = vpop.f32.mrb[0].mxu0
    %v14110 = vadd.f32 %v14067, %v14109
    %v14111 = vpop.f32.mrb[0].mxu0
    %v14112 = vadd.f32 %v14069, %v14111
    %14113 = vdwg.mxu0
    %14114 = vmatprep.subr.bf16.mxu0 0
    %14115 = vmatpush1.bf16.msra.mxu0 %v12142
    %14116 = vmatprep.subr.bf16.mxu0 0
    %14117 = vmatpush1.bf16.msra.mxu0 %v12161
    %14118 = vmatprep.subr.bf16.mxu0 0
    %14119 = vmatpush1.bf16.msra.mxu0 %v12180
    %14120 = vmatprep.subr.bf16.mxu0 0
    %14121 = vmatpush1.bf16.msra.mxu0 %v12199
    %14122 = vmatprep.subr.bf16.mxu0 0
    %14123 = vmatpush1.bf16.msra.mxu0 %v12218
    %14124 = vmatprep.subr.bf16.mxu0 0
    %14125 = vmatpush1.bf16.msra.mxu0 %v12237
    %14126 = vmatprep.subr.bf16.mxu0 0
    %14127 = vmatpush1.bf16.msra.mxu0 %v12256
    %14128 = vmatprep.subr.bf16.mxu0 0
    %14129 = vmatpush1.bf16.msra.mxu0 %v12275
    %14130 = vmatprep.subr.bf16.mxu0 0
    %14131 = vmatpush1.bf16.msra.mxu0 %v12294
    %14132 = vmatprep.subr.bf16.mxu0 0
    %14133 = vmatpush1.bf16.msra.mxu0 %v12313
    %14134 = vmatprep.subr.bf16.mxu0 0
    %14135 = vmatpush1.bf16.msra.mxu0 %v12332
    %14136 = vmatprep.subr.bf16.mxu0 0
    %14137 = vmatpush1.bf16.msra.mxu0 %v12351
    %14138 = vmatprep.subr.bf16.mxu0 0
    %14139 = vmatpush1.bf16.msra.mxu0 %v12370
    %14140 = vmatprep.subr.bf16.mxu0 0
    %14141 = vmatpush1.bf16.msra.mxu0 %v12389
    %14142 = vmatprep.subr.bf16.mxu0 0
    %14143 = vmatpush1.bf16.msra.mxu0 %v12408
    %14144 = vmatprep.subr.bf16.mxu0 0
    %14145 = vmatpush1.bf16.msra.mxu0 %v12427
    %14146 = vmatprep.mubr.bf16.mxu0 %v9524
    %14147 = vmatmul.mubr.bf16.gmra.mrb[0].mxu0 %v9523
    %v14148 = vpop.f32.mrb[0].mxu0
    %v14149 = vadd.f32 %v10248, %v14148
    %v14150 = vpop.f32.mrb[0].mxu0
    %v14151 = vpop.f32.mrb[0].mxu0
    %v14152 = vadd.f32 %v10248, %v14151
    %v14153 = vpop.f32.mrb[0].mxu0
    %14154 = vdwg.mxu0
    %14155 = vmatprep.subr.bf16.mxu0 0
    %14156 = vmatpush1.bf16.msra.mxu0 %v12446
    %14157 = vmatprep.subr.bf16.mxu0 0
    %14158 = vmatpush1.bf16.msra.mxu0 %v12465
    %14159 = vmatprep.subr.bf16.mxu0 0
    %14160 = vmatpush1.bf16.msra.mxu0 %v12484
    %14161 = vmatprep.subr.bf16.mxu0 0
    %14162 = vmatpush1.bf16.msra.mxu0 %v12503
    %14163 = vmatprep.subr.bf16.mxu0 0
    %14164 = vmatpush1.bf16.msra.mxu0 %v12522
    %14165 = vmatprep.subr.bf16.mxu0 0
    %14166 = vmatpush1.bf16.msra.mxu0 %v12541
    %14167 = vmatprep.subr.bf16.mxu0 0
    %14168 = vmatpush1.bf16.msra.mxu0 %v12560
    %14169 = vmatprep.subr.bf16.mxu0 0
    %14170 = vmatpush1.bf16.msra.mxu0 %v12579
    %14171 = vmatprep.subr.bf16.mxu0 0
    %14172 = vmatpush1.bf16.msra.mxu0 %v12598
    %14173 = vmatprep.subr.bf16.mxu0 0
    %14174 = vmatpush1.bf16.msra.mxu0 %v12617
    %14175 = vmatprep.subr.bf16.mxu0 0
    %14176 = vmatpush1.bf16.msra.mxu0 %v12636
    %14177 = vmatprep.subr.bf16.mxu0 0
    %14178 = vmatpush1.bf16.msra.mxu0 %v12655
    %14179 = vmatprep.subr.bf16.mxu0 0
    %14180 = vmatpush1.bf16.msra.mxu0 %v12674
    %14181 = vmatprep.subr.bf16.mxu0 0
    %14182 = vmatpush1.bf16.msra.mxu0 %v12693
    %14183 = vmatprep.subr.bf16.mxu0 0
    %14184 = vmatpush1.bf16.msra.mxu0 %v12712
    %14185 = vmatprep.subr.bf16.mxu0 0
    %14186 = vmatpush1.bf16.msra.mxu0 %v12731
    %14187 = vmatprep.mubr.bf16.mxu0 %v9526
    %14188 = vmatmul.mubr.bf16.gmra.mrb[0].mxu0 %v9525
    %v14189 = vpop.f32.mrb[0].mxu0
    %v14190 = vadd.f32 %v14149, %v14189
    %v14191 = vpop.f32.mrb[0].mxu0
    %v14192 = vpop.f32.mrb[0].mxu0
    %v14193 = vadd.f32 %v14152, %v14192
    %v14194 = vpop.f32.mrb[0].mxu0
    %14195 = vdwg.mxu0
    %v14196 = vxor.u32 %v13418, 2147483648
    %v14197 = vxor.u32 %v13420, 2147483648
    %v14198 = vxor.u32 %v13504, 2147483648
    %v14199 = vxor.u32 %v13506, 2147483648
    %v14200 = vxor.u32 %v13590, 2147483648
    %v14201 = vxor.u32 %v13592, 2147483648
    %v14202 = vxor.u32 %v13676, 2147483648
    %v14203 = vxor.u32 %v13678, 2147483648
    %v14204 = vxor.u32 %v13762, 2147483648
    %v14205 = vxor.u32 %v13764, 2147483648
    %v14206 = vxor.u32 %v13848, 2147483648
    %v14207 = vxor.u32 %v13850, 2147483648
    %v14208 = vxor.u32 %v13934, 2147483648
    %v14209 = vxor.u32 %v13936, 2147483648
    %v14210 = vxor.u32 %v14020, 2147483648
    %v14211 = vxor.u32 %v14022, 2147483648
    %v14212 = vxor.u32 %v14106, 2147483648
    %v14213 = vxor.u32 %v14108, 2147483648
    %v14214 = vxor.u32 %v14190, 2147483648
    %v14215 = vxor.u32 %v13422, 2147483648
    %v14216 = vxor.u32 %v13424, 2147483648
    %v14217 = vxor.u32 %v13508, 2147483648
    %v14218 = vxor.u32 %v13510, 2147483648
    %v14219 = vxor.u32 %v13594, 2147483648
    %v14220 = vxor.u32 %v13596, 2147483648
    %v14221 = vxor.u32 %v13680, 2147483648
    %v14222 = vxor.u32 %v13682, 2147483648
    %v14223 = vxor.u32 %v13766, 2147483648
    %v14224 = vxor.u32 %v13768, 2147483648
    %v14225 = vxor.u32 %v13852, 2147483648
    %v14226 = vxor.u32 %v13854, 2147483648
    %v14227 = vxor.u32 %v13938, 2147483648
    %v14228 = vxor.u32 %v13940, 2147483648
    %v14229 = vxor.u32 %v14024, 2147483648
    %v14230 = vxor.u32 %v14026, 2147483648
    %v14231 = vxor.u32 %v14110, 2147483648
    %v14232 = vxor.u32 %v14112, 2147483648
    %v14233 = vxor.u32 %v14193, 2147483648
    %v14234 = vmul.f32 %v14196, 1.442695
    %v14235 = vpow.pop %v14234
    %v14236 = vmul.f32 %v14197, 1.442695
    %v14237 = vpow.pop %v14236
    %v14238 = vmul.f32 %v14198, 1.442695
    %v14239 = vpow.pop %v14238
    %v14240 = vmul.f32 %v14199, 1.442695
    %v14241 = vpow.pop %v14240
    %v14242 = vmul.f32 %v14200, 1.442695
    %v14243 = vpow.pop %v14242
    %v14244 = vmul.f32 %v14201, 1.442695
    %v14245 = vpow.pop %v14244
    %v14246 = vmul.f32 %v14202, 1.442695
    %v14247 = vpow.pop %v14246
    %v14248 = vmul.f32 %v14203, 1.442695
    %v14249 = vpow.pop %v14248
    %v14250 = vmul.f32 %v14204, 1.442695
    %v14251 = vpow.pop %v14250
    %v14252 = vmul.f32 %v14205, 1.442695
    %v14253 = vpow.pop %v14252
    %v14254 = vmul.f32 %v14206, 1.442695
    %v14255 = vpow.pop %v14254
    %v14256 = vmul.f32 %v14207, 1.442695
    %v14257 = vpow.pop %v14256
    %v14258 = vmul.f32 %v14208, 1.442695
    %v14259 = vpow.pop %v14258
    %v14260 = vmul.f32 %v14209, 1.442695
    %v14261 = vpow.pop %v14260
    %v14262 = vmul.f32 %v14210, 1.442695
    %v14263 = vpow.pop %v14262
    %v14264 = vmul.f32 %v14211, 1.442695
    %v14265 = vpow.pop %v14264
    %v14266 = vmul.f32 %v14212, 1.442695
    %v14267 = vpow.pop %v14266
    %v14268 = vmul.f32 %v14213, 1.442695
    %v14269 = vpow.pop %v14268
    %v14270 = vmul.f32 %v14214, 1.442695
    %v14271 = vpow.pop %v14270
    %v14272 = vmul.f32 %v14215, 1.442695
    %v14273 = vpow.pop %v14272
    %v14274 = vmul.f32 %v14216, 1.442695
    %v14275 = vpow.pop %v14274
    %v14276 = vmul.f32 %v14217, 1.442695
    %v14277 = vpow.pop %v14276
    %v14278 = vmul.f32 %v14218, 1.442695
    %v14279 = vpow.pop %v14278
    %v14280 = vmul.f32 %v14219, 1.442695
    %v14281 = vpow.pop %v14280
    %v14282 = vmul.f32 %v14220, 1.442695
    %v14283 = vpow.pop %v14282
    %v14284 = vmul.f32 %v14221, 1.442695
    %v14285 = vpow.pop %v14284
    %v14286 = vmul.f32 %v14222, 1.442695
    %v14287 = vpow.pop %v14286
    %v14288 = vmul.f32 %v14223, 1.442695
    %v14289 = vpow.pop %v14288
    %v14290 = vmul.f32 %v14224, 1.442695
    %v14291 = vpow.pop %v14290
    %v14292 = vmul.f32 %v14225, 1.442695
    %v14293 = vpow.pop %v14292
    %v14294 = vmul.f32 %v14226, 1.442695
    %v14295 = vpow.pop %v14294
    %v14296 = vmul.f32 %v14227, 1.442695
    %v14297 = vpow.pop %v14296
    %v14298 = vmul.f32 %v14228, 1.442695
    %v14299 = vpow.pop %v14298
    %v14300 = vmul.f32 %v14229, 1.442695
    %v14301 = vpow.pop %v14300
    %v14302 = vmul.f32 %v14230, 1.442695
    %v14303 = vpow.pop %v14302
    %v14304 = vmul.f32 %v14231, 1.442695
    %v14305 = vpow.pop %v14304
    %v14306 = vmul.f32 %v14232, 1.442695
    %v14307 = vpow.pop %v14306
    %v14308 = vmul.f32 %v14233, 1.442695
    %v14309 = vpow.pop %v14308
    %v14310 = vadd.f32 %v14235, 1.0
    %v14311 = vadd.f32 %v14237, 1.0
    %v14312 = vadd.f32 %v14239, 1.0
    %v14313 = vadd.f32 %v14241, 1.0
    %v14314 = vadd.f32 %v14243, 1.0
    %v14315 = vadd.f32 %v14245, 1.0
    %v14316 = vadd.f32 %v14247, 1.0
    %v14317 = vadd.f32 %v14249, 1.0
    %v14318 = vadd.f32 %v14251, 1.0
    %v14319 = vadd.f32 %v14253, 1.0
    %v14320 = vadd.f32 %v14255, 1.0
    %v14321 = vadd.f32 %v14257, 1.0
    %v14322 = vadd.f32 %v14259, 1.0
    %v14323 = vadd.f32 %v14261, 1.0
    %v14324 = vadd.f32 %v14263, 1.0
    %v14325 = vadd.f32 %v14265, 1.0
    %v14326 = vadd.f32 %v14267, 1.0
    %v14327 = vadd.f32 %v14269, 1.0
    %v14328 = vadd.f32 %v14271, 1.0
    %v14329 = vadd.f32 %v14273, 1.0
    %v14330 = vadd.f32 %v14275, 1.0
    %v14331 = vadd.f32 %v14277, 1.0
    %v14332 = vadd.f32 %v14279, 1.0
    %v14333 = vadd.f32 %v14281, 1.0
    %v14334 = vadd.f32 %v14283, 1.0
    %v14335 = vadd.f32 %v14285, 1.0
    %v14336 = vadd.f32 %v14287, 1.0
    %v14337 = vadd.f32 %v14289, 1.0
    %v14338 = vadd.f32 %v14291, 1.0
    %v14339 = vadd.f32 %v14293, 1.0
    %v14340 = vadd.f32 %v14295, 1.0
    %v14341 = vadd.f32 %v14297, 1.0
    %v14342 = vadd.f32 %v14299, 1.0
    %v14343 = vadd.f32 %v14301, 1.0
    %v14344 = vadd.f32 %v14303, 1.0
    %v14345 = vadd.f32 %v14305, 1.0
    %v14346 = vadd.f32 %v14307, 1.0
    %v14347 = vadd.f32 %v14309, 1.0
    %v14348 = vrcp.pop %v14310
    %v14349 = vmul.f32 1.0, %v14348
    %v14350 = vrcp.pop %v14311
    %v14351 = vmul.f32 1.0, %v14350
    %v14352 = vrcp.pop %v14312
    %v14353 = vmul.f32 1.0, %v14352
    %v14354 = vrcp.pop %v14313
    %v14355 = vmul.f32 1.0, %v14354
    %v14356 = vrcp.pop %v14314
    %v14357 = vmul.f32 1.0, %v14356
    %v14358 = vrcp.pop %v14315
    %v14359 = vmul.f32 1.0, %v14358
    %v14360 = vrcp.pop %v14316
    %v14361 = vmul.f32 1.0, %v14360
    %v14362 = vrcp.pop %v14317
    %v14363 = vmul.f32 1.0, %v14362
    %v14364 = vrcp.pop %v14318
    %v14365 = vmul.f32 1.0, %v14364
    %v14366 = vrcp.pop %v14319
    %v14367 = vmul.f32 1.0, %v14366
    %v14368 = vrcp.pop %v14320
    %v14369 = vmul.f32 1.0, %v14368
    %v14370 = vrcp.pop %v14321
    %v14371 = vmul.f32 1.0, %v14370
    %v14372 = vrcp.pop %v14322
    %v14373 = vmul.f32 1.0, %v14372
    %v14374 = vrcp.pop %v14323
    %v14375 = vmul.f32 1.0, %v14374
    %v14376 = vrcp.pop %v14324
    %v14377 = vmul.f32 1.0, %v14376
    %v14378 = vrcp.pop %v14325
    %v14379 = vmul.f32 1.0, %v14378
    %v14380 = vrcp.pop %v14326
    %v14381 = vmul.f32 1.0, %v14380
    %v14382 = vrcp.pop %v14327
    %v14383 = vmul.f32 1.0, %v14382
    %v14384 = vrcp.pop %v14328
    %v14385 = vmul.f32 1.0, %v14384
    %v14386 = vrcp.pop %v14329
    %v14387 = vmul.f32 1.0, %v14386
    %v14388 = vrcp.pop %v14330
    %v14389 = vmul.f32 1.0, %v14388
    %v14390 = vrcp.pop %v14331
    %v14391 = vmul.f32 1.0, %v14390
    %v14392 = vrcp.pop %v14332
    %v14393 = vmul.f32 1.0, %v14392
    %v14394 = vrcp.pop %v14333
    %v14395 = vmul.f32 1.0, %v14394
    %v14396 = vrcp.pop %v14334
    %v14397 = vmul.f32 1.0, %v14396
    %v14398 = vrcp.pop %v14335
    %v14399 = vmul.f32 1.0, %v14398
    %v14400 = vrcp.pop %v14336
    %v14401 = vmul.f32 1.0, %v14400
    %v14402 = vrcp.pop %v14337
    %v14403 = vmul.f32 1.0, %v14402
    %v14404 = vrcp.pop %v14338
    %v14405 = vmul.f32 1.0, %v14404
    %v14406 = vrcp.pop %v14339
    %v14407 = vmul.f32 1.0, %v14406
    %v14408 = vrcp.pop %v14340
    %v14409 = vmul.f32 1.0, %v14408
    %v14410 = vrcp.pop %v14341
    %v14411 = vmul.f32 1.0, %v14410
    %v14412 = vrcp.pop %v14342
    %v14413 = vmul.f32 1.0, %v14412
    %v14414 = vrcp.pop %v14343
    %v14415 = vmul.f32 1.0, %v14414
    %v14416 = vrcp.pop %v14344
    %v14417 = vmul.f32 1.0, %v14416
    %v14418 = vrcp.pop %v14345
    %v14419 = vmul.f32 1.0, %v14418
    %v14420 = vrcp.pop %v14346
    %v14421 = vmul.f32 1.0, %v14420
    %v14422 = vrcp.pop %v14347
    %v14423 = vmul.f32 1.0, %v14422
    %v14424 = vpack.c.bf16 %v14387, %v14349
    %v14425 = vpack.c.bf16 %v14389, %v14351
    %v14426 = vpack.c.bf16 %v14391, %v14353
    %v14427 = vpack.c.bf16 %v14393, %v14355
    %v14428 = vpack.c.bf16 %v14395, %v14357
    %v14429 = vpack.c.bf16 %v14397, %v14359
    %v14430 = vpack.c.bf16 %v14399, %v14361
    %v14431 = vpack.c.bf16 %v14401, %v14363
    %v14432 = vpack.c.bf16 %v14403, %v14365
    %v14433 = vpack.c.bf16 %v14405, %v14367
    %v14434 = vpack.c.bf16 %v14407, %v14369
    %v14435 = vpack.c.bf16 %v14409, %v14371
    %v14436 = vpack.c.bf16 %v14411, %v14373
    %v14437 = vpack.c.bf16 %v14413, %v14375
    %v14438 = vpack.c.bf16 %v14415, %v14377
    %v14439 = vpack.c.bf16 %v14417, %v14379
    %v14440 = vpack.c.bf16 %v14419, %v14381
    %v14441 = vpack.c.bf16 %v14421, %v14383
    %v14442 = vpack.c.bf16 %v14423, %v14385
    %v14462 = vunpack.c.l.b16 %v14424
    %v14463 = vunpack.c.l.b16 %v14425
    %v14464 = vunpack.c.l.b16 %v14426
    %v14465 = vunpack.c.l.b16 %v14427
    %v14466 = vunpack.c.l.b16 %v14428
    %v14467 = vunpack.c.l.b16 %v14429
    %v14468 = vunpack.c.l.b16 %v14430
    %v14469 = vunpack.c.l.b16 %v14431
    %v14470 = vunpack.c.l.b16 %v14432
    %v14471 = vunpack.c.l.b16 %v14433
    %v14472 = vunpack.c.l.b16 %v14434
    %v14473 = vunpack.c.l.b16 %v14435
    %v14474 = vunpack.c.l.b16 %v14436
    %v14475 = vunpack.c.l.b16 %v14437
    %v14476 = vunpack.c.l.b16 %v14438
    %v14477 = vunpack.c.l.b16 %v14439
    %v14478 = vunpack.c.l.b16 %v14440
    %v14479 = vunpack.c.l.b16 %v14441
    %v14480 = vunpack.c.l.b16 %v14442
    %v14481 = vunpack.c.h.b16 %v14424
    %v14482 = vunpack.c.h.b16 %v14425
    %v14483 = vunpack.c.h.b16 %v14426
    %v14484 = vunpack.c.h.b16 %v14427
    %v14485 = vunpack.c.h.b16 %v14428
    %v14486 = vunpack.c.h.b16 %v14429
    %v14487 = vunpack.c.h.b16 %v14430
    %v14488 = vunpack.c.h.b16 %v14431
    %v14489 = vunpack.c.h.b16 %v14432
    %v14490 = vunpack.c.h.b16 %v14433
    %v14491 = vunpack.c.h.b16 %v14434
    %v14492 = vunpack.c.h.b16 %v14435
    %v14493 = vunpack.c.h.b16 %v14436
    %v14494 = vunpack.c.h.b16 %v14437
    %v14495 = vunpack.c.h.b16 %v14438
    %v14496 = vunpack.c.h.b16 %v14439
    %v14497 = vunpack.c.h.b16 %v14440
    %v14498 = vunpack.c.h.b16 %v14441
    %v14499 = vunpack.c.h.b16 %v14442
    %v14500 = vpack.c.b16 %v14463, %v14462
    %v14501 = vpack.c.b16 %v14465, %v14464
    %v14502 = vpack.c.b16 %v14467, %v14466
    %v14503 = vpack.c.b16 %v14469, %v14468
    %v14504 = vpack.c.b16 %v14471, %v14470
    %v14505 = vpack.c.b16 %v14473, %v14472
    %v14506 = vpack.c.b16 %v14475, %v14474
    %v14507 = vpack.c.b16 %v14477, %v14476
    %v14508 = vpack.c.b16 %v14479, %v14478
    %v14509 = vpack.c.b16 %v14480, %v14480
    %v14510 = vpack.c.b16 %v14482, %v14481
    %v14511 = vpack.c.b16 %v14484, %v14483
    %v14512 = vpack.c.b16 %v14486, %v14485
    %v14513 = vpack.c.b16 %v14488, %v14487
    %v14514 = vpack.c.b16 %v14490, %v14489
    %v14515 = vpack.c.b16 %v14492, %v14491
    %v14516 = vpack.c.b16 %v14494, %v14493
    %v14517 = vpack.c.b16 %v14496, %v14495
    %v14518 = vpack.c.b16 %v14498, %v14497
    %v14519 = vpack.c.b16 %v14499, %v14499
    %14540 = vst [vmem:[%s11] sm:$0xff] %v14500
    %14541 = vst [vmem:[%s11 + $0x8] sm:$0xff] %v14501
    %14542 = vst [vmem:[%s11 + $0x10] sm:$0xff] %v14502
    %14543 = vst [vmem:[%s11 + $0x18] sm:$0xff] %v14503
    %14544 = vst [vmem:[%s11 + $0x20] sm:$0xff] %v14504
    %14545 = vst [vmem:[%s11 + $0x28] sm:$0xff] %v14505
    %14546 = vst [vmem:[%s11 + $0x30] sm:$0xff] %v14506
    %14547 = vst [vmem:[%s11 + $0x38] sm:$0xff] %v14507
    %14548 = vst [vmem:[%s11 + $0x40] sm:$0xff] %v14508
    %14549 = vst [vmem:[%s11 + $0x48] sm:$0xf] %v14509
    %14550 = vst [vmem:[%s11 + $0x4c] sm:$0xff] %v14510
    %14551 = vst [vmem:[%s11 + $0x54] sm:$0xff] %v14511
    %14552 = vst [vmem:[%s11 + $0x5c] sm:$0xff] %v14512
    %14553 = vst [vmem:[%s11 + $0x64] sm:$0xff] %v14513
    %14554 = vst [vmem:[%s11 + $0x6c] sm:$0xff] %v14514
    %14555 = vst [vmem:[%s11 + $0x74] sm:$0xff] %v14515
    %14556 = vst [vmem:[%s11 + $0x7c] sm:$0xff] %v14516
    %14557 = vst [vmem:[%s11 + $0x84] sm:$0xff] %v14517
    %14558 = vst [vmem:[%s11 + $0x8c] sm:$0xff] %v14518
    %14559 = vst [vmem:[%s11 + $0x94] sm:$0xf] %v14519
    // Predicated region
    $region82: #{vae_forward.1} parent=1 // pred_check
      _
    $region83: #{vae_forward.1} parent=1 // pred_check_branch
      %14561 = sbr.rel (0) target = $region85
    $region84: #{vae_forward.1} parent=1 // pred_region
      _
    $region85: #{vae_forward.1} parent=1 // pred_fallthru
      _
    // Predicated region
    $region86: #{vae_forward.1} parent=1 // pred_check
      _
    $region87: #{vae_forward.1} parent=1 // pred_check_branch
      %14563 = sbr.rel (0) target = $region89
    $region88: #{vae_forward.1} parent=1 // pred_region
      _
    $region89: #{vae_forward.1} parent=1 // pred_fallthru
      _
    // Predicated region
    $region90: #{vae_forward.1} parent=1 // pred_check
      _
    $region91: #{vae_forward.1} parent=1 // pred_check_branch
      %14565 = sbr.rel (0) target = $region93
    $region92: #{vae_forward.1} parent=1 // pred_region
      _
    $region93: #{vae_forward.1} parent=1 // pred_fallthru
      _
    // Predicated region
    $region94: #{vae_forward.1} parent=1 // pred_check
      _
    $region95: #{vae_forward.1} parent=1 // pred_check_branch
      %14567 = sbr.rel (0) target = $region97
    $region96: #{vae_forward.1} parent=1 // pred_region
      _
    $region97: #{vae_forward.1} parent=1 // pred_fallthru
      _
    // Predicated region
    $region98: #{vae_forward.1} parent=1 // pred_check
      _
    $region99: #{vae_forward.1} parent=1 // pred_check_branch
      %14569 = sbr.rel (0) target = $region101
    $region100: #{vae_forward.1} parent=1 // pred_region
      _
    $region101: #{vae_forward.1} parent=1 // pred_fallthru
      _
    // Predicated region
    $region102: #{vae_forward.1} parent=1 // pred_check
      _
    $region103: #{vae_forward.1} parent=1 // pred_check_branch
      %14571 = sbr.rel (0) target = $region105
    $region104: #{vae_forward.1} parent=1 // pred_region
      _
    $region105: #{vae_forward.1} parent=1 // pred_fallthru
      _
    %14572 = vsyncpa [#allocation3], 1
    %14573 = vsyncpa [#allocation5], 1
    %14574 = vsyncpa [#allocation8], 1
    %14575 = vsyncpa [#allocation11], 1
    %14576 = vsyncpa [#allocation14], 1

</llo_original>
